<compile_context>
chip_gen: v7x
topology: tpu7x:2x2x1
jax: 0.10.0
libtpu: 0.0.40
codegen_flags: <defaults>
</compile_context>

<pallas_src>
import functools
import math

import jax
import jax.numpy as jnp
from jax.experimental import pallas as pl
from jax.experimental.pallas import tpu as pltpu

EPS = 1e-5


# ----------------------------- small helpers --------------------------------


def _rup(x, m):
    return ((x + m - 1) // m) * m


@functools.lru_cache(maxsize=1)
def _vmem_limit_bytes():
    """Generation-aware scoped-VMEM limit: ~3/4 of physical, capped at 112 MiB."""
    try:
        cap = int(pltpu.get_tpu_info().vmem_capacity_bytes)
    except Exception:
        cap = 64 * 1024 * 1024
    return max(32 * 1024 * 1024, min(cap * 3 // 4, 112 * 1024 * 1024))


def _cparams(semantics):
    return pltpu.CompilerParams(dimension_semantics=semantics,
                                vmem_limit_bytes=_vmem_limit_bytes())


def _stats_rows(y):
    """(rows, C) f32 -> (8, C): row0=sum, row1=sum of squares, rest zero."""
    s = jnp.sum(y, axis=0, keepdims=True)
    sq = jnp.sum(y * y, axis=0, keepdims=True)
    z = jnp.zeros((6, y.shape[1]), jnp.float32)
    return jnp.concatenate([s, sq, z], axis=0)


def _finalize_bn(stats, m, gamma, beta):
    """(8, C) accumulated (sum, sumsq) -> per-channel scale/shift (f32)."""
    mean = stats[0] / m
    var = jnp.maximum(stats[1] / m - mean * mean, 0.0)
    scale = gamma.astype(jnp.float32) * jax.lax.rsqrt(var + EPS)
    shift = beta.astype(jnp.float32) - mean * scale
    return scale[None, :], shift[None, :]


# ------------------------------- kernels -------------------------------------


def stage1_kernel(x_ref, w1_ref, ws_ref, y1_ref, ysc_ref, st1_ref, sts_ref):
    """conv1 (1x1) + shortcut conv (1x1) in one pass over x; raw outputs plus
    VMEM-resident (sum, sumsq) accumulators for both BatchNorms."""
    x = x_ref[...]
    acc1 = jnp.dot(x, w1_ref[...], preferred_element_type=jnp.float32)
    accs = jnp.dot(x, ws_ref[...], preferred_element_type=jnp.float32)
    y1_ref[...] = acc1.astype(y1_ref.dtype)
    ysc_ref[...] = accs.astype(ysc_ref.dtype)

    @pl.when(pl.program_id(0) == 0)
    def _():
        st1_ref[...] = jnp.zeros_like(st1_ref)
        sts_ref[...] = jnp.zeros_like(sts_ref)

    st1_ref[...] += _stats_rows(acc1)
    sts_ref[...] += _stats_rows(accs)


def conv3x3_stats_kernel(yc_ref, yt_ref, yb_ref, sc_ref, sh_ref, w_ref,
                         y2_ref, st_ref, pad_ref, *, TH, W):
    """3x3 conv (stride=1, pad=1) with BN1+ReLU fused on the raw conv1 output.

    grid = (N, H//TH).  Per tile, TH center rows plus one halo row above/below
    (extra 1-row BlockSpecs on the same array; zeroed at image edges) are
    normalized and staged into a zero-bordered (TH+2, Wpad, C) bf16 scratch.
    The conv is 9 accumulated matmuls, one per (ky, kx) tap.
    """
    n = pl.program_id(0)
    t = pl.program_id(1)
    nt = pl.num_programs(1)
    first = jnp.logical_and(n == 0, t == 0)
    cin = yc_ref.shape[-1]
    cout = w_ref.shape[-1]

    @pl.when(first)
    def _():
        # Left/right border columns are zeroed once and never written again;
        # interior + halo rows are fully rewritten every grid step.
        pad_ref[...] = jnp.zeros_like(pad_ref)
        st_ref[...] = jnp.zeros_like(st_ref)

    scale = sc_ref[...].reshape(1, 1, cin)
    shift = sh_ref[...].reshape(1, 1, cin)

    def bn_relu(raw):
        return jnp.maximum(raw.astype(jnp.float32) * scale + shift, 0.0)

    hc = bn_relu(yc_ref[0])                                    # (TH, W, C)
    ht = bn_relu(yt_ref[0]) * jnp.where(t == 0, 0.0, 1.0)      # (1, W, C)
    hb = bn_relu(yb_ref[0]) * jnp.where(t == nt - 1, 0.0, 1.0)

    pad_ref[0:1, 1:W + 1, :] = ht.astype(pad_ref.dtype)
    pad_ref[1:TH + 1, 1:W + 1, :] = hc.astype(pad_ref.dtype)
    pad_ref[TH + 1:TH + 2, 1:W + 1, :] = hb.astype(pad_ref.dtype)

    acc = jnp.zeros((TH * W, cout), jnp.float32)
    for ky in range(3):
        for kx in range(3):
            tap = pad_ref[ky:ky + TH, kx:kx + W, :].reshape(TH * W, cin)
            acc += jnp.dot(tap, w_ref[ky * 3 + kx],
                           preferred_element_type=jnp.float32)

    y2_ref[...] = acc.astype(y2_ref.dtype)
    st_ref[...] += _stats_rows(acc)


def stage3_kernel(y2_ref, sc2_ref, sh2_ref, w3_ref, y3_ref, st3_ref):
    """BN2+ReLU fused on the raw conv2 output, conv3 (1x1) matmul, BN3 stats."""
    h2 = jnp.maximum(
        y2_ref[...].astype(jnp.float32) * sc2_ref[...] + sh2_ref[...], 0.0)
    acc = jnp.dot(h2.astype(jnp.bfloat16), w3_ref[...],
                  preferred_element_type=jnp.float32)
    y3_ref[...] = acc.astype(y3_ref.dtype)

    @pl.when(pl.program_id(0) == 0)
    def _():
        st3_ref[...] = jnp.zeros_like(st3_ref)

    st3_ref[...] += _stats_rows(acc)


def residual_kernel(y3_ref, ysc_ref, sc3_ref, sh3_ref, scs_ref, shs_ref, o_ref):
    """Second BN pass for conv3 + shortcut, residual add, ReLU (tiled over M)."""
    a = y3_ref[...].astype(jnp.float32) * sc3_ref[...] + sh3_ref[...]
    b = ysc_ref[...].astype(jnp.float32) * scs_ref[...] + shs_ref[...]
    o_ref[...] = jnp.maximum(a + b, 0.0)


# -------------------------------- wrapper ------------------------------------


def bottleneck_forward(x_nchw, params, *, tm=512, th=8):
    """BottleNeck forward (stride=1).  x_nchw: (N, Cin, H, W) f32.  Returns NCHW."""
    N, Cin, H, W = x_nchw.shape
    P = params["w1"].shape[1]
    C4 = params["w3"].shape[1]
    M = N * H * W

    assert H % th == 0 and (th * W) % 8 == 0, (H, W, th)
    T = H // th
    tm = min(tm, M)
    if M % tm != 0:            # keep tm a divisor of M -> no wrapper-side pads
        tm = math.gcd(M, tm)
    assert tm % 8 == 0 and M % tm == 0, (M, tm)
    Mt = M // tm
    Wpad = _rup(W + 2, 8)

    # NCHW -> NHWC -> (M, C), native channel widths (no 128-padding), bf16 for
    # the MXU (f32 accumulation + f32 BN math inside the kernels).
    x2d = (jnp.transpose(x_nchw, (0, 2, 3, 1)).astype(jnp.float32)
           .reshape(M, Cin).astype(jnp.bfloat16))

    w1 = params["w1"].astype(jnp.bfloat16)                     # (Cin, P)
    ws = params["ws"].astype(jnp.bfloat16)                     # (Cin, C4)
    w2 = params["w2"].astype(jnp.bfloat16).reshape(9, P, P)    # tap-major (ky,kx)
    w3 = params["w3"].astype(jnp.bfloat16)                     # (P, C4)

    # --- stage 1: conv1 (1x1) + shortcut (1x1), raw outputs + BN partials -----
    y1, ysc, st1, sts = pl.pallas_call(
        stage1_kernel,
        grid=(Mt,),
        in_specs=[pl.BlockSpec((tm, Cin), lambda i: (i, 0)),
                  pl.BlockSpec((Cin, P), lambda i: (0, 0)),
                  pl.BlockSpec((Cin, C4), lambda i: (0, 0))],
        out_specs=[pl.BlockSpec((tm, P), lambda i: (i, 0)),
                   pl.BlockSpec((tm, C4), lambda i: (i, 0)),
                   pl.BlockSpec((8, P), lambda i: (0, 0)),
                   pl.BlockSpec((8, C4), lambda i: (0, 0))],
        out_shape=[jax.ShapeDtypeStruct((M, P), jnp.bfloat16),
                   jax.ShapeDtypeStruct((M, C4), jnp.bfloat16),
                   jax.ShapeDtypeStruct((8, P), jnp.float32),
                   jax.ShapeDtypeStruct((8, C4), jnp.float32)],
        compiler_params=_cparams(("arbitrary",)),   # resident stat accumulators
    )(x2d, w1, ws)
    sc1, sh1 = _finalize_bn(st1, M, params["g1"], params["b1"])
    scs, shs = _finalize_bn(sts, M, params["gs"], params["bs"])

    # --- stage 2: conv2 (3x3, pad=1, stride=1) with fused BN1+ReLU ------------
    y1_img = y1.reshape(N, H, W, P)
    k2 = functools.partial(conv3x3_stats_kernel, TH=th, W=W)
    y2, st2 = pl.pallas_call(
        k2,
        grid=(N, T),
        in_specs=[pl.BlockSpec((1, th, W, P), lambda n, t: (n, t, 0, 0)),
                  pl.BlockSpec((1, 1, W, P),
                               lambda n, t: (n, jnp.maximum(t * th - 1, 0), 0, 0)),
                  pl.BlockSpec((1, 1, W, P),
                               lambda n, t: (n, jnp.minimum(t * th + th, H - 1), 0, 0)),
                  pl.BlockSpec((1, P), lambda n, t: (0, 0)),
                  pl.BlockSpec((1, P), lambda n, t: (0, 0)),
                  pl.BlockSpec((9, P, P), lambda n, t: (0, 0, 0))],
        out_specs=[pl.BlockSpec((th * W, P), lambda n, t: (n * T + t, 0)),
                   pl.BlockSpec((8, P), lambda n, t: (0, 0))],
        out_shape=[jax.ShapeDtypeStruct((M, P), jnp.bfloat16),
                   jax.ShapeDtypeStruct((8, P), jnp.float32)],
        scratch_shapes=[pltpu.VMEM((th + 2, Wpad, P), jnp.bfloat16)],
        compiler_params=_cparams(("arbitrary", "arbitrary")),
    )(y1_img, y1_img, y1_img, sc1, sh1, w2)
    sc2, sh2 = _finalize_bn(st2, M, params["g2"], params["b2"])

    # --- stage 3: fused BN2+ReLU, conv3 (1x1), BN3 partials -------------------
    y3, st3 = pl.pallas_call(
        stage3_kernel,
        grid=(Mt,),
        in_specs=[pl.BlockSpec((tm, P), lambda i: (i, 0)),
                  pl.BlockSpec((1, P), lambda i: (0, 0)),
                  pl.BlockSpec((1, P), lambda i: (0, 0)),
                  pl.BlockSpec((P, C4), lambda i: (0, 0))],
        out_specs=[pl.BlockSpec((tm, C4), lambda i: (i, 0)),
                   pl.BlockSpec((8, C4), lambda i: (0, 0))],
        out_shape=[jax.ShapeDtypeStruct((M, C4), jnp.bfloat16),
                   jax.ShapeDtypeStruct((8, C4), jnp.float32)],
        compiler_params=_cparams(("arbitrary",)),
    )(y2, sc2, sh2, w3)
    sc3, sh3 = _finalize_bn(st3, M, params["g3"], params["b3"])

    # --- final pass: BN3 + BN_shortcut, residual add, ReLU --------------------
    out2d = pl.pallas_call(
        residual_kernel,
        grid=(Mt,),
        in_specs=[pl.BlockSpec((tm, C4), lambda i: (i, 0)),
                  pl.BlockSpec((tm, C4), lambda i: (i, 0)),
                  pl.BlockSpec((1, C4), lambda i: (0, 0)),
                  pl.BlockSpec((1, C4), lambda i: (0, 0)),
                  pl.BlockSpec((1, C4), lambda i: (0, 0)),
                  pl.BlockSpec((1, C4), lambda i: (0, 0))],
        out_specs=pl.BlockSpec((tm, C4), lambda i: (i, 0)),
        out_shape=jax.ShapeDtypeStruct((M, C4), jnp.float32),
        compiler_params=_cparams(("parallel",)),
    )(y3, ysc, sc3, sh3, scs, shs)

    return out2d.reshape(N, H, W, C4).transpose(0, 3, 1, 2)


# --------------------------- pure-JAX reference ------------------------------


def bottleneck_reference(x_nchw, params):
    """Mirrors the kernel's numerics (bf16 matmul inputs, f32 accum/BN)."""
    f32, bf16 = jnp.float32, jnp.bfloat16
    x = jnp.transpose(x_nchw, (0, 2, 3, 1)).astype(f32)

    def bn_affine(y, g, b):
        m = y.mean(axis=(0, 1, 2))
        v = jnp.maximum((y * y).mean(axis=(0, 1, 2)) - m * m, 0.0)
        scale = g * jax.lax.rsqrt(v + EPS)
        return scale, b - m * scale

    y1 = jnp.einsum("nhwc,cd->nhwd", x.astype(bf16), params["w1"].astype(bf16),
                    preferred_element_type=f32)
    s1, t1 = bn_affine(y1, params["g1"], params["b1"])
    h1 = jnp.maximum(y1.astype(bf16).astype(f32) * s1 + t1, 0.0)

    y2 = jax.lax.conv_general_dilated(
        h1.astype(bf16), params["w2"].astype(bf16), (1, 1), "SAME",
        dimension_numbers=("NHWC", "HWIO", "NHWC"),
        preferred_element_type=f32)
    s2, t2 = bn_affine(y2, params["g2"], params["b2"])
    h2 = jnp.maximum(y2.astype(bf16).astype(f32) * s2 + t2, 0.0)

    y3 = jnp.einsum("nhwc,cd->nhwd", h2.astype(bf16), params["w3"].astype(bf16),
                    preferred_element_type=f32)
    s3, t3 = bn_affine(y3, params["g3"], params["b3"])
    ysc = jnp.einsum("nhwc,cd->nhwd", x.astype(bf16), params["ws"].astype(bf16),
                     preferred_element_type=f32)
    ss, ts = bn_affine(ysc, params["gs"], params["bs"])
    out = jnp.maximum(y3.astype(bf16).astype(f32) * s3 + t3
                      + ysc.astype(bf16).astype(f32) * ss + ts, 0.0)
    return out.transpose(0, 3, 1, 2)


# ---------------------------------- main --------------------------------------

if __name__ == "__main__":
    # FPN stage-1 first BottleNeck: inplanes=64, planes=64, expansion=4, stride=1
    # (shortcut is 1x1 conv + BN since inplanes != 4*planes), small spatial size.
    N, inplanes, H, W = 2, 64, 16, 16
    planes = 64
    C4 = 4 * planes

    key = jax.random.PRNGKey(0)
    k1, k2, k3, k4, kx = jax.random.split(key, 5)
    params = dict(
        # conv weights in matmul / HWIO layouts (transposed from PyTorch OIHW)
        w1=jax.random.normal(k1, (inplanes, planes), jnp.float32) * 0.1,
        w2=jax.random.normal(k2, (3, 3, planes, planes), jnp.float32) * 0.05,
        w3=jax.random.normal(k3, (planes, C4), jnp.float32) * 0.1,
        ws=jax.random.normal(k4, (inplanes, C4), jnp.float32) * 0.1,
        # BatchNorm affine params (PyTorch default init: gamma=1, beta=0)
        g1=jnp.ones((planes,), jnp.float32), b1=jnp.zeros((planes,), jnp.float32),
        g2=jnp.ones((planes,), jnp.float32), b2=jnp.zeros((planes,), jnp.float32),
        g3=jnp.ones((C4,), jnp.float32), b3=jnp.zeros((C4,), jnp.float32),
        gs=jnp.ones((C4,), jnp.float32), bs=jnp.zeros((C4,), jnp.float32),
    )
    x = jax.random.normal(kx, (N, inplanes, H, W), jnp.float32)  # NCHW like PyTorch

    fwd = jax.jit(bottleneck_forward)
    out = jax.block_until_ready(fwd(x, params))
    assert out.shape == (N, C4, H, W), out.shape

    ref = bottleneck_reference(x, params)
    err = float(jnp.max(jnp.abs(out - ref)))
    ref_scale = max(float(jnp.max(jnp.abs(ref))), 1.0)
    if err > 5e-3 * ref_scale:
        raise AssertionError(f"mismatch vs reference: max abs err={err}, "
                             f"ref scale={ref_scale}")
    print("KERNEL_OK")
</pallas_src>

<mosaic_0001>
module attributes {stable_mosaic.version = 11 : i64} {
  func.func @stage1_kernel(%arg0: i32, %arg1: memref<512x64xbf16, #tpu.memory_space<vmem>>, %arg2: memref<64x64xbf16, #tpu.memory_space<vmem>>, %arg3: memref<64x256xbf16, #tpu.memory_space<vmem>>, %arg4: memref<512x64xbf16, #tpu.memory_space<vmem>>, %arg5: memref<512x256xbf16, #tpu.memory_space<vmem>>, %arg6: memref<8x64xf32, #tpu.memory_space<vmem>>, %arg7: memref<8x256xf32, #tpu.memory_space<vmem>>) attributes {dimension_semantics = [#tpu.dimension_semantics<arbitrary>], iteration_bounds = array<i64: 1>, scalar_prefetch = 0 : i64, scratch_operands = 0 : i64, tpu.core_type = #tpu.core_type<tc>, window_params = [{transform_indices = @transform_0, window_bounds = array<i64: 512, 64>}, {pipeline_mode = #tpu.pipeline_mode<synchronous>, transform_indices = @transform_1, window_bounds = array<i64: 64, 64>}, {pipeline_mode = #tpu.pipeline_mode<synchronous>, transform_indices = @transform_2, window_bounds = array<i64: 64, 256>}, {transform_indices = @transform_3, window_bounds = array<i64: 512, 64>}, {transform_indices = @transform_4, window_bounds = array<i64: 512, 256>}, {pipeline_mode = #tpu.pipeline_mode<synchronous>, transform_indices = @transform_5, window_bounds = array<i64: 8, 64>}, {pipeline_mode = #tpu.pipeline_mode<synchronous>, transform_indices = @transform_6, window_bounds = array<i64: 8, 256>}]} {
    %c0 = arith.constant 0 : index
    %c0_0 = arith.constant 0 : index
    %0 = vector.load %arg1[%c0, %c0_0] : memref<512x64xbf16, #tpu.memory_space<vmem>>, vector<512x64xbf16>
    %c0_1 = arith.constant 0 : index
    %c0_2 = arith.constant 0 : index
    %1 = vector.load %arg2[%c0_1, %c0_2] : memref<64x64xbf16, #tpu.memory_space<vmem>>, vector<64x64xbf16>
    %cst = arith.constant dense<0.000000e+00> : vector<512x64xf32>
    %2 = tpu.matmul %0, %1, %cst {dimension_numbers = #tpu.dot_dimension_numbers<[1], [0], [0], [1], [0, 0, 1, 1], [], []>} : vector<512x64xbf16>, vector<64x64xbf16>, vector<512x64xf32> -> vector<512x64xf32>
    %c0_3 = arith.constant 0 : index
    %c0_4 = arith.constant 0 : index
    %3 = vector.load %arg3[%c0_3, %c0_4] : memref<64x256xbf16, #tpu.memory_space<vmem>>, vector<64x256xbf16>
    %cst_5 = arith.constant dense<0.000000e+00> : vector<512x256xf32>
    %4 = tpu.matmul %0, %3, %cst_5 {dimension_numbers = #tpu.dot_dimension_numbers<[1], [0], [0], [1], [0, 0, 1, 1], [], []>} : vector<512x64xbf16>, vector<64x256xbf16>, vector<512x256xf32> -> vector<512x256xf32>
    %5 = arith.truncf %2 : vector<512x64xf32> to vector<512x64xbf16>
    %c0_6 = arith.constant 0 : index
    %c0_7 = arith.constant 0 : index
    %6 = vector.load %arg4[%c0_6, %c0_7] : memref<512x64xbf16, #tpu.memory_space<vmem>>, vector<512x64xbf16>
    tpu.vector_store %arg4[%c0_6, %c0_7], %5 {strides = array<i32>} : memref<512x64xbf16, #tpu.memory_space<vmem>>, vector<512x64xbf16>,
    %7 = arith.truncf %4 : vector<512x256xf32> to vector<512x256xbf16>
    %c0_8 = arith.constant 0 : index
    %c0_9 = arith.constant 0 : index
    %8 = vector.load %arg5[%c0_8, %c0_9] : memref<512x256xbf16, #tpu.memory_space<vmem>>, vector<512x256xbf16>
    tpu.vector_store %arg5[%c0_8, %c0_9], %7 {strides = array<i32>} : memref<512x256xbf16, #tpu.memory_space<vmem>>, vector<512x256xbf16>,
    %c0_i32 = arith.constant 0 : i32
    %9 = arith.cmpi eq, %arg0, %c0_i32 : i32
    %10 = arith.extui %9 : i1 to i32
    %c0_i32_10 = arith.constant 0 : i32
    %11 = arith.cmpi ne, %10, %c0_i32_10 : i32
    scf.if %11 {
      %cst_25 = arith.constant 0.000000e+00 : f32
      %32 = vector.broadcast %cst_25 : f32 to vector<8x64xf32>
      %c0_26 = arith.constant 0 : index
      %c0_27 = arith.constant 0 : index
      %33 = vector.load %arg6[%c0_26, %c0_27] : memref<8x64xf32, #tpu.memory_space<vmem>>, vector<8x64xf32>
      tpu.vector_store %arg6[%c0_26, %c0_27], %32 {strides = array<i32>} : memref<8x64xf32, #tpu.memory_space<vmem>>, vector<8x64xf32>,
      %cst_28 = arith.constant 0.000000e+00 : f32
      %34 = vector.broadcast %cst_28 : f32 to vector<8x256xf32>
      %c0_29 = arith.constant 0 : index
      %c0_30 = arith.constant 0 : index
      %35 = vector.load %arg7[%c0_29, %c0_30] : memref<8x256xf32, #tpu.memory_space<vmem>>, vector<8x256xf32>
      tpu.vector_store %arg7[%c0_29, %c0_30], %34 {strides = array<i32>} : memref<8x256xf32, #tpu.memory_space<vmem>>, vector<8x256xf32>,
    } else {
    }
    %c0_11 = arith.constant 0 : index
    %c0_12 = arith.constant 0 : index
    %12 = vector.load %arg6[%c0_11, %c0_12] : memref<8x64xf32, #tpu.memory_space<vmem>>, vector<8x64xf32>
    %cst_13 = arith.constant dense<0.000000e+00> : vector<64xf32>
    %13 = vector.multi_reduction <add>, %2, %cst_13 [0] : vector<512x64xf32> to vector<64xf32>
    %14 = vector.shape_cast %13 : vector<64xf32> to vector<1x64xf32>
    %15 = arith.mulf %2, %2 : vector<512x64xf32>
    %cst_14 = arith.constant dense<0.000000e+00> : vector<64xf32>
    %16 = vector.multi_reduction <add>, %15, %cst_14 [0] : vector<512x64xf32> to vector<64xf32>
    %17 = vector.shape_cast %16 : vector<64xf32> to vector<1x64xf32>
    %cst_15 = arith.constant 0.000000e+00 : f32
    %18 = vector.broadcast %cst_15 : f32 to vector<6x64xf32>
    %19 = tpu.concatenate %14, %17, %18 in 0 : vector<1x64xf32>, vector<1x64xf32>, vector<6x64xf32> -> vector<8x64xf32>
    %20 = arith.addf %12, %19 : vector<8x64xf32>
    %c0_16 = arith.constant 0 : index
    %c0_17 = arith.constant 0 : index
    %21 = vector.load %arg6[%c0_16, %c0_17] : memref<8x64xf32, #tpu.memory_space<vmem>>, vector<8x64xf32>
    tpu.vector_store %arg6[%c0_16, %c0_17], %20 {strides = array<i32>} : memref<8x64xf32, #tpu.memory_space<vmem>>, vector<8x64xf32>,
    %c0_18 = arith.constant 0 : index
    %c0_19 = arith.constant 0 : index
    %22 = vector.load %arg7[%c0_18, %c0_19] : memref<8x256xf32, #tpu.memory_space<vmem>>, vector<8x256xf32>
    %cst_20 = arith.constant dense<0.000000e+00> : vector<256xf32>
    %23 = vector.multi_reduction <add>, %4, %cst_20 [0] : vector<512x256xf32> to vector<256xf32>
    %24 = vector.shape_cast %23 : vector<256xf32> to vector<1x256xf32>
    %25 = arith.mulf %4, %4 : vector<512x256xf32>
    %cst_21 = arith.constant dense<0.000000e+00> : vector<256xf32>
    %26 = vector.multi_reduction <add>, %25, %cst_21 [0] : vector<512x256xf32> to vector<256xf32>
    %27 = vector.shape_cast %26 : vector<256xf32> to vector<1x256xf32>
    %cst_22 = arith.constant 0.000000e+00 : f32
    %28 = vector.broadcast %cst_22 : f32 to vector<6x256xf32>
    %29 = tpu.concatenate %24, %27, %28 in 0 : vector<1x256xf32>, vector<1x256xf32>, vector<6x256xf32> -> vector<8x256xf32>
    %30 = arith.addf %22, %29 : vector<8x256xf32>
    %c0_23 = arith.constant 0 : index
    %c0_24 = arith.constant 0 : index
    %31 = vector.load %arg7[%c0_23, %c0_24] : memref<8x256xf32, #tpu.memory_space<vmem>>, vector<8x256xf32>
    tpu.vector_store %arg7[%c0_23, %c0_24], %30 {strides = array<i32>} : memref<8x256xf32, #tpu.memory_space<vmem>>, vector<8x256xf32>,
    return
  }
  func.func @transform_0(%arg0: i32) -> (i32, i32) {
    %c0_i32 = arith.constant 0 : i32
    %c0_i32_0 = arith.constant 0 : i32
    return %arg0, %c0_i32 : i32, i32
  }
  func.func @transform_1(%arg0: i32) -> (i32, i32) {
    %c0_i32 = arith.constant 0 : i32
    %c0_i32_0 = arith.constant 0 : i32
    %c0_i32_1 = arith.constant 0 : i32
    return %c0_i32, %c0_i32_0 : i32, i32
  }
  func.func @transform_2(%arg0: i32) -> (i32, i32) {
    %c0_i32 = arith.constant 0 : i32
    %c0_i32_0 = arith.constant 0 : i32
    %c0_i32_1 = arith.constant 0 : i32
    return %c0_i32, %c0_i32_0 : i32, i32
  }
  func.func @transform_3(%arg0: i32) -> (i32, i32) {
    %c0_i32 = arith.constant 0 : i32
    %c0_i32_0 = arith.constant 0 : i32
    return %arg0, %c0_i32 : i32, i32
  }
  func.func @transform_4(%arg0: i32) -> (i32, i32) {
    %c0_i32 = arith.constant 0 : i32
    %c0_i32_0 = arith.constant 0 : i32
    return %arg0, %c0_i32 : i32, i32
  }
  func.func @transform_5(%arg0: i32) -> (i32, i32) {
    %c0_i32 = arith.constant 0 : i32
    %c0_i32_0 = arith.constant 0 : i32
    %c0_i32_1 = arith.constant 0 : i32
    return %c0_i32, %c0_i32_0 : i32, i32
  }
  func.func @transform_6(%arg0: i32) -> (i32, i32) {
    %c0_i32 = arith.constant 0 : i32
    %c0_i32_0 = arith.constant 0 : i32
    %c0_i32_1 = arith.constant 0 : i32
    return %c0_i32, %c0_i32_0 : i32, i32
  }
}

module attributes {stable_mosaic.version = 11 : i64} {
  func.func @residual_kernel(%arg0: i32, %arg1: memref<512x256xbf16, #tpu.memory_space<vmem>>, %arg2: memref<512x256xbf16, #tpu.memory_space<vmem>>, %arg3: memref<1x256xf32, #tpu.memory_space<vmem>>, %arg4: memref<1x256xf32, #tpu.memory_space<vmem>>, %arg5: memref<1x256xf32, #tpu.memory_space<vmem>>, %arg6: memref<1x256xf32, #tpu.memory_space<vmem>>, %arg7: memref<512x256xf32, #tpu.memory_space<vmem>>) attributes {dimension_semantics = [#tpu.dimension_semantics<parallel>], iteration_bounds = array<i64: 1>, scalar_prefetch = 0 : i64, scratch_operands = 0 : i64, tpu.core_type = #tpu.core_type<tc>, window_params = [{transform_indices = @transform_0, window_bounds = array<i64: 512, 256>}, {transform_indices = @transform_1, window_bounds = array<i64: 512, 256>}, {pipeline_mode = #tpu.pipeline_mode<synchronous>, transform_indices = @transform_2, window_bounds = array<i64: 1, 256>}, {pipeline_mode = #tpu.pipeline_mode<synchronous>, transform_indices = @transform_3, window_bounds = array<i64: 1, 256>}, {pipeline_mode = #tpu.pipeline_mode<synchronous>, transform_indices = @transform_4, window_bounds = array<i64: 1, 256>}, {pipeline_mode = #tpu.pipeline_mode<synchronous>, transform_indices = @transform_5, window_bounds = array<i64: 1, 256>}, {transform_indices = @transform_6, window_bounds = array<i64: 512, 256>}]} {
    %c0 = arith.constant 0 : index
    %c0_0 = arith.constant 0 : index
    %0 = vector.load %arg1[%c0, %c0_0] : memref<512x256xbf16, #tpu.memory_space<vmem>>, vector<512x256xbf16>
    %1 = arith.extf %0 : vector<512x256xbf16> to vector<512x256xf32>
    %c0_1 = arith.constant 0 : index
    %c0_2 = arith.constant 0 : index
    %2 = vector.load %arg3[%c0_1, %c0_2] : memref<1x256xf32, #tpu.memory_space<vmem>>, vector<1x256xf32>
    %3 = vector.broadcast %2 : vector<1x256xf32> to vector<512x256xf32>
    %4 = arith.mulf %1, %3 : vector<512x256xf32>
    %c0_3 = arith.constant 0 : index
    %c0_4 = arith.constant 0 : index
    %5 = vector.load %arg4[%c0_3, %c0_4] : memref<1x256xf32, #tpu.memory_space<vmem>>, vector<1x256xf32>
    %6 = vector.broadcast %5 : vector<1x256xf32> to vector<512x256xf32>
    %7 = arith.addf %4, %6 : vector<512x256xf32>
    %c0_5 = arith.constant 0 : index
    %c0_6 = arith.constant 0 : index
    %8 = vector.load %arg2[%c0_5, %c0_6] : memref<512x256xbf16, #tpu.memory_space<vmem>>, vector<512x256xbf16>
    %9 = arith.extf %8 : vector<512x256xbf16> to vector<512x256xf32>
    %c0_7 = arith.constant 0 : index
    %c0_8 = arith.constant 0 : index
    %10 = vector.load %arg5[%c0_7, %c0_8] : memref<1x256xf32, #tpu.memory_space<vmem>>, vector<1x256xf32>
    %11 = vector.broadcast %10 : vector<1x256xf32> to vector<512x256xf32>
    %12 = arith.mulf %9, %11 : vector<512x256xf32>
    %c0_9 = arith.constant 0 : index
    %c0_10 = arith.constant 0 : index
    %13 = vector.load %arg6[%c0_9, %c0_10] : memref<1x256xf32, #tpu.memory_space<vmem>>, vector<1x256xf32>
    %14 = vector.broadcast %13 : vector<1x256xf32> to vector<512x256xf32>
    %15 = arith.addf %12, %14 : vector<512x256xf32>
    %16 = arith.addf %7, %15 : vector<512x256xf32>
    %cst = arith.constant 0.000000e+00 : f32
    %17 = vector.broadcast %cst : f32 to vector<512x256xf32>
    %18 = arith.maximumf %16, %17 : vector<512x256xf32>
    %c0_11 = arith.constant 0 : index
    %c0_12 = arith.constant 0 : index
    %19 = vector.load %arg7[%c0_11, %c0_12] : memref<512x256xf32, #tpu.memory_space<vmem>>, vector<512x256xf32>
    tpu.vector_store %arg7[%c0_11, %c0_12], %18 {strides = array<i32>} : memref<512x256xf32, #tpu.memory_space<vmem>>, vector<512x256xf32>,
    return
  }
  func.func @transform_0(%arg0: i32) -> (i32, i32) {
    %c0_i32 = arith.constant 0 : i32
    %c0_i32_0 = arith.constant 0 : i32
    return %arg0, %c0_i32 : i32, i32
  }
  func.func @transform_1(%arg0: i32) -> (i32, i32) {
    %c0_i32 = arith.constant 0 : i32
    %c0_i32_0 = arith.constant 0 : i32
    return %arg0, %c0_i32 : i32, i32
  }
  func.func @transform_2(%arg0: i32) -> (i32, i32) {
    %c0_i32 = arith.constant 0 : i32
    %c0_i32_0 = arith.constant 0 : i32
    %c0_i32_1 = arith.constant 0 : i32
    return %c0_i32, %c0_i32_0 : i32, i32
  }
  func.func @transform_3(%arg0: i32) -> (i32, i32) {
    %c0_i32 = arith.constant 0 : i32
    %c0_i32_0 = arith.constant 0 : i32
    %c0_i32_1 = arith.constant 0 : i32
    return %c0_i32, %c0_i32_0 : i32, i32
  }
  func.func @transform_4(%arg0: i32) -> (i32, i32) {
    %c0_i32 = arith.constant 0 : i32
    %c0_i32_0 = arith.constant 0 : i32
    %c0_i32_1 = arith.constant 0 : i32
    return %c0_i32, %c0_i32_0 : i32, i32
  }
  func.func @transform_5(%arg0: i32) -> (i32, i32) {
    %c0_i32 = arith.constant 0 : i32
    %c0_i32_0 = arith.constant 0 : i32
    %c0_i32_1 = arith.constant 0 : i32
    return %c0_i32, %c0_i32_0 : i32, i32
  }
  func.func @transform_6(%arg0: i32) -> (i32, i32) {
    %c0_i32 = arith.constant 0 : i32
    %c0_i32_0 = arith.constant 0 : i32
    return %arg0, %c0_i32 : i32, i32
  }
}

module attributes {stable_mosaic.version = 11 : i64} {
  func.func @stage3_kernel(%arg0: i32, %arg1: memref<512x64xbf16, #tpu.memory_space<vmem>>, %arg2: memref<1x64xf32, #tpu.memory_space<vmem>>, %arg3: memref<1x64xf32, #tpu.memory_space<vmem>>, %arg4: memref<64x256xbf16, #tpu.memory_space<vmem>>, %arg5: memref<512x256xbf16, #tpu.memory_space<vmem>>, %arg6: memref<8x256xf32, #tpu.memory_space<vmem>>) attributes {dimension_semantics = [#tpu.dimension_semantics<arbitrary>], iteration_bounds = array<i64: 1>, scalar_prefetch = 0 : i64, scratch_operands = 0 : i64, tpu.core_type = #tpu.core_type<tc>, window_params = [{transform_indices = @transform_0, window_bounds = array<i64: 512, 64>}, {pipeline_mode = #tpu.pipeline_mode<synchronous>, transform_indices = @transform_1, window_bounds = array<i64: 1, 64>}, {pipeline_mode = #tpu.pipeline_mode<synchronous>, transform_indices = @transform_2, window_bounds = array<i64: 1, 64>}, {pipeline_mode = #tpu.pipeline_mode<synchronous>, transform_indices = @transform_3, window_bounds = array<i64: 64, 256>}, {transform_indices = @transform_4, window_bounds = array<i64: 512, 256>}, {pipeline_mode = #tpu.pipeline_mode<synchronous>, transform_indices = @transform_5, window_bounds = array<i64: 8, 256>}]} {
    %c0 = arith.constant 0 : index
    %c0_0 = arith.constant 0 : index
    %0 = vector.load %arg1[%c0, %c0_0] : memref<512x64xbf16, #tpu.memory_space<vmem>>, vector<512x64xbf16>
    %1 = arith.extf %0 : vector<512x64xbf16> to vector<512x64xf32>
    %c0_1 = arith.constant 0 : index
    %c0_2 = arith.constant 0 : index
    %2 = vector.load %arg2[%c0_1, %c0_2] : memref<1x64xf32, #tpu.memory_space<vmem>>, vector<1x64xf32>
    %3 = vector.broadcast %2 : vector<1x64xf32> to vector<512x64xf32>
    %4 = arith.mulf %1, %3 : vector<512x64xf32>
    %c0_3 = arith.constant 0 : index
    %c0_4 = arith.constant 0 : index
    %5 = vector.load %arg3[%c0_3, %c0_4] : memref<1x64xf32, #tpu.memory_space<vmem>>, vector<1x64xf32>
    %6 = vector.broadcast %5 : vector<1x64xf32> to vector<512x64xf32>
    %7 = arith.addf %4, %6 : vector<512x64xf32>
    %cst = arith.constant 0.000000e+00 : f32
    %8 = vector.broadcast %cst : f32 to vector<512x64xf32>
    %9 = arith.maximumf %7, %8 : vector<512x64xf32>
    %10 = arith.truncf %9 : vector<512x64xf32> to vector<512x64xbf16>
    %c0_5 = arith.constant 0 : index
    %c0_6 = arith.constant 0 : index
    %11 = vector.load %arg4[%c0_5, %c0_6] : memref<64x256xbf16, #tpu.memory_space<vmem>>, vector<64x256xbf16>
    %cst_7 = arith.constant dense<0.000000e+00> : vector<512x256xf32>
    %12 = tpu.matmul %10, %11, %cst_7 {dimension_numbers = #tpu.dot_dimension_numbers<[1], [0], [0], [1], [0, 0, 1, 1], [], []>} : vector<512x64xbf16>, vector<64x256xbf16>, vector<512x256xf32> -> vector<512x256xf32>
    %13 = arith.truncf %12 : vector<512x256xf32> to vector<512x256xbf16>
    %c0_8 = arith.constant 0 : index
    %c0_9 = arith.constant 0 : index
    %14 = vector.load %arg5[%c0_8, %c0_9] : memref<512x256xbf16, #tpu.memory_space<vmem>>, vector<512x256xbf16>
    tpu.vector_store %arg5[%c0_8, %c0_9], %13 {strides = array<i32>} : memref<512x256xbf16, #tpu.memory_space<vmem>>, vector<512x256xbf16>,
    %c0_i32 = arith.constant 0 : i32
    %15 = arith.cmpi eq, %arg0, %c0_i32 : i32
    %16 = arith.extui %15 : i1 to i32
    %c0_i32_10 = arith.constant 0 : i32
    %17 = arith.cmpi ne, %16, %c0_i32_10 : i32
    scf.if %17 {
      %cst_18 = arith.constant 0.000000e+00 : f32
      %28 = vector.broadcast %cst_18 : f32 to vector<8x256xf32>
      %c0_19 = arith.constant 0 : index
      %c0_20 = arith.constant 0 : index
      %29 = vector.load %arg6[%c0_19, %c0_20] : memref<8x256xf32, #tpu.memory_space<vmem>>, vector<8x256xf32>
      tpu.vector_store %arg6[%c0_19, %c0_20], %28 {strides = array<i32>} : memref<8x256xf32, #tpu.memory_space<vmem>>, vector<8x256xf32>,
    } else {
    }
    %c0_11 = arith.constant 0 : index
    %c0_12 = arith.constant 0 : index
    %18 = vector.load %arg6[%c0_11, %c0_12] : memref<8x256xf32, #tpu.memory_space<vmem>>, vector<8x256xf32>
    %cst_13 = arith.constant dense<0.000000e+00> : vector<256xf32>
    %19 = vector.multi_reduction <add>, %12, %cst_13 [0] : vector<512x256xf32> to vector<256xf32>
    %20 = vector.shape_cast %19 : vector<256xf32> to vector<1x256xf32>
    %21 = arith.mulf %12, %12 : vector<512x256xf32>
    %cst_14 = arith.constant dense<0.000000e+00> : vector<256xf32>
    %22 = vector.multi_reduction <add>, %21, %cst_14 [0] : vector<512x256xf32> to vector<256xf32>
    %23 = vector.shape_cast %22 : vector<256xf32> to vector<1x256xf32>
    %cst_15 = arith.constant 0.000000e+00 : f32
    %24 = vector.broadcast %cst_15 : f32 to vector<6x256xf32>
    %25 = tpu.concatenate %20, %23, %24 in 0 : vector<1x256xf32>, vector<1x256xf32>, vector<6x256xf32> -> vector<8x256xf32>
    %26 = arith.addf %18, %25 : vector<8x256xf32>
    %c0_16 = arith.constant 0 : index
    %c0_17 = arith.constant 0 : index
    %27 = vector.load %arg6[%c0_16, %c0_17] : memref<8x256xf32, #tpu.memory_space<vmem>>, vector<8x256xf32>
    tpu.vector_store %arg6[%c0_16, %c0_17], %26 {strides = array<i32>} : memref<8x256xf32, #tpu.memory_space<vmem>>, vector<8x256xf32>,
    return
  }
  func.func @transform_0(%arg0: i32) -> (i32, i32) {
    %c0_i32 = arith.constant 0 : i32
    %c0_i32_0 = arith.constant 0 : i32
    return %arg0, %c0_i32 : i32, i32
  }
  func.func @transform_1(%arg0: i32) -> (i32, i32) {
    %c0_i32 = arith.constant 0 : i32
    %c0_i32_0 = arith.constant 0 : i32
    %c0_i32_1 = arith.constant 0 : i32
    return %c0_i32, %c0_i32_0 : i32, i32
  }
  func.func @transform_2(%arg0: i32) -> (i32, i32) {
    %c0_i32 = arith.constant 0 : i32
    %c0_i32_0 = arith.constant 0 : i32
    %c0_i32_1 = arith.constant 0 : i32
    return %c0_i32, %c0_i32_0 : i32, i32
  }
  func.func @transform_3(%arg0: i32) -> (i32, i32) {
    %c0_i32 = arith.constant 0 : i32
    %c0_i32_0 = arith.constant 0 : i32
    %c0_i32_1 = arith.constant 0 : i32
    return %c0_i32, %c0_i32_0 : i32, i32
  }
  func.func @transform_4(%arg0: i32) -> (i32, i32) {
    %c0_i32 = arith.constant 0 : i32
    %c0_i32_0 = arith.constant 0 : i32
    return %arg0, %c0_i32 : i32, i32
  }
  func.func @transform_5(%arg0: i32) -> (i32, i32) {
    %c0_i32 = arith.constant 0 : i32
    %c0_i32_0 = arith.constant 0 : i32
    %c0_i32_1 = arith.constant 0 : i32
    return %c0_i32, %c0_i32_0 : i32, i32
  }
}

module attributes {stable_mosaic.version = 11 : i64} {
  func.func @conv3x3_stats_kernel(%arg0: i32, %arg1: i32, %arg2: memref<1x8x16x64xbf16, #tpu.memory_space<vmem>>, %arg3: memref<1x1x16x64xbf16, #tpu.memory_space<vmem>>, %arg4: memref<1x1x16x64xbf16, #tpu.memory_space<vmem>>, %arg5: memref<1x64xf32, #tpu.memory_space<vmem>>, %arg6: memref<1x64xf32, #tpu.memory_space<vmem>>, %arg7: memref<9x64x64xbf16, #tpu.memory_space<vmem>>, %arg8: memref<128x64xbf16, #tpu.memory_space<vmem>>, %arg9: memref<8x64xf32, #tpu.memory_space<vmem>>, %arg10: memref<10x24x64xbf16, #tpu.memory_space<vmem>>) attributes {dimension_semantics = [#tpu.dimension_semantics<arbitrary>, #tpu.dimension_semantics<arbitrary>], iteration_bounds = array<i64: 2, 2>, scalar_prefetch = 0 : i64, scratch_operands = 1 : i64, tpu.core_type = #tpu.core_type<tc>, window_params = [{transform_indices = @transform_0, window_bounds = array<i64: 1, 8, 16, 64>}, {transform_indices = @transform_1, window_bounds = array<i64: 1, 1, 16, 64>}, {transform_indices = @transform_2, window_bounds = array<i64: 1, 1, 16, 64>}, {pipeline_mode = #tpu.pipeline_mode<synchronous>, transform_indices = @transform_3, window_bounds = array<i64: 1, 64>}, {pipeline_mode = #tpu.pipeline_mode<synchronous>, transform_indices = @transform_4, window_bounds = array<i64: 1, 64>}, {pipeline_mode = #tpu.pipeline_mode<synchronous>, transform_indices = @transform_5, window_bounds = array<i64: 9, 64, 64>}, {transform_indices = @transform_6, window_bounds = array<i64: 128, 64>}, {pipeline_mode = #tpu.pipeline_mode<synchronous>, transform_indices = @transform_7, window_bounds = array<i64: 8, 64>}]} {
    %c0_i32 = arith.constant 0 : i32
    %0 = arith.cmpi eq, %arg0, %c0_i32 : i32
    %c0_i32_0 = arith.constant 0 : i32
    %1 = arith.cmpi eq, %arg1, %c0_i32_0 : i32
    %2 = arith.andi %0, %1 : i1
    %3 = arith.extui %2 : i1 to i32
    %c0_i32_1 = arith.constant 0 : i32
    %4 = arith.cmpi ne, %3, %c0_i32_1 : i32
    scf.if %4 {
      %cst_97 = arith.constant 0.000000e+00 : bf16
      %117 = vector.broadcast %cst_97 : bf16 to vector<10x24x64xbf16>
      %c0_98 = arith.constant 0 : index
      %c0_99 = arith.constant 0 : index
      %c0_100 = arith.constant 0 : index
      %118 = vector.load %arg10[%c0_98, %c0_99, %c0_100] : memref<10x24x64xbf16, #tpu.memory_space<vmem>>, vector<10x24x64xbf16>
      tpu.vector_store %arg10[%c0_98, %c0_99, %c0_100], %117 {strides = array<i32>} : memref<10x24x64xbf16, #tpu.memory_space<vmem>>, vector<10x24x64xbf16>,
      %cst_101 = arith.constant 0.000000e+00 : f32
      %119 = vector.broadcast %cst_101 : f32 to vector<8x64xf32>
      %c0_102 = arith.constant 0 : index
      %c0_103 = arith.constant 0 : index
      %120 = vector.load %arg9[%c0_102, %c0_103] : memref<8x64xf32, #tpu.memory_space<vmem>>, vector<8x64xf32>
      tpu.vector_store %arg9[%c0_102, %c0_103], %119 {strides = array<i32>} : memref<8x64xf32, #tpu.memory_space<vmem>>, vector<8x64xf32>,
    } else {
    }
    %c0 = arith.constant 0 : index
    %c0_2 = arith.constant 0 : index
    %5 = vector.load %arg5[%c0, %c0_2] : memref<1x64xf32, #tpu.memory_space<vmem>>, vector<1x64xf32>
    %6 = vector.shape_cast %5 : vector<1x64xf32> to vector<1x1x64xf32>
    %c0_3 = arith.constant 0 : index
    %c0_4 = arith.constant 0 : index
    %7 = vector.load %arg6[%c0_3, %c0_4] : memref<1x64xf32, #tpu.memory_space<vmem>>, vector<1x64xf32>
    %8 = vector.shape_cast %7 : vector<1x64xf32> to vector<1x1x64xf32>
    %c0_5 = arith.constant 0 : index
    %c0_6 = arith.constant 0 : index
    %c0_7 = arith.constant 0 : index
    %c0_8 = arith.constant 0 : index
    %9 = vector.load %arg2[%c0_5, %c0_6, %c0_7, %c0_8] : memref<1x8x16x64xbf16, #tpu.memory_space<vmem>>, vector<1x8x16x64xbf16>
    %10 = vector.shape_cast %9 : vector<1x8x16x64xbf16> to vector<8x16x64xbf16>
    %11 = arith.extf %10 : vector<8x16x64xbf16> to vector<8x16x64xf32>
    %12 = vector.broadcast %6 : vector<1x1x64xf32> to vector<8x16x64xf32>
    %13 = arith.mulf %11, %12 : vector<8x16x64xf32>
    %14 = vector.broadcast %8 : vector<1x1x64xf32> to vector<8x16x64xf32>
    %15 = arith.addf %13, %14 : vector<8x16x64xf32>
    %cst = arith.constant 0.000000e+00 : f32
    %16 = vector.broadcast %cst : f32 to vector<8x16x64xf32>
    %17 = arith.maximumf %15, %16 : vector<8x16x64xf32>
    %c0_9 = arith.constant 0 : index
    %c0_10 = arith.constant 0 : index
    %c0_11 = arith.constant 0 : index
    %c0_12 = arith.constant 0 : index
    %18 = vector.load %arg3[%c0_9, %c0_10, %c0_11, %c0_12] : memref<1x1x16x64xbf16, #tpu.memory_space<vmem>>, vector<1x1x16x64xbf16>
    %19 = vector.shape_cast %18 : vector<1x1x16x64xbf16> to vector<1x16x64xbf16>
    %20 = arith.extf %19 : vector<1x16x64xbf16> to vector<1x16x64xf32>
    %21 = vector.broadcast %6 : vector<1x1x64xf32> to vector<1x16x64xf32>
    %22 = arith.mulf %20, %21 : vector<1x16x64xf32>
    %23 = vector.broadcast %8 : vector<1x1x64xf32> to vector<1x16x64xf32>
    %24 = arith.addf %22, %23 : vector<1x16x64xf32>
    %cst_13 = arith.constant 0.000000e+00 : f32
    %25 = vector.broadcast %cst_13 : f32 to vector<1x16x64xf32>
    %26 = arith.maximumf %24, %25 : vector<1x16x64xf32>
    %c0_i32_14 = arith.constant 0 : i32
    %27 = arith.cmpi eq, %arg1, %c0_i32_14 : i32
    %cst_15 = arith.constant 0.000000e+00 : f32
    %cst_16 = arith.constant 1.000000e+00 : f32
    %28 = arith.select %27, %cst_15, %cst_16 : f32
    %29 = vector.broadcast %28 : f32 to vector<1x16x64xf32>
    %30 = arith.mulf %26, %29 : vector<1x16x64xf32>
    %c0_17 = arith.constant 0 : index
    %c0_18 = arith.constant 0 : index
    %c0_19 = arith.constant 0 : index
    %c0_20 = arith.constant 0 : index
    %31 = vector.load %arg4[%c0_17, %c0_18, %c0_19, %c0_20] : memref<1x1x16x64xbf16, #tpu.memory_space<vmem>>, vector<1x1x16x64xbf16>
    %32 = vector.shape_cast %31 : vector<1x1x16x64xbf16> to vector<1x16x64xbf16>
    %33 = arith.extf %32 : vector<1x16x64xbf16> to vector<1x16x64xf32>
    %34 = vector.broadcast %6 : vector<1x1x64xf32> to vector<1x16x64xf32>
    %35 = arith.mulf %33, %34 : vector<1x16x64xf32>
    %36 = vector.broadcast %8 : vector<1x1x64xf32> to vector<1x16x64xf32>
    %37 = arith.addf %35, %36 : vector<1x16x64xf32>
    %cst_21 = arith.constant 0.000000e+00 : f32
    %38 = vector.broadcast %cst_21 : f32 to vector<1x16x64xf32>
    %39 = arith.maximumf %37, %38 : vector<1x16x64xf32>
    %c1_i32 = arith.constant 1 : i32
    %40 = arith.cmpi eq, %arg1, %c1_i32 : i32
    %cst_22 = arith.constant 0.000000e+00 : f32
    %cst_23 = arith.constant 1.000000e+00 : f32
    %41 = arith.select %40, %cst_22, %cst_23 : f32
    %42 = vector.broadcast %41 : f32 to vector<1x16x64xf32>
    %43 = arith.mulf %39, %42 : vector<1x16x64xf32>
    %44 = arith.truncf %30 : vector<1x16x64xf32> to vector<1x16x64xbf16>
    %c0_24 = arith.constant 0 : index
    %c1 = arith.constant 1 : index
    %c0_25 = arith.constant 0 : index
    %45 = vector.load %arg10[%c0_24, %c1, %c0_25] : memref<10x24x64xbf16, #tpu.memory_space<vmem>>, vector<1x16x64xbf16>
    tpu.vector_store %arg10[%c0_24, %c1, %c0_25], %44 {strides = array<i32>} : memref<10x24x64xbf16, #tpu.memory_space<vmem>>, vector<1x16x64xbf16>,
    %46 = arith.truncf %17 : vector<8x16x64xf32> to vector<8x16x64xbf16>
    %c1_26 = arith.constant 1 : index
    %c1_27 = arith.constant 1 : index
    %c0_28 = arith.constant 0 : index
    %47 = vector.load %arg10[%c1_26, %c1_27, %c0_28] : memref<10x24x64xbf16, #tpu.memory_space<vmem>>, vector<8x16x64xbf16>
    tpu.vector_store %arg10[%c1_26, %c1_27, %c0_28], %46 {strides = array<i32>} : memref<10x24x64xbf16, #tpu.memory_space<vmem>>, vector<8x16x64xbf16>,
    %48 = arith.truncf %43 : vector<1x16x64xf32> to vector<1x16x64xbf16>
    %c9 = arith.constant 9 : index
    %c1_29 = arith.constant 1 : index
    %c0_30 = arith.constant 0 : index
    %49 = vector.load %arg10[%c9, %c1_29, %c0_30] : memref<10x24x64xbf16, #tpu.memory_space<vmem>>, vector<1x16x64xbf16>
    tpu.vector_store %arg10[%c9, %c1_29, %c0_30], %48 {strides = array<i32>} : memref<10x24x64xbf16, #tpu.memory_space<vmem>>, vector<1x16x64xbf16>,
    %cst_31 = arith.constant 0.000000e+00 : f32
    %50 = vector.broadcast %cst_31 : f32 to vector<128x64xf32>
    %c0_32 = arith.constant 0 : index
    %c0_33 = arith.constant 0 : index
    %c0_34 = arith.constant 0 : index
    %51 = vector.load %arg10[%c0_32, %c0_33, %c0_34] : memref<10x24x64xbf16, #tpu.memory_space<vmem>>, vector<8x16x64xbf16>
    %52 = vector.shape_cast %51 : vector<8x16x64xbf16> to vector<128x64xbf16>
    %c0_35 = arith.constant 0 : index
    %c0_36 = arith.constant 0 : index
    %c0_37 = arith.constant 0 : index
    %53 = vector.load %arg7[%c0_35, %c0_36, %c0_37] : memref<9x64x64xbf16, #tpu.memory_space<vmem>>, vector<1x64x64xbf16>
    %54 = vector.shape_cast %53 : vector<1x64x64xbf16> to vector<64x64xbf16>
    %cst_38 = arith.constant dense<0.000000e+00> : vector<128x64xf32>
    %55 = tpu.matmul %52, %54, %cst_38 {dimension_numbers = #tpu.dot_dimension_numbers<[1], [0], [0], [1], [0, 0, 1, 1], [], []>} : vector<128x64xbf16>, vector<64x64xbf16>, vector<128x64xf32> -> vector<128x64xf32>
    %56 = arith.addf %50, %55 : vector<128x64xf32>
    %c0_39 = arith.constant 0 : index
    %c1_40 = arith.constant 1 : index
    %c0_41 = arith.constant 0 : index
    %57 = vector.load %arg10[%c0_39, %c1_40, %c0_41] : memref<10x24x64xbf16, #tpu.memory_space<vmem>>, vector<8x16x64xbf16>
    %58 = vector.shape_cast %57 : vector<8x16x64xbf16> to vector<128x64xbf16>
    %c1_42 = arith.constant 1 : index
    %c0_43 = arith.constant 0 : index
    %c0_44 = arith.constant 0 : index
    %59 = vector.load %arg7[%c1_42, %c0_43, %c0_44] : memref<9x64x64xbf16, #tpu.memory_space<vmem>>, vector<1x64x64xbf16>
    %60 = vector.shape_cast %59 : vector<1x64x64xbf16> to vector<64x64xbf16>
    %cst_45 = arith.constant dense<0.000000e+00> : vector<128x64xf32>
    %61 = tpu.matmul %58, %60, %cst_45 {dimension_numbers = #tpu.dot_dimension_numbers<[1], [0], [0], [1], [0, 0, 1, 1], [], []>} : vector<128x64xbf16>, vector<64x64xbf16>, vector<128x64xf32> -> vector<128x64xf32>
    %62 = arith.addf %56, %61 : vector<128x64xf32>
    %c0_46 = arith.constant 0 : index
    %c2 = arith.constant 2 : index
    %c0_47 = arith.constant 0 : index
    %63 = vector.load %arg10[%c0_46, %c2, %c0_47] : memref<10x24x64xbf16, #tpu.memory_space<vmem>>, vector<8x16x64xbf16>
    %64 = vector.shape_cast %63 : vector<8x16x64xbf16> to vector<128x64xbf16>
    %c2_48 = arith.constant 2 : index
    %c0_49 = arith.constant 0 : index
    %c0_50 = arith.constant 0 : index
    %65 = vector.load %arg7[%c2_48, %c0_49, %c0_50] : memref<9x64x64xbf16, #tpu.memory_space<vmem>>, vector<1x64x64xbf16>
    %66 = vector.shape_cast %65 : vector<1x64x64xbf16> to vector<64x64xbf16>
    %cst_51 = arith.constant dense<0.000000e+00> : vector<128x64xf32>
    %67 = tpu.matmul %64, %66, %cst_51 {dimension_numbers = #tpu.dot_dimension_numbers<[1], [0], [0], [1], [0, 0, 1, 1], [], []>} : vector<128x64xbf16>, vector<64x64xbf16>, vector<128x64xf32> -> vector<128x64xf32>
    %68 = arith.addf %62, %67 : vector<128x64xf32>
    %c1_52 = arith.constant 1 : index
    %c0_53 = arith.constant 0 : index
    %c0_54 = arith.constant 0 : index
    %69 = vector.load %arg10[%c1_52, %c0_53, %c0_54] : memref<10x24x64xbf16, #tpu.memory_space<vmem>>, vector<8x16x64xbf16>
    %70 = vector.shape_cast %69 : vector<8x16x64xbf16> to vector<128x64xbf16>
    %c3 = arith.constant 3 : index
    %c0_55 = arith.constant 0 : index
    %c0_56 = arith.constant 0 : index
    %71 = vector.load %arg7[%c3, %c0_55, %c0_56] : memref<9x64x64xbf16, #tpu.memory_space<vmem>>, vector<1x64x64xbf16>
    %72 = vector.shape_cast %71 : vector<1x64x64xbf16> to vector<64x64xbf16>
    %cst_57 = arith.constant dense<0.000000e+00> : vector<128x64xf32>
    %73 = tpu.matmul %70, %72, %cst_57 {dimension_numbers = #tpu.dot_dimension_numbers<[1], [0], [0], [1], [0, 0, 1, 1], [], []>} : vector<128x64xbf16>, vector<64x64xbf16>, vector<128x64xf32> -> vector<128x64xf32>
    %74 = arith.addf %68, %73 : vector<128x64xf32>
    %c1_58 = arith.constant 1 : index
    %c1_59 = arith.constant 1 : index
    %c0_60 = arith.constant 0 : index
    %75 = vector.load %arg10[%c1_58, %c1_59, %c0_60] : memref<10x24x64xbf16, #tpu.memory_space<vmem>>, vector<8x16x64xbf16>
    %76 = vector.shape_cast %75 : vector<8x16x64xbf16> to vector<128x64xbf16>
    %c4 = arith.constant 4 : index
    %c0_61 = arith.constant 0 : index
    %c0_62 = arith.constant 0 : index
    %77 = vector.load %arg7[%c4, %c0_61, %c0_62] : memref<9x64x64xbf16, #tpu.memory_space<vmem>>, vector<1x64x64xbf16>
    %78 = vector.shape_cast %77 : vector<1x64x64xbf16> to vector<64x64xbf16>
    %cst_63 = arith.constant dense<0.000000e+00> : vector<128x64xf32>
    %79 = tpu.matmul %76, %78, %cst_63 {dimension_numbers = #tpu.dot_dimension_numbers<[1], [0], [0], [1], [0, 0, 1, 1], [], []>} : vector<128x64xbf16>, vector<64x64xbf16>, vector<128x64xf32> -> vector<128x64xf32>
    %80 = arith.addf %74, %79 : vector<128x64xf32>
    %c1_64 = arith.constant 1 : index
    %c2_65 = arith.constant 2 : index
    %c0_66 = arith.constant 0 : index
    %81 = vector.load %arg10[%c1_64, %c2_65, %c0_66] : memref<10x24x64xbf16, #tpu.memory_space<vmem>>, vector<8x16x64xbf16>
    %82 = vector.shape_cast %81 : vector<8x16x64xbf16> to vector<128x64xbf16>
    %c5 = arith.constant 5 : index
    %c0_67 = arith.constant 0 : index
    %c0_68 = arith.constant 0 : index
    %83 = vector.load %arg7[%c5, %c0_67, %c0_68] : memref<9x64x64xbf16, #tpu.memory_space<vmem>>, vector<1x64x64xbf16>
    %84 = vector.shape_cast %83 : vector<1x64x64xbf16> to vector<64x64xbf16>
    %cst_69 = arith.constant dense<0.000000e+00> : vector<128x64xf32>
    %85 = tpu.matmul %82, %84, %cst_69 {dimension_numbers = #tpu.dot_dimension_numbers<[1], [0], [0], [1], [0, 0, 1, 1], [], []>} : vector<128x64xbf16>, vector<64x64xbf16>, vector<128x64xf32> -> vector<128x64xf32>
    %86 = arith.addf %80, %85 : vector<128x64xf32>
    %c2_70 = arith.constant 2 : index
    %c0_71 = arith.constant 0 : index
    %c0_72 = arith.constant 0 : index
    %87 = vector.load %arg10[%c2_70, %c0_71, %c0_72] : memref<10x24x64xbf16, #tpu.memory_space<vmem>>, vector<8x16x64xbf16>
    %88 = vector.shape_cast %87 : vector<8x16x64xbf16> to vector<128x64xbf16>
    %c6 = arith.constant 6 : index
    %c0_73 = arith.constant 0 : index
    %c0_74 = arith.constant 0 : index
    %89 = vector.load %arg7[%c6, %c0_73, %c0_74] : memref<9x64x64xbf16, #tpu.memory_space<vmem>>, vector<1x64x64xbf16>
    %90 = vector.shape_cast %89 : vector<1x64x64xbf16> to vector<64x64xbf16>
    %cst_75 = arith.constant dense<0.000000e+00> : vector<128x64xf32>
    %91 = tpu.matmul %88, %90, %cst_75 {dimension_numbers = #tpu.dot_dimension_numbers<[1], [0], [0], [1], [0, 0, 1, 1], [], []>} : vector<128x64xbf16>, vector<64x64xbf16>, vector<128x64xf32> -> vector<128x64xf32>
    %92 = arith.addf %86, %91 : vector<128x64xf32>
    %c2_76 = arith.constant 2 : index
    %c1_77 = arith.constant 1 : index
    %c0_78 = arith.constant 0 : index
    %93 = vector.load %arg10[%c2_76, %c1_77, %c0_78] : memref<10x24x64xbf16, #tpu.memory_space<vmem>>, vector<8x16x64xbf16>
    %94 = vector.shape_cast %93 : vector<8x16x64xbf16> to vector<128x64xbf16>
    %c7 = arith.constant 7 : index
    %c0_79 = arith.constant 0 : index
    %c0_80 = arith.constant 0 : index
    %95 = vector.load %arg7[%c7, %c0_79, %c0_80] : memref<9x64x64xbf16, #tpu.memory_space<vmem>>, vector<1x64x64xbf16>
    %96 = vector.shape_cast %95 : vector<1x64x64xbf16> to vector<64x64xbf16>
    %cst_81 = arith.constant dense<0.000000e+00> : vector<128x64xf32>
    %97 = tpu.matmul %94, %96, %cst_81 {dimension_numbers = #tpu.dot_dimension_numbers<[1], [0], [0], [1], [0, 0, 1, 1], [], []>} : vector<128x64xbf16>, vector<64x64xbf16>, vector<128x64xf32> -> vector<128x64xf32>
    %98 = arith.addf %92, %97 : vector<128x64xf32>
    %c2_82 = arith.constant 2 : index
    %c2_83 = arith.constant 2 : index
    %c0_84 = arith.constant 0 : index
    %99 = vector.load %arg10[%c2_82, %c2_83, %c0_84] : memref<10x24x64xbf16, #tpu.memory_space<vmem>>, vector<8x16x64xbf16>
    %100 = vector.shape_cast %99 : vector<8x16x64xbf16> to vector<128x64xbf16>
    %c8 = arith.constant 8 : index
    %c0_85 = arith.constant 0 : index
    %c0_86 = arith.constant 0 : index
    %101 = vector.load %arg7[%c8, %c0_85, %c0_86] : memref<9x64x64xbf16, #tpu.memory_space<vmem>>, vector<1x64x64xbf16>
    %102 = vector.shape_cast %101 : vector<1x64x64xbf16> to vector<64x64xbf16>
    %cst_87 = arith.constant dense<0.000000e+00> : vector<128x64xf32>
    %103 = tpu.matmul %100, %102, %cst_87 {dimension_numbers = #tpu.dot_dimension_numbers<[1], [0], [0], [1], [0, 0, 1, 1], [], []>} : vector<128x64xbf16>, vector<64x64xbf16>, vector<128x64xf32> -> vector<128x64xf32>
    %104 = arith.addf %98, %103 : vector<128x64xf32>
    %105 = arith.truncf %104 : vector<128x64xf32> to vector<128x64xbf16>
    %c0_88 = arith.constant 0 : index
    %c0_89 = arith.constant 0 : index
    %106 = vector.load %arg8[%c0_88, %c0_89] : memref<128x64xbf16, #tpu.memory_space<vmem>>, vector<128x64xbf16>
    tpu.vector_store %arg8[%c0_88, %c0_89], %105 {strides = array<i32>} : memref<128x64xbf16, #tpu.memory_space<vmem>>, vector<128x64xbf16>,
    %c0_90 = arith.constant 0 : index
    %c0_91 = arith.constant 0 : index
    %107 = vector.load %arg9[%c0_90, %c0_91] : memref<8x64xf32, #tpu.memory_space<vmem>>, vector<8x64xf32>
    %cst_92 = arith.constant dense<0.000000e+00> : vector<64xf32>
    %108 = vector.multi_reduction <add>, %104, %cst_92 [0] : vector<128x64xf32> to vector<64xf32>
    %109 = vector.shape_cast %108 : vector<64xf32> to vector<1x64xf32>
    %110 = arith.mulf %104, %104 : vector<128x64xf32>
    %cst_93 = arith.constant dense<0.000000e+00> : vector<64xf32>
    %111 = vector.multi_reduction <add>, %110, %cst_93 [0] : vector<128x64xf32> to vector<64xf32>
    %112 = vector.shape_cast %111 : vector<64xf32> to vector<1x64xf32>
    %cst_94 = arith.constant 0.000000e+00 : f32
    %113 = vector.broadcast %cst_94 : f32 to vector<6x64xf32>
    %114 = tpu.concatenate %109, %112, %113 in 0 : vector<1x64xf32>, vector<1x64xf32>, vector<6x64xf32> -> vector<8x64xf32>
    %115 = arith.addf %107, %114 : vector<8x64xf32>
    %c0_95 = arith.constant 0 : index
    %c0_96 = arith.constant 0 : index
    %116 = vector.load %arg9[%c0_95, %c0_96] : memref<8x64xf32, #tpu.memory_space<vmem>>, vector<8x64xf32>
    tpu.vector_store %arg9[%c0_95, %c0_96], %115 {strides = array<i32>} : memref<8x64xf32, #tpu.memory_space<vmem>>, vector<8x64xf32>,
    return
  }
  func.func @transform_0(%arg0: i32, %arg1: i32) -> (i32, i32, i32, i32) {
    %c0_i32 = arith.constant 0 : i32
    %c0_i32_0 = arith.constant 0 : i32
    %c0_i32_1 = arith.constant 0 : i32
    return %arg0, %arg1, %c0_i32, %c0_i32_0 : i32, i32, i32, i32
  }
  func.func @transform_1(%arg0: i32, %arg1: i32) -> (i32, i32, i32, i32) {
    %c8_i32 = arith.constant 8 : i32
    %0 = arith.muli %arg1, %c8_i32 : i32
    %c1_i32 = arith.constant 1 : i32
    %1 = arith.subi %0, %c1_i32 : i32
    %c0_i32 = arith.constant 0 : i32
    %2 = arith.maxsi %1, %c0_i32 : i32
    %c0_i32_0 = arith.constant 0 : i32
    %c0_i32_1 = arith.constant 0 : i32
    %c0_i32_2 = arith.constant 0 : i32
    return %arg0, %2, %c0_i32_0, %c0_i32_1 : i32, i32, i32, i32
  }
  func.func @transform_2(%arg0: i32, %arg1: i32) -> (i32, i32, i32, i32) {
    %c8_i32 = arith.constant 8 : i32
    %0 = arith.muli %arg1, %c8_i32 : i32
    %c8_i32_0 = arith.constant 8 : i32
    %1 = arith.addi %0, %c8_i32_0 : i32
    %c15_i32 = arith.constant 15 : i32
    %2 = arith.minsi %1, %c15_i32 : i32
    %c0_i32 = arith.constant 0 : i32
    %c0_i32_1 = arith.constant 0 : i32
    %c0_i32_2 = arith.constant 0 : i32
    return %arg0, %2, %c0_i32, %c0_i32_1 : i32, i32, i32, i32
  }
  func.func @transform_3(%arg0: i32, %arg1: i32) -> (i32, i32) {
    %c0_i32 = arith.constant 0 : i32
    %c0_i32_0 = arith.constant 0 : i32
    %c0_i32_1 = arith.constant 0 : i32
    return %c0_i32, %c0_i32_0 : i32, i32
  }
  func.func @transform_4(%arg0: i32, %arg1: i32) -> (i32, i32) {
    %c0_i32 = arith.constant 0 : i32
    %c0_i32_0 = arith.constant 0 : i32
    %c0_i32_1 = arith.constant 0 : i32
    return %c0_i32, %c0_i32_0 : i32, i32
  }
  func.func @transform_5(%arg0: i32, %arg1: i32) -> (i32, i32, i32) {
    %c0_i32 = arith.constant 0 : i32
    %c0_i32_0 = arith.constant 0 : i32
    %c0_i32_1 = arith.constant 0 : i32
    %c0_i32_2 = arith.constant 0 : i32
    return %c0_i32, %c0_i32_0, %c0_i32_1 : i32, i32, i32
  }
  func.func @transform_6(%arg0: i32, %arg1: i32) -> (i32, i32) {
    %c2_i32 = arith.constant 2 : i32
    %0 = arith.muli %arg0, %c2_i32 : i32
    %1 = arith.addi %0, %arg1 : i32
    %c0_i32 = arith.constant 0 : i32
    %c0_i32_0 = arith.constant 0 : i32
    return %1, %c0_i32 : i32, i32
  }
  func.func @transform_7(%arg0: i32, %arg1: i32) -> (i32, i32) {
    %c0_i32 = arith.constant 0 : i32
    %c0_i32_0 = arith.constant 0 : i32
    %c0_i32_1 = arith.constant 0 : i32
    return %c0_i32, %c0_i32_0 : i32, i32
  }
}

</mosaic_0001>

<llo_original>
// kernel: bottleneck_forward.7
$region0: #{bottleneck_forward.7}
  #allocation0 [shape = 'u32[]', space=smem, size = 0x4, offset = 0x4, fixed_abs, tag = 'smem constant byte address 0x4 - core index']
  #allocation1 [shape = 'u32[144,128]{1,0:T(1,128)}', space=vmem, size = 0x12000, scoped, tag = 'internal scratch']
  %s0 = inlined_call_operand.vmem [shape: bf16[512,256], index: 0, kind: input, shape index: {}]
  %s1 = inlined_call_operand.vmem [shape: bf16[512,256], index: 1, kind: input, shape index: {}]
  %s2 = inlined_call_operand.vmem [shape: f32[1,256], index: 2, kind: input, shape index: {}]
  %s3 = inlined_call_operand.vmem [shape: f32[1,256], index: 3, kind: input, shape index: {}]
  %s4 = inlined_call_operand.vmem [shape: f32[1,256], index: 4, kind: input, shape index: {}]
  %s5 = inlined_call_operand.vmem [shape: f32[1,256], index: 5, kind: input, shape index: {}]
  %s6 = inlined_call_operand.hbm [shape: f32[512,256], index: 6, kind: output, shape index: {}]
  %s7 = sld [smem:[#allocation0]]
  $region34: #{bottleneck_forward.7} parent=0
    _
  %s9 = ssub.s32 1, %s7
  %s10 = scalar_select 0, %s9, %s7
  $region1: #{bottleneck_forward.7} parent=0
    #allocation2 [shape = 'u8[524288]{0}', space=vmem, size = 0x80000, scoped, tag = 'output window, operand 0, single buffered']
    #allocation3 [shape = 's32[1]{0}', space=sflag, size = 0x4, scoped, tag = 'scoped memory for bottleneck_forward.7']
    %11 = vsyncpa [#allocation3], 0
    // Predicated region
    $region2: #{bottleneck_forward.7} parent=1 // pred_check
      _
    $region3: #{bottleneck_forward.7} parent=1 // pred_check_branch
      %13 = sbr.rel (0) target = $region5
    $region4: #{bottleneck_forward.7} parent=1 // pred_region
      _
    $region5: #{bottleneck_forward.7} parent=1 // pred_fallthru
      _
    // Predicated region
    $region6: #{bottleneck_forward.7} parent=1 // pred_check
      _
    $region7: #{bottleneck_forward.7} parent=1 // pred_check_branch
      %15 = sbr.rel (0) target = $region9
    $region8: #{bottleneck_forward.7} parent=1 // pred_region
      _
    $region9: #{bottleneck_forward.7} parent=1 // pred_fallthru
      _
    // Predicated region
    $region10: #{bottleneck_forward.7} parent=1 // pred_check
      _
    $region11: #{bottleneck_forward.7} parent=1 // pred_check_branch
      %17 = sbr.rel (0) target = $region13
    $region12: #{bottleneck_forward.7} parent=1 // pred_region
      _
    $region13: #{bottleneck_forward.7} parent=1 // pred_fallthru
      _
    // Predicated region
    $region14: #{bottleneck_forward.7} parent=1 // pred_check
      _
    $region15: #{bottleneck_forward.7} parent=1 // pred_check_branch
      %19 = sbr.rel (0) target = $region17
    $region16: #{bottleneck_forward.7} parent=1 // pred_region
      _
    $region17: #{bottleneck_forward.7} parent=1 // pred_fallthru
      _
    // Predicated region
    $region18: #{bottleneck_forward.7} parent=1 // pred_check
      _
    $region19: #{bottleneck_forward.7} parent=1 // pred_check_branch
      %21 = sbr.rel (0) target = $region21
    $region20: #{bottleneck_forward.7} parent=1 // pred_region
      _
    $region21: #{bottleneck_forward.7} parent=1 // pred_fallthru
      _
    // Predicated region
    $region22: #{bottleneck_forward.7} parent=1 // pred_check
      _
    $region23: #{bottleneck_forward.7} parent=1 // pred_check_branch
      %23 = sbr.rel (0) target = $region25
    $region24: #{bottleneck_forward.7} parent=1 // pred_region
      _
    $region25: #{bottleneck_forward.7} parent=1 // pred_fallthru
      _
    %v24 = vld [vmem:[%s0] sm:$0xff]
    %v25 = vld [vmem:[%s0 + $0x8] sm:$0xff]
    %v26 = vld [vmem:[%s0 + $0x10] sm:$0xff]
    %v27 = vld [vmem:[%s0 + $0x18] sm:$0xff]
    %v28 = vld [vmem:[%s0 + $0x20] sm:$0xff]
    %v29 = vld [vmem:[%s0 + $0x28] sm:$0xff]
    %v30 = vld [vmem:[%s0 + $0x30] sm:$0xff]
    %v31 = vld [vmem:[%s0 + $0x38] sm:$0xff]
    %v32 = vld [vmem:[%s0 + $0x40] sm:$0xff]
    %v33 = vld [vmem:[%s0 + $0x48] sm:$0xff]
    %v34 = vld [vmem:[%s0 + $0x50] sm:$0xff]
    %v35 = vld [vmem:[%s0 + $0x58] sm:$0xff]
    %v36 = vld [vmem:[%s0 + $0x60] sm:$0xff]
    %v37 = vld [vmem:[%s0 + $0x68] sm:$0xff]
    %v38 = vld [vmem:[%s0 + $0x70] sm:$0xff]
    %v39 = vld [vmem:[%s0 + $0x78] sm:$0xff]
    %v40 = vld [vmem:[%s0 + $0x80] sm:$0xff]
    %v41 = vld [vmem:[%s0 + $0x88] sm:$0xff]
    %v42 = vld [vmem:[%s0 + $0x90] sm:$0xff]
    %v43 = vld [vmem:[%s0 + $0x98] sm:$0xff]
    %v44 = vld [vmem:[%s0 + $0xa0] sm:$0xff]
    %v45 = vld [vmem:[%s0 + $0xa8] sm:$0xff]
    %v46 = vld [vmem:[%s0 + $0xb0] sm:$0xff]
    %v47 = vld [vmem:[%s0 + $0xb8] sm:$0xff]
    %v48 = vld [vmem:[%s0 + $0xc0] sm:$0xff]
    %v49 = vld [vmem:[%s0 + $0xc8] sm:$0xff]
    %v50 = vld [vmem:[%s0 + $0xd0] sm:$0xff]
    %v51 = vld [vmem:[%s0 + $0xd8] sm:$0xff]
    %v52 = vld [vmem:[%s0 + $0xe0] sm:$0xff]
    %v53 = vld [vmem:[%s0 + $0xe8] sm:$0xff]
    %v54 = vld [vmem:[%s0 + $0xf0] sm:$0xff]
    %v55 = vld [vmem:[%s0 + $0xf8] sm:$0xff]
    %v56 = vld [vmem:[%s0 + $0x100] sm:$0xff]
    %v57 = vld [vmem:[%s0 + $0x108] sm:$0xff]
    %v58 = vld [vmem:[%s0 + $0x110] sm:$0xff]
    %v59 = vld [vmem:[%s0 + $0x118] sm:$0xff]
    %v60 = vld [vmem:[%s0 + $0x120] sm:$0xff]
    %v61 = vld [vmem:[%s0 + $0x128] sm:$0xff]
    %v62 = vld [vmem:[%s0 + $0x130] sm:$0xff]
    %v63 = vld [vmem:[%s0 + $0x138] sm:$0xff]
    %v64 = vld [vmem:[%s0 + $0x140] sm:$0xff]
    %v65 = vld [vmem:[%s0 + $0x148] sm:$0xff]
    %v66 = vld [vmem:[%s0 + $0x150] sm:$0xff]
    %v67 = vld [vmem:[%s0 + $0x158] sm:$0xff]
    %v68 = vld [vmem:[%s0 + $0x160] sm:$0xff]
    %v69 = vld [vmem:[%s0 + $0x168] sm:$0xff]
    %v70 = vld [vmem:[%s0 + $0x170] sm:$0xff]
    %v71 = vld [vmem:[%s0 + $0x178] sm:$0xff]
    %v72 = vld [vmem:[%s0 + $0x180] sm:$0xff]
    %v73 = vld [vmem:[%s0 + $0x188] sm:$0xff]
    %v74 = vld [vmem:[%s0 + $0x190] sm:$0xff]
    %v75 = vld [vmem:[%s0 + $0x198] sm:$0xff]
    %v76 = vld [vmem:[%s0 + $0x1a0] sm:$0xff]
    %v77 = vld [vmem:[%s0 + $0x1a8] sm:$0xff]
    %v78 = vld [vmem:[%s0 + $0x1b0] sm:$0xff]
    %v79 = vld [vmem:[%s0 + $0x1b8] sm:$0xff]
    %v80 = vld [vmem:[%s0 + $0x1c0] sm:$0xff]
    %v81 = vld [vmem:[%s0 + $0x1c8] sm:$0xff]
    %v82 = vld [vmem:[%s0 + $0x1d0] sm:$0xff]
    %v83 = vld [vmem:[%s0 + $0x1d8] sm:$0xff]
    %v84 = vld [vmem:[%s0 + $0x1e0] sm:$0xff]
    %v85 = vld [vmem:[%s0 + $0x1e8] sm:$0xff]
    %v86 = vld [vmem:[%s0 + $0x1f0] sm:$0xff]
    %v87 = vld [vmem:[%s0 + $0x1f8] sm:$0xff]
    %v88 = vunpack.c.l.bf16 %v24
    %v89 = vunpack.c.h.bf16 %v24
    %v90 = vunpack.c.l.bf16 %v25
    %v91 = vunpack.c.h.bf16 %v25
    %v92 = vunpack.c.l.bf16 %v26
    %v93 = vunpack.c.h.bf16 %v26
    %v94 = vunpack.c.l.bf16 %v27
    %v95 = vunpack.c.h.bf16 %v27
    %v96 = vunpack.c.l.bf16 %v28
    %v97 = vunpack.c.h.bf16 %v28
    %v98 = vunpack.c.l.bf16 %v29
    %v99 = vunpack.c.h.bf16 %v29
    %v100 = vunpack.c.l.bf16 %v30
    %v101 = vunpack.c.h.bf16 %v30
    %v102 = vunpack.c.l.bf16 %v31
    %v103 = vunpack.c.h.bf16 %v31
    %v104 = vunpack.c.l.bf16 %v32
    %v105 = vunpack.c.h.bf16 %v32
    %v106 = vunpack.c.l.bf16 %v33
    %v107 = vunpack.c.h.bf16 %v33
    %v108 = vunpack.c.l.bf16 %v34
    %v109 = vunpack.c.h.bf16 %v34
    %v110 = vunpack.c.l.bf16 %v35
    %v111 = vunpack.c.h.bf16 %v35
    %v112 = vunpack.c.l.bf16 %v36
    %v113 = vunpack.c.h.bf16 %v36
    %v114 = vunpack.c.l.bf16 %v37
    %v115 = vunpack.c.h.bf16 %v37
    %v116 = vunpack.c.l.bf16 %v38
    %v117 = vunpack.c.h.bf16 %v38
    %v118 = vunpack.c.l.bf16 %v39
    %v119 = vunpack.c.h.bf16 %v39
    %v120 = vunpack.c.l.bf16 %v40
    %v121 = vunpack.c.h.bf16 %v40
    %v122 = vunpack.c.l.bf16 %v41
    %v123 = vunpack.c.h.bf16 %v41
    %v124 = vunpack.c.l.bf16 %v42
    %v125 = vunpack.c.h.bf16 %v42
    %v126 = vunpack.c.l.bf16 %v43
    %v127 = vunpack.c.h.bf16 %v43
    %v128 = vunpack.c.l.bf16 %v44
    %v129 = vunpack.c.h.bf16 %v44
    %v130 = vunpack.c.l.bf16 %v45
    %v131 = vunpack.c.h.bf16 %v45
    %v132 = vunpack.c.l.bf16 %v46
    %v133 = vunpack.c.h.bf16 %v46
    %v134 = vunpack.c.l.bf16 %v47
    %v135 = vunpack.c.h.bf16 %v47
    %v136 = vunpack.c.l.bf16 %v48
    %v137 = vunpack.c.h.bf16 %v48
    %v138 = vunpack.c.l.bf16 %v49
    %v139 = vunpack.c.h.bf16 %v49
    %v140 = vunpack.c.l.bf16 %v50
    %v141 = vunpack.c.h.bf16 %v50
    %v142 = vunpack.c.l.bf16 %v51
    %v143 = vunpack.c.h.bf16 %v51
    %v144 = vunpack.c.l.bf16 %v52
    %v145 = vunpack.c.h.bf16 %v52
    %v146 = vunpack.c.l.bf16 %v53
    %v147 = vunpack.c.h.bf16 %v53
    %v148 = vunpack.c.l.bf16 %v54
    %v149 = vunpack.c.h.bf16 %v54
    %v150 = vunpack.c.l.bf16 %v55
    %v151 = vunpack.c.h.bf16 %v55
    %v152 = vunpack.c.l.bf16 %v56
    %v153 = vunpack.c.h.bf16 %v56
    %v154 = vunpack.c.l.bf16 %v57
    %v155 = vunpack.c.h.bf16 %v57
    %v156 = vunpack.c.l.bf16 %v58
    %v157 = vunpack.c.h.bf16 %v58
    %v158 = vunpack.c.l.bf16 %v59
    %v159 = vunpack.c.h.bf16 %v59
    %v160 = vunpack.c.l.bf16 %v60
    %v161 = vunpack.c.h.bf16 %v60
    %v162 = vunpack.c.l.bf16 %v61
    %v163 = vunpack.c.h.bf16 %v61
    %v164 = vunpack.c.l.bf16 %v62
    %v165 = vunpack.c.h.bf16 %v62
    %v166 = vunpack.c.l.bf16 %v63
    %v167 = vunpack.c.h.bf16 %v63
    %v168 = vunpack.c.l.bf16 %v64
    %v169 = vunpack.c.h.bf16 %v64
    %v170 = vunpack.c.l.bf16 %v65
    %v171 = vunpack.c.h.bf16 %v65
    %v172 = vunpack.c.l.bf16 %v66
    %v173 = vunpack.c.h.bf16 %v66
    %v174 = vunpack.c.l.bf16 %v67
    %v175 = vunpack.c.h.bf16 %v67
    %v176 = vunpack.c.l.bf16 %v68
    %v177 = vunpack.c.h.bf16 %v68
    %v178 = vunpack.c.l.bf16 %v69
    %v179 = vunpack.c.h.bf16 %v69
    %v180 = vunpack.c.l.bf16 %v70
    %v181 = vunpack.c.h.bf16 %v70
    %v182 = vunpack.c.l.bf16 %v71
    %v183 = vunpack.c.h.bf16 %v71
    %v184 = vunpack.c.l.bf16 %v72
    %v185 = vunpack.c.h.bf16 %v72
    %v186 = vunpack.c.l.bf16 %v73
    %v187 = vunpack.c.h.bf16 %v73
    %v188 = vunpack.c.l.bf16 %v74
    %v189 = vunpack.c.h.bf16 %v74
    %v190 = vunpack.c.l.bf16 %v75
    %v191 = vunpack.c.h.bf16 %v75
    %v192 = vunpack.c.l.bf16 %v76
    %v193 = vunpack.c.h.bf16 %v76
    %v194 = vunpack.c.l.bf16 %v77
    %v195 = vunpack.c.h.bf16 %v77
    %v196 = vunpack.c.l.bf16 %v78
    %v197 = vunpack.c.h.bf16 %v78
    %v198 = vunpack.c.l.bf16 %v79
    %v199 = vunpack.c.h.bf16 %v79
    %v200 = vunpack.c.l.bf16 %v80
    %v201 = vunpack.c.h.bf16 %v80
    %v202 = vunpack.c.l.bf16 %v81
    %v203 = vunpack.c.h.bf16 %v81
    %v204 = vunpack.c.l.bf16 %v82
    %v205 = vunpack.c.h.bf16 %v82
    %v206 = vunpack.c.l.bf16 %v83
    %v207 = vunpack.c.h.bf16 %v83
    %v208 = vunpack.c.l.bf16 %v84
    %v209 = vunpack.c.h.bf16 %v84
    %v210 = vunpack.c.l.bf16 %v85
    %v211 = vunpack.c.h.bf16 %v85
    %v212 = vunpack.c.l.bf16 %v86
    %v213 = vunpack.c.h.bf16 %v86
    %v214 = vunpack.c.l.bf16 %v87
    %v215 = vunpack.c.h.bf16 %v87
    %v216 = vld [vmem:[%s2] sm:$0x3]
    %v218 = vlaneseq
    %v219 = vshrl.u32 %v218, 7
    %v220 = vsub.s32 0, %v219
    %v221 = vrot.slane %v216, %v220
    %v222 = vlaneseq
    %v223 = vshrl.u32 %v222, 7
    %v224 = vsub.s32 1, %v223
    %v225 = vrot.slane %v216, %v224
    %v228 = vmul.f32 %v88, %v221
    %v229 = vmul.f32 %v89, %v225
    %v230 = vmul.f32 %v90, %v221
    %v231 = vmul.f32 %v91, %v225
    %v232 = vmul.f32 %v92, %v221
    %v233 = vmul.f32 %v93, %v225
    %v234 = vmul.f32 %v94, %v221
    %v235 = vmul.f32 %v95, %v225
    %v236 = vmul.f32 %v96, %v221
    %v237 = vmul.f32 %v97, %v225
    %v238 = vmul.f32 %v98, %v221
    %v239 = vmul.f32 %v99, %v225
    %v240 = vmul.f32 %v100, %v221
    %v241 = vmul.f32 %v101, %v225
    %v242 = vmul.f32 %v102, %v221
    %v243 = vmul.f32 %v103, %v225
    %v244 = vmul.f32 %v104, %v221
    %v245 = vmul.f32 %v105, %v225
    %v246 = vmul.f32 %v106, %v221
    %v247 = vmul.f32 %v107, %v225
    %v248 = vmul.f32 %v108, %v221
    %v249 = vmul.f32 %v109, %v225
    %v250 = vmul.f32 %v110, %v221
    %v251 = vmul.f32 %v111, %v225
    %v252 = vmul.f32 %v112, %v221
    %v253 = vmul.f32 %v113, %v225
    %v254 = vmul.f32 %v114, %v221
    %v255 = vmul.f32 %v115, %v225
    %v256 = vmul.f32 %v116, %v221
    %v257 = vmul.f32 %v117, %v225
    %v258 = vmul.f32 %v118, %v221
    %v259 = vmul.f32 %v119, %v225
    %v260 = vmul.f32 %v120, %v221
    %v261 = vmul.f32 %v121, %v225
    %v262 = vmul.f32 %v122, %v221
    %v263 = vmul.f32 %v123, %v225
    %v264 = vmul.f32 %v124, %v221
    %v265 = vmul.f32 %v125, %v225
    %v266 = vmul.f32 %v126, %v221
    %v267 = vmul.f32 %v127, %v225
    %v268 = vmul.f32 %v128, %v221
    %v269 = vmul.f32 %v129, %v225
    %v270 = vmul.f32 %v130, %v221
    %v271 = vmul.f32 %v131, %v225
    %v272 = vmul.f32 %v132, %v221
    %v273 = vmul.f32 %v133, %v225
    %v274 = vmul.f32 %v134, %v221
    %v275 = vmul.f32 %v135, %v225
    %v276 = vmul.f32 %v136, %v221
    %v277 = vmul.f32 %v137, %v225
    %v278 = vmul.f32 %v138, %v221
    %v279 = vmul.f32 %v139, %v225
    %v280 = vmul.f32 %v140, %v221
    %v281 = vmul.f32 %v141, %v225
    %v282 = vmul.f32 %v142, %v221
    %v283 = vmul.f32 %v143, %v225
    %v284 = vmul.f32 %v144, %v221
    %v285 = vmul.f32 %v145, %v225
    %v286 = vmul.f32 %v146, %v221
    %v287 = vmul.f32 %v147, %v225
    %v288 = vmul.f32 %v148, %v221
    %v289 = vmul.f32 %v149, %v225
    %v290 = vmul.f32 %v150, %v221
    %v291 = vmul.f32 %v151, %v225
    %v292 = vmul.f32 %v152, %v221
    %v293 = vmul.f32 %v153, %v225
    %v294 = vmul.f32 %v154, %v221
    %v295 = vmul.f32 %v155, %v225
    %v296 = vmul.f32 %v156, %v221
    %v297 = vmul.f32 %v157, %v225
    %v298 = vmul.f32 %v158, %v221
    %v299 = vmul.f32 %v159, %v225
    %v300 = vmul.f32 %v160, %v221
    %v301 = vmul.f32 %v161, %v225
    %v302 = vmul.f32 %v162, %v221
    %v303 = vmul.f32 %v163, %v225
    %v304 = vmul.f32 %v164, %v221
    %v305 = vmul.f32 %v165, %v225
    %v306 = vmul.f32 %v166, %v221
    %v307 = vmul.f32 %v167, %v225
    %v308 = vmul.f32 %v168, %v221
    %v309 = vmul.f32 %v169, %v225
    %v310 = vmul.f32 %v170, %v221
    %v311 = vmul.f32 %v171, %v225
    %v312 = vmul.f32 %v172, %v221
    %v313 = vmul.f32 %v173, %v225
    %v314 = vmul.f32 %v174, %v221
    %v315 = vmul.f32 %v175, %v225
    %v316 = vmul.f32 %v176, %v221
    %v317 = vmul.f32 %v177, %v225
    %v318 = vmul.f32 %v178, %v221
    %v319 = vmul.f32 %v179, %v225
    %v320 = vmul.f32 %v180, %v221
    %v321 = vmul.f32 %v181, %v225
    %v322 = vmul.f32 %v182, %v221
    %v323 = vmul.f32 %v183, %v225
    %v324 = vmul.f32 %v184, %v221
    %v325 = vmul.f32 %v185, %v225
    %v326 = vmul.f32 %v186, %v221
    %v327 = vmul.f32 %v187, %v225
    %v328 = vmul.f32 %v188, %v221
    %v329 = vmul.f32 %v189, %v225
    %v330 = vmul.f32 %v190, %v221
    %v331 = vmul.f32 %v191, %v225
    %v332 = vmul.f32 %v192, %v221
    %v333 = vmul.f32 %v193, %v225
    %v334 = vmul.f32 %v194, %v221
    %v335 = vmul.f32 %v195, %v225
    %v336 = vmul.f32 %v196, %v221
    %v337 = vmul.f32 %v197, %v225
    %v338 = vmul.f32 %v198, %v221
    %v339 = vmul.f32 %v199, %v225
    %v340 = vmul.f32 %v200, %v221
    %v341 = vmul.f32 %v201, %v225
    %v342 = vmul.f32 %v202, %v221
    %v343 = vmul.f32 %v203, %v225
    %v344 = vmul.f32 %v204, %v221
    %v345 = vmul.f32 %v205, %v225
    %v346 = vmul.f32 %v206, %v221
    %v347 = vmul.f32 %v207, %v225
    %v348 = vmul.f32 %v208, %v221
    %v349 = vmul.f32 %v209, %v225
    %v350 = vmul.f32 %v210, %v221
    %v351 = vmul.f32 %v211, %v225
    %v352 = vmul.f32 %v212, %v221
    %v353 = vmul.f32 %v213, %v225
    %v354 = vmul.f32 %v214, %v221
    %v355 = vmul.f32 %v215, %v225
    %v356 = vld [vmem:[%s3] sm:$0x3]
    %v358 = vlaneseq
    %v359 = vshrl.u32 %v358, 7
    %v360 = vsub.s32 0, %v359
    %v361 = vrot.slane %v356, %v360
    %v362 = vlaneseq
    %v363 = vshrl.u32 %v362, 7
    %v364 = vsub.s32 1, %v363
    %v365 = vrot.slane %v356, %v364
    %v368 = vadd.f32 %v228, %v361
    %v369 = vadd.f32 %v229, %v365
    %v370 = vadd.f32 %v230, %v361
    %v371 = vadd.f32 %v231, %v365
    %v372 = vadd.f32 %v232, %v361
    %v373 = vadd.f32 %v233, %v365
    %v374 = vadd.f32 %v234, %v361
    %v375 = vadd.f32 %v235, %v365
    %v376 = vadd.f32 %v236, %v361
    %v377 = vadd.f32 %v237, %v365
    %v378 = vadd.f32 %v238, %v361
    %v379 = vadd.f32 %v239, %v365
    %v380 = vadd.f32 %v240, %v361
    %v381 = vadd.f32 %v241, %v365
    %v382 = vadd.f32 %v242, %v361
    %v383 = vadd.f32 %v243, %v365
    %v384 = vadd.f32 %v244, %v361
    %v385 = vadd.f32 %v245, %v365
    %v386 = vadd.f32 %v246, %v361
    %v387 = vadd.f32 %v247, %v365
    %v388 = vadd.f32 %v248, %v361
    %v389 = vadd.f32 %v249, %v365
    %v390 = vadd.f32 %v250, %v361
    %v391 = vadd.f32 %v251, %v365
    %v392 = vadd.f32 %v252, %v361
    %v393 = vadd.f32 %v253, %v365
    %v394 = vadd.f32 %v254, %v361
    %v395 = vadd.f32 %v255, %v365
    %v396 = vadd.f32 %v256, %v361
    %v397 = vadd.f32 %v257, %v365
    %v398 = vadd.f32 %v258, %v361
    %v399 = vadd.f32 %v259, %v365
    %v400 = vadd.f32 %v260, %v361
    %v401 = vadd.f32 %v261, %v365
    %v402 = vadd.f32 %v262, %v361
    %v403 = vadd.f32 %v263, %v365
    %v404 = vadd.f32 %v264, %v361
    %v405 = vadd.f32 %v265, %v365
    %v406 = vadd.f32 %v266, %v361
    %v407 = vadd.f32 %v267, %v365
    %v408 = vadd.f32 %v268, %v361
    %v409 = vadd.f32 %v269, %v365
    %v410 = vadd.f32 %v270, %v361
    %v411 = vadd.f32 %v271, %v365
    %v412 = vadd.f32 %v272, %v361
    %v413 = vadd.f32 %v273, %v365
    %v414 = vadd.f32 %v274, %v361
    %v415 = vadd.f32 %v275, %v365
    %v416 = vadd.f32 %v276, %v361
    %v417 = vadd.f32 %v277, %v365
    %v418 = vadd.f32 %v278, %v361
    %v419 = vadd.f32 %v279, %v365
    %v420 = vadd.f32 %v280, %v361
    %v421 = vadd.f32 %v281, %v365
    %v422 = vadd.f32 %v282, %v361
    %v423 = vadd.f32 %v283, %v365
    %v424 = vadd.f32 %v284, %v361
    %v425 = vadd.f32 %v285, %v365
    %v426 = vadd.f32 %v286, %v361
    %v427 = vadd.f32 %v287, %v365
    %v428 = vadd.f32 %v288, %v361
    %v429 = vadd.f32 %v289, %v365
    %v430 = vadd.f32 %v290, %v361
    %v431 = vadd.f32 %v291, %v365
    %v432 = vadd.f32 %v292, %v361
    %v433 = vadd.f32 %v293, %v365
    %v434 = vadd.f32 %v294, %v361
    %v435 = vadd.f32 %v295, %v365
    %v436 = vadd.f32 %v296, %v361
    %v437 = vadd.f32 %v297, %v365
    %v438 = vadd.f32 %v298, %v361
    %v439 = vadd.f32 %v299, %v365
    %v440 = vadd.f32 %v300, %v361
    %v441 = vadd.f32 %v301, %v365
    %v442 = vadd.f32 %v302, %v361
    %v443 = vadd.f32 %v303, %v365
    %v444 = vadd.f32 %v304, %v361
    %v445 = vadd.f32 %v305, %v365
    %v446 = vadd.f32 %v306, %v361
    %v447 = vadd.f32 %v307, %v365
    %v448 = vadd.f32 %v308, %v361
    %v449 = vadd.f32 %v309, %v365
    %v450 = vadd.f32 %v310, %v361
    %v451 = vadd.f32 %v311, %v365
    %v452 = vadd.f32 %v312, %v361
    %v453 = vadd.f32 %v313, %v365
    %v454 = vadd.f32 %v314, %v361
    %v455 = vadd.f32 %v315, %v365
    %v456 = vadd.f32 %v316, %v361
    %v457 = vadd.f32 %v317, %v365
    %v458 = vadd.f32 %v318, %v361
    %v459 = vadd.f32 %v319, %v365
    %v460 = vadd.f32 %v320, %v361
    %v461 = vadd.f32 %v321, %v365
    %v462 = vadd.f32 %v322, %v361
    %v463 = vadd.f32 %v323, %v365
    %v464 = vadd.f32 %v324, %v361
    %v465 = vadd.f32 %v325, %v365
    %v466 = vadd.f32 %v326, %v361
    %v467 = vadd.f32 %v327, %v365
    %v468 = vadd.f32 %v328, %v361
    %v469 = vadd.f32 %v329, %v365
    %v470 = vadd.f32 %v330, %v361
    %v471 = vadd.f32 %v331, %v365
    %v472 = vadd.f32 %v332, %v361
    %v473 = vadd.f32 %v333, %v365
    %v474 = vadd.f32 %v334, %v361
    %v475 = vadd.f32 %v335, %v365
    %v476 = vadd.f32 %v336, %v361
    %v477 = vadd.f32 %v337, %v365
    %v478 = vadd.f32 %v338, %v361
    %v479 = vadd.f32 %v339, %v365
    %v480 = vadd.f32 %v340, %v361
    %v481 = vadd.f32 %v341, %v365
    %v482 = vadd.f32 %v342, %v361
    %v483 = vadd.f32 %v343, %v365
    %v484 = vadd.f32 %v344, %v361
    %v485 = vadd.f32 %v345, %v365
    %v486 = vadd.f32 %v346, %v361
    %v487 = vadd.f32 %v347, %v365
    %v488 = vadd.f32 %v348, %v361
    %v489 = vadd.f32 %v349, %v365
    %v490 = vadd.f32 %v350, %v361
    %v491 = vadd.f32 %v351, %v365
    %v492 = vadd.f32 %v352, %v361
    %v493 = vadd.f32 %v353, %v365
    %v494 = vadd.f32 %v354, %v361
    %v495 = vadd.f32 %v355, %v365
    %v496 = vld [vmem:[%s1] sm:$0xff]
    %v497 = vld [vmem:[%s1 + $0x8] sm:$0xff]
    %v498 = vld [vmem:[%s1 + $0x10] sm:$0xff]
    %v499 = vld [vmem:[%s1 + $0x18] sm:$0xff]
    %v500 = vld [vmem:[%s1 + $0x20] sm:$0xff]
    %v501 = vld [vmem:[%s1 + $0x28] sm:$0xff]
    %v502 = vld [vmem:[%s1 + $0x30] sm:$0xff]
    %v503 = vld [vmem:[%s1 + $0x38] sm:$0xff]
    %v504 = vld [vmem:[%s1 + $0x40] sm:$0xff]
    %v505 = vld [vmem:[%s1 + $0x48] sm:$0xff]
    %v506 = vld [vmem:[%s1 + $0x50] sm:$0xff]
    %v507 = vld [vmem:[%s1 + $0x58] sm:$0xff]
    %v508 = vld [vmem:[%s1 + $0x60] sm:$0xff]
    %v509 = vld [vmem:[%s1 + $0x68] sm:$0xff]
    %v510 = vld [vmem:[%s1 + $0x70] sm:$0xff]
    %v511 = vld [vmem:[%s1 + $0x78] sm:$0xff]
    %v512 = vld [vmem:[%s1 + $0x80] sm:$0xff]
    %v513 = vld [vmem:[%s1 + $0x88] sm:$0xff]
    %v514 = vld [vmem:[%s1 + $0x90] sm:$0xff]
    %v515 = vld [vmem:[%s1 + $0x98] sm:$0xff]
    %v516 = vld [vmem:[%s1 + $0xa0] sm:$0xff]
    %v517 = vld [vmem:[%s1 + $0xa8] sm:$0xff]
    %v518 = vld [vmem:[%s1 + $0xb0] sm:$0xff]
    %v519 = vld [vmem:[%s1 + $0xb8] sm:$0xff]
    %v520 = vld [vmem:[%s1 + $0xc0] sm:$0xff]
    %v521 = vld [vmem:[%s1 + $0xc8] sm:$0xff]
    %v522 = vld [vmem:[%s1 + $0xd0] sm:$0xff]
    %v523 = vld [vmem:[%s1 + $0xd8] sm:$0xff]
    %v524 = vld [vmem:[%s1 + $0xe0] sm:$0xff]
    %v525 = vld [vmem:[%s1 + $0xe8] sm:$0xff]
    %v526 = vld [vmem:[%s1 + $0xf0] sm:$0xff]
    %v527 = vld [vmem:[%s1 + $0xf8] sm:$0xff]
    %v528 = vld [vmem:[%s1 + $0x100] sm:$0xff]
    %v529 = vld [vmem:[%s1 + $0x108] sm:$0xff]
    %v530 = vld [vmem:[%s1 + $0x110] sm:$0xff]
    %v531 = vld [vmem:[%s1 + $0x118] sm:$0xff]
    %v532 = vld [vmem:[%s1 + $0x120] sm:$0xff]
    %v533 = vld [vmem:[%s1 + $0x128] sm:$0xff]
    %v534 = vld [vmem:[%s1 + $0x130] sm:$0xff]
    %v535 = vld [vmem:[%s1 + $0x138] sm:$0xff]
    %v536 = vld [vmem:[%s1 + $0x140] sm:$0xff]
    %v537 = vld [vmem:[%s1 + $0x148] sm:$0xff]
    %v538 = vld [vmem:[%s1 + $0x150] sm:$0xff]
    %v539 = vld [vmem:[%s1 + $0x158] sm:$0xff]
    %v540 = vld [vmem:[%s1 + $0x160] sm:$0xff]
    %v541 = vld [vmem:[%s1 + $0x168] sm:$0xff]
    %v542 = vld [vmem:[%s1 + $0x170] sm:$0xff]
    %v543 = vld [vmem:[%s1 + $0x178] sm:$0xff]
    %v544 = vld [vmem:[%s1 + $0x180] sm:$0xff]
    %v545 = vld [vmem:[%s1 + $0x188] sm:$0xff]
    %v546 = vld [vmem:[%s1 + $0x190] sm:$0xff]
    %v547 = vld [vmem:[%s1 + $0x198] sm:$0xff]
    %v548 = vld [vmem:[%s1 + $0x1a0] sm:$0xff]
    %v549 = vld [vmem:[%s1 + $0x1a8] sm:$0xff]
    %v550 = vld [vmem:[%s1 + $0x1b0] sm:$0xff]
    %v551 = vld [vmem:[%s1 + $0x1b8] sm:$0xff]
    %v552 = vld [vmem:[%s1 + $0x1c0] sm:$0xff]
    %v553 = vld [vmem:[%s1 + $0x1c8] sm:$0xff]
    %v554 = vld [vmem:[%s1 + $0x1d0] sm:$0xff]
    %v555 = vld [vmem:[%s1 + $0x1d8] sm:$0xff]
    %v556 = vld [vmem:[%s1 + $0x1e0] sm:$0xff]
    %v557 = vld [vmem:[%s1 + $0x1e8] sm:$0xff]
    %v558 = vld [vmem:[%s1 + $0x1f0] sm:$0xff]
    %v559 = vld [vmem:[%s1 + $0x1f8] sm:$0xff]
    %v560 = vunpack.c.l.bf16 %v496
    %v561 = vunpack.c.h.bf16 %v496
    %v562 = vunpack.c.l.bf16 %v497
    %v563 = vunpack.c.h.bf16 %v497
    %v564 = vunpack.c.l.bf16 %v498
    %v565 = vunpack.c.h.bf16 %v498
    %v566 = vunpack.c.l.bf16 %v499
    %v567 = vunpack.c.h.bf16 %v499
    %v568 = vunpack.c.l.bf16 %v500
    %v569 = vunpack.c.h.bf16 %v500
    %v570 = vunpack.c.l.bf16 %v501
    %v571 = vunpack.c.h.bf16 %v501
    %v572 = vunpack.c.l.bf16 %v502
    %v573 = vunpack.c.h.bf16 %v502
    %v574 = vunpack.c.l.bf16 %v503
    %v575 = vunpack.c.h.bf16 %v503
    %v576 = vunpack.c.l.bf16 %v504
    %v577 = vunpack.c.h.bf16 %v504
    %v578 = vunpack.c.l.bf16 %v505
    %v579 = vunpack.c.h.bf16 %v505
    %v580 = vunpack.c.l.bf16 %v506
    %v581 = vunpack.c.h.bf16 %v506
    %v582 = vunpack.c.l.bf16 %v507
    %v583 = vunpack.c.h.bf16 %v507
    %v584 = vunpack.c.l.bf16 %v508
    %v585 = vunpack.c.h.bf16 %v508
    %v586 = vunpack.c.l.bf16 %v509
    %v587 = vunpack.c.h.bf16 %v509
    %v588 = vunpack.c.l.bf16 %v510
    %v589 = vunpack.c.h.bf16 %v510
    %v590 = vunpack.c.l.bf16 %v511
    %v591 = vunpack.c.h.bf16 %v511
    %v592 = vunpack.c.l.bf16 %v512
    %v593 = vunpack.c.h.bf16 %v512
    %v594 = vunpack.c.l.bf16 %v513
    %v595 = vunpack.c.h.bf16 %v513
    %v596 = vunpack.c.l.bf16 %v514
    %v597 = vunpack.c.h.bf16 %v514
    %v598 = vunpack.c.l.bf16 %v515
    %v599 = vunpack.c.h.bf16 %v515
    %v600 = vunpack.c.l.bf16 %v516
    %v601 = vunpack.c.h.bf16 %v516
    %v602 = vunpack.c.l.bf16 %v517
    %v603 = vunpack.c.h.bf16 %v517
    %v604 = vunpack.c.l.bf16 %v518
    %v605 = vunpack.c.h.bf16 %v518
    %v606 = vunpack.c.l.bf16 %v519
    %v607 = vunpack.c.h.bf16 %v519
    %v608 = vunpack.c.l.bf16 %v520
    %v609 = vunpack.c.h.bf16 %v520
    %v610 = vunpack.c.l.bf16 %v521
    %v611 = vunpack.c.h.bf16 %v521
    %v612 = vunpack.c.l.bf16 %v522
    %v613 = vunpack.c.h.bf16 %v522
    %v614 = vunpack.c.l.bf16 %v523
    %v615 = vunpack.c.h.bf16 %v523
    %v616 = vunpack.c.l.bf16 %v524
    %v617 = vunpack.c.h.bf16 %v524
    %v618 = vunpack.c.l.bf16 %v525
    %v619 = vunpack.c.h.bf16 %v525
    %v620 = vunpack.c.l.bf16 %v526
    %v621 = vunpack.c.h.bf16 %v526
    %v622 = vunpack.c.l.bf16 %v527
    %v623 = vunpack.c.h.bf16 %v527
    %v624 = vunpack.c.l.bf16 %v528
    %v625 = vunpack.c.h.bf16 %v528
    %v626 = vunpack.c.l.bf16 %v529
    %v627 = vunpack.c.h.bf16 %v529
    %v628 = vunpack.c.l.bf16 %v530
    %v629 = vunpack.c.h.bf16 %v530
    %v630 = vunpack.c.l.bf16 %v531
    %v631 = vunpack.c.h.bf16 %v531
    %v632 = vunpack.c.l.bf16 %v532
    %v633 = vunpack.c.h.bf16 %v532
    %v634 = vunpack.c.l.bf16 %v533
    %v635 = vunpack.c.h.bf16 %v533
    %v636 = vunpack.c.l.bf16 %v534
    %v637 = vunpack.c.h.bf16 %v534
    %v638 = vunpack.c.l.bf16 %v535
    %v639 = vunpack.c.h.bf16 %v535
    %v640 = vunpack.c.l.bf16 %v536
    %v641 = vunpack.c.h.bf16 %v536
    %v642 = vunpack.c.l.bf16 %v537
    %v643 = vunpack.c.h.bf16 %v537
    %v644 = vunpack.c.l.bf16 %v538
    %v645 = vunpack.c.h.bf16 %v538
    %v646 = vunpack.c.l.bf16 %v539
    %v647 = vunpack.c.h.bf16 %v539
    %v648 = vunpack.c.l.bf16 %v540
    %v649 = vunpack.c.h.bf16 %v540
    %v650 = vunpack.c.l.bf16 %v541
    %v651 = vunpack.c.h.bf16 %v541
    %v652 = vunpack.c.l.bf16 %v542
    %v653 = vunpack.c.h.bf16 %v542
    %v654 = vunpack.c.l.bf16 %v543
    %v655 = vunpack.c.h.bf16 %v543
    %v656 = vunpack.c.l.bf16 %v544
    %v657 = vunpack.c.h.bf16 %v544
    %v658 = vunpack.c.l.bf16 %v545
    %v659 = vunpack.c.h.bf16 %v545
    %v660 = vunpack.c.l.bf16 %v546
    %v661 = vunpack.c.h.bf16 %v546
    %v662 = vunpack.c.l.bf16 %v547
    %v663 = vunpack.c.h.bf16 %v547
    %v664 = vunpack.c.l.bf16 %v548
    %v665 = vunpack.c.h.bf16 %v548
    %v666 = vunpack.c.l.bf16 %v549
    %v667 = vunpack.c.h.bf16 %v549
    %v668 = vunpack.c.l.bf16 %v550
    %v669 = vunpack.c.h.bf16 %v550
    %v670 = vunpack.c.l.bf16 %v551
    %v671 = vunpack.c.h.bf16 %v551
    %v672 = vunpack.c.l.bf16 %v552
    %v673 = vunpack.c.h.bf16 %v552
    %v674 = vunpack.c.l.bf16 %v553
    %v675 = vunpack.c.h.bf16 %v553
    %v676 = vunpack.c.l.bf16 %v554
    %v677 = vunpack.c.h.bf16 %v554
    %v678 = vunpack.c.l.bf16 %v555
    %v679 = vunpack.c.h.bf16 %v555
    %v680 = vunpack.c.l.bf16 %v556
    %v681 = vunpack.c.h.bf16 %v556
    %v682 = vunpack.c.l.bf16 %v557
    %v683 = vunpack.c.h.bf16 %v557
    %v684 = vunpack.c.l.bf16 %v558
    %v685 = vunpack.c.h.bf16 %v558
    %v686 = vunpack.c.l.bf16 %v559
    %v687 = vunpack.c.h.bf16 %v559
    %v688 = vld [vmem:[%s4] sm:$0x3]
    %v690 = vlaneseq
    %v691 = vshrl.u32 %v690, 7
    %v692 = vsub.s32 0, %v691
    %v693 = vrot.slane %v688, %v692
    %v694 = vlaneseq
    %v695 = vshrl.u32 %v694, 7
    %v696 = vsub.s32 1, %v695
    %v697 = vrot.slane %v688, %v696
    %v700 = vmul.f32 %v560, %v693
    %v701 = vmul.f32 %v561, %v697
    %v702 = vmul.f32 %v562, %v693
    %v703 = vmul.f32 %v563, %v697
    %v704 = vmul.f32 %v564, %v693
    %v705 = vmul.f32 %v565, %v697
    %v706 = vmul.f32 %v566, %v693
    %v707 = vmul.f32 %v567, %v697
    %v708 = vmul.f32 %v568, %v693
    %v709 = vmul.f32 %v569, %v697
    %v710 = vmul.f32 %v570, %v693
    %v711 = vmul.f32 %v571, %v697
    %v712 = vmul.f32 %v572, %v693
    %v713 = vmul.f32 %v573, %v697
    %v714 = vmul.f32 %v574, %v693
    %v715 = vmul.f32 %v575, %v697
    %v716 = vmul.f32 %v576, %v693
    %v717 = vmul.f32 %v577, %v697
    %v718 = vmul.f32 %v578, %v693
    %v719 = vmul.f32 %v579, %v697
    %v720 = vmul.f32 %v580, %v693
    %v721 = vmul.f32 %v581, %v697
    %v722 = vmul.f32 %v582, %v693
    %v723 = vmul.f32 %v583, %v697
    %v724 = vmul.f32 %v584, %v693
    %v725 = vmul.f32 %v585, %v697
    %v726 = vmul.f32 %v586, %v693
    %v727 = vmul.f32 %v587, %v697
    %v728 = vmul.f32 %v588, %v693
    %v729 = vmul.f32 %v589, %v697
    %v730 = vmul.f32 %v590, %v693
    %v731 = vmul.f32 %v591, %v697
    %v732 = vmul.f32 %v592, %v693
    %v733 = vmul.f32 %v593, %v697
    %v734 = vmul.f32 %v594, %v693
    %v735 = vmul.f32 %v595, %v697
    %v736 = vmul.f32 %v596, %v693
    %v737 = vmul.f32 %v597, %v697
    %v738 = vmul.f32 %v598, %v693
    %v739 = vmul.f32 %v599, %v697
    %v740 = vmul.f32 %v600, %v693
    %v741 = vmul.f32 %v601, %v697
    %v742 = vmul.f32 %v602, %v693
    %v743 = vmul.f32 %v603, %v697
    %v744 = vmul.f32 %v604, %v693
    %v745 = vmul.f32 %v605, %v697
    %v746 = vmul.f32 %v606, %v693
    %v747 = vmul.f32 %v607, %v697
    %v748 = vmul.f32 %v608, %v693
    %v749 = vmul.f32 %v609, %v697
    %v750 = vmul.f32 %v610, %v693
    %v751 = vmul.f32 %v611, %v697
    %v752 = vmul.f32 %v612, %v693
    %v753 = vmul.f32 %v613, %v697
    %v754 = vmul.f32 %v614, %v693
    %v755 = vmul.f32 %v615, %v697
    %v756 = vmul.f32 %v616, %v693
    %v757 = vmul.f32 %v617, %v697
    %v758 = vmul.f32 %v618, %v693
    %v759 = vmul.f32 %v619, %v697
    %v760 = vmul.f32 %v620, %v693
    %v761 = vmul.f32 %v621, %v697
    %v762 = vmul.f32 %v622, %v693
    %v763 = vmul.f32 %v623, %v697
    %v764 = vmul.f32 %v624, %v693
    %v765 = vmul.f32 %v625, %v697
    %v766 = vmul.f32 %v626, %v693
    %v767 = vmul.f32 %v627, %v697
    %v768 = vmul.f32 %v628, %v693
    %v769 = vmul.f32 %v629, %v697
    %v770 = vmul.f32 %v630, %v693
    %v771 = vmul.f32 %v631, %v697
    %v772 = vmul.f32 %v632, %v693
    %v773 = vmul.f32 %v633, %v697
    %v774 = vmul.f32 %v634, %v693
    %v775 = vmul.f32 %v635, %v697
    %v776 = vmul.f32 %v636, %v693
    %v777 = vmul.f32 %v637, %v697
    %v778 = vmul.f32 %v638, %v693
    %v779 = vmul.f32 %v639, %v697
    %v780 = vmul.f32 %v640, %v693
    %v781 = vmul.f32 %v641, %v697
    %v782 = vmul.f32 %v642, %v693
    %v783 = vmul.f32 %v643, %v697
    %v784 = vmul.f32 %v644, %v693
    %v785 = vmul.f32 %v645, %v697
    %v786 = vmul.f32 %v646, %v693
    %v787 = vmul.f32 %v647, %v697
    %v788 = vmul.f32 %v648, %v693
    %v789 = vmul.f32 %v649, %v697
    %v790 = vmul.f32 %v650, %v693
    %v791 = vmul.f32 %v651, %v697
    %v792 = vmul.f32 %v652, %v693
    %v793 = vmul.f32 %v653, %v697
    %v794 = vmul.f32 %v654, %v693
    %v795 = vmul.f32 %v655, %v697
    %v796 = vmul.f32 %v656, %v693
    %v797 = vmul.f32 %v657, %v697
    %v798 = vmul.f32 %v658, %v693
    %v799 = vmul.f32 %v659, %v697
    %v800 = vmul.f32 %v660, %v693
    %v801 = vmul.f32 %v661, %v697
    %v802 = vmul.f32 %v662, %v693
    %v803 = vmul.f32 %v663, %v697
    %v804 = vmul.f32 %v664, %v693
    %v805 = vmul.f32 %v665, %v697
    %v806 = vmul.f32 %v666, %v693
    %v807 = vmul.f32 %v667, %v697
    %v808 = vmul.f32 %v668, %v693
    %v809 = vmul.f32 %v669, %v697
    %v810 = vmul.f32 %v670, %v693
    %v811 = vmul.f32 %v671, %v697
    %v812 = vmul.f32 %v672, %v693
    %v813 = vmul.f32 %v673, %v697
    %v814 = vmul.f32 %v674, %v693
    %v815 = vmul.f32 %v675, %v697
    %v816 = vmul.f32 %v676, %v693
    %v817 = vmul.f32 %v677, %v697
    %v818 = vmul.f32 %v678, %v693
    %v819 = vmul.f32 %v679, %v697
    %v820 = vmul.f32 %v680, %v693
    %v821 = vmul.f32 %v681, %v697
    %v822 = vmul.f32 %v682, %v693
    %v823 = vmul.f32 %v683, %v697
    %v824 = vmul.f32 %v684, %v693
    %v825 = vmul.f32 %v685, %v697
    %v826 = vmul.f32 %v686, %v693
    %v827 = vmul.f32 %v687, %v697
    %v828 = vld [vmem:[%s5] sm:$0x3]
    %v830 = vlaneseq
    %v831 = vshrl.u32 %v830, 7
    %v832 = vsub.s32 0, %v831
    %v833 = vrot.slane %v828, %v832
    %v834 = vlaneseq
    %v835 = vshrl.u32 %v834, 7
    %v836 = vsub.s32 1, %v835
    %v837 = vrot.slane %v828, %v836
    %v840 = vadd.f32 %v700, %v833
    %v841 = vadd.f32 %v701, %v837
    %v842 = vadd.f32 %v702, %v833
    %v843 = vadd.f32 %v703, %v837
    %v844 = vadd.f32 %v704, %v833
    %v845 = vadd.f32 %v705, %v837
    %v846 = vadd.f32 %v706, %v833
    %v847 = vadd.f32 %v707, %v837
    %v848 = vadd.f32 %v708, %v833
    %v849 = vadd.f32 %v709, %v837
    %v850 = vadd.f32 %v710, %v833
    %v851 = vadd.f32 %v711, %v837
    %v852 = vadd.f32 %v712, %v833
    %v853 = vadd.f32 %v713, %v837
    %v854 = vadd.f32 %v714, %v833
    %v855 = vadd.f32 %v715, %v837
    %v856 = vadd.f32 %v716, %v833
    %v857 = vadd.f32 %v717, %v837
    %v858 = vadd.f32 %v718, %v833
    %v859 = vadd.f32 %v719, %v837
    %v860 = vadd.f32 %v720, %v833
    %v861 = vadd.f32 %v721, %v837
    %v862 = vadd.f32 %v722, %v833
    %v863 = vadd.f32 %v723, %v837
    %v864 = vadd.f32 %v724, %v833
    %v865 = vadd.f32 %v725, %v837
    %v866 = vadd.f32 %v726, %v833
    %v867 = vadd.f32 %v727, %v837
    %v868 = vadd.f32 %v728, %v833
    %v869 = vadd.f32 %v729, %v837
    %v870 = vadd.f32 %v730, %v833
    %v871 = vadd.f32 %v731, %v837
    %v872 = vadd.f32 %v732, %v833
    %v873 = vadd.f32 %v733, %v837
    %v874 = vadd.f32 %v734, %v833
    %v875 = vadd.f32 %v735, %v837
    %v876 = vadd.f32 %v736, %v833
    %v877 = vadd.f32 %v737, %v837
    %v878 = vadd.f32 %v738, %v833
    %v879 = vadd.f32 %v739, %v837
    %v880 = vadd.f32 %v740, %v833
    %v881 = vadd.f32 %v741, %v837
    %v882 = vadd.f32 %v742, %v833
    %v883 = vadd.f32 %v743, %v837
    %v884 = vadd.f32 %v744, %v833
    %v885 = vadd.f32 %v745, %v837
    %v886 = vadd.f32 %v746, %v833
    %v887 = vadd.f32 %v747, %v837
    %v888 = vadd.f32 %v748, %v833
    %v889 = vadd.f32 %v749, %v837
    %v890 = vadd.f32 %v750, %v833
    %v891 = vadd.f32 %v751, %v837
    %v892 = vadd.f32 %v752, %v833
    %v893 = vadd.f32 %v753, %v837
    %v894 = vadd.f32 %v754, %v833
    %v895 = vadd.f32 %v755, %v837
    %v896 = vadd.f32 %v756, %v833
    %v897 = vadd.f32 %v757, %v837
    %v898 = vadd.f32 %v758, %v833
    %v899 = vadd.f32 %v759, %v837
    %v900 = vadd.f32 %v760, %v833
    %v901 = vadd.f32 %v761, %v837
    %v902 = vadd.f32 %v762, %v833
    %v903 = vadd.f32 %v763, %v837
    %v904 = vadd.f32 %v764, %v833
    %v905 = vadd.f32 %v765, %v837
    %v906 = vadd.f32 %v766, %v833
    %v907 = vadd.f32 %v767, %v837
    %v908 = vadd.f32 %v768, %v833
    %v909 = vadd.f32 %v769, %v837
    %v910 = vadd.f32 %v770, %v833
    %v911 = vadd.f32 %v771, %v837
    %v912 = vadd.f32 %v772, %v833
    %v913 = vadd.f32 %v773, %v837
    %v914 = vadd.f32 %v774, %v833
    %v915 = vadd.f32 %v775, %v837
    %v916 = vadd.f32 %v776, %v833
    %v917 = vadd.f32 %v777, %v837
    %v918 = vadd.f32 %v778, %v833
    %v919 = vadd.f32 %v779, %v837
    %v920 = vadd.f32 %v780, %v833
    %v921 = vadd.f32 %v781, %v837
    %v922 = vadd.f32 %v782, %v833
    %v923 = vadd.f32 %v783, %v837
    %v924 = vadd.f32 %v784, %v833
    %v925 = vadd.f32 %v785, %v837
    %v926 = vadd.f32 %v786, %v833
    %v927 = vadd.f32 %v787, %v837
    %v928 = vadd.f32 %v788, %v833
    %v929 = vadd.f32 %v789, %v837
    %v930 = vadd.f32 %v790, %v833
    %v931 = vadd.f32 %v791, %v837
    %v932 = vadd.f32 %v792, %v833
    %v933 = vadd.f32 %v793, %v837
    %v934 = vadd.f32 %v794, %v833
    %v935 = vadd.f32 %v795, %v837
    %v936 = vadd.f32 %v796, %v833
    %v937 = vadd.f32 %v797, %v837
    %v938 = vadd.f32 %v798, %v833
    %v939 = vadd.f32 %v799, %v837
    %v940 = vadd.f32 %v800, %v833
    %v941 = vadd.f32 %v801, %v837
    %v942 = vadd.f32 %v802, %v833
    %v943 = vadd.f32 %v803, %v837
    %v944 = vadd.f32 %v804, %v833
    %v945 = vadd.f32 %v805, %v837
    %v946 = vadd.f32 %v806, %v833
    %v947 = vadd.f32 %v807, %v837
    %v948 = vadd.f32 %v808, %v833
    %v949 = vadd.f32 %v809, %v837
    %v950 = vadd.f32 %v810, %v833
    %v951 = vadd.f32 %v811, %v837
    %v952 = vadd.f32 %v812, %v833
    %v953 = vadd.f32 %v813, %v837
    %v954 = vadd.f32 %v814, %v833
    %v955 = vadd.f32 %v815, %v837
    %v956 = vadd.f32 %v816, %v833
    %v957 = vadd.f32 %v817, %v837
    %v958 = vadd.f32 %v818, %v833
    %v959 = vadd.f32 %v819, %v837
    %v960 = vadd.f32 %v820, %v833
    %v961 = vadd.f32 %v821, %v837
    %v962 = vadd.f32 %v822, %v833
    %v963 = vadd.f32 %v823, %v837
    %v964 = vadd.f32 %v824, %v833
    %v965 = vadd.f32 %v825, %v837
    %v966 = vadd.f32 %v826, %v833
    %v967 = vadd.f32 %v827, %v837
    %v968 = vadd.f32 %v368, %v840
    %v969 = vadd.f32 %v369, %v841
    %v970 = vadd.f32 %v370, %v842
    %v971 = vadd.f32 %v371, %v843
    %v972 = vadd.f32 %v372, %v844
    %v973 = vadd.f32 %v373, %v845
    %v974 = vadd.f32 %v374, %v846
    %v975 = vadd.f32 %v375, %v847
    %v976 = vadd.f32 %v376, %v848
    %v977 = vadd.f32 %v377, %v849
    %v978 = vadd.f32 %v378, %v850
    %v979 = vadd.f32 %v379, %v851
    %v980 = vadd.f32 %v380, %v852
    %v981 = vadd.f32 %v381, %v853
    %v982 = vadd.f32 %v382, %v854
    %v983 = vadd.f32 %v383, %v855
    %v984 = vadd.f32 %v384, %v856
    %v985 = vadd.f32 %v385, %v857
    %v986 = vadd.f32 %v386, %v858
    %v987 = vadd.f32 %v387, %v859
    %v988 = vadd.f32 %v388, %v860
    %v989 = vadd.f32 %v389, %v861
    %v990 = vadd.f32 %v390, %v862
    %v991 = vadd.f32 %v391, %v863
    %v992 = vadd.f32 %v392, %v864
    %v993 = vadd.f32 %v393, %v865
    %v994 = vadd.f32 %v394, %v866
    %v995 = vadd.f32 %v395, %v867
    %v996 = vadd.f32 %v396, %v868
    %v997 = vadd.f32 %v397, %v869
    %v998 = vadd.f32 %v398, %v870
    %v999 = vadd.f32 %v399, %v871
    %v1000 = vadd.f32 %v400, %v872
    %v1001 = vadd.f32 %v401, %v873
    %v1002 = vadd.f32 %v402, %v874
    %v1003 = vadd.f32 %v403, %v875
    %v1004 = vadd.f32 %v404, %v876
    %v1005 = vadd.f32 %v405, %v877
    %v1006 = vadd.f32 %v406, %v878
    %v1007 = vadd.f32 %v407, %v879
    %v1008 = vadd.f32 %v408, %v880
    %v1009 = vadd.f32 %v409, %v881
    %v1010 = vadd.f32 %v410, %v882
    %v1011 = vadd.f32 %v411, %v883
    %v1012 = vadd.f32 %v412, %v884
    %v1013 = vadd.f32 %v413, %v885
    %v1014 = vadd.f32 %v414, %v886
    %v1015 = vadd.f32 %v415, %v887
    %v1016 = vadd.f32 %v416, %v888
    %v1017 = vadd.f32 %v417, %v889
    %v1018 = vadd.f32 %v418, %v890
    %v1019 = vadd.f32 %v419, %v891
    %v1020 = vadd.f32 %v420, %v892
    %v1021 = vadd.f32 %v421, %v893
    %v1022 = vadd.f32 %v422, %v894
    %v1023 = vadd.f32 %v423, %v895
    %v1024 = vadd.f32 %v424, %v896
    %v1025 = vadd.f32 %v425, %v897
    %v1026 = vadd.f32 %v426, %v898
    %v1027 = vadd.f32 %v427, %v899
    %v1028 = vadd.f32 %v428, %v900
    %v1029 = vadd.f32 %v429, %v901
    %v1030 = vadd.f32 %v430, %v902
    %v1031 = vadd.f32 %v431, %v903
    %v1032 = vadd.f32 %v432, %v904
    %v1033 = vadd.f32 %v433, %v905
    %v1034 = vadd.f32 %v434, %v906
    %v1035 = vadd.f32 %v435, %v907
    %v1036 = vadd.f32 %v436, %v908
    %v1037 = vadd.f32 %v437, %v909
    %v1038 = vadd.f32 %v438, %v910
    %v1039 = vadd.f32 %v439, %v911
    %v1040 = vadd.f32 %v440, %v912
    %v1041 = vadd.f32 %v441, %v913
    %v1042 = vadd.f32 %v442, %v914
    %v1043 = vadd.f32 %v443, %v915
    %v1044 = vadd.f32 %v444, %v916
    %v1045 = vadd.f32 %v445, %v917
    %v1046 = vadd.f32 %v446, %v918
    %v1047 = vadd.f32 %v447, %v919
    %v1048 = vadd.f32 %v448, %v920
    %v1049 = vadd.f32 %v449, %v921
    %v1050 = vadd.f32 %v450, %v922
    %v1051 = vadd.f32 %v451, %v923
    %v1052 = vadd.f32 %v452, %v924
    %v1053 = vadd.f32 %v453, %v925
    %v1054 = vadd.f32 %v454, %v926
    %v1055 = vadd.f32 %v455, %v927
    %v1056 = vadd.f32 %v456, %v928
    %v1057 = vadd.f32 %v457, %v929
    %v1058 = vadd.f32 %v458, %v930
    %v1059 = vadd.f32 %v459, %v931
    %v1060 = vadd.f32 %v460, %v932
    %v1061 = vadd.f32 %v461, %v933
    %v1062 = vadd.f32 %v462, %v934
    %v1063 = vadd.f32 %v463, %v935
    %v1064 = vadd.f32 %v464, %v936
    %v1065 = vadd.f32 %v465, %v937
    %v1066 = vadd.f32 %v466, %v938
    %v1067 = vadd.f32 %v467, %v939
    %v1068 = vadd.f32 %v468, %v940
    %v1069 = vadd.f32 %v469, %v941
    %v1070 = vadd.f32 %v470, %v942
    %v1071 = vadd.f32 %v471, %v943
    %v1072 = vadd.f32 %v472, %v944
    %v1073 = vadd.f32 %v473, %v945
    %v1074 = vadd.f32 %v474, %v946
    %v1075 = vadd.f32 %v475, %v947
    %v1076 = vadd.f32 %v476, %v948
    %v1077 = vadd.f32 %v477, %v949
    %v1078 = vadd.f32 %v478, %v950
    %v1079 = vadd.f32 %v479, %v951
    %v1080 = vadd.f32 %v480, %v952
    %v1081 = vadd.f32 %v481, %v953
    %v1082 = vadd.f32 %v482, %v954
    %v1083 = vadd.f32 %v483, %v955
    %v1084 = vadd.f32 %v484, %v956
    %v1085 = vadd.f32 %v485, %v957
    %v1086 = vadd.f32 %v486, %v958
    %v1087 = vadd.f32 %v487, %v959
    %v1088 = vadd.f32 %v488, %v960
    %v1089 = vadd.f32 %v489, %v961
    %v1090 = vadd.f32 %v490, %v962
    %v1091 = vadd.f32 %v491, %v963
    %v1092 = vadd.f32 %v492, %v964
    %v1093 = vadd.f32 %v493, %v965
    %v1094 = vadd.f32 %v494, %v966
    %v1095 = vadd.f32 %v495, %v967
    %v1096 = vmax.f32 %v968, 0.0
    %v1097 = vmax.f32 %v969, 0.0
    %v1098 = vmax.f32 %v970, 0.0
    %v1099 = vmax.f32 %v971, 0.0
    %v1100 = vmax.f32 %v972, 0.0
    %v1101 = vmax.f32 %v973, 0.0
    %v1102 = vmax.f32 %v974, 0.0
    %v1103 = vmax.f32 %v975, 0.0
    %v1104 = vmax.f32 %v976, 0.0
    %v1105 = vmax.f32 %v977, 0.0
    %v1106 = vmax.f32 %v978, 0.0
    %v1107 = vmax.f32 %v979, 0.0
    %v1108 = vmax.f32 %v980, 0.0
    %v1109 = vmax.f32 %v981, 0.0
    %v1110 = vmax.f32 %v982, 0.0
    %v1111 = vmax.f32 %v983, 0.0
    %v1112 = vmax.f32 %v984, 0.0
    %v1113 = vmax.f32 %v985, 0.0
    %v1114 = vmax.f32 %v986, 0.0
    %v1115 = vmax.f32 %v987, 0.0
    %v1116 = vmax.f32 %v988, 0.0
    %v1117 = vmax.f32 %v989, 0.0
    %v1118 = vmax.f32 %v990, 0.0
    %v1119 = vmax.f32 %v991, 0.0
    %v1120 = vmax.f32 %v992, 0.0
    %v1121 = vmax.f32 %v993, 0.0
    %v1122 = vmax.f32 %v994, 0.0
    %v1123 = vmax.f32 %v995, 0.0
    %v1124 = vmax.f32 %v996, 0.0
    %v1125 = vmax.f32 %v997, 0.0
    %v1126 = vmax.f32 %v998, 0.0
    %v1127 = vmax.f32 %v999, 0.0
    %v1128 = vmax.f32 %v1000, 0.0
    %v1129 = vmax.f32 %v1001, 0.0
    %v1130 = vmax.f32 %v1002, 0.0
    %v1131 = vmax.f32 %v1003, 0.0
    %v1132 = vmax.f32 %v1004, 0.0
    %v1133 = vmax.f32 %v1005, 0.0
    %v1134 = vmax.f32 %v1006, 0.0
    %v1135 = vmax.f32 %v1007, 0.0
    %v1136 = vmax.f32 %v1008, 0.0
    %v1137 = vmax.f32 %v1009, 0.0
    %v1138 = vmax.f32 %v1010, 0.0
    %v1139 = vmax.f32 %v1011, 0.0
    %v1140 = vmax.f32 %v1012, 0.0
    %v1141 = vmax.f32 %v1013, 0.0
    %v1142 = vmax.f32 %v1014, 0.0
    %v1143 = vmax.f32 %v1015, 0.0
    %v1144 = vmax.f32 %v1016, 0.0
    %v1145 = vmax.f32 %v1017, 0.0
    %v1146 = vmax.f32 %v1018, 0.0
    %v1147 = vmax.f32 %v1019, 0.0
    %v1148 = vmax.f32 %v1020, 0.0
    %v1149 = vmax.f32 %v1021, 0.0
    %v1150 = vmax.f32 %v1022, 0.0
    %v1151 = vmax.f32 %v1023, 0.0
    %v1152 = vmax.f32 %v1024, 0.0
    %v1153 = vmax.f32 %v1025, 0.0
    %v1154 = vmax.f32 %v1026, 0.0
    %v1155 = vmax.f32 %v1027, 0.0
    %v1156 = vmax.f32 %v1028, 0.0
    %v1157 = vmax.f32 %v1029, 0.0
    %v1158 = vmax.f32 %v1030, 0.0
    %v1159 = vmax.f32 %v1031, 0.0
    %v1160 = vmax.f32 %v1032, 0.0
    %v1161 = vmax.f32 %v1033, 0.0
    %v1162 = vmax.f32 %v1034, 0.0
    %v1163 = vmax.f32 %v1035, 0.0
    %v1164 = vmax.f32 %v1036, 0.0
    %v1165 = vmax.f32 %v1037, 0.0
    %v1166 = vmax.f32 %v1038, 0.0
    %v1167 = vmax.f32 %v1039, 0.0
    %v1168 = vmax.f32 %v1040, 0.0
    %v1169 = vmax.f32 %v1041, 0.0
    %v1170 = vmax.f32 %v1042, 0.0
    %v1171 = vmax.f32 %v1043, 0.0
    %v1172 = vmax.f32 %v1044, 0.0
    %v1173 = vmax.f32 %v1045, 0.0
    %v1174 = vmax.f32 %v1046, 0.0
    %v1175 = vmax.f32 %v1047, 0.0
    %v1176 = vmax.f32 %v1048, 0.0
    %v1177 = vmax.f32 %v1049, 0.0
    %v1178 = vmax.f32 %v1050, 0.0
    %v1179 = vmax.f32 %v1051, 0.0
    %v1180 = vmax.f32 %v1052, 0.0
    %v1181 = vmax.f32 %v1053, 0.0
    %v1182 = vmax.f32 %v1054, 0.0
    %v1183 = vmax.f32 %v1055, 0.0
    %v1184 = vmax.f32 %v1056, 0.0
    %v1185 = vmax.f32 %v1057, 0.0
    %v1186 = vmax.f32 %v1058, 0.0
    %v1187 = vmax.f32 %v1059, 0.0
    %v1188 = vmax.f32 %v1060, 0.0
    %v1189 = vmax.f32 %v1061, 0.0
    %v1190 = vmax.f32 %v1062, 0.0
    %v1191 = vmax.f32 %v1063, 0.0
    %v1192 = vmax.f32 %v1064, 0.0
    %v1193 = vmax.f32 %v1065, 0.0
    %v1194 = vmax.f32 %v1066, 0.0
    %v1195 = vmax.f32 %v1067, 0.0
    %v1196 = vmax.f32 %v1068, 0.0
    %v1197 = vmax.f32 %v1069, 0.0
    %v1198 = vmax.f32 %v1070, 0.0
    %v1199 = vmax.f32 %v1071, 0.0
    %v1200 = vmax.f32 %v1072, 0.0
    %v1201 = vmax.f32 %v1073, 0.0
    %v1202 = vmax.f32 %v1074, 0.0
    %v1203 = vmax.f32 %v1075, 0.0
    %v1204 = vmax.f32 %v1076, 0.0
    %v1205 = vmax.f32 %v1077, 0.0
    %v1206 = vmax.f32 %v1078, 0.0
    %v1207 = vmax.f32 %v1079, 0.0
    %v1208 = vmax.f32 %v1080, 0.0
    %v1209 = vmax.f32 %v1081, 0.0
    %v1210 = vmax.f32 %v1082, 0.0
    %v1211 = vmax.f32 %v1083, 0.0
    %v1212 = vmax.f32 %v1084, 0.0
    %v1213 = vmax.f32 %v1085, 0.0
    %v1214 = vmax.f32 %v1086, 0.0
    %v1215 = vmax.f32 %v1087, 0.0
    %v1216 = vmax.f32 %v1088, 0.0
    %v1217 = vmax.f32 %v1089, 0.0
    %v1218 = vmax.f32 %v1090, 0.0
    %v1219 = vmax.f32 %v1091, 0.0
    %v1220 = vmax.f32 %v1092, 0.0
    %v1221 = vmax.f32 %v1093, 0.0
    %v1222 = vmax.f32 %v1094, 0.0
    %v1223 = vmax.f32 %v1095, 0.0
    %1224 = vst [vmem:[#allocation2] sm:$0xff] %v1096
    %1225 = vst [vmem:[#allocation2 + $0x8] sm:$0xff] %v1097
    %1226 = vst [vmem:[#allocation2 + $0x10] sm:$0xff] %v1098
    %1227 = vst [vmem:[#allocation2 + $0x18] sm:$0xff] %v1099
    %1228 = vst [vmem:[#allocation2 + $0x20] sm:$0xff] %v1100
    %1229 = vst [vmem:[#allocation2 + $0x28] sm:$0xff] %v1101
    %1230 = vst [vmem:[#allocation2 + $0x30] sm:$0xff] %v1102
    %1231 = vst [vmem:[#allocation2 + $0x38] sm:$0xff] %v1103
    %1232 = vst [vmem:[#allocation2 + $0x40] sm:$0xff] %v1104
    %1233 = vst [vmem:[#allocation2 + $0x48] sm:$0xff] %v1105
    %1234 = vst [vmem:[#allocation2 + $0x50] sm:$0xff] %v1106
    %1235 = vst [vmem:[#allocation2 + $0x58] sm:$0xff] %v1107
    %1236 = vst [vmem:[#allocation2 + $0x60] sm:$0xff] %v1108
    %1237 = vst [vmem:[#allocation2 + $0x68] sm:$0xff] %v1109
    %1238 = vst [vmem:[#allocation2 + $0x70] sm:$0xff] %v1110
    %1239 = vst [vmem:[#allocation2 + $0x78] sm:$0xff] %v1111
    %1240 = vst [vmem:[#allocation2 + $0x80] sm:$0xff] %v1112
    %1241 = vst [vmem:[#allocation2 + $0x88] sm:$0xff] %v1113
    %1242 = vst [vmem:[#allocation2 + $0x90] sm:$0xff] %v1114
    %1243 = vst [vmem:[#allocation2 + $0x98] sm:$0xff] %v1115
    %1244 = vst [vmem:[#allocation2 + $0xa0] sm:$0xff] %v1116
    %1245 = vst [vmem:[#allocation2 + $0xa8] sm:$0xff] %v1117
    %1246 = vst [vmem:[#allocation2 + $0xb0] sm:$0xff] %v1118
    %1247 = vst [vmem:[#allocation2 + $0xb8] sm:$0xff] %v1119
    %1248 = vst [vmem:[#allocation2 + $0xc0] sm:$0xff] %v1120
    %1249 = vst [vmem:[#allocation2 + $0xc8] sm:$0xff] %v1121
    %1250 = vst [vmem:[#allocation2 + $0xd0] sm:$0xff] %v1122
    %1251 = vst [vmem:[#allocation2 + $0xd8] sm:$0xff] %v1123
    %1252 = vst [vmem:[#allocation2 + $0xe0] sm:$0xff] %v1124
    %1253 = vst [vmem:[#allocation2 + $0xe8] sm:$0xff] %v1125
    %1254 = vst [vmem:[#allocation2 + $0xf0] sm:$0xff] %v1126
    %1255 = vst [vmem:[#allocation2 + $0xf8] sm:$0xff] %v1127
    %1256 = vst [vmem:[#allocation2 + $0x100] sm:$0xff] %v1128
    %1257 = vst [vmem:[#allocation2 + $0x108] sm:$0xff] %v1129
    %1258 = vst [vmem:[#allocation2 + $0x110] sm:$0xff] %v1130
    %1259 = vst [vmem:[#allocation2 + $0x118] sm:$0xff] %v1131
    %1260 = vst [vmem:[#allocation2 + $0x120] sm:$0xff] %v1132
    %1261 = vst [vmem:[#allocation2 + $0x128] sm:$0xff] %v1133
    %1262 = vst [vmem:[#allocation2 + $0x130] sm:$0xff] %v1134
    %1263 = vst [vmem:[#allocation2 + $0x138] sm:$0xff] %v1135
    %1264 = vst [vmem:[#allocation2 + $0x140] sm:$0xff] %v1136
    %1265 = vst [vmem:[#allocation2 + $0x148] sm:$0xff] %v1137
    %1266 = vst [vmem:[#allocation2 + $0x150] sm:$0xff] %v1138
    %1267 = vst [vmem:[#allocation2 + $0x158] sm:$0xff] %v1139
    %1268 = vst [vmem:[#allocation2 + $0x160] sm:$0xff] %v1140
    %1269 = vst [vmem:[#allocation2 + $0x168] sm:$0xff] %v1141
    %1270 = vst [vmem:[#allocation2 + $0x170] sm:$0xff] %v1142
    %1271 = vst [vmem:[#allocation2 + $0x178] sm:$0xff] %v1143
    %1272 = vst [vmem:[#allocation2 + $0x180] sm:$0xff] %v1144
    %1273 = vst [vmem:[#allocation2 + $0x188] sm:$0xff] %v1145
    %1274 = vst [vmem:[#allocation2 + $0x190] sm:$0xff] %v1146
    %1275 = vst [vmem:[#allocation2 + $0x198] sm:$0xff] %v1147
    %1276 = vst [vmem:[#allocation2 + $0x1a0] sm:$0xff] %v1148
    %1277 = vst [vmem:[#allocation2 + $0x1a8] sm:$0xff] %v1149
    %1278 = vst [vmem:[#allocation2 + $0x1b0] sm:$0xff] %v1150
    %1279 = vst [vmem:[#allocation2 + $0x1b8] sm:$0xff] %v1151
    %1280 = vst [vmem:[#allocation2 + $0x1c0] sm:$0xff] %v1152
    %1281 = vst [vmem:[#allocation2 + $0x1c8] sm:$0xff] %v1153
    %1282 = vst [vmem:[#allocation2 + $0x1d0] sm:$0xff] %v1154
    %1283 = vst [vmem:[#allocation2 + $0x1d8] sm:$0xff] %v1155
    %1284 = vst [vmem:[#allocation2 + $0x1e0] sm:$0xff] %v1156
    %1285 = vst [vmem:[#allocation2 + $0x1e8] sm:$0xff] %v1157
    %1286 = vst [vmem:[#allocation2 + $0x1f0] sm:$0xff] %v1158
    %1287 = vst [vmem:[#allocation2 + $0x1f8] sm:$0xff] %v1159
    %1288 = vst [vmem:[#allocation2 + $0x200] sm:$0xff] %v1160
    %1289 = vst [vmem:[#allocation2 + $0x208] sm:$0xff] %v1161
    %1290 = vst [vmem:[#allocation2 + $0x210] sm:$0xff] %v1162
    %1291 = vst [vmem:[#allocation2 + $0x218] sm:$0xff] %v1163
    %1292 = vst [vmem:[#allocation2 + $0x220] sm:$0xff] %v1164
    %1293 = vst [vmem:[#allocation2 + $0x228] sm:$0xff] %v1165
    %1294 = vst [vmem:[#allocation2 + $0x230] sm:$0xff] %v1166
    %1295 = vst [vmem:[#allocation2 + $0x238] sm:$0xff] %v1167
    %1296 = vst [vmem:[#allocation2 + $0x240] sm:$0xff] %v1168
    %1297 = vst [vmem:[#allocation2 + $0x248] sm:$0xff] %v1169
    %1298 = vst [vmem:[#allocation2 + $0x250] sm:$0xff] %v1170
    %1299 = vst [vmem:[#allocation2 + $0x258] sm:$0xff] %v1171
    %1300 = vst [vmem:[#allocation2 + $0x260] sm:$0xff] %v1172
    %1301 = vst [vmem:[#allocation2 + $0x268] sm:$0xff] %v1173
    %1302 = vst [vmem:[#allocation2 + $0x270] sm:$0xff] %v1174
    %1303 = vst [vmem:[#allocation2 + $0x278] sm:$0xff] %v1175
    %1304 = vst [vmem:[#allocation2 + $0x280] sm:$0xff] %v1176
    %1305 = vst [vmem:[#allocation2 + $0x288] sm:$0xff] %v1177
    %1306 = vst [vmem:[#allocation2 + $0x290] sm:$0xff] %v1178
    %1307 = vst [vmem:[#allocation2 + $0x298] sm:$0xff] %v1179
    %1308 = vst [vmem:[#allocation2 + $0x2a0] sm:$0xff] %v1180
    %1309 = vst [vmem:[#allocation2 + $0x2a8] sm:$0xff] %v1181
    %1310 = vst [vmem:[#allocation2 + $0x2b0] sm:$0xff] %v1182
    %1311 = vst [vmem:[#allocation2 + $0x2b8] sm:$0xff] %v1183
    %1312 = vst [vmem:[#allocation2 + $0x2c0] sm:$0xff] %v1184
    %1313 = vst [vmem:[#allocation2 + $0x2c8] sm:$0xff] %v1185
    %1314 = vst [vmem:[#allocation2 + $0x2d0] sm:$0xff] %v1186
    %1315 = vst [vmem:[#allocation2 + $0x2d8] sm:$0xff] %v1187
    %1316 = vst [vmem:[#allocation2 + $0x2e0] sm:$0xff] %v1188
    %1317 = vst [vmem:[#allocation2 + $0x2e8] sm:$0xff] %v1189
    %1318 = vst [vmem:[#allocation2 + $0x2f0] sm:$0xff] %v1190
    %1319 = vst [vmem:[#allocation2 + $0x2f8] sm:$0xff] %v1191
    %1320 = vst [vmem:[#allocation2 + $0x300] sm:$0xff] %v1192
    %1321 = vst [vmem:[#allocation2 + $0x308] sm:$0xff] %v1193
    %1322 = vst [vmem:[#allocation2 + $0x310] sm:$0xff] %v1194
    %1323 = vst [vmem:[#allocation2 + $0x318] sm:$0xff] %v1195
    %1324 = vst [vmem:[#allocation2 + $0x320] sm:$0xff] %v1196
    %1325 = vst [vmem:[#allocation2 + $0x328] sm:$0xff] %v1197
    %1326 = vst [vmem:[#allocation2 + $0x330] sm:$0xff] %v1198
    %1327 = vst [vmem:[#allocation2 + $0x338] sm:$0xff] %v1199
    %1328 = vst [vmem:[#allocation2 + $0x340] sm:$0xff] %v1200
    %1329 = vst [vmem:[#allocation2 + $0x348] sm:$0xff] %v1201
    %1330 = vst [vmem:[#allocation2 + $0x350] sm:$0xff] %v1202
    %1331 = vst [vmem:[#allocation2 + $0x358] sm:$0xff] %v1203
    %1332 = vst [vmem:[#allocation2 + $0x360] sm:$0xff] %v1204
    %1333 = vst [vmem:[#allocation2 + $0x368] sm:$0xff] %v1205
    %1334 = vst [vmem:[#allocation2 + $0x370] sm:$0xff] %v1206
    %1335 = vst [vmem:[#allocation2 + $0x378] sm:$0xff] %v1207
    %1336 = vst [vmem:[#allocation2 + $0x380] sm:$0xff] %v1208
    %1337 = vst [vmem:[#allocation2 + $0x388] sm:$0xff] %v1209
    %1338 = vst [vmem:[#allocation2 + $0x390] sm:$0xff] %v1210
    %1339 = vst [vmem:[#allocation2 + $0x398] sm:$0xff] %v1211
    %1340 = vst [vmem:[#allocation2 + $0x3a0] sm:$0xff] %v1212
    %1341 = vst [vmem:[#allocation2 + $0x3a8] sm:$0xff] %v1213
    %1342 = vst [vmem:[#allocation2 + $0x3b0] sm:$0xff] %v1214
    %1343 = vst [vmem:[#allocation2 + $0x3b8] sm:$0xff] %v1215
    %1344 = vst [vmem:[#allocation2 + $0x3c0] sm:$0xff] %v1216
    %1345 = vst [vmem:[#allocation2 + $0x3c8] sm:$0xff] %v1217
    %1346 = vst [vmem:[#allocation2 + $0x3d0] sm:$0xff] %v1218
    %1347 = vst [vmem:[#allocation2 + $0x3d8] sm:$0xff] %v1219
    %1348 = vst [vmem:[#allocation2 + $0x3e0] sm:$0xff] %v1220
    %1349 = vst [vmem:[#allocation2 + $0x3e8] sm:$0xff] %v1221
    %1350 = vst [vmem:[#allocation2 + $0x3f0] sm:$0xff] %v1222
    %1351 = vst [vmem:[#allocation2 + $0x3f8] sm:$0xff] %v1223
    // Predicated region
    $region26: #{bottleneck_forward.7} parent=1 // pred_check
      _
    $region27: #{bottleneck_forward.7} parent=1 // pred_check_branch
      %1353 = sbr.rel (0) target = $region29
    $region28: #{bottleneck_forward.7} parent=1 // pred_region
      %s1355 = ssub.s32 16384, 16384
      %1356 = vsyncadd [#allocation3], %s1355
      %s1357 = sshll.u32 [#allocation2], 4
      %s1358 = int_to_ptr.vmem [resolvable:$true] %s1357
      %1363 = dma.vmem_to_hbm [thread:$0]  %s1358, 16384, %s6, [#allocation3], 256, 256, 16
    $region29: #{bottleneck_forward.7} parent=1 // pred_fallthru
      _
    // Predicated region
    $region30: #{bottleneck_forward.7} parent=1 // pred_check
      _
    $region31: #{bottleneck_forward.7} parent=1 // pred_check_branch
      %1365 = sbr.rel (0) target = $region33
    $region32: #{bottleneck_forward.7} parent=1 // pred_region
      %1366 = dma.done [#allocation3], 16384
    $region33: #{bottleneck_forward.7} parent=1 // pred_fallthru
      _
    %1367 = vsyncpa [#allocation3], 1

// kernel: bottleneck_forward.6
$region0: #{bottleneck_forward.6}
  #allocation0 [shape = 'u32[]', space=smem, size = 0x4, offset = 0x4, fixed_abs, tag = 'smem constant byte address 0x4 - core index']
  #allocation1 [shape = 'u32[144,128]{1,0:T(1,128)}', space=vmem, size = 0x12000, scoped, tag = 'internal scratch']
  %s0 = inlined_call_operand.vmem [shape: bf16[512,64], index: 0, kind: input, shape index: {}]
  %s1 = inlined_call_operand.vmem [shape: f32[1,64], index: 1, kind: input, shape index: {}]
  %s2 = inlined_call_operand.vmem [shape: f32[1,64], index: 2, kind: input, shape index: {}]
  %s3 = inlined_call_operand.vmem [shape: bf16[64,256], index: 3, kind: input, shape index: {}]
  %s4 = inlined_call_operand.vmem [shape: bf16[512,256], index: 4, kind: output, shape index: {0}]
  %s5 = inlined_call_operand.vmem [shape: f32[8,256], index: 5, kind: output, shape index: {1}]
  %6 = xla_tuple %s4, %s5
  %s7 = sld [smem:[#allocation0]]
  $region38: #{bottleneck_forward.6} parent=0
    _
  %s9 = ssub.s32 1, %s7
  %s10 = scalar_select 0, %s9, %s7
  // Predicated region
  $region2: #{bottleneck_forward.6} parent=0 // pred_check
    _
  $region3: #{bottleneck_forward.6} parent=0 // pred_check_branch
    %12 = sbr.rel (0) target = $region5
  $region4: #{bottleneck_forward.6} parent=0 // pred_region
    _
  $region5: #{bottleneck_forward.6} parent=0 // pred_fallthru
    _
  // Predicated region
  $region6: #{bottleneck_forward.6} parent=0 // pred_check
    _
  $region7: #{bottleneck_forward.6} parent=0 // pred_check_branch
    %14 = sbr.rel (0) target = $region9
  $region8: #{bottleneck_forward.6} parent=0 // pred_region
    _
  $region9: #{bottleneck_forward.6} parent=0 // pred_fallthru
    _
  // Predicated region
  $region10: #{bottleneck_forward.6} parent=0 // pred_check
    _
  $region11: #{bottleneck_forward.6} parent=0 // pred_check_branch
    %16 = sbr.rel (0) target = $region13
  $region12: #{bottleneck_forward.6} parent=0 // pred_region
    _
  $region13: #{bottleneck_forward.6} parent=0 // pred_fallthru
    _
  // Predicated region
  $region14: #{bottleneck_forward.6} parent=0 // pred_check
    _
  $region15: #{bottleneck_forward.6} parent=0 // pred_check_branch
    %18 = sbr.rel (0) target = $region17
  $region16: #{bottleneck_forward.6} parent=0 // pred_region
    _
  $region17: #{bottleneck_forward.6} parent=0 // pred_fallthru
    _
  %v20 = vld [vmem:[%s0] sm:$0xf]
  %v21 = vld [vmem:[%s0 + $0x4] sm:$0xf]
  %v22 = vld [vmem:[%s0 + $0x8] sm:$0xf]
  %v23 = vld [vmem:[%s0 + $0xc] sm:$0xf]
  %v24 = vld [vmem:[%s0 + $0x10] sm:$0xf]
  %v25 = vld [vmem:[%s0 + $0x14] sm:$0xf]
  %v26 = vld [vmem:[%s0 + $0x18] sm:$0xf]
  %v27 = vld [vmem:[%s0 + $0x1c] sm:$0xf]
  %v28 = vld [vmem:[%s0 + $0x20] sm:$0xf]
  %v29 = vld [vmem:[%s0 + $0x24] sm:$0xf]
  %v30 = vld [vmem:[%s0 + $0x28] sm:$0xf]
  %v31 = vld [vmem:[%s0 + $0x2c] sm:$0xf]
  %v32 = vld [vmem:[%s0 + $0x30] sm:$0xf]
  %v33 = vld [vmem:[%s0 + $0x34] sm:$0xf]
  %v34 = vld [vmem:[%s0 + $0x38] sm:$0xf]
  %v35 = vld [vmem:[%s0 + $0x3c] sm:$0xf]
  %v36 = vld [vmem:[%s0 + $0x40] sm:$0xf]
  %v37 = vld [vmem:[%s0 + $0x44] sm:$0xf]
  %v38 = vld [vmem:[%s0 + $0x48] sm:$0xf]
  %v39 = vld [vmem:[%s0 + $0x4c] sm:$0xf]
  %v40 = vld [vmem:[%s0 + $0x50] sm:$0xf]
  %v41 = vld [vmem:[%s0 + $0x54] sm:$0xf]
  %v42 = vld [vmem:[%s0 + $0x58] sm:$0xf]
  %v43 = vld [vmem:[%s0 + $0x5c] sm:$0xf]
  %v44 = vld [vmem:[%s0 + $0x60] sm:$0xf]
  %v45 = vld [vmem:[%s0 + $0x64] sm:$0xf]
  %v46 = vld [vmem:[%s0 + $0x68] sm:$0xf]
  %v47 = vld [vmem:[%s0 + $0x6c] sm:$0xf]
  %v48 = vld [vmem:[%s0 + $0x70] sm:$0xf]
  %v49 = vld [vmem:[%s0 + $0x74] sm:$0xf]
  %v50 = vld [vmem:[%s0 + $0x78] sm:$0xf]
  %v51 = vld [vmem:[%s0 + $0x7c] sm:$0xf]
  %v52 = vld [vmem:[%s0 + $0x80] sm:$0xf]
  %v53 = vld [vmem:[%s0 + $0x84] sm:$0xf]
  %v54 = vld [vmem:[%s0 + $0x88] sm:$0xf]
  %v55 = vld [vmem:[%s0 + $0x8c] sm:$0xf]
  %v56 = vld [vmem:[%s0 + $0x90] sm:$0xf]
  %v57 = vld [vmem:[%s0 + $0x94] sm:$0xf]
  %v58 = vld [vmem:[%s0 + $0x98] sm:$0xf]
  %v59 = vld [vmem:[%s0 + $0x9c] sm:$0xf]
  %v60 = vld [vmem:[%s0 + $0xa0] sm:$0xf]
  %v61 = vld [vmem:[%s0 + $0xa4] sm:$0xf]
  %v62 = vld [vmem:[%s0 + $0xa8] sm:$0xf]
  %v63 = vld [vmem:[%s0 + $0xac] sm:$0xf]
  %v64 = vld [vmem:[%s0 + $0xb0] sm:$0xf]
  %v65 = vld [vmem:[%s0 + $0xb4] sm:$0xf]
  %v66 = vld [vmem:[%s0 + $0xb8] sm:$0xf]
  %v67 = vld [vmem:[%s0 + $0xbc] sm:$0xf]
  %v68 = vld [vmem:[%s0 + $0xc0] sm:$0xf]
  %v69 = vld [vmem:[%s0 + $0xc4] sm:$0xf]
  %v70 = vld [vmem:[%s0 + $0xc8] sm:$0xf]
  %v71 = vld [vmem:[%s0 + $0xcc] sm:$0xf]
  %v72 = vld [vmem:[%s0 + $0xd0] sm:$0xf]
  %v73 = vld [vmem:[%s0 + $0xd4] sm:$0xf]
  %v74 = vld [vmem:[%s0 + $0xd8] sm:$0xf]
  %v75 = vld [vmem:[%s0 + $0xdc] sm:$0xf]
  %v76 = vld [vmem:[%s0 + $0xe0] sm:$0xf]
  %v77 = vld [vmem:[%s0 + $0xe4] sm:$0xf]
  %v78 = vld [vmem:[%s0 + $0xe8] sm:$0xf]
  %v79 = vld [vmem:[%s0 + $0xec] sm:$0xf]
  %v80 = vld [vmem:[%s0 + $0xf0] sm:$0xf]
  %v81 = vld [vmem:[%s0 + $0xf4] sm:$0xf]
  %v82 = vld [vmem:[%s0 + $0xf8] sm:$0xf]
  %v83 = vld [vmem:[%s0 + $0xfc] sm:$0xf]
  %v84 = vunpack.c.l.bf16 %v20
  %v85 = vunpack.c.l.bf16 %v21
  %v86 = vunpack.c.l.bf16 %v22
  %v87 = vunpack.c.l.bf16 %v23
  %v88 = vunpack.c.l.bf16 %v24
  %v89 = vunpack.c.l.bf16 %v25
  %v90 = vunpack.c.l.bf16 %v26
  %v91 = vunpack.c.l.bf16 %v27
  %v92 = vunpack.c.l.bf16 %v28
  %v93 = vunpack.c.l.bf16 %v29
  %v94 = vunpack.c.l.bf16 %v30
  %v95 = vunpack.c.l.bf16 %v31
  %v96 = vunpack.c.l.bf16 %v32
  %v97 = vunpack.c.l.bf16 %v33
  %v98 = vunpack.c.l.bf16 %v34
  %v99 = vunpack.c.l.bf16 %v35
  %v100 = vunpack.c.l.bf16 %v36
  %v101 = vunpack.c.l.bf16 %v37
  %v102 = vunpack.c.l.bf16 %v38
  %v103 = vunpack.c.l.bf16 %v39
  %v104 = vunpack.c.l.bf16 %v40
  %v105 = vunpack.c.l.bf16 %v41
  %v106 = vunpack.c.l.bf16 %v42
  %v107 = vunpack.c.l.bf16 %v43
  %v108 = vunpack.c.l.bf16 %v44
  %v109 = vunpack.c.l.bf16 %v45
  %v110 = vunpack.c.l.bf16 %v46
  %v111 = vunpack.c.l.bf16 %v47
  %v112 = vunpack.c.l.bf16 %v48
  %v113 = vunpack.c.l.bf16 %v49
  %v114 = vunpack.c.l.bf16 %v50
  %v115 = vunpack.c.l.bf16 %v51
  %v116 = vunpack.c.l.bf16 %v52
  %v117 = vunpack.c.l.bf16 %v53
  %v118 = vunpack.c.l.bf16 %v54
  %v119 = vunpack.c.l.bf16 %v55
  %v120 = vunpack.c.l.bf16 %v56
  %v121 = vunpack.c.l.bf16 %v57
  %v122 = vunpack.c.l.bf16 %v58
  %v123 = vunpack.c.l.bf16 %v59
  %v124 = vunpack.c.l.bf16 %v60
  %v125 = vunpack.c.l.bf16 %v61
  %v126 = vunpack.c.l.bf16 %v62
  %v127 = vunpack.c.l.bf16 %v63
  %v128 = vunpack.c.l.bf16 %v64
  %v129 = vunpack.c.l.bf16 %v65
  %v130 = vunpack.c.l.bf16 %v66
  %v131 = vunpack.c.l.bf16 %v67
  %v132 = vunpack.c.l.bf16 %v68
  %v133 = vunpack.c.l.bf16 %v69
  %v134 = vunpack.c.l.bf16 %v70
  %v135 = vunpack.c.l.bf16 %v71
  %v136 = vunpack.c.l.bf16 %v72
  %v137 = vunpack.c.l.bf16 %v73
  %v138 = vunpack.c.l.bf16 %v74
  %v139 = vunpack.c.l.bf16 %v75
  %v140 = vunpack.c.l.bf16 %v76
  %v141 = vunpack.c.l.bf16 %v77
  %v142 = vunpack.c.l.bf16 %v78
  %v143 = vunpack.c.l.bf16 %v79
  %v144 = vunpack.c.l.bf16 %v80
  %v145 = vunpack.c.l.bf16 %v81
  %v146 = vunpack.c.l.bf16 %v82
  %v147 = vunpack.c.l.bf16 %v83
  %v148 = vld [vmem:[%s1] sm:$0x1]
  %v150 = vlaneseq
  %v151 = vshrl.u32 %v150, 7
  %v152 = vsub.s32 0, %v151
  %v153 = vrot.slane %v148, %v152
  %v155 = vmul.f32 %v84, %v153
  %v156 = vmul.f32 %v85, %v153
  %v157 = vmul.f32 %v86, %v153
  %v158 = vmul.f32 %v87, %v153
  %v159 = vmul.f32 %v88, %v153
  %v160 = vmul.f32 %v89, %v153
  %v161 = vmul.f32 %v90, %v153
  %v162 = vmul.f32 %v91, %v153
  %v163 = vmul.f32 %v92, %v153
  %v164 = vmul.f32 %v93, %v153
  %v165 = vmul.f32 %v94, %v153
  %v166 = vmul.f32 %v95, %v153
  %v167 = vmul.f32 %v96, %v153
  %v168 = vmul.f32 %v97, %v153
  %v169 = vmul.f32 %v98, %v153
  %v170 = vmul.f32 %v99, %v153
  %v171 = vmul.f32 %v100, %v153
  %v172 = vmul.f32 %v101, %v153
  %v173 = vmul.f32 %v102, %v153
  %v174 = vmul.f32 %v103, %v153
  %v175 = vmul.f32 %v104, %v153
  %v176 = vmul.f32 %v105, %v153
  %v177 = vmul.f32 %v106, %v153
  %v178 = vmul.f32 %v107, %v153
  %v179 = vmul.f32 %v108, %v153
  %v180 = vmul.f32 %v109, %v153
  %v181 = vmul.f32 %v110, %v153
  %v182 = vmul.f32 %v111, %v153
  %v183 = vmul.f32 %v112, %v153
  %v184 = vmul.f32 %v113, %v153
  %v185 = vmul.f32 %v114, %v153
  %v186 = vmul.f32 %v115, %v153
  %v187 = vmul.f32 %v116, %v153
  %v188 = vmul.f32 %v117, %v153
  %v189 = vmul.f32 %v118, %v153
  %v190 = vmul.f32 %v119, %v153
  %v191 = vmul.f32 %v120, %v153
  %v192 = vmul.f32 %v121, %v153
  %v193 = vmul.f32 %v122, %v153
  %v194 = vmul.f32 %v123, %v153
  %v195 = vmul.f32 %v124, %v153
  %v196 = vmul.f32 %v125, %v153
  %v197 = vmul.f32 %v126, %v153
  %v198 = vmul.f32 %v127, %v153
  %v199 = vmul.f32 %v128, %v153
  %v200 = vmul.f32 %v129, %v153
  %v201 = vmul.f32 %v130, %v153
  %v202 = vmul.f32 %v131, %v153
  %v203 = vmul.f32 %v132, %v153
  %v204 = vmul.f32 %v133, %v153
  %v205 = vmul.f32 %v134, %v153
  %v206 = vmul.f32 %v135, %v153
  %v207 = vmul.f32 %v136, %v153
  %v208 = vmul.f32 %v137, %v153
  %v209 = vmul.f32 %v138, %v153
  %v210 = vmul.f32 %v139, %v153
  %v211 = vmul.f32 %v140, %v153
  %v212 = vmul.f32 %v141, %v153
  %v213 = vmul.f32 %v142, %v153
  %v214 = vmul.f32 %v143, %v153
  %v215 = vmul.f32 %v144, %v153
  %v216 = vmul.f32 %v145, %v153
  %v217 = vmul.f32 %v146, %v153
  %v218 = vmul.f32 %v147, %v153
  %v219 = vld [vmem:[%s2] sm:$0x1]
  %v221 = vlaneseq
  %v222 = vshrl.u32 %v221, 7
  %v223 = vsub.s32 0, %v222
  %v224 = vrot.slane %v219, %v223
  %v226 = vadd.f32 %v155, %v224
  %v227 = vadd.f32 %v156, %v224
  %v228 = vadd.f32 %v157, %v224
  %v229 = vadd.f32 %v158, %v224
  %v230 = vadd.f32 %v159, %v224
  %v231 = vadd.f32 %v160, %v224
  %v232 = vadd.f32 %v161, %v224
  %v233 = vadd.f32 %v162, %v224
  %v234 = vadd.f32 %v163, %v224
  %v235 = vadd.f32 %v164, %v224
  %v236 = vadd.f32 %v165, %v224
  %v237 = vadd.f32 %v166, %v224
  %v238 = vadd.f32 %v167, %v224
  %v239 = vadd.f32 %v168, %v224
  %v240 = vadd.f32 %v169, %v224
  %v241 = vadd.f32 %v170, %v224
  %v242 = vadd.f32 %v171, %v224
  %v243 = vadd.f32 %v172, %v224
  %v244 = vadd.f32 %v173, %v224
  %v245 = vadd.f32 %v174, %v224
  %v246 = vadd.f32 %v175, %v224
  %v247 = vadd.f32 %v176, %v224
  %v248 = vadd.f32 %v177, %v224
  %v249 = vadd.f32 %v178, %v224
  %v250 = vadd.f32 %v179, %v224
  %v251 = vadd.f32 %v180, %v224
  %v252 = vadd.f32 %v181, %v224
  %v253 = vadd.f32 %v182, %v224
  %v254 = vadd.f32 %v183, %v224
  %v255 = vadd.f32 %v184, %v224
  %v256 = vadd.f32 %v185, %v224
  %v257 = vadd.f32 %v186, %v224
  %v258 = vadd.f32 %v187, %v224
  %v259 = vadd.f32 %v188, %v224
  %v260 = vadd.f32 %v189, %v224
  %v261 = vadd.f32 %v190, %v224
  %v262 = vadd.f32 %v191, %v224
  %v263 = vadd.f32 %v192, %v224
  %v264 = vadd.f32 %v193, %v224
  %v265 = vadd.f32 %v194, %v224
  %v266 = vadd.f32 %v195, %v224
  %v267 = vadd.f32 %v196, %v224
  %v268 = vadd.f32 %v197, %v224
  %v269 = vadd.f32 %v198, %v224
  %v270 = vadd.f32 %v199, %v224
  %v271 = vadd.f32 %v200, %v224
  %v272 = vadd.f32 %v201, %v224
  %v273 = vadd.f32 %v202, %v224
  %v274 = vadd.f32 %v203, %v224
  %v275 = vadd.f32 %v204, %v224
  %v276 = vadd.f32 %v205, %v224
  %v277 = vadd.f32 %v206, %v224
  %v278 = vadd.f32 %v207, %v224
  %v279 = vadd.f32 %v208, %v224
  %v280 = vadd.f32 %v209, %v224
  %v281 = vadd.f32 %v210, %v224
  %v282 = vadd.f32 %v211, %v224
  %v283 = vadd.f32 %v212, %v224
  %v284 = vadd.f32 %v213, %v224
  %v285 = vadd.f32 %v214, %v224
  %v286 = vadd.f32 %v215, %v224
  %v287 = vadd.f32 %v216, %v224
  %v288 = vadd.f32 %v217, %v224
  %v289 = vadd.f32 %v218, %v224
  %v290 = vmax.f32 %v226, 0.0
  %v291 = vmax.f32 %v227, 0.0
  %v292 = vmax.f32 %v228, 0.0
  %v293 = vmax.f32 %v229, 0.0
  %v294 = vmax.f32 %v230, 0.0
  %v295 = vmax.f32 %v231, 0.0
  %v296 = vmax.f32 %v232, 0.0
  %v297 = vmax.f32 %v233, 0.0
  %v298 = vmax.f32 %v234, 0.0
  %v299 = vmax.f32 %v235, 0.0
  %v300 = vmax.f32 %v236, 0.0
  %v301 = vmax.f32 %v237, 0.0
  %v302 = vmax.f32 %v238, 0.0
  %v303 = vmax.f32 %v239, 0.0
  %v304 = vmax.f32 %v240, 0.0
  %v305 = vmax.f32 %v241, 0.0
  %v306 = vmax.f32 %v242, 0.0
  %v307 = vmax.f32 %v243, 0.0
  %v308 = vmax.f32 %v244, 0.0
  %v309 = vmax.f32 %v245, 0.0
  %v310 = vmax.f32 %v246, 0.0
  %v311 = vmax.f32 %v247, 0.0
  %v312 = vmax.f32 %v248, 0.0
  %v313 = vmax.f32 %v249, 0.0
  %v314 = vmax.f32 %v250, 0.0
  %v315 = vmax.f32 %v251, 0.0
  %v316 = vmax.f32 %v252, 0.0
  %v317 = vmax.f32 %v253, 0.0
  %v318 = vmax.f32 %v254, 0.0
  %v319 = vmax.f32 %v255, 0.0
  %v320 = vmax.f32 %v256, 0.0
  %v321 = vmax.f32 %v257, 0.0
  %v322 = vmax.f32 %v258, 0.0
  %v323 = vmax.f32 %v259, 0.0
  %v324 = vmax.f32 %v260, 0.0
  %v325 = vmax.f32 %v261, 0.0
  %v326 = vmax.f32 %v262, 0.0
  %v327 = vmax.f32 %v263, 0.0
  %v328 = vmax.f32 %v264, 0.0
  %v329 = vmax.f32 %v265, 0.0
  %v330 = vmax.f32 %v266, 0.0
  %v331 = vmax.f32 %v267, 0.0
  %v332 = vmax.f32 %v268, 0.0
  %v333 = vmax.f32 %v269, 0.0
  %v334 = vmax.f32 %v270, 0.0
  %v335 = vmax.f32 %v271, 0.0
  %v336 = vmax.f32 %v272, 0.0
  %v337 = vmax.f32 %v273, 0.0
  %v338 = vmax.f32 %v274, 0.0
  %v339 = vmax.f32 %v275, 0.0
  %v340 = vmax.f32 %v276, 0.0
  %v341 = vmax.f32 %v277, 0.0
  %v342 = vmax.f32 %v278, 0.0
  %v343 = vmax.f32 %v279, 0.0
  %v344 = vmax.f32 %v280, 0.0
  %v345 = vmax.f32 %v281, 0.0
  %v346 = vmax.f32 %v282, 0.0
  %v347 = vmax.f32 %v283, 0.0
  %v348 = vmax.f32 %v284, 0.0
  %v349 = vmax.f32 %v285, 0.0
  %v350 = vmax.f32 %v286, 0.0
  %v351 = vmax.f32 %v287, 0.0
  %v352 = vmax.f32 %v288, 0.0
  %v353 = vmax.f32 %v289, 0.0
  %v354 = vpack.c.bf16 %v291, %v290
  %v355 = vpack.c.bf16 %v293, %v292
  %v356 = vpack.c.bf16 %v295, %v294
  %v357 = vpack.c.bf16 %v297, %v296
  %v358 = vpack.c.bf16 %v299, %v298
  %v359 = vpack.c.bf16 %v301, %v300
  %v360 = vpack.c.bf16 %v303, %v302
  %v361 = vpack.c.bf16 %v305, %v304
  %v362 = vpack.c.bf16 %v307, %v306
  %v363 = vpack.c.bf16 %v309, %v308
  %v364 = vpack.c.bf16 %v311, %v310
  %v365 = vpack.c.bf16 %v313, %v312
  %v366 = vpack.c.bf16 %v315, %v314
  %v367 = vpack.c.bf16 %v317, %v316
  %v368 = vpack.c.bf16 %v319, %v318
  %v369 = vpack.c.bf16 %v321, %v320
  %v370 = vpack.c.bf16 %v323, %v322
  %v371 = vpack.c.bf16 %v325, %v324
  %v372 = vpack.c.bf16 %v327, %v326
  %v373 = vpack.c.bf16 %v329, %v328
  %v374 = vpack.c.bf16 %v331, %v330
  %v375 = vpack.c.bf16 %v333, %v332
  %v376 = vpack.c.bf16 %v335, %v334
  %v377 = vpack.c.bf16 %v337, %v336
  %v378 = vpack.c.bf16 %v339, %v338
  %v379 = vpack.c.bf16 %v341, %v340
  %v380 = vpack.c.bf16 %v343, %v342
  %v381 = vpack.c.bf16 %v345, %v344
  %v382 = vpack.c.bf16 %v347, %v346
  %v383 = vpack.c.bf16 %v349, %v348
  %v384 = vpack.c.bf16 %v351, %v350
  %v385 = vpack.c.bf16 %v353, %v352
  %v386 = vld [vmem:[%s3] sm:$0xff]
  %v387 = vld [vmem:[%s3 + $0x8] sm:$0xff]
  %v388 = vld [vmem:[%s3 + $0x10] sm:$0xff]
  %v389 = vld [vmem:[%s3 + $0x18] sm:$0xff]
  %v390 = vld [vmem:[%s3 + $0x20] sm:$0xff]
  %v391 = vld [vmem:[%s3 + $0x28] sm:$0xff]
  %v392 = vld [vmem:[%s3 + $0x30] sm:$0xff]
  %v393 = vld [vmem:[%s3 + $0x38] sm:$0xff]
  %v402 = vunpack.c.l.b16 %v386
  %v403 = vunpack.c.h.b16 %v386
  %v404 = vunpack.c.l.b16 %v387
  %v405 = vunpack.c.h.b16 %v387
  %v406 = vunpack.c.l.b16 %v388
  %v407 = vunpack.c.h.b16 %v388
  %v408 = vunpack.c.l.b16 %v389
  %v409 = vunpack.c.h.b16 %v389
  %v410 = vunpack.c.l.b16 %v390
  %v411 = vunpack.c.h.b16 %v390
  %v412 = vunpack.c.l.b16 %v391
  %v413 = vunpack.c.h.b16 %v391
  %v414 = vunpack.c.l.b16 %v392
  %v415 = vunpack.c.h.b16 %v392
  %v416 = vunpack.c.l.b16 %v393
  %v417 = vunpack.c.h.b16 %v393
  %v418 = vpack.c.b16 %v404, %v402
  %v419 = vpack.c.b16 %v405, %v403
  %v420 = vpack.c.b16 %v408, %v406
  %v421 = vpack.c.b16 %v409, %v407
  %v422 = vpack.c.b16 %v412, %v410
  %v423 = vpack.c.b16 %v413, %v411
  %v424 = vpack.c.b16 %v416, %v414
  %v425 = vpack.c.b16 %v417, %v415
  %vm434 = vcmask 523264
  %v436 = vsel %vm434, %v354, 0
  %v439 = vsel %vm434, %v355, 0
  %v442 = vsel %vm434, %v356, 0
  %v445 = vsel %vm434, %v357, 0
  %v448 = vsel %vm434, %v358, 0
  %v451 = vsel %vm434, %v359, 0
  %v454 = vsel %vm434, %v360, 0
  %v457 = vsel %vm434, %v361, 0
  %v460 = vsel %vm434, %v362, 0
  %v463 = vsel %vm434, %v363, 0
  %v466 = vsel %vm434, %v364, 0
  %v469 = vsel %vm434, %v365, 0
  %v472 = vsel %vm434, %v366, 0
  %v475 = vsel %vm434, %v367, 0
  %v478 = vsel %vm434, %v368, 0
  %v481 = vsel %vm434, %v369, 0
  %v484 = vsel %vm434, %v370, 0
  %v487 = vsel %vm434, %v371, 0
  %v490 = vsel %vm434, %v372, 0
  %v493 = vsel %vm434, %v373, 0
  %v496 = vsel %vm434, %v374, 0
  %v499 = vsel %vm434, %v375, 0
  %v502 = vsel %vm434, %v376, 0
  %v505 = vsel %vm434, %v377, 0
  %v508 = vsel %vm434, %v378, 0
  %v511 = vsel %vm434, %v379, 0
  %v514 = vsel %vm434, %v380, 0
  %v517 = vsel %vm434, %v381, 0
  %v520 = vsel %vm434, %v382, 0
  %v523 = vsel %vm434, %v383, 0
  %v526 = vsel %vm434, %v384, 0
  %v529 = vsel %vm434, %v385, 0
  %531 = vmatprep.subr.bf16.mxu0 %v419
  %532 = vmatpush1.bf16.msra.mxu0 %v418
  %533 = vmatprep.subr.bf16.mxu0 %v421
  %534 = vmatpush1.bf16.msra.mxu0 %v420
  %535 = vmatprep.subr.bf16.mxu0 %v423
  %536 = vmatpush1.bf16.msra.mxu0 %v422
  %537 = vmatprep.subr.bf16.mxu0 %v425
  %538 = vmatpush1.bf16.msra.mxu0 %v424
  %539 = vmatprep.subr.bf16.mxu0 0
  %540 = vmatpush1.bf16.msra.mxu0 0
  %541 = vmatprep.subr.bf16.mxu0 0
  %542 = vmatpush1.bf16.msra.mxu0 0
  %543 = vmatprep.subr.bf16.mxu0 0
  %544 = vmatpush1.bf16.msra.mxu0 0
  %545 = vmatprep.subr.bf16.mxu0 0
  %546 = vmatpush1.bf16.msra.mxu0 0
  %547 = vmatprep.subr.bf16.mxu0 0
  %548 = vmatpush1.bf16.msra.mxu0 0
  %549 = vmatprep.subr.bf16.mxu0 0
  %550 = vmatpush1.bf16.msra.mxu0 0
  %551 = vmatprep.subr.bf16.mxu0 0
  %552 = vmatpush1.bf16.msra.mxu0 0
  %553 = vmatprep.subr.bf16.mxu0 0
  %554 = vmatpush1.bf16.msra.mxu0 0
  %555 = vmatprep.subr.bf16.mxu0 0
  %556 = vmatpush1.bf16.msra.mxu0 0
  %557 = vmatprep.subr.bf16.mxu0 0
  %558 = vmatpush1.bf16.msra.mxu0 0
  %559 = vmatprep.subr.bf16.mxu0 0
  %560 = vmatpush1.bf16.msra.mxu0 0
  %561 = vmatprep.subr.bf16.mxu0 0
  %562 = vmatpush1.bf16.msra.mxu0 0
  %563 = vmatprep.mubr.bf16.mxu0 0
  %564 = vmatmul.mubr.bf16.gmra.mrb[0].mxu0 %v436
  %v565 = vpop.f32.mrb[0].mxu0
  %v566 = vadd.f32 0.0, %v565
  %v567 = vpop.f32.mrb[0].mxu0
  %v568 = vadd.f32 0.0, %v567
  %v569 = vpop.f32.mrb[0].mxu0
  %v570 = vadd.f32 0.0, %v569
  %v571 = vpop.f32.mrb[0].mxu0
  %v572 = vadd.f32 0.0, %v571
  %573 = vmatprep.mubr.bf16.mxu0 0
  %574 = vmatmul.mubr.bf16.gmra.mrb[0].mxu0 %v439
  %v575 = vpop.f32.mrb[0].mxu0
  %v576 = vadd.f32 0.0, %v575
  %v577 = vpop.f32.mrb[0].mxu0
  %v578 = vadd.f32 0.0, %v577
  %v579 = vpop.f32.mrb[0].mxu0
  %v580 = vadd.f32 0.0, %v579
  %v581 = vpop.f32.mrb[0].mxu0
  %v582 = vadd.f32 0.0, %v581
  %583 = vmatprep.mubr.bf16.mxu0 0
  %584 = vmatmul.mubr.bf16.gmra.mrb[0].mxu0 %v442
  %v585 = vpop.f32.mrb[0].mxu0
  %v586 = vadd.f32 0.0, %v585
  %v587 = vpop.f32.mrb[0].mxu0
  %v588 = vadd.f32 0.0, %v587
  %v589 = vpop.f32.mrb[0].mxu0
  %v590 = vadd.f32 0.0, %v589
  %v591 = vpop.f32.mrb[0].mxu0
  %v592 = vadd.f32 0.0, %v591
  %593 = vmatprep.mubr.bf16.mxu0 0
  %594 = vmatmul.mubr.bf16.gmra.mrb[0].mxu0 %v445
  %v595 = vpop.f32.mrb[0].mxu0
  %v596 = vadd.f32 0.0, %v595
  %v597 = vpop.f32.mrb[0].mxu0
  %v598 = vadd.f32 0.0, %v597
  %v599 = vpop.f32.mrb[0].mxu0
  %v600 = vadd.f32 0.0, %v599
  %v601 = vpop.f32.mrb[0].mxu0
  %v602 = vadd.f32 0.0, %v601
  %603 = vmatprep.mubr.bf16.mxu0 0
  %604 = vmatmul.mubr.bf16.gmra.mrb[0].mxu0 %v448
  %v605 = vpop.f32.mrb[0].mxu0
  %v606 = vadd.f32 0.0, %v605
  %v607 = vpop.f32.mrb[0].mxu0
  %v608 = vadd.f32 0.0, %v607
  %v609 = vpop.f32.mrb[0].mxu0
  %v610 = vadd.f32 0.0, %v609
  %v611 = vpop.f32.mrb[0].mxu0
  %v612 = vadd.f32 0.0, %v611
  %613 = vmatprep.mubr.bf16.mxu0 0
  %614 = vmatmul.mubr.bf16.gmra.mrb[0].mxu0 %v451
  %v615 = vpop.f32.mrb[0].mxu0
  %v616 = vadd.f32 0.0, %v615
  %v617 = vpop.f32.mrb[0].mxu0
  %v618 = vadd.f32 0.0, %v617
  %v619 = vpop.f32.mrb[0].mxu0
  %v620 = vadd.f32 0.0, %v619
  %v621 = vpop.f32.mrb[0].mxu0
  %v622 = vadd.f32 0.0, %v621
  %623 = vmatprep.mubr.bf16.mxu0 0
  %624 = vmatmul.mubr.bf16.gmra.mrb[0].mxu0 %v454
  %v625 = vpop.f32.mrb[0].mxu0
  %v626 = vadd.f32 0.0, %v625
  %v627 = vpop.f32.mrb[0].mxu0
  %v628 = vadd.f32 0.0, %v627
  %v629 = vpop.f32.mrb[0].mxu0
  %v630 = vadd.f32 0.0, %v629
  %v631 = vpop.f32.mrb[0].mxu0
  %v632 = vadd.f32 0.0, %v631
  %633 = vmatprep.mubr.bf16.mxu0 0
  %634 = vmatmul.mubr.bf16.gmra.mrb[0].mxu0 %v457
  %v635 = vpop.f32.mrb[0].mxu0
  %v636 = vadd.f32 0.0, %v635
  %v637 = vpop.f32.mrb[0].mxu0
  %v638 = vadd.f32 0.0, %v637
  %v639 = vpop.f32.mrb[0].mxu0
  %v640 = vadd.f32 0.0, %v639
  %v641 = vpop.f32.mrb[0].mxu0
  %v642 = vadd.f32 0.0, %v641
  %643 = vmatprep.mubr.bf16.mxu0 0
  %644 = vmatmul.mubr.bf16.gmra.mrb[0].mxu0 %v460
  %v645 = vpop.f32.mrb[0].mxu0
  %v646 = vadd.f32 0.0, %v645
  %v647 = vpop.f32.mrb[0].mxu0
  %v648 = vadd.f32 0.0, %v647
  %v649 = vpop.f32.mrb[0].mxu0
  %v650 = vadd.f32 0.0, %v649
  %v651 = vpop.f32.mrb[0].mxu0
  %v652 = vadd.f32 0.0, %v651
  %653 = vmatprep.mubr.bf16.mxu0 0
  %654 = vmatmul.mubr.bf16.gmra.mrb[0].mxu0 %v463
  %v655 = vpop.f32.mrb[0].mxu0
  %v656 = vadd.f32 0.0, %v655
  %v657 = vpop.f32.mrb[0].mxu0
  %v658 = vadd.f32 0.0, %v657
  %v659 = vpop.f32.mrb[0].mxu0
  %v660 = vadd.f32 0.0, %v659
  %v661 = vpop.f32.mrb[0].mxu0
  %v662 = vadd.f32 0.0, %v661
  %663 = vmatprep.mubr.bf16.mxu0 0
  %664 = vmatmul.mubr.bf16.gmra.mrb[0].mxu0 %v466
  %v665 = vpop.f32.mrb[0].mxu0
  %v666 = vadd.f32 0.0, %v665
  %v667 = vpop.f32.mrb[0].mxu0
  %v668 = vadd.f32 0.0, %v667
  %v669 = vpop.f32.mrb[0].mxu0
  %v670 = vadd.f32 0.0, %v669
  %v671 = vpop.f32.mrb[0].mxu0
  %v672 = vadd.f32 0.0, %v671
  %673 = vmatprep.mubr.bf16.mxu0 0
  %674 = vmatmul.mubr.bf16.gmra.mrb[0].mxu0 %v469
  %v675 = vpop.f32.mrb[0].mxu0
  %v676 = vadd.f32 0.0, %v675
  %v677 = vpop.f32.mrb[0].mxu0
  %v678 = vadd.f32 0.0, %v677
  %v679 = vpop.f32.mrb[0].mxu0
  %v680 = vadd.f32 0.0, %v679
  %v681 = vpop.f32.mrb[0].mxu0
  %v682 = vadd.f32 0.0, %v681
  %683 = vmatprep.mubr.bf16.mxu0 0
  %684 = vmatmul.mubr.bf16.gmra.mrb[0].mxu0 %v472
  %v685 = vpop.f32.mrb[0].mxu0
  %v686 = vadd.f32 0.0, %v685
  %v687 = vpop.f32.mrb[0].mxu0
  %v688 = vadd.f32 0.0, %v687
  %v689 = vpop.f32.mrb[0].mxu0
  %v690 = vadd.f32 0.0, %v689
  %v691 = vpop.f32.mrb[0].mxu0
  %v692 = vadd.f32 0.0, %v691
  %693 = vmatprep.mubr.bf16.mxu0 0
  %694 = vmatmul.mubr.bf16.gmra.mrb[0].mxu0 %v475
  %v695 = vpop.f32.mrb[0].mxu0
  %v696 = vadd.f32 0.0, %v695
  %v697 = vpop.f32.mrb[0].mxu0
  %v698 = vadd.f32 0.0, %v697
  %v699 = vpop.f32.mrb[0].mxu0
  %v700 = vadd.f32 0.0, %v699
  %v701 = vpop.f32.mrb[0].mxu0
  %v702 = vadd.f32 0.0, %v701
  %703 = vmatprep.mubr.bf16.mxu0 0
  %704 = vmatmul.mubr.bf16.gmra.mrb[0].mxu0 %v478
  %v705 = vpop.f32.mrb[0].mxu0
  %v706 = vadd.f32 0.0, %v705
  %v707 = vpop.f32.mrb[0].mxu0
  %v708 = vadd.f32 0.0, %v707
  %v709 = vpop.f32.mrb[0].mxu0
  %v710 = vadd.f32 0.0, %v709
  %v711 = vpop.f32.mrb[0].mxu0
  %v712 = vadd.f32 0.0, %v711
  %713 = vmatprep.mubr.bf16.mxu0 0
  %714 = vmatmul.mubr.bf16.gmra.mrb[0].mxu0 %v481
  %v715 = vpop.f32.mrb[0].mxu0
  %v716 = vadd.f32 0.0, %v715
  %v717 = vpop.f32.mrb[0].mxu0
  %v718 = vadd.f32 0.0, %v717
  %v719 = vpop.f32.mrb[0].mxu0
  %v720 = vadd.f32 0.0, %v719
  %v721 = vpop.f32.mrb[0].mxu0
  %v722 = vadd.f32 0.0, %v721
  %723 = vmatprep.mubr.bf16.mxu0 0
  %724 = vmatmul.mubr.bf16.gmra.mrb[0].mxu0 %v484
  %v725 = vpop.f32.mrb[0].mxu0
  %v726 = vadd.f32 0.0, %v725
  %v727 = vpop.f32.mrb[0].mxu0
  %v728 = vadd.f32 0.0, %v727
  %v729 = vpop.f32.mrb[0].mxu0
  %v730 = vadd.f32 0.0, %v729
  %v731 = vpop.f32.mrb[0].mxu0
  %v732 = vadd.f32 0.0, %v731
  %733 = vmatprep.mubr.bf16.mxu0 0
  %734 = vmatmul.mubr.bf16.gmra.mrb[0].mxu0 %v487
  %v735 = vpop.f32.mrb[0].mxu0
  %v736 = vadd.f32 0.0, %v735
  %v737 = vpop.f32.mrb[0].mxu0
  %v738 = vadd.f32 0.0, %v737
  %v739 = vpop.f32.mrb[0].mxu0
  %v740 = vadd.f32 0.0, %v739
  %v741 = vpop.f32.mrb[0].mxu0
  %v742 = vadd.f32 0.0, %v741
  %743 = vmatprep.mubr.bf16.mxu0 0
  %744 = vmatmul.mubr.bf16.gmra.mrb[0].mxu0 %v490
  %v745 = vpop.f32.mrb[0].mxu0
  %v746 = vadd.f32 0.0, %v745
  %v747 = vpop.f32.mrb[0].mxu0
  %v748 = vadd.f32 0.0, %v747
  %v749 = vpop.f32.mrb[0].mxu0
  %v750 = vadd.f32 0.0, %v749
  %v751 = vpop.f32.mrb[0].mxu0
  %v752 = vadd.f32 0.0, %v751
  %753 = vmatprep.mubr.bf16.mxu0 0
  %754 = vmatmul.mubr.bf16.gmra.mrb[0].mxu0 %v493
  %v755 = vpop.f32.mrb[0].mxu0
  %v756 = vadd.f32 0.0, %v755
  %v757 = vpop.f32.mrb[0].mxu0
  %v758 = vadd.f32 0.0, %v757
  %v759 = vpop.f32.mrb[0].mxu0
  %v760 = vadd.f32 0.0, %v759
  %v761 = vpop.f32.mrb[0].mxu0
  %v762 = vadd.f32 0.0, %v761
  %763 = vmatprep.mubr.bf16.mxu0 0
  %764 = vmatmul.mubr.bf16.gmra.mrb[0].mxu0 %v496
  %v765 = vpop.f32.mrb[0].mxu0
  %v766 = vadd.f32 0.0, %v765
  %v767 = vpop.f32.mrb[0].mxu0
  %v768 = vadd.f32 0.0, %v767
  %v769 = vpop.f32.mrb[0].mxu0
  %v770 = vadd.f32 0.0, %v769
  %v771 = vpop.f32.mrb[0].mxu0
  %v772 = vadd.f32 0.0, %v771
  %773 = vmatprep.mubr.bf16.mxu0 0
  %774 = vmatmul.mubr.bf16.gmra.mrb[0].mxu0 %v499
  %v775 = vpop.f32.mrb[0].mxu0
  %v776 = vadd.f32 0.0, %v775
  %v777 = vpop.f32.mrb[0].mxu0
  %v778 = vadd.f32 0.0, %v777
  %v779 = vpop.f32.mrb[0].mxu0
  %v780 = vadd.f32 0.0, %v779
  %v781 = vpop.f32.mrb[0].mxu0
  %v782 = vadd.f32 0.0, %v781
  %783 = vmatprep.mubr.bf16.mxu0 0
  %784 = vmatmul.mubr.bf16.gmra.mrb[0].mxu0 %v502
  %v785 = vpop.f32.mrb[0].mxu0
  %v786 = vadd.f32 0.0, %v785
  %v787 = vpop.f32.mrb[0].mxu0
  %v788 = vadd.f32 0.0, %v787
  %v789 = vpop.f32.mrb[0].mxu0
  %v790 = vadd.f32 0.0, %v789
  %v791 = vpop.f32.mrb[0].mxu0
  %v792 = vadd.f32 0.0, %v791
  %793 = vmatprep.mubr.bf16.mxu0 0
  %794 = vmatmul.mubr.bf16.gmra.mrb[0].mxu0 %v505
  %v795 = vpop.f32.mrb[0].mxu0
  %v796 = vadd.f32 0.0, %v795
  %v797 = vpop.f32.mrb[0].mxu0
  %v798 = vadd.f32 0.0, %v797
  %v799 = vpop.f32.mrb[0].mxu0
  %v800 = vadd.f32 0.0, %v799
  %v801 = vpop.f32.mrb[0].mxu0
  %v802 = vadd.f32 0.0, %v801
  %803 = vmatprep.mubr.bf16.mxu0 0
  %804 = vmatmul.mubr.bf16.gmra.mrb[0].mxu0 %v508
  %v805 = vpop.f32.mrb[0].mxu0
  %v806 = vadd.f32 0.0, %v805
  %v807 = vpop.f32.mrb[0].mxu0
  %v808 = vadd.f32 0.0, %v807
  %v809 = vpop.f32.mrb[0].mxu0
  %v810 = vadd.f32 0.0, %v809
  %v811 = vpop.f32.mrb[0].mxu0
  %v812 = vadd.f32 0.0, %v811
  %813 = vmatprep.mubr.bf16.mxu0 0
  %814 = vmatmul.mubr.bf16.gmra.mrb[0].mxu0 %v511
  %v815 = vpop.f32.mrb[0].mxu0
  %v816 = vadd.f32 0.0, %v815
  %v817 = vpop.f32.mrb[0].mxu0
  %v818 = vadd.f32 0.0, %v817
  %v819 = vpop.f32.mrb[0].mxu0
  %v820 = vadd.f32 0.0, %v819
  %v821 = vpop.f32.mrb[0].mxu0
  %v822 = vadd.f32 0.0, %v821
  %823 = vmatprep.mubr.bf16.mxu0 0
  %824 = vmatmul.mubr.bf16.gmra.mrb[0].mxu0 %v514
  %v825 = vpop.f32.mrb[0].mxu0
  %v826 = vadd.f32 0.0, %v825
  %v827 = vpop.f32.mrb[0].mxu0
  %v828 = vadd.f32 0.0, %v827
  %v829 = vpop.f32.mrb[0].mxu0
  %v830 = vadd.f32 0.0, %v829
  %v831 = vpop.f32.mrb[0].mxu0
  %v832 = vadd.f32 0.0, %v831
  %833 = vmatprep.mubr.bf16.mxu0 0
  %834 = vmatmul.mubr.bf16.gmra.mrb[0].mxu0 %v517
  %v835 = vpop.f32.mrb[0].mxu0
  %v836 = vadd.f32 0.0, %v835
  %v837 = vpop.f32.mrb[0].mxu0
  %v838 = vadd.f32 0.0, %v837
  %v839 = vpop.f32.mrb[0].mxu0
  %v840 = vadd.f32 0.0, %v839
  %v841 = vpop.f32.mrb[0].mxu0
  %v842 = vadd.f32 0.0, %v841
  %843 = vmatprep.mubr.bf16.mxu0 0
  %844 = vmatmul.mubr.bf16.gmra.mrb[0].mxu0 %v520
  %v845 = vpop.f32.mrb[0].mxu0
  %v846 = vadd.f32 0.0, %v845
  %v847 = vpop.f32.mrb[0].mxu0
  %v848 = vadd.f32 0.0, %v847
  %v849 = vpop.f32.mrb[0].mxu0
  %v850 = vadd.f32 0.0, %v849
  %v851 = vpop.f32.mrb[0].mxu0
  %v852 = vadd.f32 0.0, %v851
  %853 = vmatprep.mubr.bf16.mxu0 0
  %854 = vmatmul.mubr.bf16.gmra.mrb[0].mxu0 %v523
  %v855 = vpop.f32.mrb[0].mxu0
  %v856 = vadd.f32 0.0, %v855
  %v857 = vpop.f32.mrb[0].mxu0
  %v858 = vadd.f32 0.0, %v857
  %v859 = vpop.f32.mrb[0].mxu0
  %v860 = vadd.f32 0.0, %v859
  %v861 = vpop.f32.mrb[0].mxu0
  %v862 = vadd.f32 0.0, %v861
  %863 = vmatprep.mubr.bf16.mxu0 0
  %864 = vmatmul.mubr.bf16.gmra.mrb[0].mxu0 %v526
  %v865 = vpop.f32.mrb[0].mxu0
  %v866 = vadd.f32 0.0, %v865
  %v867 = vpop.f32.mrb[0].mxu0
  %v868 = vadd.f32 0.0, %v867
  %v869 = vpop.f32.mrb[0].mxu0
  %v870 = vadd.f32 0.0, %v869
  %v871 = vpop.f32.mrb[0].mxu0
  %v872 = vadd.f32 0.0, %v871
  %873 = vmatprep.mubr.bf16.mxu0 0
  %874 = vmatmul.mubr.bf16.gmra.mrb[0].mxu0 %v529
  %v875 = vpop.f32.mrb[0].mxu0
  %v876 = vadd.f32 0.0, %v875
  %v877 = vpop.f32.mrb[0].mxu0
  %v878 = vadd.f32 0.0, %v877
  %v879 = vpop.f32.mrb[0].mxu0
  %v880 = vadd.f32 0.0, %v879
  %v881 = vpop.f32.mrb[0].mxu0
  %v882 = vadd.f32 0.0, %v881
  %883 = vdwg.mxu0
  %v884 = vpack.c.bf16 %v570, %v566
  %v885 = vpack.c.bf16 %v572, %v568
  %v886 = vpack.c.bf16 %v580, %v576
  %v887 = vpack.c.bf16 %v582, %v578
  %v888 = vpack.c.bf16 %v590, %v586
  %v889 = vpack.c.bf16 %v592, %v588
  %v890 = vpack.c.bf16 %v600, %v596
  %v891 = vpack.c.bf16 %v602, %v598
  %v892 = vpack.c.bf16 %v610, %v606
  %v893 = vpack.c.bf16 %v612, %v608
  %v894 = vpack.c.bf16 %v620, %v616
  %v895 = vpack.c.bf16 %v622, %v618
  %v896 = vpack.c.bf16 %v630, %v626
  %v897 = vpack.c.bf16 %v632, %v628
  %v898 = vpack.c.bf16 %v640, %v636
  %v899 = vpack.c.bf16 %v642, %v638
  %v900 = vpack.c.bf16 %v650, %v646
  %v901 = vpack.c.bf16 %v652, %v648
  %v902 = vpack.c.bf16 %v660, %v656
  %v903 = vpack.c.bf16 %v662, %v658
  %v904 = vpack.c.bf16 %v670, %v666
  %v905 = vpack.c.bf16 %v672, %v668
  %v906 = vpack.c.bf16 %v680, %v676
  %v907 = vpack.c.bf16 %v682, %v678
  %v908 = vpack.c.bf16 %v690, %v686
  %v909 = vpack.c.bf16 %v692, %v688
  %v910 = vpack.c.bf16 %v700, %v696
  %v911 = vpack.c.bf16 %v702, %v698
  %v912 = vpack.c.bf16 %v710, %v706
  %v913 = vpack.c.bf16 %v712, %v708
  %v914 = vpack.c.bf16 %v720, %v716
  %v915 = vpack.c.bf16 %v722, %v718
  %v916 = vpack.c.bf16 %v730, %v726
  %v917 = vpack.c.bf16 %v732, %v728
  %v918 = vpack.c.bf16 %v740, %v736
  %v919 = vpack.c.bf16 %v742, %v738
  %v920 = vpack.c.bf16 %v750, %v746
  %v921 = vpack.c.bf16 %v752, %v748
  %v922 = vpack.c.bf16 %v760, %v756
  %v923 = vpack.c.bf16 %v762, %v758
  %v924 = vpack.c.bf16 %v770, %v766
  %v925 = vpack.c.bf16 %v772, %v768
  %v926 = vpack.c.bf16 %v780, %v776
  %v927 = vpack.c.bf16 %v782, %v778
  %v928 = vpack.c.bf16 %v790, %v786
  %v929 = vpack.c.bf16 %v792, %v788
  %v930 = vpack.c.bf16 %v800, %v796
  %v931 = vpack.c.bf16 %v802, %v798
  %v932 = vpack.c.bf16 %v810, %v806
  %v933 = vpack.c.bf16 %v812, %v808
  %v934 = vpack.c.bf16 %v820, %v816
  %v935 = vpack.c.bf16 %v822, %v818
  %v936 = vpack.c.bf16 %v830, %v826
  %v937 = vpack.c.bf16 %v832, %v828
  %v938 = vpack.c.bf16 %v840, %v836
  %v939 = vpack.c.bf16 %v842, %v838
  %v940 = vpack.c.bf16 %v850, %v846
  %v941 = vpack.c.bf16 %v852, %v848
  %v942 = vpack.c.bf16 %v860, %v856
  %v943 = vpack.c.bf16 %v862, %v858
  %v944 = vpack.c.bf16 %v870, %v866
  %v945 = vpack.c.bf16 %v872, %v868
  %v946 = vpack.c.bf16 %v880, %v876
  %v947 = vpack.c.bf16 %v882, %v878
  %v1012 = vunpack.c.l.b16 %v884
  %v1013 = vunpack.c.l.b16 %v885
  %v1014 = vunpack.c.h.b16 %v884
  %v1015 = vunpack.c.h.b16 %v885
  %v1016 = vunpack.c.l.b16 %v886
  %v1017 = vunpack.c.l.b16 %v887
  %v1018 = vunpack.c.h.b16 %v886
  %v1019 = vunpack.c.h.b16 %v887
  %v1020 = vunpack.c.l.b16 %v888
  %v1021 = vunpack.c.l.b16 %v889
  %v1022 = vunpack.c.h.b16 %v888
  %v1023 = vunpack.c.h.b16 %v889
  %v1024 = vunpack.c.l.b16 %v890
  %v1025 = vunpack.c.l.b16 %v891
  %v1026 = vunpack.c.h.b16 %v890
  %v1027 = vunpack.c.h.b16 %v891
  %v1028 = vunpack.c.l.b16 %v892
  %v1029 = vunpack.c.l.b16 %v893
  %v1030 = vunpack.c.h.b16 %v892
  %v1031 = vunpack.c.h.b16 %v893
  %v1032 = vunpack.c.l.b16 %v894
  %v1033 = vunpack.c.l.b16 %v895
  %v1034 = vunpack.c.h.b16 %v894
  %v1035 = vunpack.c.h.b16 %v895
  %v1036 = vunpack.c.l.b16 %v896
  %v1037 = vunpack.c.l.b16 %v897
  %v1038 = vunpack.c.h.b16 %v896
  %v1039 = vunpack.c.h.b16 %v897
  %v1040 = vunpack.c.l.b16 %v898
  %v1041 = vunpack.c.l.b16 %v899
  %v1042 = vunpack.c.h.b16 %v898
  %v1043 = vunpack.c.h.b16 %v899
  %v1044 = vunpack.c.l.b16 %v900
  %v1045 = vunpack.c.l.b16 %v901
  %v1046 = vunpack.c.h.b16 %v900
  %v1047 = vunpack.c.h.b16 %v901
  %v1048 = vunpack.c.l.b16 %v902
  %v1049 = vunpack.c.l.b16 %v903
  %v1050 = vunpack.c.h.b16 %v902
  %v1051 = vunpack.c.h.b16 %v903
  %v1052 = vunpack.c.l.b16 %v904
  %v1053 = vunpack.c.l.b16 %v905
  %v1054 = vunpack.c.h.b16 %v904
  %v1055 = vunpack.c.h.b16 %v905
  %v1056 = vunpack.c.l.b16 %v906
  %v1057 = vunpack.c.l.b16 %v907
  %v1058 = vunpack.c.h.b16 %v906
  %v1059 = vunpack.c.h.b16 %v907
  %v1060 = vunpack.c.l.b16 %v908
  %v1061 = vunpack.c.l.b16 %v909
  %v1062 = vunpack.c.h.b16 %v908
  %v1063 = vunpack.c.h.b16 %v909
  %v1064 = vunpack.c.l.b16 %v910
  %v1065 = vunpack.c.l.b16 %v911
  %v1066 = vunpack.c.h.b16 %v910
  %v1067 = vunpack.c.h.b16 %v911
  %v1068 = vunpack.c.l.b16 %v912
  %v1069 = vunpack.c.l.b16 %v913
  %v1070 = vunpack.c.h.b16 %v912
  %v1071 = vunpack.c.h.b16 %v913
  %v1072 = vunpack.c.l.b16 %v914
  %v1073 = vunpack.c.l.b16 %v915
  %v1074 = vunpack.c.h.b16 %v914
  %v1075 = vunpack.c.h.b16 %v915
  %v1076 = vunpack.c.l.b16 %v916
  %v1077 = vunpack.c.l.b16 %v917
  %v1078 = vunpack.c.h.b16 %v916
  %v1079 = vunpack.c.h.b16 %v917
  %v1080 = vunpack.c.l.b16 %v918
  %v1081 = vunpack.c.l.b16 %v919
  %v1082 = vunpack.c.h.b16 %v918
  %v1083 = vunpack.c.h.b16 %v919
  %v1084 = vunpack.c.l.b16 %v920
  %v1085 = vunpack.c.l.b16 %v921
  %v1086 = vunpack.c.h.b16 %v920
  %v1087 = vunpack.c.h.b16 %v921
  %v1088 = vunpack.c.l.b16 %v922
  %v1089 = vunpack.c.l.b16 %v923
  %v1090 = vunpack.c.h.b16 %v922
  %v1091 = vunpack.c.h.b16 %v923
  %v1092 = vunpack.c.l.b16 %v924
  %v1093 = vunpack.c.l.b16 %v925
  %v1094 = vunpack.c.h.b16 %v924
  %v1095 = vunpack.c.h.b16 %v925
  %v1096 = vunpack.c.l.b16 %v926
  %v1097 = vunpack.c.l.b16 %v927
  %v1098 = vunpack.c.h.b16 %v926
  %v1099 = vunpack.c.h.b16 %v927
  %v1100 = vunpack.c.l.b16 %v928
  %v1101 = vunpack.c.l.b16 %v929
  %v1102 = vunpack.c.h.b16 %v928
  %v1103 = vunpack.c.h.b16 %v929
  %v1104 = vunpack.c.l.b16 %v930
  %v1105 = vunpack.c.l.b16 %v931
  %v1106 = vunpack.c.h.b16 %v930
  %v1107 = vunpack.c.h.b16 %v931
  %v1108 = vunpack.c.l.b16 %v932
  %v1109 = vunpack.c.l.b16 %v933
  %v1110 = vunpack.c.h.b16 %v932
  %v1111 = vunpack.c.h.b16 %v933
  %v1112 = vunpack.c.l.b16 %v934
  %v1113 = vunpack.c.l.b16 %v935
  %v1114 = vunpack.c.h.b16 %v934
  %v1115 = vunpack.c.h.b16 %v935
  %v1116 = vunpack.c.l.b16 %v936
  %v1117 = vunpack.c.l.b16 %v937
  %v1118 = vunpack.c.h.b16 %v936
  %v1119 = vunpack.c.h.b16 %v937
  %v1120 = vunpack.c.l.b16 %v938
  %v1121 = vunpack.c.l.b16 %v939
  %v1122 = vunpack.c.h.b16 %v938
  %v1123 = vunpack.c.h.b16 %v939
  %v1124 = vunpack.c.l.b16 %v940
  %v1125 = vunpack.c.l.b16 %v941
  %v1126 = vunpack.c.h.b16 %v940
  %v1127 = vunpack.c.h.b16 %v941
  %v1128 = vunpack.c.l.b16 %v942
  %v1129 = vunpack.c.l.b16 %v943
  %v1130 = vunpack.c.h.b16 %v942
  %v1131 = vunpack.c.h.b16 %v943
  %v1132 = vunpack.c.l.b16 %v944
  %v1133 = vunpack.c.l.b16 %v945
  %v1134 = vunpack.c.h.b16 %v944
  %v1135 = vunpack.c.h.b16 %v945
  %v1136 = vunpack.c.l.b16 %v946
  %v1137 = vunpack.c.l.b16 %v947
  %v1138 = vunpack.c.h.b16 %v946
  %v1139 = vunpack.c.h.b16 %v947
  %v1140 = vpack.c.b16 %v1013, %v1012
  %v1141 = vpack.c.b16 %v1015, %v1014
  %v1142 = vpack.c.b16 %v1017, %v1016
  %v1143 = vpack.c.b16 %v1019, %v1018
  %v1144 = vpack.c.b16 %v1021, %v1020
  %v1145 = vpack.c.b16 %v1023, %v1022
  %v1146 = vpack.c.b16 %v1025, %v1024
  %v1147 = vpack.c.b16 %v1027, %v1026
  %v1148 = vpack.c.b16 %v1029, %v1028
  %v1149 = vpack.c.b16 %v1031, %v1030
  %v1150 = vpack.c.b16 %v1033, %v1032
  %v1151 = vpack.c.b16 %v1035, %v1034
  %v1152 = vpack.c.b16 %v1037, %v1036
  %v1153 = vpack.c.b16 %v1039, %v1038
  %v1154 = vpack.c.b16 %v1041, %v1040
  %v1155 = vpack.c.b16 %v1043, %v1042
  %v1156 = vpack.c.b16 %v1045, %v1044
  %v1157 = vpack.c.b16 %v1047, %v1046
  %v1158 = vpack.c.b16 %v1049, %v1048
  %v1159 = vpack.c.b16 %v1051, %v1050
  %v1160 = vpack.c.b16 %v1053, %v1052
  %v1161 = vpack.c.b16 %v1055, %v1054
  %v1162 = vpack.c.b16 %v1057, %v1056
  %v1163 = vpack.c.b16 %v1059, %v1058
  %v1164 = vpack.c.b16 %v1061, %v1060
  %v1165 = vpack.c.b16 %v1063, %v1062
  %v1166 = vpack.c.b16 %v1065, %v1064
  %v1167 = vpack.c.b16 %v1067, %v1066
  %v1168 = vpack.c.b16 %v1069, %v1068
  %v1169 = vpack.c.b16 %v1071, %v1070
  %v1170 = vpack.c.b16 %v1073, %v1072
  %v1171 = vpack.c.b16 %v1075, %v1074
  %v1172 = vpack.c.b16 %v1077, %v1076
  %v1173 = vpack.c.b16 %v1079, %v1078
  %v1174 = vpack.c.b16 %v1081, %v1080
  %v1175 = vpack.c.b16 %v1083, %v1082
  %v1176 = vpack.c.b16 %v1085, %v1084
  %v1177 = vpack.c.b16 %v1087, %v1086
  %v1178 = vpack.c.b16 %v1089, %v1088
  %v1179 = vpack.c.b16 %v1091, %v1090
  %v1180 = vpack.c.b16 %v1093, %v1092
  %v1181 = vpack.c.b16 %v1095, %v1094
  %v1182 = vpack.c.b16 %v1097, %v1096
  %v1183 = vpack.c.b16 %v1099, %v1098
  %v1184 = vpack.c.b16 %v1101, %v1100
  %v1185 = vpack.c.b16 %v1103, %v1102
  %v1186 = vpack.c.b16 %v1105, %v1104
  %v1187 = vpack.c.b16 %v1107, %v1106
  %v1188 = vpack.c.b16 %v1109, %v1108
  %v1189 = vpack.c.b16 %v1111, %v1110
  %v1190 = vpack.c.b16 %v1113, %v1112
  %v1191 = vpack.c.b16 %v1115, %v1114
  %v1192 = vpack.c.b16 %v1117, %v1116
  %v1193 = vpack.c.b16 %v1119, %v1118
  %v1194 = vpack.c.b16 %v1121, %v1120
  %v1195 = vpack.c.b16 %v1123, %v1122
  %v1196 = vpack.c.b16 %v1125, %v1124
  %v1197 = vpack.c.b16 %v1127, %v1126
  %v1198 = vpack.c.b16 %v1129, %v1128
  %v1199 = vpack.c.b16 %v1131, %v1130
  %v1200 = vpack.c.b16 %v1133, %v1132
  %v1201 = vpack.c.b16 %v1135, %v1134
  %v1202 = vpack.c.b16 %v1137, %v1136
  %v1203 = vpack.c.b16 %v1139, %v1138
  %1268 = vst [vmem:[%s4] sm:$0xff] %v1140
  %1269 = vst [vmem:[%s4 + $0x8] sm:$0xff] %v1141
  %1270 = vst [vmem:[%s4 + $0x10] sm:$0xff] %v1142
  %1271 = vst [vmem:[%s4 + $0x18] sm:$0xff] %v1143
  %1272 = vst [vmem:[%s4 + $0x20] sm:$0xff] %v1144
  %1273 = vst [vmem:[%s4 + $0x28] sm:$0xff] %v1145
  %1274 = vst [vmem:[%s4 + $0x30] sm:$0xff] %v1146
  %1275 = vst [vmem:[%s4 + $0x38] sm:$0xff] %v1147
  %1276 = vst [vmem:[%s4 + $0x40] sm:$0xff] %v1148
  %1277 = vst [vmem:[%s4 + $0x48] sm:$0xff] %v1149
  %1278 = vst [vmem:[%s4 + $0x50] sm:$0xff] %v1150
  %1279 = vst [vmem:[%s4 + $0x58] sm:$0xff] %v1151
  %1280 = vst [vmem:[%s4 + $0x60] sm:$0xff] %v1152
  %1281 = vst [vmem:[%s4 + $0x68] sm:$0xff] %v1153
  %1282 = vst [vmem:[%s4 + $0x70] sm:$0xff] %v1154
  %1283 = vst [vmem:[%s4 + $0x78] sm:$0xff] %v1155
  %1284 = vst [vmem:[%s4 + $0x80] sm:$0xff] %v1156
  %1285 = vst [vmem:[%s4 + $0x88] sm:$0xff] %v1157
  %1286 = vst [vmem:[%s4 + $0x90] sm:$0xff] %v1158
  %1287 = vst [vmem:[%s4 + $0x98] sm:$0xff] %v1159
  %1288 = vst [vmem:[%s4 + $0xa0] sm:$0xff] %v1160
  %1289 = vst [vmem:[%s4 + $0xa8] sm:$0xff] %v1161
  %1290 = vst [vmem:[%s4 + $0xb0] sm:$0xff] %v1162
  %1291 = vst [vmem:[%s4 + $0xb8] sm:$0xff] %v1163
  %1292 = vst [vmem:[%s4 + $0xc0] sm:$0xff] %v1164
  %1293 = vst [vmem:[%s4 + $0xc8] sm:$0xff] %v1165
  %1294 = vst [vmem:[%s4 + $0xd0] sm:$0xff] %v1166
  %1295 = vst [vmem:[%s4 + $0xd8] sm:$0xff] %v1167
  %1296 = vst [vmem:[%s4 + $0xe0] sm:$0xff] %v1168
  %1297 = vst [vmem:[%s4 + $0xe8] sm:$0xff] %v1169
  %1298 = vst [vmem:[%s4 + $0xf0] sm:$0xff] %v1170
  %1299 = vst [vmem:[%s4 + $0xf8] sm:$0xff] %v1171
  %1300 = vst [vmem:[%s4 + $0x100] sm:$0xff] %v1172
  %1301 = vst [vmem:[%s4 + $0x108] sm:$0xff] %v1173
  %1302 = vst [vmem:[%s4 + $0x110] sm:$0xff] %v1174
  %1303 = vst [vmem:[%s4 + $0x118] sm:$0xff] %v1175
  %1304 = vst [vmem:[%s4 + $0x120] sm:$0xff] %v1176
  %1305 = vst [vmem:[%s4 + $0x128] sm:$0xff] %v1177
  %1306 = vst [vmem:[%s4 + $0x130] sm:$0xff] %v1178
  %1307 = vst [vmem:[%s4 + $0x138] sm:$0xff] %v1179
  %1308 = vst [vmem:[%s4 + $0x140] sm:$0xff] %v1180
  %1309 = vst [vmem:[%s4 + $0x148] sm:$0xff] %v1181
  %1310 = vst [vmem:[%s4 + $0x150] sm:$0xff] %v1182
  %1311 = vst [vmem:[%s4 + $0x158] sm:$0xff] %v1183
  %1312 = vst [vmem:[%s4 + $0x160] sm:$0xff] %v1184
  %1313 = vst [vmem:[%s4 + $0x168] sm:$0xff] %v1185
  %1314 = vst [vmem:[%s4 + $0x170] sm:$0xff] %v1186
  %1315 = vst [vmem:[%s4 + $0x178] sm:$0xff] %v1187
  %1316 = vst [vmem:[%s4 + $0x180] sm:$0xff] %v1188
  %1317 = vst [vmem:[%s4 + $0x188] sm:$0xff] %v1189
  %1318 = vst [vmem:[%s4 + $0x190] sm:$0xff] %v1190
  %1319 = vst [vmem:[%s4 + $0x198] sm:$0xff] %v1191
  %1320 = vst [vmem:[%s4 + $0x1a0] sm:$0xff] %v1192
  %1321 = vst [vmem:[%s4 + $0x1a8] sm:$0xff] %v1193
  %1322 = vst [vmem:[%s4 + $0x1b0] sm:$0xff] %v1194
  %1323 = vst [vmem:[%s4 + $0x1b8] sm:$0xff] %v1195
  %1324 = vst [vmem:[%s4 + $0x1c0] sm:$0xff] %v1196
  %1325 = vst [vmem:[%s4 + $0x1c8] sm:$0xff] %v1197
  %1326 = vst [vmem:[%s4 + $0x1d0] sm:$0xff] %v1198
  %1327 = vst [vmem:[%s4 + $0x1d8] sm:$0xff] %v1199
  %1328 = vst [vmem:[%s4 + $0x1e0] sm:$0xff] %v1200
  %1329 = vst [vmem:[%s4 + $0x1e8] sm:$0xff] %v1201
  %1330 = vst [vmem:[%s4 + $0x1f0] sm:$0xff] %v1202
  %1331 = vst [vmem:[%s4 + $0x1f8] sm:$0xff] %v1203
  %p1332 = scmp.eq.s32.totalorder 0, 0
  // Predicated region
  $region18: #{bottleneck_forward.6} parent=0 // pred_check
    %p1333 = pneg %p1332
  $region19: #{bottleneck_forward.6} parent=0 // pred_check_branch
    %1335 = sbr.rel (%p1333) target = $region21
  $region20: #{bottleneck_forward.6} parent=0 // pred_region
    %1336 = vst [vmem:[%s5] sm:$0xff] 0.0
    %1337 = vst [vmem:[%s5 + $0x8] sm:$0xff] 0.0
  $region21: #{bottleneck_forward.6} parent=0 // pred_fallthru
    _
  %v1338 = vld [vmem:[%s5] sm:$0xff]
  %v1339 = vld [vmem:[%s5 + $0x8] sm:$0xff]
  %v1340 = vadd.f32 %v566, %v570
  %v1341 = vadd.f32 %v1340, %v576
  %v1342 = vadd.f32 %v1341, %v580
  %v1343 = vadd.f32 %v1342, %v586
  %v1344 = vadd.f32 %v1343, %v590
  %v1345 = vadd.f32 %v1344, %v596
  %v1346 = vadd.f32 %v1345, %v600
  %v1347 = vadd.f32 %v1346, %v606
  %v1348 = vadd.f32 %v1347, %v610
  %v1349 = vadd.f32 %v1348, %v616
  %v1350 = vadd.f32 %v1349, %v620
  %v1351 = vadd.f32 %v1350, %v626
  %v1352 = vadd.f32 %v1351, %v630
  %v1353 = vadd.f32 %v1352, %v636
  %v1354 = vadd.f32 %v1353, %v640
  %v1355 = vadd.f32 %v1354, %v646
  %v1356 = vadd.f32 %v1355, %v650
  %v1357 = vadd.f32 %v1356, %v656
  %v1358 = vadd.f32 %v1357, %v660
  %v1359 = vadd.f32 %v1358, %v666
  %v1360 = vadd.f32 %v1359, %v670
  %v1361 = vadd.f32 %v1360, %v676
  %v1362 = vadd.f32 %v1361, %v680
  %v1363 = vadd.f32 %v1362, %v686
  %v1364 = vadd.f32 %v1363, %v690
  %v1365 = vadd.f32 %v1364, %v696
  %v1366 = vadd.f32 %v1365, %v700
  %v1367 = vadd.f32 %v1366, %v706
  %v1368 = vadd.f32 %v1367, %v710
  %v1369 = vadd.f32 %v1368, %v716
  %v1370 = vadd.f32 %v1369, %v720
  %v1371 = vadd.f32 %v1370, %v726
  %v1372 = vadd.f32 %v1371, %v730
  %v1373 = vadd.f32 %v1372, %v736
  %v1374 = vadd.f32 %v1373, %v740
  %v1375 = vadd.f32 %v1374, %v746
  %v1376 = vadd.f32 %v1375, %v750
  %v1377 = vadd.f32 %v1376, %v756
  %v1378 = vadd.f32 %v1377, %v760
  %v1379 = vadd.f32 %v1378, %v766
  %v1380 = vadd.f32 %v1379, %v770
  %v1381 = vadd.f32 %v1380, %v776
  %v1382 = vadd.f32 %v1381, %v780
  %v1383 = vadd.f32 %v1382, %v786
  %v1384 = vadd.f32 %v1383, %v790
  %v1385 = vadd.f32 %v1384, %v796
  %v1386 = vadd.f32 %v1385, %v800
  %v1387 = vadd.f32 %v1386, %v806
  %v1388 = vadd.f32 %v1387, %v810
  %v1389 = vadd.f32 %v1388, %v816
  %v1390 = vadd.f32 %v1389, %v820
  %v1391 = vadd.f32 %v1390, %v826
  %v1392 = vadd.f32 %v1391, %v830
  %v1393 = vadd.f32 %v1392, %v836
  %v1394 = vadd.f32 %v1393, %v840
  %v1395 = vadd.f32 %v1394, %v846
  %v1396 = vadd.f32 %v1395, %v850
  %v1397 = vadd.f32 %v1396, %v856
  %v1398 = vadd.f32 %v1397, %v860
  %v1399 = vadd.f32 %v1398, %v866
  %v1400 = vadd.f32 %v1399, %v870
  %v1401 = vadd.f32 %v1400, %v876
  %v1402 = vadd.f32 %v1401, %v880
  %v1403 = vrot.slane %v1402, 4
  %v1404 = vadd.f32 %v1402, %v1403
  %v1405 = vrot.slane %v1404, 2
  %v1406 = vadd.f32 %v1404, %v1405
  %v1407 = vrot.slane %v1406, 1
  %v1408 = vadd.f32 %v1406, %v1407
  %v1409 = vadd.f32 %v568, %v572
  %v1410 = vadd.f32 %v1409, %v578
  %v1411 = vadd.f32 %v1410, %v582
  %v1412 = vadd.f32 %v1411, %v588
  %v1413 = vadd.f32 %v1412, %v592
  %v1414 = vadd.f32 %v1413, %v598
  %v1415 = vadd.f32 %v1414, %v602
  %v1416 = vadd.f32 %v1415, %v608
  %v1417 = vadd.f32 %v1416, %v612
  %v1418 = vadd.f32 %v1417, %v618
  %v1419 = vadd.f32 %v1418, %v622
  %v1420 = vadd.f32 %v1419, %v628
  %v1421 = vadd.f32 %v1420, %v632
  %v1422 = vadd.f32 %v1421, %v638
  %v1423 = vadd.f32 %v1422, %v642
  %v1424 = vadd.f32 %v1423, %v648
  %v1425 = vadd.f32 %v1424, %v652
  %v1426 = vadd.f32 %v1425, %v658
  %v1427 = vadd.f32 %v1426, %v662
  %v1428 = vadd.f32 %v1427, %v668
  %v1429 = vadd.f32 %v1428, %v672
  %v1430 = vadd.f32 %v1429, %v678
  %v1431 = vadd.f32 %v1430, %v682
  %v1432 = vadd.f32 %v1431, %v688
  %v1433 = vadd.f32 %v1432, %v692
  %v1434 = vadd.f32 %v1433, %v698
  %v1435 = vadd.f32 %v1434, %v702
  %v1436 = vadd.f32 %v1435, %v708
  %v1437 = vadd.f32 %v1436, %v712
  %v1438 = vadd.f32 %v1437, %v718
  %v1439 = vadd.f32 %v1438, %v722
  %v1440 = vadd.f32 %v1439, %v728
  %v1441 = vadd.f32 %v1440, %v732
  %v1442 = vadd.f32 %v1441, %v738
  %v1443 = vadd.f32 %v1442, %v742
  %v1444 = vadd.f32 %v1443, %v748
  %v1445 = vadd.f32 %v1444, %v752
  %v1446 = vadd.f32 %v1445, %v758
  %v1447 = vadd.f32 %v1446, %v762
  %v1448 = vadd.f32 %v1447, %v768
  %v1449 = vadd.f32 %v1448, %v772
  %v1450 = vadd.f32 %v1449, %v778
  %v1451 = vadd.f32 %v1450, %v782
  %v1452 = vadd.f32 %v1451, %v788
  %v1453 = vadd.f32 %v1452, %v792
  %v1454 = vadd.f32 %v1453, %v798
  %v1455 = vadd.f32 %v1454, %v802
  %v1456 = vadd.f32 %v1455, %v808
  %v1457 = vadd.f32 %v1456, %v812
  %v1458 = vadd.f32 %v1457, %v818
  %v1459 = vadd.f32 %v1458, %v822
  %v1460 = vadd.f32 %v1459, %v828
  %v1461 = vadd.f32 %v1460, %v832
  %v1462 = vadd.f32 %v1461, %v838
  %v1463 = vadd.f32 %v1462, %v842
  %v1464 = vadd.f32 %v1463, %v848
  %v1465 = vadd.f32 %v1464, %v852
  %v1466 = vadd.f32 %v1465, %v858
  %v1467 = vadd.f32 %v1466, %v862
  %v1468 = vadd.f32 %v1467, %v868
  %v1469 = vadd.f32 %v1468, %v872
  %v1470 = vadd.f32 %v1469, %v878
  %v1471 = vadd.f32 %v1470, %v882
  %v1472 = vrot.slane %v1471, 4
  %v1473 = vadd.f32 %v1471, %v1472
  %v1474 = vrot.slane %v1473, 2
  %v1475 = vadd.f32 %v1473, %v1474
  %v1476 = vrot.slane %v1475, 1
  %v1477 = vadd.f32 %v1475, %v1476
  %v1478 = vmul.f32 %v566, %v566
  %v1479 = vmul.f32 %v568, %v568
  %v1480 = vmul.f32 %v570, %v570
  %v1481 = vmul.f32 %v572, %v572
  %v1482 = vmul.f32 %v576, %v576
  %v1483 = vmul.f32 %v578, %v578
  %v1484 = vmul.f32 %v580, %v580
  %v1485 = vmul.f32 %v582, %v582
  %v1486 = vmul.f32 %v586, %v586
  %v1487 = vmul.f32 %v588, %v588
  %v1488 = vmul.f32 %v590, %v590
  %v1489 = vmul.f32 %v592, %v592
  %v1490 = vmul.f32 %v596, %v596
  %v1491 = vmul.f32 %v598, %v598
  %v1492 = vmul.f32 %v600, %v600
  %v1493 = vmul.f32 %v602, %v602
  %v1494 = vmul.f32 %v606, %v606
  %v1495 = vmul.f32 %v608, %v608
  %v1496 = vmul.f32 %v610, %v610
  %v1497 = vmul.f32 %v612, %v612
  %v1498 = vmul.f32 %v616, %v616
  %v1499 = vmul.f32 %v618, %v618
  %v1500 = vmul.f32 %v620, %v620
  %v1501 = vmul.f32 %v622, %v622
  %v1502 = vmul.f32 %v626, %v626
  %v1503 = vmul.f32 %v628, %v628
  %v1504 = vmul.f32 %v630, %v630
  %v1505 = vmul.f32 %v632, %v632
  %v1506 = vmul.f32 %v636, %v636
  %v1507 = vmul.f32 %v638, %v638
  %v1508 = vmul.f32 %v640, %v640
  %v1509 = vmul.f32 %v642, %v642
  %v1510 = vmul.f32 %v646, %v646
  %v1511 = vmul.f32 %v648, %v648
  %v1512 = vmul.f32 %v650, %v650
  %v1513 = vmul.f32 %v652, %v652
  %v1514 = vmul.f32 %v656, %v656
  %v1515 = vmul.f32 %v658, %v658
  %v1516 = vmul.f32 %v660, %v660
  %v1517 = vmul.f32 %v662, %v662
  %v1518 = vmul.f32 %v666, %v666
  %v1519 = vmul.f32 %v668, %v668
  %v1520 = vmul.f32 %v670, %v670
  %v1521 = vmul.f32 %v672, %v672
  %v1522 = vmul.f32 %v676, %v676
  %v1523 = vmul.f32 %v678, %v678
  %v1524 = vmul.f32 %v680, %v680
  %v1525 = vmul.f32 %v682, %v682
  %v1526 = vmul.f32 %v686, %v686
  %v1527 = vmul.f32 %v688, %v688
  %v1528 = vmul.f32 %v690, %v690
  %v1529 = vmul.f32 %v692, %v692
  %v1530 = vmul.f32 %v696, %v696
  %v1531 = vmul.f32 %v698, %v698
  %v1532 = vmul.f32 %v700, %v700
  %v1533 = vmul.f32 %v702, %v702
  %v1534 = vmul.f32 %v706, %v706
  %v1535 = vmul.f32 %v708, %v708
  %v1536 = vmul.f32 %v710, %v710
  %v1537 = vmul.f32 %v712, %v712
  %v1538 = vmul.f32 %v716, %v716
  %v1539 = vmul.f32 %v718, %v718
  %v1540 = vmul.f32 %v720, %v720
  %v1541 = vmul.f32 %v722, %v722
  %v1542 = vmul.f32 %v726, %v726
  %v1543 = vmul.f32 %v728, %v728
  %v1544 = vmul.f32 %v730, %v730
  %v1545 = vmul.f32 %v732, %v732
  %v1546 = vmul.f32 %v736, %v736
  %v1547 = vmul.f32 %v738, %v738
  %v1548 = vmul.f32 %v740, %v740
  %v1549 = vmul.f32 %v742, %v742
  %v1550 = vmul.f32 %v746, %v746
  %v1551 = vmul.f32 %v748, %v748
  %v1552 = vmul.f32 %v750, %v750
  %v1553 = vmul.f32 %v752, %v752
  %v1554 = vmul.f32 %v756, %v756
  %v1555 = vmul.f32 %v758, %v758
  %v1556 = vmul.f32 %v760, %v760
  %v1557 = vmul.f32 %v762, %v762
  %v1558 = vmul.f32 %v766, %v766
  %v1559 = vmul.f32 %v768, %v768
  %v1560 = vmul.f32 %v770, %v770
  %v1561 = vmul.f32 %v772, %v772
  %v1562 = vmul.f32 %v776, %v776
  %v1563 = vmul.f32 %v778, %v778
  %v1564 = vmul.f32 %v780, %v780
  %v1565 = vmul.f32 %v782, %v782
  %v1566 = vmul.f32 %v786, %v786
  %v1567 = vmul.f32 %v788, %v788
  %v1568 = vmul.f32 %v790, %v790
  %v1569 = vmul.f32 %v792, %v792
  %v1570 = vmul.f32 %v796, %v796
  %v1571 = vmul.f32 %v798, %v798
  %v1572 = vmul.f32 %v800, %v800
  %v1573 = vmul.f32 %v802, %v802
  %v1574 = vmul.f32 %v806, %v806
  %v1575 = vmul.f32 %v808, %v808
  %v1576 = vmul.f32 %v810, %v810
  %v1577 = vmul.f32 %v812, %v812
  %v1578 = vmul.f32 %v816, %v816
  %v1579 = vmul.f32 %v818, %v818
  %v1580 = vmul.f32 %v820, %v820
  %v1581 = vmul.f32 %v822, %v822
  %v1582 = vmul.f32 %v826, %v826
  %v1583 = vmul.f32 %v828, %v828
  %v1584 = vmul.f32 %v830, %v830
  %v1585 = vmul.f32 %v832, %v832
  %v1586 = vmul.f32 %v836, %v836
  %v1587 = vmul.f32 %v838, %v838
  %v1588 = vmul.f32 %v840, %v840
  %v1589 = vmul.f32 %v842, %v842
  %v1590 = vmul.f32 %v846, %v846
  %v1591 = vmul.f32 %v848, %v848
  %v1592 = vmul.f32 %v850, %v850
  %v1593 = vmul.f32 %v852, %v852
  %v1594 = vmul.f32 %v856, %v856
  %v1595 = vmul.f32 %v858, %v858
  %v1596 = vmul.f32 %v860, %v860
  %v1597 = vmul.f32 %v862, %v862
  %v1598 = vmul.f32 %v866, %v866
  %v1599 = vmul.f32 %v868, %v868
  %v1600 = vmul.f32 %v870, %v870
  %v1601 = vmul.f32 %v872, %v872
  %v1602 = vmul.f32 %v876, %v876
  %v1603 = vmul.f32 %v878, %v878
  %v1604 = vmul.f32 %v880, %v880
  %v1605 = vmul.f32 %v882, %v882
  %v1606 = vadd.f32 %v1478, %v1480
  %v1607 = vadd.f32 %v1606, %v1482
  %v1608 = vadd.f32 %v1607, %v1484
  %v1609 = vadd.f32 %v1608, %v1486
  %v1610 = vadd.f32 %v1609, %v1488
  %v1611 = vadd.f32 %v1610, %v1490
  %v1612 = vadd.f32 %v1611, %v1492
  %v1613 = vadd.f32 %v1612, %v1494
  %v1614 = vadd.f32 %v1613, %v1496
  %v1615 = vadd.f32 %v1614, %v1498
  %v1616 = vadd.f32 %v1615, %v1500
  %v1617 = vadd.f32 %v1616, %v1502
  %v1618 = vadd.f32 %v1617, %v1504
  %v1619 = vadd.f32 %v1618, %v1506
  %v1620 = vadd.f32 %v1619, %v1508
  %v1621 = vadd.f32 %v1620, %v1510
  %v1622 = vadd.f32 %v1621, %v1512
  %v1623 = vadd.f32 %v1622, %v1514
  %v1624 = vadd.f32 %v1623, %v1516
  %v1625 = vadd.f32 %v1624, %v1518
  %v1626 = vadd.f32 %v1625, %v1520
  %v1627 = vadd.f32 %v1626, %v1522
  %v1628 = vadd.f32 %v1627, %v1524
  %v1629 = vadd.f32 %v1628, %v1526
  %v1630 = vadd.f32 %v1629, %v1528
  %v1631 = vadd.f32 %v1630, %v1530
  %v1632 = vadd.f32 %v1631, %v1532
  %v1633 = vadd.f32 %v1632, %v1534
  %v1634 = vadd.f32 %v1633, %v1536
  %v1635 = vadd.f32 %v1634, %v1538
  %v1636 = vadd.f32 %v1635, %v1540
  %v1637 = vadd.f32 %v1636, %v1542
  %v1638 = vadd.f32 %v1637, %v1544
  %v1639 = vadd.f32 %v1638, %v1546
  %v1640 = vadd.f32 %v1639, %v1548
  %v1641 = vadd.f32 %v1640, %v1550
  %v1642 = vadd.f32 %v1641, %v1552
  %v1643 = vadd.f32 %v1642, %v1554
  %v1644 = vadd.f32 %v1643, %v1556
  %v1645 = vadd.f32 %v1644, %v1558
  %v1646 = vadd.f32 %v1645, %v1560
  %v1647 = vadd.f32 %v1646, %v1562
  %v1648 = vadd.f32 %v1647, %v1564
  %v1649 = vadd.f32 %v1648, %v1566
  %v1650 = vadd.f32 %v1649, %v1568
  %v1651 = vadd.f32 %v1650, %v1570
  %v1652 = vadd.f32 %v1651, %v1572
  %v1653 = vadd.f32 %v1652, %v1574
  %v1654 = vadd.f32 %v1653, %v1576
  %v1655 = vadd.f32 %v1654, %v1578
  %v1656 = vadd.f32 %v1655, %v1580
  %v1657 = vadd.f32 %v1656, %v1582
  %v1658 = vadd.f32 %v1657, %v1584
  %v1659 = vadd.f32 %v1658, %v1586
  %v1660 = vadd.f32 %v1659, %v1588
  %v1661 = vadd.f32 %v1660, %v1590
  %v1662 = vadd.f32 %v1661, %v1592
  %v1663 = vadd.f32 %v1662, %v1594
  %v1664 = vadd.f32 %v1663, %v1596
  %v1665 = vadd.f32 %v1664, %v1598
  %v1666 = vadd.f32 %v1665, %v1600
  %v1667 = vadd.f32 %v1666, %v1602
  %v1668 = vadd.f32 %v1667, %v1604
  %v1669 = vrot.slane %v1668, 4
  %v1670 = vadd.f32 %v1668, %v1669
  %v1671 = vrot.slane %v1670, 2
  %v1672 = vadd.f32 %v1670, %v1671
  %v1673 = vrot.slane %v1672, 1
  %v1674 = vadd.f32 %v1672, %v1673
  %v1675 = vadd.f32 %v1479, %v1481
  %v1676 = vadd.f32 %v1675, %v1483
  %v1677 = vadd.f32 %v1676, %v1485
  %v1678 = vadd.f32 %v1677, %v1487
  %v1679 = vadd.f32 %v1678, %v1489
  %v1680 = vadd.f32 %v1679, %v1491
  %v1681 = vadd.f32 %v1680, %v1493
  %v1682 = vadd.f32 %v1681, %v1495
  %v1683 = vadd.f32 %v1682, %v1497
  %v1684 = vadd.f32 %v1683, %v1499
  %v1685 = vadd.f32 %v1684, %v1501
  %v1686 = vadd.f32 %v1685, %v1503
  %v1687 = vadd.f32 %v1686, %v1505
  %v1688 = vadd.f32 %v1687, %v1507
  %v1689 = vadd.f32 %v1688, %v1509
  %v1690 = vadd.f32 %v1689, %v1511
  %v1691 = vadd.f32 %v1690, %v1513
  %v1692 = vadd.f32 %v1691, %v1515
  %v1693 = vadd.f32 %v1692, %v1517
  %v1694 = vadd.f32 %v1693, %v1519
  %v1695 = vadd.f32 %v1694, %v1521
  %v1696 = vadd.f32 %v1695, %v1523
  %v1697 = vadd.f32 %v1696, %v1525
  %v1698 = vadd.f32 %v1697, %v1527
  %v1699 = vadd.f32 %v1698, %v1529
  %v1700 = vadd.f32 %v1699, %v1531
  %v1701 = vadd.f32 %v1700, %v1533
  %v1702 = vadd.f32 %v1701, %v1535
  %v1703 = vadd.f32 %v1702, %v1537
  %v1704 = vadd.f32 %v1703, %v1539
  %v1705 = vadd.f32 %v1704, %v1541
  %v1706 = vadd.f32 %v1705, %v1543
  %v1707 = vadd.f32 %v1706, %v1545
  %v1708 = vadd.f32 %v1707, %v1547
  %v1709 = vadd.f32 %v1708, %v1549
  %v1710 = vadd.f32 %v1709, %v1551
  %v1711 = vadd.f32 %v1710, %v1553
  %v1712 = vadd.f32 %v1711, %v1555
  %v1713 = vadd.f32 %v1712, %v1557
  %v1714 = vadd.f32 %v1713, %v1559
  %v1715 = vadd.f32 %v1714, %v1561
  %v1716 = vadd.f32 %v1715, %v1563
  %v1717 = vadd.f32 %v1716, %v1565
  %v1718 = vadd.f32 %v1717, %v1567
  %v1719 = vadd.f32 %v1718, %v1569
  %v1720 = vadd.f32 %v1719, %v1571
  %v1721 = vadd.f32 %v1720, %v1573
  %v1722 = vadd.f32 %v1721, %v1575
  %v1723 = vadd.f32 %v1722, %v1577
  %v1724 = vadd.f32 %v1723, %v1579
  %v1725 = vadd.f32 %v1724, %v1581
  %v1726 = vadd.f32 %v1725, %v1583
  %v1727 = vadd.f32 %v1726, %v1585
  %v1728 = vadd.f32 %v1727, %v1587
  %v1729 = vadd.f32 %v1728, %v1589
  %v1730 = vadd.f32 %v1729, %v1591
  %v1731 = vadd.f32 %v1730, %v1593
  %v1732 = vadd.f32 %v1731, %v1595
  %v1733 = vadd.f32 %v1732, %v1597
  %v1734 = vadd.f32 %v1733, %v1599
  %v1735 = vadd.f32 %v1734, %v1601
  %v1736 = vadd.f32 %v1735, %v1603
  %v1737 = vadd.f32 %v1736, %v1605
  %v1738 = vrot.slane %v1737, 4
  %v1739 = vadd.f32 %v1737, %v1738
  %v1740 = vrot.slane %v1739, 2
  %v1741 = vadd.f32 %v1739, %v1740
  %v1742 = vrot.slane %v1741, 1
  %v1743 = vadd.f32 %v1741, %v1742
  %vm1744 = vcmask 1040384
  %v1745 = vsel %vm1744, %v1408, %v1674
  %v1746 = vsel %vm1744, %v1477, %v1743
  %vm1747 = vcmask 1041408
  %v1748 = vsel %vm1747, %v1745, 0.0
  %v1749 = vsel %vm1747, %v1746, 0.0
  %v1750 = vadd.f32 %v1338, %v1748
  %v1751 = vadd.f32 %v1339, %v1749
  %1752 = vst [vmem:[%s5] sm:$0xff] %v1750
  %1753 = vst [vmem:[%s5 + $0x8] sm:$0xff] %v1751
  // Predicated region
  $region22: #{bottleneck_forward.6} parent=0 // pred_check
    _
  $region23: #{bottleneck_forward.6} parent=0 // pred_check_branch
    %1755 = sbr.rel (0) target = $region25
  $region24: #{bottleneck_forward.6} parent=0 // pred_region
    _
  $region25: #{bottleneck_forward.6} parent=0 // pred_fallthru
    _
  // Predicated region
  $region26: #{bottleneck_forward.6} parent=0 // pred_check
    _
  $region27: #{bottleneck_forward.6} parent=0 // pred_check_branch
    %1757 = sbr.rel (0) target = $region29
  $region28: #{bottleneck_forward.6} parent=0 // pred_region
    _
  $region29: #{bottleneck_forward.6} parent=0 // pred_fallthru
    _
  // Predicated region
  $region30: #{bottleneck_forward.6} parent=0 // pred_check
    _
  $region31: #{bottleneck_forward.6} parent=0 // pred_check_branch
    %1759 = sbr.rel (0) target = $region33
  $region32: #{bottleneck_forward.6} parent=0 // pred_region
    _
  $region33: #{bottleneck_forward.6} parent=0 // pred_fallthru
    _
  // Predicated region
  $region34: #{bottleneck_forward.6} parent=0 // pred_check
    _
  $region35: #{bottleneck_forward.6} parent=0 // pred_check_branch
    %1761 = sbr.rel (0) target = $region37
  $region36: #{bottleneck_forward.6} parent=0 // pred_region
    _
  $region37: #{bottleneck_forward.6} parent=0 // pred_fallthru
    _

// kernel: bottleneck_forward.4
$region0: #{bottleneck_forward.4}
  #allocation0 [shape = 'u32[]', space=smem, size = 0x4, offset = 0x4, fixed_abs, tag = 'smem constant byte address 0x4 - core index']
  #allocation1 [shape = 'u32[144,128]{1,0:T(1,128)}', space=vmem, size = 0x12000, scoped, tag = 'internal scratch']
  %s0 = inlined_call_operand.vmem [shape: bf16[512,64], index: 0, kind: input, shape index: {}]
  %s1 = inlined_call_operand.vmem [shape: bf16[64,64], index: 1, kind: input, shape index: {}]
  %s2 = inlined_call_operand.vmem [shape: bf16[64,256], index: 2, kind: input, shape index: {}]
  %s3 = inlined_call_operand.vmem [shape: bf16[512,64], index: 3, kind: output, shape index: {0}]
  %s4 = inlined_call_operand.vmem [shape: bf16[512,256], index: 4, kind: output, shape index: {1}]
  %s5 = inlined_call_operand.vmem [shape: f32[8,64], index: 5, kind: output, shape index: {2}]
  %s6 = inlined_call_operand.vmem [shape: f32[8,256], index: 6, kind: output, shape index: {3}]
  %7 = xla_tuple %s3, %s4, %s5, %s6
  %s8 = sld [smem:[#allocation0]]
  $region50: #{bottleneck_forward.4} parent=0
    _
  %s10 = ssub.s32 1, %s8
  %s11 = scalar_select 0, %s10, %s8
  // Predicated region
  $region2: #{bottleneck_forward.4} parent=0 // pred_check
    _
  $region3: #{bottleneck_forward.4} parent=0 // pred_check_branch
    %13 = sbr.rel (0) target = $region5
  $region4: #{bottleneck_forward.4} parent=0 // pred_region
    _
  $region5: #{bottleneck_forward.4} parent=0 // pred_fallthru
    _
  // Predicated region
  $region6: #{bottleneck_forward.4} parent=0 // pred_check
    _
  $region7: #{bottleneck_forward.4} parent=0 // pred_check_branch
    %15 = sbr.rel (0) target = $region9
  $region8: #{bottleneck_forward.4} parent=0 // pred_region
    _
  $region9: #{bottleneck_forward.4} parent=0 // pred_fallthru
    _
  // Predicated region
  $region10: #{bottleneck_forward.4} parent=0 // pred_check
    _
  $region11: #{bottleneck_forward.4} parent=0 // pred_check_branch
    %17 = sbr.rel (0) target = $region13
  $region12: #{bottleneck_forward.4} parent=0 // pred_region
    _
  $region13: #{bottleneck_forward.4} parent=0 // pred_fallthru
    _
  %v19 = vld [vmem:[%s0] sm:$0xf]
  %v20 = vld [vmem:[%s0 + $0x4] sm:$0xf]
  %v21 = vld [vmem:[%s0 + $0x8] sm:$0xf]
  %v22 = vld [vmem:[%s0 + $0xc] sm:$0xf]
  %v23 = vld [vmem:[%s0 + $0x10] sm:$0xf]
  %v24 = vld [vmem:[%s0 + $0x14] sm:$0xf]
  %v25 = vld [vmem:[%s0 + $0x18] sm:$0xf]
  %v26 = vld [vmem:[%s0 + $0x1c] sm:$0xf]
  %v27 = vld [vmem:[%s0 + $0x20] sm:$0xf]
  %v28 = vld [vmem:[%s0 + $0x24] sm:$0xf]
  %v29 = vld [vmem:[%s0 + $0x28] sm:$0xf]
  %v30 = vld [vmem:[%s0 + $0x2c] sm:$0xf]
  %v31 = vld [vmem:[%s0 + $0x30] sm:$0xf]
  %v32 = vld [vmem:[%s0 + $0x34] sm:$0xf]
  %v33 = vld [vmem:[%s0 + $0x38] sm:$0xf]
  %v34 = vld [vmem:[%s0 + $0x3c] sm:$0xf]
  %v35 = vld [vmem:[%s0 + $0x40] sm:$0xf]
  %v36 = vld [vmem:[%s0 + $0x44] sm:$0xf]
  %v37 = vld [vmem:[%s0 + $0x48] sm:$0xf]
  %v38 = vld [vmem:[%s0 + $0x4c] sm:$0xf]
  %v39 = vld [vmem:[%s0 + $0x50] sm:$0xf]
  %v40 = vld [vmem:[%s0 + $0x54] sm:$0xf]
  %v41 = vld [vmem:[%s0 + $0x58] sm:$0xf]
  %v42 = vld [vmem:[%s0 + $0x5c] sm:$0xf]
  %v43 = vld [vmem:[%s0 + $0x60] sm:$0xf]
  %v44 = vld [vmem:[%s0 + $0x64] sm:$0xf]
  %v45 = vld [vmem:[%s0 + $0x68] sm:$0xf]
  %v46 = vld [vmem:[%s0 + $0x6c] sm:$0xf]
  %v47 = vld [vmem:[%s0 + $0x70] sm:$0xf]
  %v48 = vld [vmem:[%s0 + $0x74] sm:$0xf]
  %v49 = vld [vmem:[%s0 + $0x78] sm:$0xf]
  %v50 = vld [vmem:[%s0 + $0x7c] sm:$0xf]
  %v51 = vld [vmem:[%s0 + $0x80] sm:$0xf]
  %v52 = vld [vmem:[%s0 + $0x84] sm:$0xf]
  %v53 = vld [vmem:[%s0 + $0x88] sm:$0xf]
  %v54 = vld [vmem:[%s0 + $0x8c] sm:$0xf]
  %v55 = vld [vmem:[%s0 + $0x90] sm:$0xf]
  %v56 = vld [vmem:[%s0 + $0x94] sm:$0xf]
  %v57 = vld [vmem:[%s0 + $0x98] sm:$0xf]
  %v58 = vld [vmem:[%s0 + $0x9c] sm:$0xf]
  %v59 = vld [vmem:[%s0 + $0xa0] sm:$0xf]
  %v60 = vld [vmem:[%s0 + $0xa4] sm:$0xf]
  %v61 = vld [vmem:[%s0 + $0xa8] sm:$0xf]
  %v62 = vld [vmem:[%s0 + $0xac] sm:$0xf]
  %v63 = vld [vmem:[%s0 + $0xb0] sm:$0xf]
  %v64 = vld [vmem:[%s0 + $0xb4] sm:$0xf]
  %v65 = vld [vmem:[%s0 + $0xb8] sm:$0xf]
  %v66 = vld [vmem:[%s0 + $0xbc] sm:$0xf]
  %v67 = vld [vmem:[%s0 + $0xc0] sm:$0xf]
  %v68 = vld [vmem:[%s0 + $0xc4] sm:$0xf]
  %v69 = vld [vmem:[%s0 + $0xc8] sm:$0xf]
  %v70 = vld [vmem:[%s0 + $0xcc] sm:$0xf]
  %v71 = vld [vmem:[%s0 + $0xd0] sm:$0xf]
  %v72 = vld [vmem:[%s0 + $0xd4] sm:$0xf]
  %v73 = vld [vmem:[%s0 + $0xd8] sm:$0xf]
  %v74 = vld [vmem:[%s0 + $0xdc] sm:$0xf]
  %v75 = vld [vmem:[%s0 + $0xe0] sm:$0xf]
  %v76 = vld [vmem:[%s0 + $0xe4] sm:$0xf]
  %v77 = vld [vmem:[%s0 + $0xe8] sm:$0xf]
  %v78 = vld [vmem:[%s0 + $0xec] sm:$0xf]
  %v79 = vld [vmem:[%s0 + $0xf0] sm:$0xf]
  %v80 = vld [vmem:[%s0 + $0xf4] sm:$0xf]
  %v81 = vld [vmem:[%s0 + $0xf8] sm:$0xf]
  %v82 = vld [vmem:[%s0 + $0xfc] sm:$0xf]
  %v83 = vld [vmem:[%s1] sm:$0xf]
  %v84 = vld [vmem:[%s1 + $0x4] sm:$0xf]
  %v85 = vld [vmem:[%s1 + $0x8] sm:$0xf]
  %v86 = vld [vmem:[%s1 + $0xc] sm:$0xf]
  %v87 = vld [vmem:[%s1 + $0x10] sm:$0xf]
  %v88 = vld [vmem:[%s1 + $0x14] sm:$0xf]
  %v89 = vld [vmem:[%s1 + $0x18] sm:$0xf]
  %v90 = vld [vmem:[%s1 + $0x1c] sm:$0xf]
  %v155 = vunpack.c.l.b16 %v19
  %v156 = vunpack.c.l.b16 %v20
  %v157 = vunpack.c.l.b16 %v21
  %v158 = vunpack.c.l.b16 %v22
  %v159 = vunpack.c.l.b16 %v23
  %v160 = vunpack.c.l.b16 %v24
  %v161 = vunpack.c.l.b16 %v25
  %v162 = vunpack.c.l.b16 %v26
  %v163 = vunpack.c.l.b16 %v27
  %v164 = vunpack.c.l.b16 %v28
  %v165 = vunpack.c.l.b16 %v29
  %v166 = vunpack.c.l.b16 %v30
  %v167 = vunpack.c.l.b16 %v31
  %v168 = vunpack.c.l.b16 %v32
  %v169 = vunpack.c.l.b16 %v33
  %v170 = vunpack.c.l.b16 %v34
  %v171 = vunpack.c.l.b16 %v35
  %v172 = vunpack.c.l.b16 %v36
  %v173 = vunpack.c.l.b16 %v37
  %v174 = vunpack.c.l.b16 %v38
  %v175 = vunpack.c.l.b16 %v39
  %v176 = vunpack.c.l.b16 %v40
  %v177 = vunpack.c.l.b16 %v41
  %v178 = vunpack.c.l.b16 %v42
  %v179 = vunpack.c.l.b16 %v43
  %v180 = vunpack.c.l.b16 %v44
  %v181 = vunpack.c.l.b16 %v45
  %v182 = vunpack.c.l.b16 %v46
  %v183 = vunpack.c.l.b16 %v47
  %v184 = vunpack.c.l.b16 %v48
  %v185 = vunpack.c.l.b16 %v49
  %v186 = vunpack.c.l.b16 %v50
  %v187 = vunpack.c.l.b16 %v51
  %v188 = vunpack.c.l.b16 %v52
  %v189 = vunpack.c.l.b16 %v53
  %v190 = vunpack.c.l.b16 %v54
  %v191 = vunpack.c.l.b16 %v55
  %v192 = vunpack.c.l.b16 %v56
  %v193 = vunpack.c.l.b16 %v57
  %v194 = vunpack.c.l.b16 %v58
  %v195 = vunpack.c.l.b16 %v59
  %v196 = vunpack.c.l.b16 %v60
  %v197 = vunpack.c.l.b16 %v61
  %v198 = vunpack.c.l.b16 %v62
  %v199 = vunpack.c.l.b16 %v63
  %v200 = vunpack.c.l.b16 %v64
  %v201 = vunpack.c.l.b16 %v65
  %v202 = vunpack.c.l.b16 %v66
  %v203 = vunpack.c.l.b16 %v67
  %v204 = vunpack.c.l.b16 %v68
  %v205 = vunpack.c.l.b16 %v69
  %v206 = vunpack.c.l.b16 %v70
  %v207 = vunpack.c.l.b16 %v71
  %v208 = vunpack.c.l.b16 %v72
  %v209 = vunpack.c.l.b16 %v73
  %v210 = vunpack.c.l.b16 %v74
  %v211 = vunpack.c.l.b16 %v75
  %v212 = vunpack.c.l.b16 %v76
  %v213 = vunpack.c.l.b16 %v77
  %v214 = vunpack.c.l.b16 %v78
  %v215 = vunpack.c.l.b16 %v79
  %v216 = vunpack.c.l.b16 %v80
  %v217 = vunpack.c.l.b16 %v81
  %v218 = vunpack.c.l.b16 %v82
  %v219 = vpack.c.b16 %v156, %v155
  %v220 = vpack.c.b16 %v158, %v157
  %v221 = vpack.c.b16 %v160, %v159
  %v222 = vpack.c.b16 %v162, %v161
  %v223 = vpack.c.b16 %v164, %v163
  %v224 = vpack.c.b16 %v166, %v165
  %v225 = vpack.c.b16 %v168, %v167
  %v226 = vpack.c.b16 %v170, %v169
  %v227 = vpack.c.b16 %v172, %v171
  %v228 = vpack.c.b16 %v174, %v173
  %v229 = vpack.c.b16 %v176, %v175
  %v230 = vpack.c.b16 %v178, %v177
  %v231 = vpack.c.b16 %v180, %v179
  %v232 = vpack.c.b16 %v182, %v181
  %v233 = vpack.c.b16 %v184, %v183
  %v234 = vpack.c.b16 %v186, %v185
  %v235 = vpack.c.b16 %v188, %v187
  %v236 = vpack.c.b16 %v190, %v189
  %v237 = vpack.c.b16 %v192, %v191
  %v238 = vpack.c.b16 %v194, %v193
  %v239 = vpack.c.b16 %v196, %v195
  %v240 = vpack.c.b16 %v198, %v197
  %v241 = vpack.c.b16 %v200, %v199
  %v242 = vpack.c.b16 %v202, %v201
  %v243 = vpack.c.b16 %v204, %v203
  %v244 = vpack.c.b16 %v206, %v205
  %v245 = vpack.c.b16 %v208, %v207
  %v246 = vpack.c.b16 %v210, %v209
  %v247 = vpack.c.b16 %v212, %v211
  %v248 = vpack.c.b16 %v214, %v213
  %v249 = vpack.c.b16 %v216, %v215
  %v250 = vpack.c.b16 %v218, %v217
  %v259 = vunpack.c.l.b16 %v83
  %v260 = vunpack.c.l.b16 %v84
  %v261 = vunpack.c.l.b16 %v85
  %v262 = vunpack.c.l.b16 %v86
  %v263 = vunpack.c.l.b16 %v87
  %v264 = vunpack.c.l.b16 %v88
  %v265 = vunpack.c.l.b16 %v89
  %v266 = vunpack.c.l.b16 %v90
  %v267 = vpack.c.b16 %v260, %v259
  %v268 = vpack.c.b16 %v262, %v261
  %v269 = vpack.c.b16 %v264, %v263
  %v270 = vpack.c.b16 %v266, %v265
  %vm275 = vcmask 523264
  %v277 = vsel %vm275, %v219, 0
  %v280 = vsel %vm275, %v220, 0
  %v283 = vsel %vm275, %v221, 0
  %v286 = vsel %vm275, %v222, 0
  %v289 = vsel %vm275, %v223, 0
  %v292 = vsel %vm275, %v224, 0
  %v295 = vsel %vm275, %v225, 0
  %v298 = vsel %vm275, %v226, 0
  %v301 = vsel %vm275, %v227, 0
  %v304 = vsel %vm275, %v228, 0
  %v307 = vsel %vm275, %v229, 0
  %v310 = vsel %vm275, %v230, 0
  %v313 = vsel %vm275, %v231, 0
  %v316 = vsel %vm275, %v232, 0
  %v319 = vsel %vm275, %v233, 0
  %v322 = vsel %vm275, %v234, 0
  %v325 = vsel %vm275, %v235, 0
  %v328 = vsel %vm275, %v236, 0
  %v331 = vsel %vm275, %v237, 0
  %v334 = vsel %vm275, %v238, 0
  %v337 = vsel %vm275, %v239, 0
  %v340 = vsel %vm275, %v240, 0
  %v343 = vsel %vm275, %v241, 0
  %v346 = vsel %vm275, %v242, 0
  %v349 = vsel %vm275, %v243, 0
  %v352 = vsel %vm275, %v244, 0
  %v355 = vsel %vm275, %v245, 0
  %v358 = vsel %vm275, %v246, 0
  %v361 = vsel %vm275, %v247, 0
  %v364 = vsel %vm275, %v248, 0
  %v367 = vsel %vm275, %v249, 0
  %v370 = vsel %vm275, %v250, 0
  %372 = vmatprep.subr.bf16.mxu0 0
  %373 = vmatpush1.bf16.msra.mxu0 %v267
  %374 = vmatprep.subr.bf16.mxu0 0
  %375 = vmatpush1.bf16.msra.mxu0 %v268
  %376 = vmatprep.subr.bf16.mxu0 0
  %377 = vmatpush1.bf16.msra.mxu0 %v269
  %378 = vmatprep.subr.bf16.mxu0 0
  %379 = vmatpush1.bf16.msra.mxu0 %v270
  %380 = vmatprep.subr.bf16.mxu0 0
  %381 = vmatpush1.bf16.msra.mxu0 0
  %382 = vmatprep.subr.bf16.mxu0 0
  %383 = vmatpush1.bf16.msra.mxu0 0
  %384 = vmatprep.subr.bf16.mxu0 0
  %385 = vmatpush1.bf16.msra.mxu0 0
  %386 = vmatprep.subr.bf16.mxu0 0
  %387 = vmatpush1.bf16.msra.mxu0 0
  %388 = vmatprep.subr.bf16.mxu0 0
  %389 = vmatpush1.bf16.msra.mxu0 0
  %390 = vmatprep.subr.bf16.mxu0 0
  %391 = vmatpush1.bf16.msra.mxu0 0
  %392 = vmatprep.subr.bf16.mxu0 0
  %393 = vmatpush1.bf16.msra.mxu0 0
  %394 = vmatprep.subr.bf16.mxu0 0
  %395 = vmatpush1.bf16.msra.mxu0 0
  %396 = vmatprep.subr.bf16.mxu0 0
  %397 = vmatpush1.bf16.msra.mxu0 0
  %398 = vmatprep.subr.bf16.mxu0 0
  %399 = vmatpush1.bf16.msra.mxu0 0
  %400 = vmatprep.subr.bf16.mxu0 0
  %401 = vmatpush1.bf16.msra.mxu0 0
  %402 = vmatprep.subr.bf16.mxu0 0
  %403 = vmatpush1.bf16.msra.mxu0 0
  %404 = vmatprep.mubr.bf16.mxu0 0
  %405 = vmatmul.mubr.bf16.gmra.mrb[0].mxu0 %v277
  %v406 = vpop.f32.mrb[0].mxu0
  %v407 = vadd.f32 0.0, %v406
  %v408 = vpop.f32.mrb[0].mxu0
  %v409 = vpop.f32.mrb[0].mxu0
  %v410 = vadd.f32 0.0, %v409
  %v411 = vpop.f32.mrb[0].mxu0
  %412 = vmatprep.mubr.bf16.mxu0 0
  %413 = vmatmul.mubr.bf16.gmra.mrb[0].mxu0 %v280
  %v414 = vpop.f32.mrb[0].mxu0
  %v415 = vadd.f32 0.0, %v414
  %v416 = vpop.f32.mrb[0].mxu0
  %v417 = vpop.f32.mrb[0].mxu0
  %v418 = vadd.f32 0.0, %v417
  %v419 = vpop.f32.mrb[0].mxu0
  %420 = vmatprep.mubr.bf16.mxu0 0
  %421 = vmatmul.mubr.bf16.gmra.mrb[0].mxu0 %v283
  %v422 = vpop.f32.mrb[0].mxu0
  %v423 = vadd.f32 0.0, %v422
  %v424 = vpop.f32.mrb[0].mxu0
  %v425 = vpop.f32.mrb[0].mxu0
  %v426 = vadd.f32 0.0, %v425
  %v427 = vpop.f32.mrb[0].mxu0
  %428 = vmatprep.mubr.bf16.mxu0 0
  %429 = vmatmul.mubr.bf16.gmra.mrb[0].mxu0 %v286
  %v430 = vpop.f32.mrb[0].mxu0
  %v431 = vadd.f32 0.0, %v430
  %v432 = vpop.f32.mrb[0].mxu0
  %v433 = vpop.f32.mrb[0].mxu0
  %v434 = vadd.f32 0.0, %v433
  %v435 = vpop.f32.mrb[0].mxu0
  %436 = vmatprep.mubr.bf16.mxu0 0
  %437 = vmatmul.mubr.bf16.gmra.mrb[0].mxu0 %v289
  %v438 = vpop.f32.mrb[0].mxu0
  %v439 = vadd.f32 0.0, %v438
  %v440 = vpop.f32.mrb[0].mxu0
  %v441 = vpop.f32.mrb[0].mxu0
  %v442 = vadd.f32 0.0, %v441
  %v443 = vpop.f32.mrb[0].mxu0
  %444 = vmatprep.mubr.bf16.mxu0 0
  %445 = vmatmul.mubr.bf16.gmra.mrb[0].mxu0 %v292
  %v446 = vpop.f32.mrb[0].mxu0
  %v447 = vadd.f32 0.0, %v446
  %v448 = vpop.f32.mrb[0].mxu0
  %v449 = vpop.f32.mrb[0].mxu0
  %v450 = vadd.f32 0.0, %v449
  %v451 = vpop.f32.mrb[0].mxu0
  %452 = vmatprep.mubr.bf16.mxu0 0
  %453 = vmatmul.mubr.bf16.gmra.mrb[0].mxu0 %v295
  %v454 = vpop.f32.mrb[0].mxu0
  %v455 = vadd.f32 0.0, %v454
  %v456 = vpop.f32.mrb[0].mxu0
  %v457 = vpop.f32.mrb[0].mxu0
  %v458 = vadd.f32 0.0, %v457
  %v459 = vpop.f32.mrb[0].mxu0
  %460 = vmatprep.mubr.bf16.mxu0 0
  %461 = vmatmul.mubr.bf16.gmra.mrb[0].mxu0 %v298
  %v462 = vpop.f32.mrb[0].mxu0
  %v463 = vadd.f32 0.0, %v462
  %v464 = vpop.f32.mrb[0].mxu0
  %v465 = vpop.f32.mrb[0].mxu0
  %v466 = vadd.f32 0.0, %v465
  %v467 = vpop.f32.mrb[0].mxu0
  %468 = vmatprep.mubr.bf16.mxu0 0
  %469 = vmatmul.mubr.bf16.gmra.mrb[0].mxu0 %v301
  %v470 = vpop.f32.mrb[0].mxu0
  %v471 = vadd.f32 0.0, %v470
  %v472 = vpop.f32.mrb[0].mxu0
  %v473 = vpop.f32.mrb[0].mxu0
  %v474 = vadd.f32 0.0, %v473
  %v475 = vpop.f32.mrb[0].mxu0
  %476 = vmatprep.mubr.bf16.mxu0 0
  %477 = vmatmul.mubr.bf16.gmra.mrb[0].mxu0 %v304
  %v478 = vpop.f32.mrb[0].mxu0
  %v479 = vadd.f32 0.0, %v478
  %v480 = vpop.f32.mrb[0].mxu0
  %v481 = vpop.f32.mrb[0].mxu0
  %v482 = vadd.f32 0.0, %v481
  %v483 = vpop.f32.mrb[0].mxu0
  %484 = vmatprep.mubr.bf16.mxu0 0
  %485 = vmatmul.mubr.bf16.gmra.mrb[0].mxu0 %v307
  %v486 = vpop.f32.mrb[0].mxu0
  %v487 = vadd.f32 0.0, %v486
  %v488 = vpop.f32.mrb[0].mxu0
  %v489 = vpop.f32.mrb[0].mxu0
  %v490 = vadd.f32 0.0, %v489
  %v491 = vpop.f32.mrb[0].mxu0
  %492 = vmatprep.mubr.bf16.mxu0 0
  %493 = vmatmul.mubr.bf16.gmra.mrb[0].mxu0 %v310
  %v494 = vpop.f32.mrb[0].mxu0
  %v495 = vadd.f32 0.0, %v494
  %v496 = vpop.f32.mrb[0].mxu0
  %v497 = vpop.f32.mrb[0].mxu0
  %v498 = vadd.f32 0.0, %v497
  %v499 = vpop.f32.mrb[0].mxu0
  %500 = vmatprep.mubr.bf16.mxu0 0
  %501 = vmatmul.mubr.bf16.gmra.mrb[0].mxu0 %v313
  %v502 = vpop.f32.mrb[0].mxu0
  %v503 = vadd.f32 0.0, %v502
  %v504 = vpop.f32.mrb[0].mxu0
  %v505 = vpop.f32.mrb[0].mxu0
  %v506 = vadd.f32 0.0, %v505
  %v507 = vpop.f32.mrb[0].mxu0
  %508 = vmatprep.mubr.bf16.mxu0 0
  %509 = vmatmul.mubr.bf16.gmra.mrb[0].mxu0 %v316
  %v510 = vpop.f32.mrb[0].mxu0
  %v511 = vadd.f32 0.0, %v510
  %v512 = vpop.f32.mrb[0].mxu0
  %v513 = vpop.f32.mrb[0].mxu0
  %v514 = vadd.f32 0.0, %v513
  %v515 = vpop.f32.mrb[0].mxu0
  %516 = vmatprep.mubr.bf16.mxu0 0
  %517 = vmatmul.mubr.bf16.gmra.mrb[0].mxu0 %v319
  %v518 = vpop.f32.mrb[0].mxu0
  %v519 = vadd.f32 0.0, %v518
  %v520 = vpop.f32.mrb[0].mxu0
  %v521 = vpop.f32.mrb[0].mxu0
  %v522 = vadd.f32 0.0, %v521
  %v523 = vpop.f32.mrb[0].mxu0
  %524 = vmatprep.mubr.bf16.mxu0 0
  %525 = vmatmul.mubr.bf16.gmra.mrb[0].mxu0 %v322
  %v526 = vpop.f32.mrb[0].mxu0
  %v527 = vadd.f32 0.0, %v526
  %v528 = vpop.f32.mrb[0].mxu0
  %v529 = vpop.f32.mrb[0].mxu0
  %v530 = vadd.f32 0.0, %v529
  %v531 = vpop.f32.mrb[0].mxu0
  %532 = vmatprep.mubr.bf16.mxu0 0
  %533 = vmatmul.mubr.bf16.gmra.mrb[0].mxu0 %v325
  %v534 = vpop.f32.mrb[0].mxu0
  %v535 = vadd.f32 0.0, %v534
  %v536 = vpop.f32.mrb[0].mxu0
  %v537 = vpop.f32.mrb[0].mxu0
  %v538 = vadd.f32 0.0, %v537
  %v539 = vpop.f32.mrb[0].mxu0
  %540 = vmatprep.mubr.bf16.mxu0 0
  %541 = vmatmul.mubr.bf16.gmra.mrb[0].mxu0 %v328
  %v542 = vpop.f32.mrb[0].mxu0
  %v543 = vadd.f32 0.0, %v542
  %v544 = vpop.f32.mrb[0].mxu0
  %v545 = vpop.f32.mrb[0].mxu0
  %v546 = vadd.f32 0.0, %v545
  %v547 = vpop.f32.mrb[0].mxu0
  %548 = vmatprep.mubr.bf16.mxu0 0
  %549 = vmatmul.mubr.bf16.gmra.mrb[0].mxu0 %v331
  %v550 = vpop.f32.mrb[0].mxu0
  %v551 = vadd.f32 0.0, %v550
  %v552 = vpop.f32.mrb[0].mxu0
  %v553 = vpop.f32.mrb[0].mxu0
  %v554 = vadd.f32 0.0, %v553
  %v555 = vpop.f32.mrb[0].mxu0
  %556 = vmatprep.mubr.bf16.mxu0 0
  %557 = vmatmul.mubr.bf16.gmra.mrb[0].mxu0 %v334
  %v558 = vpop.f32.mrb[0].mxu0
  %v559 = vadd.f32 0.0, %v558
  %v560 = vpop.f32.mrb[0].mxu0
  %v561 = vpop.f32.mrb[0].mxu0
  %v562 = vadd.f32 0.0, %v561
  %v563 = vpop.f32.mrb[0].mxu0
  %564 = vmatprep.mubr.bf16.mxu0 0
  %565 = vmatmul.mubr.bf16.gmra.mrb[0].mxu0 %v337
  %v566 = vpop.f32.mrb[0].mxu0
  %v567 = vadd.f32 0.0, %v566
  %v568 = vpop.f32.mrb[0].mxu0
  %v569 = vpop.f32.mrb[0].mxu0
  %v570 = vadd.f32 0.0, %v569
  %v571 = vpop.f32.mrb[0].mxu0
  %572 = vmatprep.mubr.bf16.mxu0 0
  %573 = vmatmul.mubr.bf16.gmra.mrb[0].mxu0 %v340
  %v574 = vpop.f32.mrb[0].mxu0
  %v575 = vadd.f32 0.0, %v574
  %v576 = vpop.f32.mrb[0].mxu0
  %v577 = vpop.f32.mrb[0].mxu0
  %v578 = vadd.f32 0.0, %v577
  %v579 = vpop.f32.mrb[0].mxu0
  %580 = vmatprep.mubr.bf16.mxu0 0
  %581 = vmatmul.mubr.bf16.gmra.mrb[0].mxu0 %v343
  %v582 = vpop.f32.mrb[0].mxu0
  %v583 = vadd.f32 0.0, %v582
  %v584 = vpop.f32.mrb[0].mxu0
  %v585 = vpop.f32.mrb[0].mxu0
  %v586 = vadd.f32 0.0, %v585
  %v587 = vpop.f32.mrb[0].mxu0
  %588 = vmatprep.mubr.bf16.mxu0 0
  %589 = vmatmul.mubr.bf16.gmra.mrb[0].mxu0 %v346
  %v590 = vpop.f32.mrb[0].mxu0
  %v591 = vadd.f32 0.0, %v590
  %v592 = vpop.f32.mrb[0].mxu0
  %v593 = vpop.f32.mrb[0].mxu0
  %v594 = vadd.f32 0.0, %v593
  %v595 = vpop.f32.mrb[0].mxu0
  %596 = vmatprep.mubr.bf16.mxu0 0
  %597 = vmatmul.mubr.bf16.gmra.mrb[0].mxu0 %v349
  %v598 = vpop.f32.mrb[0].mxu0
  %v599 = vadd.f32 0.0, %v598
  %v600 = vpop.f32.mrb[0].mxu0
  %v601 = vpop.f32.mrb[0].mxu0
  %v602 = vadd.f32 0.0, %v601
  %v603 = vpop.f32.mrb[0].mxu0
  %604 = vmatprep.mubr.bf16.mxu0 0
  %605 = vmatmul.mubr.bf16.gmra.mrb[0].mxu0 %v352
  %v606 = vpop.f32.mrb[0].mxu0
  %v607 = vadd.f32 0.0, %v606
  %v608 = vpop.f32.mrb[0].mxu0
  %v609 = vpop.f32.mrb[0].mxu0
  %v610 = vadd.f32 0.0, %v609
  %v611 = vpop.f32.mrb[0].mxu0
  %612 = vmatprep.mubr.bf16.mxu0 0
  %613 = vmatmul.mubr.bf16.gmra.mrb[0].mxu0 %v355
  %v614 = vpop.f32.mrb[0].mxu0
  %v615 = vadd.f32 0.0, %v614
  %v616 = vpop.f32.mrb[0].mxu0
  %v617 = vpop.f32.mrb[0].mxu0
  %v618 = vadd.f32 0.0, %v617
  %v619 = vpop.f32.mrb[0].mxu0
  %620 = vmatprep.mubr.bf16.mxu0 0
  %621 = vmatmul.mubr.bf16.gmra.mrb[0].mxu0 %v358
  %v622 = vpop.f32.mrb[0].mxu0
  %v623 = vadd.f32 0.0, %v622
  %v624 = vpop.f32.mrb[0].mxu0
  %v625 = vpop.f32.mrb[0].mxu0
  %v626 = vadd.f32 0.0, %v625
  %v627 = vpop.f32.mrb[0].mxu0
  %628 = vmatprep.mubr.bf16.mxu0 0
  %629 = vmatmul.mubr.bf16.gmra.mrb[0].mxu0 %v361
  %v630 = vpop.f32.mrb[0].mxu0
  %v631 = vadd.f32 0.0, %v630
  %v632 = vpop.f32.mrb[0].mxu0
  %v633 = vpop.f32.mrb[0].mxu0
  %v634 = vadd.f32 0.0, %v633
  %v635 = vpop.f32.mrb[0].mxu0
  %636 = vmatprep.mubr.bf16.mxu0 0
  %637 = vmatmul.mubr.bf16.gmra.mrb[0].mxu0 %v364
  %v638 = vpop.f32.mrb[0].mxu0
  %v639 = vadd.f32 0.0, %v638
  %v640 = vpop.f32.mrb[0].mxu0
  %v641 = vpop.f32.mrb[0].mxu0
  %v642 = vadd.f32 0.0, %v641
  %v643 = vpop.f32.mrb[0].mxu0
  %644 = vmatprep.mubr.bf16.mxu0 0
  %645 = vmatmul.mubr.bf16.gmra.mrb[0].mxu0 %v367
  %v646 = vpop.f32.mrb[0].mxu0
  %v647 = vadd.f32 0.0, %v646
  %v648 = vpop.f32.mrb[0].mxu0
  %v649 = vpop.f32.mrb[0].mxu0
  %v650 = vadd.f32 0.0, %v649
  %v651 = vpop.f32.mrb[0].mxu0
  %652 = vmatprep.mubr.bf16.mxu0 0
  %653 = vmatmul.mubr.bf16.gmra.mrb[0].mxu0 %v370
  %v654 = vpop.f32.mrb[0].mxu0
  %v655 = vadd.f32 0.0, %v654
  %v656 = vpop.f32.mrb[0].mxu0
  %v657 = vpop.f32.mrb[0].mxu0
  %v658 = vadd.f32 0.0, %v657
  %v659 = vpop.f32.mrb[0].mxu0
  %660 = vdwg.mxu0
  %v661 = vld [vmem:[%s2] sm:$0xff]
  %v662 = vld [vmem:[%s2 + $0x8] sm:$0xff]
  %v663 = vld [vmem:[%s2 + $0x10] sm:$0xff]
  %v664 = vld [vmem:[%s2 + $0x18] sm:$0xff]
  %v665 = vld [vmem:[%s2 + $0x20] sm:$0xff]
  %v666 = vld [vmem:[%s2 + $0x28] sm:$0xff]
  %v667 = vld [vmem:[%s2 + $0x30] sm:$0xff]
  %v668 = vld [vmem:[%s2 + $0x38] sm:$0xff]
  %v677 = vunpack.c.l.b16 %v661
  %v678 = vunpack.c.h.b16 %v661
  %v679 = vunpack.c.l.b16 %v662
  %v680 = vunpack.c.h.b16 %v662
  %v681 = vunpack.c.l.b16 %v663
  %v682 = vunpack.c.h.b16 %v663
  %v683 = vunpack.c.l.b16 %v664
  %v684 = vunpack.c.h.b16 %v664
  %v685 = vunpack.c.l.b16 %v665
  %v686 = vunpack.c.h.b16 %v665
  %v687 = vunpack.c.l.b16 %v666
  %v688 = vunpack.c.h.b16 %v666
  %v689 = vunpack.c.l.b16 %v667
  %v690 = vunpack.c.h.b16 %v667
  %v691 = vunpack.c.l.b16 %v668
  %v692 = vunpack.c.h.b16 %v668
  %v693 = vpack.c.b16 %v679, %v677
  %v694 = vpack.c.b16 %v680, %v678
  %v695 = vpack.c.b16 %v683, %v681
  %v696 = vpack.c.b16 %v684, %v682
  %v697 = vpack.c.b16 %v687, %v685
  %v698 = vpack.c.b16 %v688, %v686
  %v699 = vpack.c.b16 %v691, %v689
  %v700 = vpack.c.b16 %v692, %v690
  %709 = vmatprep.subr.bf16.mxu0 %v694
  %710 = vmatpush1.bf16.msra.mxu0 %v693
  %711 = vmatprep.subr.bf16.mxu0 %v696
  %712 = vmatpush1.bf16.msra.mxu0 %v695
  %713 = vmatprep.subr.bf16.mxu0 %v698
  %714 = vmatpush1.bf16.msra.mxu0 %v697
  %715 = vmatprep.subr.bf16.mxu0 %v700
  %716 = vmatpush1.bf16.msra.mxu0 %v699
  %717 = vmatprep.subr.bf16.mxu0 0
  %718 = vmatpush1.bf16.msra.mxu0 0
  %719 = vmatprep.subr.bf16.mxu0 0
  %720 = vmatpush1.bf16.msra.mxu0 0
  %721 = vmatprep.subr.bf16.mxu0 0
  %722 = vmatpush1.bf16.msra.mxu0 0
  %723 = vmatprep.subr.bf16.mxu0 0
  %724 = vmatpush1.bf16.msra.mxu0 0
  %725 = vmatprep.subr.bf16.mxu0 0
  %726 = vmatpush1.bf16.msra.mxu0 0
  %727 = vmatprep.subr.bf16.mxu0 0
  %728 = vmatpush1.bf16.msra.mxu0 0
  %729 = vmatprep.subr.bf16.mxu0 0
  %730 = vmatpush1.bf16.msra.mxu0 0
  %731 = vmatprep.subr.bf16.mxu0 0
  %732 = vmatpush1.bf16.msra.mxu0 0
  %733 = vmatprep.subr.bf16.mxu0 0
  %734 = vmatpush1.bf16.msra.mxu0 0
  %735 = vmatprep.subr.bf16.mxu0 0
  %736 = vmatpush1.bf16.msra.mxu0 0
  %737 = vmatprep.subr.bf16.mxu0 0
  %738 = vmatpush1.bf16.msra.mxu0 0
  %739 = vmatprep.subr.bf16.mxu0 0
  %740 = vmatpush1.bf16.msra.mxu0 0
  %741 = vmatprep.mubr.bf16.mxu0 0
  %742 = vmatmul.mubr.bf16.gmra.mrb[0].mxu0 %v277
  %v743 = vpop.f32.mrb[0].mxu0
  %v744 = vadd.f32 0.0, %v743
  %v745 = vpop.f32.mrb[0].mxu0
  %v746 = vadd.f32 0.0, %v745
  %v747 = vpop.f32.mrb[0].mxu0
  %v748 = vadd.f32 0.0, %v747
  %v749 = vpop.f32.mrb[0].mxu0
  %v750 = vadd.f32 0.0, %v749
  %751 = vmatprep.mubr.bf16.mxu0 0
  %752 = vmatmul.mubr.bf16.gmra.mrb[0].mxu0 %v280
  %v753 = vpop.f32.mrb[0].mxu0
  %v754 = vadd.f32 0.0, %v753
  %v755 = vpop.f32.mrb[0].mxu0
  %v756 = vadd.f32 0.0, %v755
  %v757 = vpop.f32.mrb[0].mxu0
  %v758 = vadd.f32 0.0, %v757
  %v759 = vpop.f32.mrb[0].mxu0
  %v760 = vadd.f32 0.0, %v759
  %761 = vmatprep.mubr.bf16.mxu0 0
  %762 = vmatmul.mubr.bf16.gmra.mrb[0].mxu0 %v283
  %v763 = vpop.f32.mrb[0].mxu0
  %v764 = vadd.f32 0.0, %v763
  %v765 = vpop.f32.mrb[0].mxu0
  %v766 = vadd.f32 0.0, %v765
  %v767 = vpop.f32.mrb[0].mxu0
  %v768 = vadd.f32 0.0, %v767
  %v769 = vpop.f32.mrb[0].mxu0
  %v770 = vadd.f32 0.0, %v769
  %771 = vmatprep.mubr.bf16.mxu0 0
  %772 = vmatmul.mubr.bf16.gmra.mrb[0].mxu0 %v286
  %v773 = vpop.f32.mrb[0].mxu0
  %v774 = vadd.f32 0.0, %v773
  %v775 = vpop.f32.mrb[0].mxu0
  %v776 = vadd.f32 0.0, %v775
  %v777 = vpop.f32.mrb[0].mxu0
  %v778 = vadd.f32 0.0, %v777
  %v779 = vpop.f32.mrb[0].mxu0
  %v780 = vadd.f32 0.0, %v779
  %781 = vmatprep.mubr.bf16.mxu0 0
  %782 = vmatmul.mubr.bf16.gmra.mrb[0].mxu0 %v289
  %v783 = vpop.f32.mrb[0].mxu0
  %v784 = vadd.f32 0.0, %v783
  %v785 = vpop.f32.mrb[0].mxu0
  %v786 = vadd.f32 0.0, %v785
  %v787 = vpop.f32.mrb[0].mxu0
  %v788 = vadd.f32 0.0, %v787
  %v789 = vpop.f32.mrb[0].mxu0
  %v790 = vadd.f32 0.0, %v789
  %791 = vmatprep.mubr.bf16.mxu0 0
  %792 = vmatmul.mubr.bf16.gmra.mrb[0].mxu0 %v292
  %v793 = vpop.f32.mrb[0].mxu0
  %v794 = vadd.f32 0.0, %v793
  %v795 = vpop.f32.mrb[0].mxu0
  %v796 = vadd.f32 0.0, %v795
  %v797 = vpop.f32.mrb[0].mxu0
  %v798 = vadd.f32 0.0, %v797
  %v799 = vpop.f32.mrb[0].mxu0
  %v800 = vadd.f32 0.0, %v799
  %801 = vmatprep.mubr.bf16.mxu0 0
  %802 = vmatmul.mubr.bf16.gmra.mrb[0].mxu0 %v295
  %v803 = vpop.f32.mrb[0].mxu0
  %v804 = vadd.f32 0.0, %v803
  %v805 = vpop.f32.mrb[0].mxu0
  %v806 = vadd.f32 0.0, %v805
  %v807 = vpop.f32.mrb[0].mxu0
  %v808 = vadd.f32 0.0, %v807
  %v809 = vpop.f32.mrb[0].mxu0
  %v810 = vadd.f32 0.0, %v809
  %811 = vmatprep.mubr.bf16.mxu0 0
  %812 = vmatmul.mubr.bf16.gmra.mrb[0].mxu0 %v298
  %v813 = vpop.f32.mrb[0].mxu0
  %v814 = vadd.f32 0.0, %v813
  %v815 = vpop.f32.mrb[0].mxu0
  %v816 = vadd.f32 0.0, %v815
  %v817 = vpop.f32.mrb[0].mxu0
  %v818 = vadd.f32 0.0, %v817
  %v819 = vpop.f32.mrb[0].mxu0
  %v820 = vadd.f32 0.0, %v819
  %821 = vmatprep.mubr.bf16.mxu0 0
  %822 = vmatmul.mubr.bf16.gmra.mrb[0].mxu0 %v301
  %v823 = vpop.f32.mrb[0].mxu0
  %v824 = vadd.f32 0.0, %v823
  %v825 = vpop.f32.mrb[0].mxu0
  %v826 = vadd.f32 0.0, %v825
  %v827 = vpop.f32.mrb[0].mxu0
  %v828 = vadd.f32 0.0, %v827
  %v829 = vpop.f32.mrb[0].mxu0
  %v830 = vadd.f32 0.0, %v829
  %831 = vmatprep.mubr.bf16.mxu0 0
  %832 = vmatmul.mubr.bf16.gmra.mrb[0].mxu0 %v304
  %v833 = vpop.f32.mrb[0].mxu0
  %v834 = vadd.f32 0.0, %v833
  %v835 = vpop.f32.mrb[0].mxu0
  %v836 = vadd.f32 0.0, %v835
  %v837 = vpop.f32.mrb[0].mxu0
  %v838 = vadd.f32 0.0, %v837
  %v839 = vpop.f32.mrb[0].mxu0
  %v840 = vadd.f32 0.0, %v839
  %841 = vmatprep.mubr.bf16.mxu0 0
  %842 = vmatmul.mubr.bf16.gmra.mrb[0].mxu0 %v307
  %v843 = vpop.f32.mrb[0].mxu0
  %v844 = vadd.f32 0.0, %v843
  %v845 = vpop.f32.mrb[0].mxu0
  %v846 = vadd.f32 0.0, %v845
  %v847 = vpop.f32.mrb[0].mxu0
  %v848 = vadd.f32 0.0, %v847
  %v849 = vpop.f32.mrb[0].mxu0
  %v850 = vadd.f32 0.0, %v849
  %851 = vmatprep.mubr.bf16.mxu0 0
  %852 = vmatmul.mubr.bf16.gmra.mrb[0].mxu0 %v310
  %v853 = vpop.f32.mrb[0].mxu0
  %v854 = vadd.f32 0.0, %v853
  %v855 = vpop.f32.mrb[0].mxu0
  %v856 = vadd.f32 0.0, %v855
  %v857 = vpop.f32.mrb[0].mxu0
  %v858 = vadd.f32 0.0, %v857
  %v859 = vpop.f32.mrb[0].mxu0
  %v860 = vadd.f32 0.0, %v859
  %861 = vmatprep.mubr.bf16.mxu0 0
  %862 = vmatmul.mubr.bf16.gmra.mrb[0].mxu0 %v313
  %v863 = vpop.f32.mrb[0].mxu0
  %v864 = vadd.f32 0.0, %v863
  %v865 = vpop.f32.mrb[0].mxu0
  %v866 = vadd.f32 0.0, %v865
  %v867 = vpop.f32.mrb[0].mxu0
  %v868 = vadd.f32 0.0, %v867
  %v869 = vpop.f32.mrb[0].mxu0
  %v870 = vadd.f32 0.0, %v869
  %871 = vmatprep.mubr.bf16.mxu0 0
  %872 = vmatmul.mubr.bf16.gmra.mrb[0].mxu0 %v316
  %v873 = vpop.f32.mrb[0].mxu0
  %v874 = vadd.f32 0.0, %v873
  %v875 = vpop.f32.mrb[0].mxu0
  %v876 = vadd.f32 0.0, %v875
  %v877 = vpop.f32.mrb[0].mxu0
  %v878 = vadd.f32 0.0, %v877
  %v879 = vpop.f32.mrb[0].mxu0
  %v880 = vadd.f32 0.0, %v879
  %881 = vmatprep.mubr.bf16.mxu0 0
  %882 = vmatmul.mubr.bf16.gmra.mrb[0].mxu0 %v319
  %v883 = vpop.f32.mrb[0].mxu0
  %v884 = vadd.f32 0.0, %v883
  %v885 = vpop.f32.mrb[0].mxu0
  %v886 = vadd.f32 0.0, %v885
  %v887 = vpop.f32.mrb[0].mxu0
  %v888 = vadd.f32 0.0, %v887
  %v889 = vpop.f32.mrb[0].mxu0
  %v890 = vadd.f32 0.0, %v889
  %891 = vmatprep.mubr.bf16.mxu0 0
  %892 = vmatmul.mubr.bf16.gmra.mrb[0].mxu0 %v322
  %v893 = vpop.f32.mrb[0].mxu0
  %v894 = vadd.f32 0.0, %v893
  %v895 = vpop.f32.mrb[0].mxu0
  %v896 = vadd.f32 0.0, %v895
  %v897 = vpop.f32.mrb[0].mxu0
  %v898 = vadd.f32 0.0, %v897
  %v899 = vpop.f32.mrb[0].mxu0
  %v900 = vadd.f32 0.0, %v899
  %901 = vmatprep.mubr.bf16.mxu0 0
  %902 = vmatmul.mubr.bf16.gmra.mrb[0].mxu0 %v325
  %v903 = vpop.f32.mrb[0].mxu0
  %v904 = vadd.f32 0.0, %v903
  %v905 = vpop.f32.mrb[0].mxu0
  %v906 = vadd.f32 0.0, %v905
  %v907 = vpop.f32.mrb[0].mxu0
  %v908 = vadd.f32 0.0, %v907
  %v909 = vpop.f32.mrb[0].mxu0
  %v910 = vadd.f32 0.0, %v909
  %911 = vmatprep.mubr.bf16.mxu0 0
  %912 = vmatmul.mubr.bf16.gmra.mrb[0].mxu0 %v328
  %v913 = vpop.f32.mrb[0].mxu0
  %v914 = vadd.f32 0.0, %v913
  %v915 = vpop.f32.mrb[0].mxu0
  %v916 = vadd.f32 0.0, %v915
  %v917 = vpop.f32.mrb[0].mxu0
  %v918 = vadd.f32 0.0, %v917
  %v919 = vpop.f32.mrb[0].mxu0
  %v920 = vadd.f32 0.0, %v919
  %921 = vmatprep.mubr.bf16.mxu0 0
  %922 = vmatmul.mubr.bf16.gmra.mrb[0].mxu0 %v331
  %v923 = vpop.f32.mrb[0].mxu0
  %v924 = vadd.f32 0.0, %v923
  %v925 = vpop.f32.mrb[0].mxu0
  %v926 = vadd.f32 0.0, %v925
  %v927 = vpop.f32.mrb[0].mxu0
  %v928 = vadd.f32 0.0, %v927
  %v929 = vpop.f32.mrb[0].mxu0
  %v930 = vadd.f32 0.0, %v929
  %931 = vmatprep.mubr.bf16.mxu0 0
  %932 = vmatmul.mubr.bf16.gmra.mrb[0].mxu0 %v334
  %v933 = vpop.f32.mrb[0].mxu0
  %v934 = vadd.f32 0.0, %v933
  %v935 = vpop.f32.mrb[0].mxu0
  %v936 = vadd.f32 0.0, %v935
  %v937 = vpop.f32.mrb[0].mxu0
  %v938 = vadd.f32 0.0, %v937
  %v939 = vpop.f32.mrb[0].mxu0
  %v940 = vadd.f32 0.0, %v939
  %941 = vmatprep.mubr.bf16.mxu0 0
  %942 = vmatmul.mubr.bf16.gmra.mrb[0].mxu0 %v337
  %v943 = vpop.f32.mrb[0].mxu0
  %v944 = vadd.f32 0.0, %v943
  %v945 = vpop.f32.mrb[0].mxu0
  %v946 = vadd.f32 0.0, %v945
  %v947 = vpop.f32.mrb[0].mxu0
  %v948 = vadd.f32 0.0, %v947
  %v949 = vpop.f32.mrb[0].mxu0
  %v950 = vadd.f32 0.0, %v949
  %951 = vmatprep.mubr.bf16.mxu0 0
  %952 = vmatmul.mubr.bf16.gmra.mrb[0].mxu0 %v340
  %v953 = vpop.f32.mrb[0].mxu0
  %v954 = vadd.f32 0.0, %v953
  %v955 = vpop.f32.mrb[0].mxu0
  %v956 = vadd.f32 0.0, %v955
  %v957 = vpop.f32.mrb[0].mxu0
  %v958 = vadd.f32 0.0, %v957
  %v959 = vpop.f32.mrb[0].mxu0
  %v960 = vadd.f32 0.0, %v959
  %961 = vmatprep.mubr.bf16.mxu0 0
  %962 = vmatmul.mubr.bf16.gmra.mrb[0].mxu0 %v343
  %v963 = vpop.f32.mrb[0].mxu0
  %v964 = vadd.f32 0.0, %v963
  %v965 = vpop.f32.mrb[0].mxu0
  %v966 = vadd.f32 0.0, %v965
  %v967 = vpop.f32.mrb[0].mxu0
  %v968 = vadd.f32 0.0, %v967
  %v969 = vpop.f32.mrb[0].mxu0
  %v970 = vadd.f32 0.0, %v969
  %971 = vmatprep.mubr.bf16.mxu0 0
  %972 = vmatmul.mubr.bf16.gmra.mrb[0].mxu0 %v346
  %v973 = vpop.f32.mrb[0].mxu0
  %v974 = vadd.f32 0.0, %v973
  %v975 = vpop.f32.mrb[0].mxu0
  %v976 = vadd.f32 0.0, %v975
  %v977 = vpop.f32.mrb[0].mxu0
  %v978 = vadd.f32 0.0, %v977
  %v979 = vpop.f32.mrb[0].mxu0
  %v980 = vadd.f32 0.0, %v979
  %981 = vmatprep.mubr.bf16.mxu0 0
  %982 = vmatmul.mubr.bf16.gmra.mrb[0].mxu0 %v349
  %v983 = vpop.f32.mrb[0].mxu0
  %v984 = vadd.f32 0.0, %v983
  %v985 = vpop.f32.mrb[0].mxu0
  %v986 = vadd.f32 0.0, %v985
  %v987 = vpop.f32.mrb[0].mxu0
  %v988 = vadd.f32 0.0, %v987
  %v989 = vpop.f32.mrb[0].mxu0
  %v990 = vadd.f32 0.0, %v989
  %991 = vmatprep.mubr.bf16.mxu0 0
  %992 = vmatmul.mubr.bf16.gmra.mrb[0].mxu0 %v352
  %v993 = vpop.f32.mrb[0].mxu0
  %v994 = vadd.f32 0.0, %v993
  %v995 = vpop.f32.mrb[0].mxu0
  %v996 = vadd.f32 0.0, %v995
  %v997 = vpop.f32.mrb[0].mxu0
  %v998 = vadd.f32 0.0, %v997
  %v999 = vpop.f32.mrb[0].mxu0
  %v1000 = vadd.f32 0.0, %v999
  %1001 = vmatprep.mubr.bf16.mxu0 0
  %1002 = vmatmul.mubr.bf16.gmra.mrb[0].mxu0 %v355
  %v1003 = vpop.f32.mrb[0].mxu0
  %v1004 = vadd.f32 0.0, %v1003
  %v1005 = vpop.f32.mrb[0].mxu0
  %v1006 = vadd.f32 0.0, %v1005
  %v1007 = vpop.f32.mrb[0].mxu0
  %v1008 = vadd.f32 0.0, %v1007
  %v1009 = vpop.f32.mrb[0].mxu0
  %v1010 = vadd.f32 0.0, %v1009
  %1011 = vmatprep.mubr.bf16.mxu0 0
  %1012 = vmatmul.mubr.bf16.gmra.mrb[0].mxu0 %v358
  %v1013 = vpop.f32.mrb[0].mxu0
  %v1014 = vadd.f32 0.0, %v1013
  %v1015 = vpop.f32.mrb[0].mxu0
  %v1016 = vadd.f32 0.0, %v1015
  %v1017 = vpop.f32.mrb[0].mxu0
  %v1018 = vadd.f32 0.0, %v1017
  %v1019 = vpop.f32.mrb[0].mxu0
  %v1020 = vadd.f32 0.0, %v1019
  %1021 = vmatprep.mubr.bf16.mxu0 0
  %1022 = vmatmul.mubr.bf16.gmra.mrb[0].mxu0 %v361
  %v1023 = vpop.f32.mrb[0].mxu0
  %v1024 = vadd.f32 0.0, %v1023
  %v1025 = vpop.f32.mrb[0].mxu0
  %v1026 = vadd.f32 0.0, %v1025
  %v1027 = vpop.f32.mrb[0].mxu0
  %v1028 = vadd.f32 0.0, %v1027
  %v1029 = vpop.f32.mrb[0].mxu0
  %v1030 = vadd.f32 0.0, %v1029
  %1031 = vmatprep.mubr.bf16.mxu0 0
  %1032 = vmatmul.mubr.bf16.gmra.mrb[0].mxu0 %v364
  %v1033 = vpop.f32.mrb[0].mxu0
  %v1034 = vadd.f32 0.0, %v1033
  %v1035 = vpop.f32.mrb[0].mxu0
  %v1036 = vadd.f32 0.0, %v1035
  %v1037 = vpop.f32.mrb[0].mxu0
  %v1038 = vadd.f32 0.0, %v1037
  %v1039 = vpop.f32.mrb[0].mxu0
  %v1040 = vadd.f32 0.0, %v1039
  %1041 = vmatprep.mubr.bf16.mxu0 0
  %1042 = vmatmul.mubr.bf16.gmra.mrb[0].mxu0 %v367
  %v1043 = vpop.f32.mrb[0].mxu0
  %v1044 = vadd.f32 0.0, %v1043
  %v1045 = vpop.f32.mrb[0].mxu0
  %v1046 = vadd.f32 0.0, %v1045
  %v1047 = vpop.f32.mrb[0].mxu0
  %v1048 = vadd.f32 0.0, %v1047
  %v1049 = vpop.f32.mrb[0].mxu0
  %v1050 = vadd.f32 0.0, %v1049
  %1051 = vmatprep.mubr.bf16.mxu0 0
  %1052 = vmatmul.mubr.bf16.gmra.mrb[0].mxu0 %v370
  %v1053 = vpop.f32.mrb[0].mxu0
  %v1054 = vadd.f32 0.0, %v1053
  %v1055 = vpop.f32.mrb[0].mxu0
  %v1056 = vadd.f32 0.0, %v1055
  %v1057 = vpop.f32.mrb[0].mxu0
  %v1058 = vadd.f32 0.0, %v1057
  %v1059 = vpop.f32.mrb[0].mxu0
  %v1060 = vadd.f32 0.0, %v1059
  %1061 = vdwg.mxu0
  %v1062 = vpack.c.bf16 %v410, %v407
  %v1063 = vpack.c.bf16 %v418, %v415
  %v1064 = vpack.c.bf16 %v426, %v423
  %v1065 = vpack.c.bf16 %v434, %v431
  %v1066 = vpack.c.bf16 %v442, %v439
  %v1067 = vpack.c.bf16 %v450, %v447
  %v1068 = vpack.c.bf16 %v458, %v455
  %v1069 = vpack.c.bf16 %v466, %v463
  %v1070 = vpack.c.bf16 %v474, %v471
  %v1071 = vpack.c.bf16 %v482, %v479
  %v1072 = vpack.c.bf16 %v490, %v487
  %v1073 = vpack.c.bf16 %v498, %v495
  %v1074 = vpack.c.bf16 %v506, %v503
  %v1075 = vpack.c.bf16 %v514, %v511
  %v1076 = vpack.c.bf16 %v522, %v519
  %v1077 = vpack.c.bf16 %v530, %v527
  %v1078 = vpack.c.bf16 %v538, %v535
  %v1079 = vpack.c.bf16 %v546, %v543
  %v1080 = vpack.c.bf16 %v554, %v551
  %v1081 = vpack.c.bf16 %v562, %v559
  %v1082 = vpack.c.bf16 %v570, %v567
  %v1083 = vpack.c.bf16 %v578, %v575
  %v1084 = vpack.c.bf16 %v586, %v583
  %v1085 = vpack.c.bf16 %v594, %v591
  %v1086 = vpack.c.bf16 %v602, %v599
  %v1087 = vpack.c.bf16 %v610, %v607
  %v1088 = vpack.c.bf16 %v618, %v615
  %v1089 = vpack.c.bf16 %v626, %v623
  %v1090 = vpack.c.bf16 %v634, %v631
  %v1091 = vpack.c.bf16 %v642, %v639
  %v1092 = vpack.c.bf16 %v650, %v647
  %v1093 = vpack.c.bf16 %v658, %v655
  %v1126 = vunpack.c.l.b16 %v1062
  %v1127 = vunpack.c.h.b16 %v1062
  %v1128 = vunpack.c.l.b16 %v1063
  %v1129 = vunpack.c.h.b16 %v1063
  %v1130 = vunpack.c.l.b16 %v1064
  %v1131 = vunpack.c.h.b16 %v1064
  %v1132 = vunpack.c.l.b16 %v1065
  %v1133 = vunpack.c.h.b16 %v1065
  %v1134 = vunpack.c.l.b16 %v1066
  %v1135 = vunpack.c.h.b16 %v1066
  %v1136 = vunpack.c.l.b16 %v1067
  %v1137 = vunpack.c.h.b16 %v1067
  %v1138 = vunpack.c.l.b16 %v1068
  %v1139 = vunpack.c.h.b16 %v1068
  %v1140 = vunpack.c.l.b16 %v1069
  %v1141 = vunpack.c.h.b16 %v1069
  %v1142 = vunpack.c.l.b16 %v1070
  %v1143 = vunpack.c.h.b16 %v1070
  %v1144 = vunpack.c.l.b16 %v1071
  %v1145 = vunpack.c.h.b16 %v1071
  %v1146 = vunpack.c.l.b16 %v1072
  %v1147 = vunpack.c.h.b16 %v1072
  %v1148 = vunpack.c.l.b16 %v1073
  %v1149 = vunpack.c.h.b16 %v1073
  %v1150 = vunpack.c.l.b16 %v1074
  %v1151 = vunpack.c.h.b16 %v1074
  %v1152 = vunpack.c.l.b16 %v1075
  %v1153 = vunpack.c.h.b16 %v1075
  %v1154 = vunpack.c.l.b16 %v1076
  %v1155 = vunpack.c.h.b16 %v1076
  %v1156 = vunpack.c.l.b16 %v1077
  %v1157 = vunpack.c.h.b16 %v1077
  %v1158 = vunpack.c.l.b16 %v1078
  %v1159 = vunpack.c.h.b16 %v1078
  %v1160 = vunpack.c.l.b16 %v1079
  %v1161 = vunpack.c.h.b16 %v1079
  %v1162 = vunpack.c.l.b16 %v1080
  %v1163 = vunpack.c.h.b16 %v1080
  %v1164 = vunpack.c.l.b16 %v1081
  %v1165 = vunpack.c.h.b16 %v1081
  %v1166 = vunpack.c.l.b16 %v1082
  %v1167 = vunpack.c.h.b16 %v1082
  %v1168 = vunpack.c.l.b16 %v1083
  %v1169 = vunpack.c.h.b16 %v1083
  %v1170 = vunpack.c.l.b16 %v1084
  %v1171 = vunpack.c.h.b16 %v1084
  %v1172 = vunpack.c.l.b16 %v1085
  %v1173 = vunpack.c.h.b16 %v1085
  %v1174 = vunpack.c.l.b16 %v1086
  %v1175 = vunpack.c.h.b16 %v1086
  %v1176 = vunpack.c.l.b16 %v1087
  %v1177 = vunpack.c.h.b16 %v1087
  %v1178 = vunpack.c.l.b16 %v1088
  %v1179 = vunpack.c.h.b16 %v1088
  %v1180 = vunpack.c.l.b16 %v1089
  %v1181 = vunpack.c.h.b16 %v1089
  %v1182 = vunpack.c.l.b16 %v1090
  %v1183 = vunpack.c.h.b16 %v1090
  %v1184 = vunpack.c.l.b16 %v1091
  %v1185 = vunpack.c.h.b16 %v1091
  %v1186 = vunpack.c.l.b16 %v1092
  %v1187 = vunpack.c.h.b16 %v1092
  %v1188 = vunpack.c.l.b16 %v1093
  %v1189 = vunpack.c.h.b16 %v1093
  %v1190 = vpack.c.b16 %v1126, %v1126
  %v1191 = vpack.c.b16 %v1127, %v1127
  %v1192 = vpack.c.b16 %v1128, %v1128
  %v1193 = vpack.c.b16 %v1129, %v1129
  %v1194 = vpack.c.b16 %v1130, %v1130
  %v1195 = vpack.c.b16 %v1131, %v1131
  %v1196 = vpack.c.b16 %v1132, %v1132
  %v1197 = vpack.c.b16 %v1133, %v1133
  %v1198 = vpack.c.b16 %v1134, %v1134
  %v1199 = vpack.c.b16 %v1135, %v1135
  %v1200 = vpack.c.b16 %v1136, %v1136
  %v1201 = vpack.c.b16 %v1137, %v1137
  %v1202 = vpack.c.b16 %v1138, %v1138
  %v1203 = vpack.c.b16 %v1139, %v1139
  %v1204 = vpack.c.b16 %v1140, %v1140
  %v1205 = vpack.c.b16 %v1141, %v1141
  %v1206 = vpack.c.b16 %v1142, %v1142
  %v1207 = vpack.c.b16 %v1143, %v1143
  %v1208 = vpack.c.b16 %v1144, %v1144
  %v1209 = vpack.c.b16 %v1145, %v1145
  %v1210 = vpack.c.b16 %v1146, %v1146
  %v1211 = vpack.c.b16 %v1147, %v1147
  %v1212 = vpack.c.b16 %v1148, %v1148
  %v1213 = vpack.c.b16 %v1149, %v1149
  %v1214 = vpack.c.b16 %v1150, %v1150
  %v1215 = vpack.c.b16 %v1151, %v1151
  %v1216 = vpack.c.b16 %v1152, %v1152
  %v1217 = vpack.c.b16 %v1153, %v1153
  %v1218 = vpack.c.b16 %v1154, %v1154
  %v1219 = vpack.c.b16 %v1155, %v1155
  %v1220 = vpack.c.b16 %v1156, %v1156
  %v1221 = vpack.c.b16 %v1157, %v1157
  %v1222 = vpack.c.b16 %v1158, %v1158
  %v1223 = vpack.c.b16 %v1159, %v1159
  %v1224 = vpack.c.b16 %v1160, %v1160
  %v1225 = vpack.c.b16 %v1161, %v1161
  %v1226 = vpack.c.b16 %v1162, %v1162
  %v1227 = vpack.c.b16 %v1163, %v1163
  %v1228 = vpack.c.b16 %v1164, %v1164
  %v1229 = vpack.c.b16 %v1165, %v1165
  %v1230 = vpack.c.b16 %v1166, %v1166
  %v1231 = vpack.c.b16 %v1167, %v1167
  %v1232 = vpack.c.b16 %v1168, %v1168
  %v1233 = vpack.c.b16 %v1169, %v1169
  %v1234 = vpack.c.b16 %v1170, %v1170
  %v1235 = vpack.c.b16 %v1171, %v1171
  %v1236 = vpack.c.b16 %v1172, %v1172
  %v1237 = vpack.c.b16 %v1173, %v1173
  %v1238 = vpack.c.b16 %v1174, %v1174
  %v1239 = vpack.c.b16 %v1175, %v1175
  %v1240 = vpack.c.b16 %v1176, %v1176
  %v1241 = vpack.c.b16 %v1177, %v1177
  %v1242 = vpack.c.b16 %v1178, %v1178
  %v1243 = vpack.c.b16 %v1179, %v1179
  %v1244 = vpack.c.b16 %v1180, %v1180
  %v1245 = vpack.c.b16 %v1181, %v1181
  %v1246 = vpack.c.b16 %v1182, %v1182
  %v1247 = vpack.c.b16 %v1183, %v1183
  %v1248 = vpack.c.b16 %v1184, %v1184
  %v1249 = vpack.c.b16 %v1185, %v1185
  %v1250 = vpack.c.b16 %v1186, %v1186
  %v1251 = vpack.c.b16 %v1187, %v1187
  %v1252 = vpack.c.b16 %v1188, %v1188
  %v1253 = vpack.c.b16 %v1189, %v1189
  %vm1318 = vcmask 519168
  %1319 = vst.msk [vmem:[%s3] sm:$0xf] %vm1318, %v1190
  %1320 = vst.msk [vmem:[%s3 + $0x4] sm:$0xf] %vm1318, %v1191
  %1321 = vst.msk [vmem:[%s3 + $0x8] sm:$0xf] %vm1318, %v1192
  %1322 = vst.msk [vmem:[%s3 + $0xc] sm:$0xf] %vm1318, %v1193
  %1323 = vst.msk [vmem:[%s3 + $0x10] sm:$0xf] %vm1318, %v1194
  %1324 = vst.msk [vmem:[%s3 + $0x14] sm:$0xf] %vm1318, %v1195
  %1325 = vst.msk [vmem:[%s3 + $0x18] sm:$0xf] %vm1318, %v1196
  %1326 = vst.msk [vmem:[%s3 + $0x1c] sm:$0xf] %vm1318, %v1197
  %1327 = vst.msk [vmem:[%s3 + $0x20] sm:$0xf] %vm1318, %v1198
  %1328 = vst.msk [vmem:[%s3 + $0x24] sm:$0xf] %vm1318, %v1199
  %1329 = vst.msk [vmem:[%s3 + $0x28] sm:$0xf] %vm1318, %v1200
  %1330 = vst.msk [vmem:[%s3 + $0x2c] sm:$0xf] %vm1318, %v1201
  %1331 = vst.msk [vmem:[%s3 + $0x30] sm:$0xf] %vm1318, %v1202
  %1332 = vst.msk [vmem:[%s3 + $0x34] sm:$0xf] %vm1318, %v1203
  %1333 = vst.msk [vmem:[%s3 + $0x38] sm:$0xf] %vm1318, %v1204
  %1334 = vst.msk [vmem:[%s3 + $0x3c] sm:$0xf] %vm1318, %v1205
  %1335 = vst.msk [vmem:[%s3 + $0x40] sm:$0xf] %vm1318, %v1206
  %1336 = vst.msk [vmem:[%s3 + $0x44] sm:$0xf] %vm1318, %v1207
  %1337 = vst.msk [vmem:[%s3 + $0x48] sm:$0xf] %vm1318, %v1208
  %1338 = vst.msk [vmem:[%s3 + $0x4c] sm:$0xf] %vm1318, %v1209
  %1339 = vst.msk [vmem:[%s3 + $0x50] sm:$0xf] %vm1318, %v1210
  %1340 = vst.msk [vmem:[%s3 + $0x54] sm:$0xf] %vm1318, %v1211
  %1341 = vst.msk [vmem:[%s3 + $0x58] sm:$0xf] %vm1318, %v1212
  %1342 = vst.msk [vmem:[%s3 + $0x5c] sm:$0xf] %vm1318, %v1213
  %1343 = vst.msk [vmem:[%s3 + $0x60] sm:$0xf] %vm1318, %v1214
  %1344 = vst.msk [vmem:[%s3 + $0x64] sm:$0xf] %vm1318, %v1215
  %1345 = vst.msk [vmem:[%s3 + $0x68] sm:$0xf] %vm1318, %v1216
  %1346 = vst.msk [vmem:[%s3 + $0x6c] sm:$0xf] %vm1318, %v1217
  %1347 = vst.msk [vmem:[%s3 + $0x70] sm:$0xf] %vm1318, %v1218
  %1348 = vst.msk [vmem:[%s3 + $0x74] sm:$0xf] %vm1318, %v1219
  %1349 = vst.msk [vmem:[%s3 + $0x78] sm:$0xf] %vm1318, %v1220
  %1350 = vst.msk [vmem:[%s3 + $0x7c] sm:$0xf] %vm1318, %v1221
  %1351 = vst.msk [vmem:[%s3 + $0x80] sm:$0xf] %vm1318, %v1222
  %1352 = vst.msk [vmem:[%s3 + $0x84] sm:$0xf] %vm1318, %v1223
  %1353 = vst.msk [vmem:[%s3 + $0x88] sm:$0xf] %vm1318, %v1224
  %1354 = vst.msk [vmem:[%s3 + $0x8c] sm:$0xf] %vm1318, %v1225
  %1355 = vst.msk [vmem:[%s3 + $0x90] sm:$0xf] %vm1318, %v1226
  %1356 = vst.msk [vmem:[%s3 + $0x94] sm:$0xf] %vm1318, %v1227
  %1357 = vst.msk [vmem:[%s3 + $0x98] sm:$0xf] %vm1318, %v1228
  %1358 = vst.msk [vmem:[%s3 + $0x9c] sm:$0xf] %vm1318, %v1229
  %1359 = vst.msk [vmem:[%s3 + $0xa0] sm:$0xf] %vm1318, %v1230
  %1360 = vst.msk [vmem:[%s3 + $0xa4] sm:$0xf] %vm1318, %v1231
  %1361 = vst.msk [vmem:[%s3 + $0xa8] sm:$0xf] %vm1318, %v1232
  %1362 = vst.msk [vmem:[%s3 + $0xac] sm:$0xf] %vm1318, %v1233
  %1363 = vst.msk [vmem:[%s3 + $0xb0] sm:$0xf] %vm1318, %v1234
  %1364 = vst.msk [vmem:[%s3 + $0xb4] sm:$0xf] %vm1318, %v1235
  %1365 = vst.msk [vmem:[%s3 + $0xb8] sm:$0xf] %vm1318, %v1236
  %1366 = vst.msk [vmem:[%s3 + $0xbc] sm:$0xf] %vm1318, %v1237
  %1367 = vst.msk [vmem:[%s3 + $0xc0] sm:$0xf] %vm1318, %v1238
  %1368 = vst.msk [vmem:[%s3 + $0xc4] sm:$0xf] %vm1318, %v1239
  %1369 = vst.msk [vmem:[%s3 + $0xc8] sm:$0xf] %vm1318, %v1240
  %1370 = vst.msk [vmem:[%s3 + $0xcc] sm:$0xf] %vm1318, %v1241
  %1371 = vst.msk [vmem:[%s3 + $0xd0] sm:$0xf] %vm1318, %v1242
  %1372 = vst.msk [vmem:[%s3 + $0xd4] sm:$0xf] %vm1318, %v1243
  %1373 = vst.msk [vmem:[%s3 + $0xd8] sm:$0xf] %vm1318, %v1244
  %1374 = vst.msk [vmem:[%s3 + $0xdc] sm:$0xf] %vm1318, %v1245
  %1375 = vst.msk [vmem:[%s3 + $0xe0] sm:$0xf] %vm1318, %v1246
  %1376 = vst.msk [vmem:[%s3 + $0xe4] sm:$0xf] %vm1318, %v1247
  %1377 = vst.msk [vmem:[%s3 + $0xe8] sm:$0xf] %vm1318, %v1248
  %1378 = vst.msk [vmem:[%s3 + $0xec] sm:$0xf] %vm1318, %v1249
  %1379 = vst.msk [vmem:[%s3 + $0xf0] sm:$0xf] %vm1318, %v1250
  %1380 = vst.msk [vmem:[%s3 + $0xf4] sm:$0xf] %vm1318, %v1251
  %1381 = vst.msk [vmem:[%s3 + $0xf8] sm:$0xf] %vm1318, %v1252
  %1382 = vst.msk [vmem:[%s3 + $0xfc] sm:$0xf] %vm1318, %v1253
  %v1383 = vpack.c.bf16 %v748, %v744
  %v1384 = vpack.c.bf16 %v750, %v746
  %v1385 = vpack.c.bf16 %v758, %v754
  %v1386 = vpack.c.bf16 %v760, %v756
  %v1387 = vpack.c.bf16 %v768, %v764
  %v1388 = vpack.c.bf16 %v770, %v766
  %v1389 = vpack.c.bf16 %v778, %v774
  %v1390 = vpack.c.bf16 %v780, %v776
  %v1391 = vpack.c.bf16 %v788, %v784
  %v1392 = vpack.c.bf16 %v790, %v786
  %v1393 = vpack.c.bf16 %v798, %v794
  %v1394 = vpack.c.bf16 %v800, %v796
  %v1395 = vpack.c.bf16 %v808, %v804
  %v1396 = vpack.c.bf16 %v810, %v806
  %v1397 = vpack.c.bf16 %v818, %v814
  %v1398 = vpack.c.bf16 %v820, %v816
  %v1399 = vpack.c.bf16 %v828, %v824
  %v1400 = vpack.c.bf16 %v830, %v826
  %v1401 = vpack.c.bf16 %v838, %v834
  %v1402 = vpack.c.bf16 %v840, %v836
  %v1403 = vpack.c.bf16 %v848, %v844
  %v1404 = vpack.c.bf16 %v850, %v846
  %v1405 = vpack.c.bf16 %v858, %v854
  %v1406 = vpack.c.bf16 %v860, %v856
  %v1407 = vpack.c.bf16 %v868, %v864
  %v1408 = vpack.c.bf16 %v870, %v866
  %v1409 = vpack.c.bf16 %v878, %v874
  %v1410 = vpack.c.bf16 %v880, %v876
  %v1411 = vpack.c.bf16 %v888, %v884
  %v1412 = vpack.c.bf16 %v890, %v886
  %v1413 = vpack.c.bf16 %v898, %v894
  %v1414 = vpack.c.bf16 %v900, %v896
  %v1415 = vpack.c.bf16 %v908, %v904
  %v1416 = vpack.c.bf16 %v910, %v906
  %v1417 = vpack.c.bf16 %v918, %v914
  %v1418 = vpack.c.bf16 %v920, %v916
  %v1419 = vpack.c.bf16 %v928, %v924
  %v1420 = vpack.c.bf16 %v930, %v926
  %v1421 = vpack.c.bf16 %v938, %v934
  %v1422 = vpack.c.bf16 %v940, %v936
  %v1423 = vpack.c.bf16 %v948, %v944
  %v1424 = vpack.c.bf16 %v950, %v946
  %v1425 = vpack.c.bf16 %v958, %v954
  %v1426 = vpack.c.bf16 %v960, %v956
  %v1427 = vpack.c.bf16 %v968, %v964
  %v1428 = vpack.c.bf16 %v970, %v966
  %v1429 = vpack.c.bf16 %v978, %v974
  %v1430 = vpack.c.bf16 %v980, %v976
  %v1431 = vpack.c.bf16 %v988, %v984
  %v1432 = vpack.c.bf16 %v990, %v986
  %v1433 = vpack.c.bf16 %v998, %v994
  %v1434 = vpack.c.bf16 %v1000, %v996
  %v1435 = vpack.c.bf16 %v1008, %v1004
  %v1436 = vpack.c.bf16 %v1010, %v1006
  %v1437 = vpack.c.bf16 %v1018, %v1014
  %v1438 = vpack.c.bf16 %v1020, %v1016
  %v1439 = vpack.c.bf16 %v1028, %v1024
  %v1440 = vpack.c.bf16 %v1030, %v1026
  %v1441 = vpack.c.bf16 %v1038, %v1034
  %v1442 = vpack.c.bf16 %v1040, %v1036
  %v1443 = vpack.c.bf16 %v1048, %v1044
  %v1444 = vpack.c.bf16 %v1050, %v1046
  %v1445 = vpack.c.bf16 %v1058, %v1054
  %v1446 = vpack.c.bf16 %v1060, %v1056
  %v1511 = vunpack.c.l.b16 %v1383
  %v1512 = vunpack.c.l.b16 %v1384
  %v1513 = vunpack.c.h.b16 %v1383
  %v1514 = vunpack.c.h.b16 %v1384
  %v1515 = vunpack.c.l.b16 %v1385
  %v1516 = vunpack.c.l.b16 %v1386
  %v1517 = vunpack.c.h.b16 %v1385
  %v1518 = vunpack.c.h.b16 %v1386
  %v1519 = vunpack.c.l.b16 %v1387
  %v1520 = vunpack.c.l.b16 %v1388
  %v1521 = vunpack.c.h.b16 %v1387
  %v1522 = vunpack.c.h.b16 %v1388
  %v1523 = vunpack.c.l.b16 %v1389
  %v1524 = vunpack.c.l.b16 %v1390
  %v1525 = vunpack.c.h.b16 %v1389
  %v1526 = vunpack.c.h.b16 %v1390
  %v1527 = vunpack.c.l.b16 %v1391
  %v1528 = vunpack.c.l.b16 %v1392
  %v1529 = vunpack.c.h.b16 %v1391
  %v1530 = vunpack.c.h.b16 %v1392
  %v1531 = vunpack.c.l.b16 %v1393
  %v1532 = vunpack.c.l.b16 %v1394
  %v1533 = vunpack.c.h.b16 %v1393
  %v1534 = vunpack.c.h.b16 %v1394
  %v1535 = vunpack.c.l.b16 %v1395
  %v1536 = vunpack.c.l.b16 %v1396
  %v1537 = vunpack.c.h.b16 %v1395
  %v1538 = vunpack.c.h.b16 %v1396
  %v1539 = vunpack.c.l.b16 %v1397
  %v1540 = vunpack.c.l.b16 %v1398
  %v1541 = vunpack.c.h.b16 %v1397
  %v1542 = vunpack.c.h.b16 %v1398
  %v1543 = vunpack.c.l.b16 %v1399
  %v1544 = vunpack.c.l.b16 %v1400
  %v1545 = vunpack.c.h.b16 %v1399
  %v1546 = vunpack.c.h.b16 %v1400
  %v1547 = vunpack.c.l.b16 %v1401
  %v1548 = vunpack.c.l.b16 %v1402
  %v1549 = vunpack.c.h.b16 %v1401
  %v1550 = vunpack.c.h.b16 %v1402
  %v1551 = vunpack.c.l.b16 %v1403
  %v1552 = vunpack.c.l.b16 %v1404
  %v1553 = vunpack.c.h.b16 %v1403
  %v1554 = vunpack.c.h.b16 %v1404
  %v1555 = vunpack.c.l.b16 %v1405
  %v1556 = vunpack.c.l.b16 %v1406
  %v1557 = vunpack.c.h.b16 %v1405
  %v1558 = vunpack.c.h.b16 %v1406
  %v1559 = vunpack.c.l.b16 %v1407
  %v1560 = vunpack.c.l.b16 %v1408
  %v1561 = vunpack.c.h.b16 %v1407
  %v1562 = vunpack.c.h.b16 %v1408
  %v1563 = vunpack.c.l.b16 %v1409
  %v1564 = vunpack.c.l.b16 %v1410
  %v1565 = vunpack.c.h.b16 %v1409
  %v1566 = vunpack.c.h.b16 %v1410
  %v1567 = vunpack.c.l.b16 %v1411
  %v1568 = vunpack.c.l.b16 %v1412
  %v1569 = vunpack.c.h.b16 %v1411
  %v1570 = vunpack.c.h.b16 %v1412
  %v1571 = vunpack.c.l.b16 %v1413
  %v1572 = vunpack.c.l.b16 %v1414
  %v1573 = vunpack.c.h.b16 %v1413
  %v1574 = vunpack.c.h.b16 %v1414
  %v1575 = vunpack.c.l.b16 %v1415
  %v1576 = vunpack.c.l.b16 %v1416
  %v1577 = vunpack.c.h.b16 %v1415
  %v1578 = vunpack.c.h.b16 %v1416
  %v1579 = vunpack.c.l.b16 %v1417
  %v1580 = vunpack.c.l.b16 %v1418
  %v1581 = vunpack.c.h.b16 %v1417
  %v1582 = vunpack.c.h.b16 %v1418
  %v1583 = vunpack.c.l.b16 %v1419
  %v1584 = vunpack.c.l.b16 %v1420
  %v1585 = vunpack.c.h.b16 %v1419
  %v1586 = vunpack.c.h.b16 %v1420
  %v1587 = vunpack.c.l.b16 %v1421
  %v1588 = vunpack.c.l.b16 %v1422
  %v1589 = vunpack.c.h.b16 %v1421
  %v1590 = vunpack.c.h.b16 %v1422
  %v1591 = vunpack.c.l.b16 %v1423
  %v1592 = vunpack.c.l.b16 %v1424
  %v1593 = vunpack.c.h.b16 %v1423
  %v1594 = vunpack.c.h.b16 %v1424
  %v1595 = vunpack.c.l.b16 %v1425
  %v1596 = vunpack.c.l.b16 %v1426
  %v1597 = vunpack.c.h.b16 %v1425
  %v1598 = vunpack.c.h.b16 %v1426
  %v1599 = vunpack.c.l.b16 %v1427
  %v1600 = vunpack.c.l.b16 %v1428
  %v1601 = vunpack.c.h.b16 %v1427
  %v1602 = vunpack.c.h.b16 %v1428
  %v1603 = vunpack.c.l.b16 %v1429
  %v1604 = vunpack.c.l.b16 %v1430
  %v1605 = vunpack.c.h.b16 %v1429
  %v1606 = vunpack.c.h.b16 %v1430
  %v1607 = vunpack.c.l.b16 %v1431
  %v1608 = vunpack.c.l.b16 %v1432
  %v1609 = vunpack.c.h.b16 %v1431
  %v1610 = vunpack.c.h.b16 %v1432
  %v1611 = vunpack.c.l.b16 %v1433
  %v1612 = vunpack.c.l.b16 %v1434
  %v1613 = vunpack.c.h.b16 %v1433
  %v1614 = vunpack.c.h.b16 %v1434
  %v1615 = vunpack.c.l.b16 %v1435
  %v1616 = vunpack.c.l.b16 %v1436
  %v1617 = vunpack.c.h.b16 %v1435
  %v1618 = vunpack.c.h.b16 %v1436
  %v1619 = vunpack.c.l.b16 %v1437
  %v1620 = vunpack.c.l.b16 %v1438
  %v1621 = vunpack.c.h.b16 %v1437
  %v1622 = vunpack.c.h.b16 %v1438
  %v1623 = vunpack.c.l.b16 %v1439
  %v1624 = vunpack.c.l.b16 %v1440
  %v1625 = vunpack.c.h.b16 %v1439
  %v1626 = vunpack.c.h.b16 %v1440
  %v1627 = vunpack.c.l.b16 %v1441
  %v1628 = vunpack.c.l.b16 %v1442
  %v1629 = vunpack.c.h.b16 %v1441
  %v1630 = vunpack.c.h.b16 %v1442
  %v1631 = vunpack.c.l.b16 %v1443
  %v1632 = vunpack.c.l.b16 %v1444
  %v1633 = vunpack.c.h.b16 %v1443
  %v1634 = vunpack.c.h.b16 %v1444
  %v1635 = vunpack.c.l.b16 %v1445
  %v1636 = vunpack.c.l.b16 %v1446
  %v1637 = vunpack.c.h.b16 %v1445
  %v1638 = vunpack.c.h.b16 %v1446
  %v1639 = vpack.c.b16 %v1512, %v1511
  %v1640 = vpack.c.b16 %v1514, %v1513
  %v1641 = vpack.c.b16 %v1516, %v1515
  %v1642 = vpack.c.b16 %v1518, %v1517
  %v1643 = vpack.c.b16 %v1520, %v1519
  %v1644 = vpack.c.b16 %v1522, %v1521
  %v1645 = vpack.c.b16 %v1524, %v1523
  %v1646 = vpack.c.b16 %v1526, %v1525
  %v1647 = vpack.c.b16 %v1528, %v1527
  %v1648 = vpack.c.b16 %v1530, %v1529
  %v1649 = vpack.c.b16 %v1532, %v1531
  %v1650 = vpack.c.b16 %v1534, %v1533
  %v1651 = vpack.c.b16 %v1536, %v1535
  %v1652 = vpack.c.b16 %v1538, %v1537
  %v1653 = vpack.c.b16 %v1540, %v1539
  %v1654 = vpack.c.b16 %v1542, %v1541
  %v1655 = vpack.c.b16 %v1544, %v1543
  %v1656 = vpack.c.b16 %v1546, %v1545
  %v1657 = vpack.c.b16 %v1548, %v1547
  %v1658 = vpack.c.b16 %v1550, %v1549
  %v1659 = vpack.c.b16 %v1552, %v1551
  %v1660 = vpack.c.b16 %v1554, %v1553
  %v1661 = vpack.c.b16 %v1556, %v1555
  %v1662 = vpack.c.b16 %v1558, %v1557
  %v1663 = vpack.c.b16 %v1560, %v1559
  %v1664 = vpack.c.b16 %v1562, %v1561
  %v1665 = vpack.c.b16 %v1564, %v1563
  %v1666 = vpack.c.b16 %v1566, %v1565
  %v1667 = vpack.c.b16 %v1568, %v1567
  %v1668 = vpack.c.b16 %v1570, %v1569
  %v1669 = vpack.c.b16 %v1572, %v1571
  %v1670 = vpack.c.b16 %v1574, %v1573
  %v1671 = vpack.c.b16 %v1576, %v1575
  %v1672 = vpack.c.b16 %v1578, %v1577
  %v1673 = vpack.c.b16 %v1580, %v1579
  %v1674 = vpack.c.b16 %v1582, %v1581
  %v1675 = vpack.c.b16 %v1584, %v1583
  %v1676 = vpack.c.b16 %v1586, %v1585
  %v1677 = vpack.c.b16 %v1588, %v1587
  %v1678 = vpack.c.b16 %v1590, %v1589
  %v1679 = vpack.c.b16 %v1592, %v1591
  %v1680 = vpack.c.b16 %v1594, %v1593
  %v1681 = vpack.c.b16 %v1596, %v1595
  %v1682 = vpack.c.b16 %v1598, %v1597
  %v1683 = vpack.c.b16 %v1600, %v1599
  %v1684 = vpack.c.b16 %v1602, %v1601
  %v1685 = vpack.c.b16 %v1604, %v1603
  %v1686 = vpack.c.b16 %v1606, %v1605
  %v1687 = vpack.c.b16 %v1608, %v1607
  %v1688 = vpack.c.b16 %v1610, %v1609
  %v1689 = vpack.c.b16 %v1612, %v1611
  %v1690 = vpack.c.b16 %v1614, %v1613
  %v1691 = vpack.c.b16 %v1616, %v1615
  %v1692 = vpack.c.b16 %v1618, %v1617
  %v1693 = vpack.c.b16 %v1620, %v1619
  %v1694 = vpack.c.b16 %v1622, %v1621
  %v1695 = vpack.c.b16 %v1624, %v1623
  %v1696 = vpack.c.b16 %v1626, %v1625
  %v1697 = vpack.c.b16 %v1628, %v1627
  %v1698 = vpack.c.b16 %v1630, %v1629
  %v1699 = vpack.c.b16 %v1632, %v1631
  %v1700 = vpack.c.b16 %v1634, %v1633
  %v1701 = vpack.c.b16 %v1636, %v1635
  %v1702 = vpack.c.b16 %v1638, %v1637
  %1767 = vst [vmem:[%s4] sm:$0xff] %v1639
  %1768 = vst [vmem:[%s4 + $0x8] sm:$0xff] %v1640
  %1769 = vst [vmem:[%s4 + $0x10] sm:$0xff] %v1641
  %1770 = vst [vmem:[%s4 + $0x18] sm:$0xff] %v1642
  %1771 = vst [vmem:[%s4 + $0x20] sm:$0xff] %v1643
  %1772 = vst [vmem:[%s4 + $0x28] sm:$0xff] %v1644
  %1773 = vst [vmem:[%s4 + $0x30] sm:$0xff] %v1645
  %1774 = vst [vmem:[%s4 + $0x38] sm:$0xff] %v1646
  %1775 = vst [vmem:[%s4 + $0x40] sm:$0xff] %v1647
  %1776 = vst [vmem:[%s4 + $0x48] sm:$0xff] %v1648
  %1777 = vst [vmem:[%s4 + $0x50] sm:$0xff] %v1649
  %1778 = vst [vmem:[%s4 + $0x58] sm:$0xff] %v1650
  %1779 = vst [vmem:[%s4 + $0x60] sm:$0xff] %v1651
  %1780 = vst [vmem:[%s4 + $0x68] sm:$0xff] %v1652
  %1781 = vst [vmem:[%s4 + $0x70] sm:$0xff] %v1653
  %1782 = vst [vmem:[%s4 + $0x78] sm:$0xff] %v1654
  %1783 = vst [vmem:[%s4 + $0x80] sm:$0xff] %v1655
  %1784 = vst [vmem:[%s4 + $0x88] sm:$0xff] %v1656
  %1785 = vst [vmem:[%s4 + $0x90] sm:$0xff] %v1657
  %1786 = vst [vmem:[%s4 + $0x98] sm:$0xff] %v1658
  %1787 = vst [vmem:[%s4 + $0xa0] sm:$0xff] %v1659
  %1788 = vst [vmem:[%s4 + $0xa8] sm:$0xff] %v1660
  %1789 = vst [vmem:[%s4 + $0xb0] sm:$0xff] %v1661
  %1790 = vst [vmem:[%s4 + $0xb8] sm:$0xff] %v1662
  %1791 = vst [vmem:[%s4 + $0xc0] sm:$0xff] %v1663
  %1792 = vst [vmem:[%s4 + $0xc8] sm:$0xff] %v1664
  %1793 = vst [vmem:[%s4 + $0xd0] sm:$0xff] %v1665
  %1794 = vst [vmem:[%s4 + $0xd8] sm:$0xff] %v1666
  %1795 = vst [vmem:[%s4 + $0xe0] sm:$0xff] %v1667
  %1796 = vst [vmem:[%s4 + $0xe8] sm:$0xff] %v1668
  %1797 = vst [vmem:[%s4 + $0xf0] sm:$0xff] %v1669
  %1798 = vst [vmem:[%s4 + $0xf8] sm:$0xff] %v1670
  %1799 = vst [vmem:[%s4 + $0x100] sm:$0xff] %v1671
  %1800 = vst [vmem:[%s4 + $0x108] sm:$0xff] %v1672
  %1801 = vst [vmem:[%s4 + $0x110] sm:$0xff] %v1673
  %1802 = vst [vmem:[%s4 + $0x118] sm:$0xff] %v1674
  %1803 = vst [vmem:[%s4 + $0x120] sm:$0xff] %v1675
  %1804 = vst [vmem:[%s4 + $0x128] sm:$0xff] %v1676
  %1805 = vst [vmem:[%s4 + $0x130] sm:$0xff] %v1677
  %1806 = vst [vmem:[%s4 + $0x138] sm:$0xff] %v1678
  %1807 = vst [vmem:[%s4 + $0x140] sm:$0xff] %v1679
  %1808 = vst [vmem:[%s4 + $0x148] sm:$0xff] %v1680
  %1809 = vst [vmem:[%s4 + $0x150] sm:$0xff] %v1681
  %1810 = vst [vmem:[%s4 + $0x158] sm:$0xff] %v1682
  %1811 = vst [vmem:[%s4 + $0x160] sm:$0xff] %v1683
  %1812 = vst [vmem:[%s4 + $0x168] sm:$0xff] %v1684
  %1813 = vst [vmem:[%s4 + $0x170] sm:$0xff] %v1685
  %1814 = vst [vmem:[%s4 + $0x178] sm:$0xff] %v1686
  %1815 = vst [vmem:[%s4 + $0x180] sm:$0xff] %v1687
  %1816 = vst [vmem:[%s4 + $0x188] sm:$0xff] %v1688
  %1817 = vst [vmem:[%s4 + $0x190] sm:$0xff] %v1689
  %1818 = vst [vmem:[%s4 + $0x198] sm:$0xff] %v1690
  %1819 = vst [vmem:[%s4 + $0x1a0] sm:$0xff] %v1691
  %1820 = vst [vmem:[%s4 + $0x1a8] sm:$0xff] %v1692
  %1821 = vst [vmem:[%s4 + $0x1b0] sm:$0xff] %v1693
  %1822 = vst [vmem:[%s4 + $0x1b8] sm:$0xff] %v1694
  %1823 = vst [vmem:[%s4 + $0x1c0] sm:$0xff] %v1695
  %1824 = vst [vmem:[%s4 + $0x1c8] sm:$0xff] %v1696
  %1825 = vst [vmem:[%s4 + $0x1d0] sm:$0xff] %v1697
  %1826 = vst [vmem:[%s4 + $0x1d8] sm:$0xff] %v1698
  %1827 = vst [vmem:[%s4 + $0x1e0] sm:$0xff] %v1699
  %1828 = vst [vmem:[%s4 + $0x1e8] sm:$0xff] %v1700
  %1829 = vst [vmem:[%s4 + $0x1f0] sm:$0xff] %v1701
  %1830 = vst [vmem:[%s4 + $0x1f8] sm:$0xff] %v1702
  %p1831 = scmp.eq.s32.totalorder 0, 0
  // Predicated region
  $region14: #{bottleneck_forward.4} parent=0 // pred_check
    %p1832 = pneg %p1831
  $region15: #{bottleneck_forward.4} parent=0 // pred_check_branch
    %1834 = sbr.rel (%p1832) target = $region17
  $region16: #{bottleneck_forward.4} parent=0 // pred_region
    %1835 = vst.msk [vmem:[%s5] sm:$0xff] %vm275, 0.0
    %1836 = vst [vmem:[%s6] sm:$0xff] 0.0
    %1837 = vst [vmem:[%s6 + $0x8] sm:$0xff] 0.0
  $region17: #{bottleneck_forward.4} parent=0 // pred_fallthru
    _
  %v1838 = vld [vmem:[%s5] sm:$0xff]
  %v1839 = vsel %vm275, %v407, 0.0
  %v1840 = vsel %vm275, %v410, 0.0
  %v1841 = vadd.f32 %v1839, %v1840
  %v1842 = vsel %vm275, %v415, 0.0
  %v1843 = vadd.f32 %v1841, %v1842
  %v1844 = vsel %vm275, %v418, 0.0
  %v1845 = vadd.f32 %v1843, %v1844
  %v1846 = vsel %vm275, %v423, 0.0
  %v1847 = vadd.f32 %v1845, %v1846
  %v1848 = vsel %vm275, %v426, 0.0
  %v1849 = vadd.f32 %v1847, %v1848
  %v1850 = vsel %vm275, %v431, 0.0
  %v1851 = vadd.f32 %v1849, %v1850
  %v1852 = vsel %vm275, %v434, 0.0
  %v1853 = vadd.f32 %v1851, %v1852
  %v1854 = vsel %vm275, %v439, 0.0
  %v1855 = vadd.f32 %v1853, %v1854
  %v1856 = vsel %vm275, %v442, 0.0
  %v1857 = vadd.f32 %v1855, %v1856
  %v1858 = vsel %vm275, %v447, 0.0
  %v1859 = vadd.f32 %v1857, %v1858
  %v1860 = vsel %vm275, %v450, 0.0
  %v1861 = vadd.f32 %v1859, %v1860
  %v1862 = vsel %vm275, %v455, 0.0
  %v1863 = vadd.f32 %v1861, %v1862
  %v1864 = vsel %vm275, %v458, 0.0
  %v1865 = vadd.f32 %v1863, %v1864
  %v1866 = vsel %vm275, %v463, 0.0
  %v1867 = vadd.f32 %v1865, %v1866
  %v1868 = vsel %vm275, %v466, 0.0
  %v1869 = vadd.f32 %v1867, %v1868
  %v1870 = vsel %vm275, %v471, 0.0
  %v1871 = vadd.f32 %v1869, %v1870
  %v1872 = vsel %vm275, %v474, 0.0
  %v1873 = vadd.f32 %v1871, %v1872
  %v1874 = vsel %vm275, %v479, 0.0
  %v1875 = vadd.f32 %v1873, %v1874
  %v1876 = vsel %vm275, %v482, 0.0
  %v1877 = vadd.f32 %v1875, %v1876
  %v1878 = vsel %vm275, %v487, 0.0
  %v1879 = vadd.f32 %v1877, %v1878
  %v1880 = vsel %vm275, %v490, 0.0
  %v1881 = vadd.f32 %v1879, %v1880
  %v1882 = vsel %vm275, %v495, 0.0
  %v1883 = vadd.f32 %v1881, %v1882
  %v1884 = vsel %vm275, %v498, 0.0
  %v1885 = vadd.f32 %v1883, %v1884
  %v1886 = vsel %vm275, %v503, 0.0
  %v1887 = vadd.f32 %v1885, %v1886
  %v1888 = vsel %vm275, %v506, 0.0
  %v1889 = vadd.f32 %v1887, %v1888
  %v1890 = vsel %vm275, %v511, 0.0
  %v1891 = vadd.f32 %v1889, %v1890
  %v1892 = vsel %vm275, %v514, 0.0
  %v1893 = vadd.f32 %v1891, %v1892
  %v1894 = vsel %vm275, %v519, 0.0
  %v1895 = vadd.f32 %v1893, %v1894
  %v1896 = vsel %vm275, %v522, 0.0
  %v1897 = vadd.f32 %v1895, %v1896
  %v1898 = vsel %vm275, %v527, 0.0
  %v1899 = vadd.f32 %v1897, %v1898
  %v1900 = vsel %vm275, %v530, 0.0
  %v1901 = vadd.f32 %v1899, %v1900
  %v1902 = vsel %vm275, %v535, 0.0
  %v1903 = vadd.f32 %v1901, %v1902
  %v1904 = vsel %vm275, %v538, 0.0
  %v1905 = vadd.f32 %v1903, %v1904
  %v1906 = vsel %vm275, %v543, 0.0
  %v1907 = vadd.f32 %v1905, %v1906
  %v1908 = vsel %vm275, %v546, 0.0
  %v1909 = vadd.f32 %v1907, %v1908
  %v1910 = vsel %vm275, %v551, 0.0
  %v1911 = vadd.f32 %v1909, %v1910
  %v1912 = vsel %vm275, %v554, 0.0
  %v1913 = vadd.f32 %v1911, %v1912
  %v1914 = vsel %vm275, %v559, 0.0
  %v1915 = vadd.f32 %v1913, %v1914
  %v1916 = vsel %vm275, %v562, 0.0
  %v1917 = vadd.f32 %v1915, %v1916
  %v1918 = vsel %vm275, %v567, 0.0
  %v1919 = vadd.f32 %v1917, %v1918
  %v1920 = vsel %vm275, %v570, 0.0
  %v1921 = vadd.f32 %v1919, %v1920
  %v1922 = vsel %vm275, %v575, 0.0
  %v1923 = vadd.f32 %v1921, %v1922
  %v1924 = vsel %vm275, %v578, 0.0
  %v1925 = vadd.f32 %v1923, %v1924
  %v1926 = vsel %vm275, %v583, 0.0
  %v1927 = vadd.f32 %v1925, %v1926
  %v1928 = vsel %vm275, %v586, 0.0
  %v1929 = vadd.f32 %v1927, %v1928
  %v1930 = vsel %vm275, %v591, 0.0
  %v1931 = vadd.f32 %v1929, %v1930
  %v1932 = vsel %vm275, %v594, 0.0
  %v1933 = vadd.f32 %v1931, %v1932
  %v1934 = vsel %vm275, %v599, 0.0
  %v1935 = vadd.f32 %v1933, %v1934
  %v1936 = vsel %vm275, %v602, 0.0
  %v1937 = vadd.f32 %v1935, %v1936
  %v1938 = vsel %vm275, %v607, 0.0
  %v1939 = vadd.f32 %v1937, %v1938
  %v1940 = vsel %vm275, %v610, 0.0
  %v1941 = vadd.f32 %v1939, %v1940
  %v1942 = vsel %vm275, %v615, 0.0
  %v1943 = vadd.f32 %v1941, %v1942
  %v1944 = vsel %vm275, %v618, 0.0
  %v1945 = vadd.f32 %v1943, %v1944
  %v1946 = vsel %vm275, %v623, 0.0
  %v1947 = vadd.f32 %v1945, %v1946
  %v1948 = vsel %vm275, %v626, 0.0
  %v1949 = vadd.f32 %v1947, %v1948
  %v1950 = vsel %vm275, %v631, 0.0
  %v1951 = vadd.f32 %v1949, %v1950
  %v1952 = vsel %vm275, %v634, 0.0
  %v1953 = vadd.f32 %v1951, %v1952
  %v1954 = vsel %vm275, %v639, 0.0
  %v1955 = vadd.f32 %v1953, %v1954
  %v1956 = vsel %vm275, %v642, 0.0
  %v1957 = vadd.f32 %v1955, %v1956
  %v1958 = vsel %vm275, %v647, 0.0
  %v1959 = vadd.f32 %v1957, %v1958
  %v1960 = vsel %vm275, %v650, 0.0
  %v1961 = vadd.f32 %v1959, %v1960
  %v1962 = vsel %vm275, %v655, 0.0
  %v1963 = vadd.f32 %v1961, %v1962
  %v1964 = vsel %vm275, %v658, 0.0
  %v1965 = vadd.f32 %v1963, %v1964
  %v1966 = vrot.slane %v1965, 4
  %v1967 = vadd.f32 %v1965, %v1966
  %v1968 = vrot.slane %v1967, 2
  %v1969 = vadd.f32 %v1967, %v1968
  %v1970 = vrot.slane %v1969, 1
  %v1971 = vadd.f32 %v1969, %v1970
  %v1972 = vmul.f32 %v407, %v407
  %v1973 = vmul.f32 %v410, %v410
  %v1974 = vmul.f32 %v415, %v415
  %v1975 = vmul.f32 %v418, %v418
  %v1976 = vmul.f32 %v423, %v423
  %v1977 = vmul.f32 %v426, %v426
  %v1978 = vmul.f32 %v431, %v431
  %v1979 = vmul.f32 %v434, %v434
  %v1980 = vmul.f32 %v439, %v439
  %v1981 = vmul.f32 %v442, %v442
  %v1982 = vmul.f32 %v447, %v447
  %v1983 = vmul.f32 %v450, %v450
  %v1984 = vmul.f32 %v455, %v455
  %v1985 = vmul.f32 %v458, %v458
  %v1986 = vmul.f32 %v463, %v463
  %v1987 = vmul.f32 %v466, %v466
  %v1988 = vmul.f32 %v471, %v471
  %v1989 = vmul.f32 %v474, %v474
  %v1990 = vmul.f32 %v479, %v479
  %v1991 = vmul.f32 %v482, %v482
  %v1992 = vmul.f32 %v487, %v487
  %v1993 = vmul.f32 %v490, %v490
  %v1994 = vmul.f32 %v495, %v495
  %v1995 = vmul.f32 %v498, %v498
  %v1996 = vmul.f32 %v503, %v503
  %v1997 = vmul.f32 %v506, %v506
  %v1998 = vmul.f32 %v511, %v511
  %v1999 = vmul.f32 %v514, %v514
  %v2000 = vmul.f32 %v519, %v519
  %v2001 = vmul.f32 %v522, %v522
  %v2002 = vmul.f32 %v527, %v527
  %v2003 = vmul.f32 %v530, %v530
  %v2004 = vmul.f32 %v535, %v535
  %v2005 = vmul.f32 %v538, %v538
  %v2006 = vmul.f32 %v543, %v543
  %v2007 = vmul.f32 %v546, %v546
  %v2008 = vmul.f32 %v551, %v551
  %v2009 = vmul.f32 %v554, %v554
  %v2010 = vmul.f32 %v559, %v559
  %v2011 = vmul.f32 %v562, %v562
  %v2012 = vmul.f32 %v567, %v567
  %v2013 = vmul.f32 %v570, %v570
  %v2014 = vmul.f32 %v575, %v575
  %v2015 = vmul.f32 %v578, %v578
  %v2016 = vmul.f32 %v583, %v583
  %v2017 = vmul.f32 %v586, %v586
  %v2018 = vmul.f32 %v591, %v591
  %v2019 = vmul.f32 %v594, %v594
  %v2020 = vmul.f32 %v599, %v599
  %v2021 = vmul.f32 %v602, %v602
  %v2022 = vmul.f32 %v607, %v607
  %v2023 = vmul.f32 %v610, %v610
  %v2024 = vmul.f32 %v615, %v615
  %v2025 = vmul.f32 %v618, %v618
  %v2026 = vmul.f32 %v623, %v623
  %v2027 = vmul.f32 %v626, %v626
  %v2028 = vmul.f32 %v631, %v631
  %v2029 = vmul.f32 %v634, %v634
  %v2030 = vmul.f32 %v639, %v639
  %v2031 = vmul.f32 %v642, %v642
  %v2032 = vmul.f32 %v647, %v647
  %v2033 = vmul.f32 %v650, %v650
  %v2034 = vmul.f32 %v655, %v655
  %v2035 = vmul.f32 %v658, %v658
  %v2036 = vsel %vm275, %v1972, 0.0
  %v2037 = vsel %vm275, %v1973, 0.0
  %v2038 = vadd.f32 %v2036, %v2037
  %v2039 = vsel %vm275, %v1974, 0.0
  %v2040 = vadd.f32 %v2038, %v2039
  %v2041 = vsel %vm275, %v1975, 0.0
  %v2042 = vadd.f32 %v2040, %v2041
  %v2043 = vsel %vm275, %v1976, 0.0
  %v2044 = vadd.f32 %v2042, %v2043
  %v2045 = vsel %vm275, %v1977, 0.0
  %v2046 = vadd.f32 %v2044, %v2045
  %v2047 = vsel %vm275, %v1978, 0.0
  %v2048 = vadd.f32 %v2046, %v2047
  %v2049 = vsel %vm275, %v1979, 0.0
  %v2050 = vadd.f32 %v2048, %v2049
  %v2051 = vsel %vm275, %v1980, 0.0
  %v2052 = vadd.f32 %v2050, %v2051
  %v2053 = vsel %vm275, %v1981, 0.0
  %v2054 = vadd.f32 %v2052, %v2053
  %v2055 = vsel %vm275, %v1982, 0.0
  %v2056 = vadd.f32 %v2054, %v2055
  %v2057 = vsel %vm275, %v1983, 0.0
  %v2058 = vadd.f32 %v2056, %v2057
  %v2059 = vsel %vm275, %v1984, 0.0
  %v2060 = vadd.f32 %v2058, %v2059
  %v2061 = vsel %vm275, %v1985, 0.0
  %v2062 = vadd.f32 %v2060, %v2061
  %v2063 = vsel %vm275, %v1986, 0.0
  %v2064 = vadd.f32 %v2062, %v2063
  %v2065 = vsel %vm275, %v1987, 0.0
  %v2066 = vadd.f32 %v2064, %v2065
  %v2067 = vsel %vm275, %v1988, 0.0
  %v2068 = vadd.f32 %v2066, %v2067
  %v2069 = vsel %vm275, %v1989, 0.0
  %v2070 = vadd.f32 %v2068, %v2069
  %v2071 = vsel %vm275, %v1990, 0.0
  %v2072 = vadd.f32 %v2070, %v2071
  %v2073 = vsel %vm275, %v1991, 0.0
  %v2074 = vadd.f32 %v2072, %v2073
  %v2075 = vsel %vm275, %v1992, 0.0
  %v2076 = vadd.f32 %v2074, %v2075
  %v2077 = vsel %vm275, %v1993, 0.0
  %v2078 = vadd.f32 %v2076, %v2077
  %v2079 = vsel %vm275, %v1994, 0.0
  %v2080 = vadd.f32 %v2078, %v2079
  %v2081 = vsel %vm275, %v1995, 0.0
  %v2082 = vadd.f32 %v2080, %v2081
  %v2083 = vsel %vm275, %v1996, 0.0
  %v2084 = vadd.f32 %v2082, %v2083
  %v2085 = vsel %vm275, %v1997, 0.0
  %v2086 = vadd.f32 %v2084, %v2085
  %v2087 = vsel %vm275, %v1998, 0.0
  %v2088 = vadd.f32 %v2086, %v2087
  %v2089 = vsel %vm275, %v1999, 0.0
  %v2090 = vadd.f32 %v2088, %v2089
  %v2091 = vsel %vm275, %v2000, 0.0
  %v2092 = vadd.f32 %v2090, %v2091
  %v2093 = vsel %vm275, %v2001, 0.0
  %v2094 = vadd.f32 %v2092, %v2093
  %v2095 = vsel %vm275, %v2002, 0.0
  %v2096 = vadd.f32 %v2094, %v2095
  %v2097 = vsel %vm275, %v2003, 0.0
  %v2098 = vadd.f32 %v2096, %v2097
  %v2099 = vsel %vm275, %v2004, 0.0
  %v2100 = vadd.f32 %v2098, %v2099
  %v2101 = vsel %vm275, %v2005, 0.0
  %v2102 = vadd.f32 %v2100, %v2101
  %v2103 = vsel %vm275, %v2006, 0.0
  %v2104 = vadd.f32 %v2102, %v2103
  %v2105 = vsel %vm275, %v2007, 0.0
  %v2106 = vadd.f32 %v2104, %v2105
  %v2107 = vsel %vm275, %v2008, 0.0
  %v2108 = vadd.f32 %v2106, %v2107
  %v2109 = vsel %vm275, %v2009, 0.0
  %v2110 = vadd.f32 %v2108, %v2109
  %v2111 = vsel %vm275, %v2010, 0.0
  %v2112 = vadd.f32 %v2110, %v2111
  %v2113 = vsel %vm275, %v2011, 0.0
  %v2114 = vadd.f32 %v2112, %v2113
  %v2115 = vsel %vm275, %v2012, 0.0
  %v2116 = vadd.f32 %v2114, %v2115
  %v2117 = vsel %vm275, %v2013, 0.0
  %v2118 = vadd.f32 %v2116, %v2117
  %v2119 = vsel %vm275, %v2014, 0.0
  %v2120 = vadd.f32 %v2118, %v2119
  %v2121 = vsel %vm275, %v2015, 0.0
  %v2122 = vadd.f32 %v2120, %v2121
  %v2123 = vsel %vm275, %v2016, 0.0
  %v2124 = vadd.f32 %v2122, %v2123
  %v2125 = vsel %vm275, %v2017, 0.0
  %v2126 = vadd.f32 %v2124, %v2125
  %v2127 = vsel %vm275, %v2018, 0.0
  %v2128 = vadd.f32 %v2126, %v2127
  %v2129 = vsel %vm275, %v2019, 0.0
  %v2130 = vadd.f32 %v2128, %v2129
  %v2131 = vsel %vm275, %v2020, 0.0
  %v2132 = vadd.f32 %v2130, %v2131
  %v2133 = vsel %vm275, %v2021, 0.0
  %v2134 = vadd.f32 %v2132, %v2133
  %v2135 = vsel %vm275, %v2022, 0.0
  %v2136 = vadd.f32 %v2134, %v2135
  %v2137 = vsel %vm275, %v2023, 0.0
  %v2138 = vadd.f32 %v2136, %v2137
  %v2139 = vsel %vm275, %v2024, 0.0
  %v2140 = vadd.f32 %v2138, %v2139
  %v2141 = vsel %vm275, %v2025, 0.0
  %v2142 = vadd.f32 %v2140, %v2141
  %v2143 = vsel %vm275, %v2026, 0.0
  %v2144 = vadd.f32 %v2142, %v2143
  %v2145 = vsel %vm275, %v2027, 0.0
  %v2146 = vadd.f32 %v2144, %v2145
  %v2147 = vsel %vm275, %v2028, 0.0
  %v2148 = vadd.f32 %v2146, %v2147
  %v2149 = vsel %vm275, %v2029, 0.0
  %v2150 = vadd.f32 %v2148, %v2149
  %v2151 = vsel %vm275, %v2030, 0.0
  %v2152 = vadd.f32 %v2150, %v2151
  %v2153 = vsel %vm275, %v2031, 0.0
  %v2154 = vadd.f32 %v2152, %v2153
  %v2155 = vsel %vm275, %v2032, 0.0
  %v2156 = vadd.f32 %v2154, %v2155
  %v2157 = vsel %vm275, %v2033, 0.0
  %v2158 = vadd.f32 %v2156, %v2157
  %v2159 = vsel %vm275, %v2034, 0.0
  %v2160 = vadd.f32 %v2158, %v2159
  %v2161 = vsel %vm275, %v2035, 0.0
  %v2162 = vadd.f32 %v2160, %v2161
  %v2163 = vrot.slane %v2162, 4
  %v2164 = vadd.f32 %v2162, %v2163
  %v2165 = vrot.slane %v2164, 2
  %v2166 = vadd.f32 %v2164, %v2165
  %v2167 = vrot.slane %v2166, 1
  %v2168 = vadd.f32 %v2166, %v2167
  %vm2169 = vcmask 1040384
  %v2170 = vsel %vm2169, %v1971, %v2168
  %vm2171 = vcmask 1041408
  %v2172 = vsel %vm2171, %v2170, 0.0
  %v2173 = vadd.f32 %v1838, %v2172
  %2174 = vst.msk [vmem:[%s5] sm:$0xff] %vm275, %v2173
  %v2175 = vld [vmem:[%s6] sm:$0xff]
  %v2176 = vld [vmem:[%s6 + $0x8] sm:$0xff]
  %v2177 = vadd.f32 %v744, %v748
  %v2178 = vadd.f32 %v2177, %v754
  %v2179 = vadd.f32 %v2178, %v758
  %v2180 = vadd.f32 %v2179, %v764
  %v2181 = vadd.f32 %v2180, %v768
  %v2182 = vadd.f32 %v2181, %v774
  %v2183 = vadd.f32 %v2182, %v778
  %v2184 = vadd.f32 %v2183, %v784
  %v2185 = vadd.f32 %v2184, %v788
  %v2186 = vadd.f32 %v2185, %v794
  %v2187 = vadd.f32 %v2186, %v798
  %v2188 = vadd.f32 %v2187, %v804
  %v2189 = vadd.f32 %v2188, %v808
  %v2190 = vadd.f32 %v2189, %v814
  %v2191 = vadd.f32 %v2190, %v818
  %v2192 = vadd.f32 %v2191, %v824
  %v2193 = vadd.f32 %v2192, %v828
  %v2194 = vadd.f32 %v2193, %v834
  %v2195 = vadd.f32 %v2194, %v838
  %v2196 = vadd.f32 %v2195, %v844
  %v2197 = vadd.f32 %v2196, %v848
  %v2198 = vadd.f32 %v2197, %v854
  %v2199 = vadd.f32 %v2198, %v858
  %v2200 = vadd.f32 %v2199, %v864
  %v2201 = vadd.f32 %v2200, %v868
  %v2202 = vadd.f32 %v2201, %v874
  %v2203 = vadd.f32 %v2202, %v878
  %v2204 = vadd.f32 %v2203, %v884
  %v2205 = vadd.f32 %v2204, %v888
  %v2206 = vadd.f32 %v2205, %v894
  %v2207 = vadd.f32 %v2206, %v898
  %v2208 = vadd.f32 %v2207, %v904
  %v2209 = vadd.f32 %v2208, %v908
  %v2210 = vadd.f32 %v2209, %v914
  %v2211 = vadd.f32 %v2210, %v918
  %v2212 = vadd.f32 %v2211, %v924
  %v2213 = vadd.f32 %v2212, %v928
  %v2214 = vadd.f32 %v2213, %v934
  %v2215 = vadd.f32 %v2214, %v938
  %v2216 = vadd.f32 %v2215, %v944
  %v2217 = vadd.f32 %v2216, %v948
  %v2218 = vadd.f32 %v2217, %v954
  %v2219 = vadd.f32 %v2218, %v958
  %v2220 = vadd.f32 %v2219, %v964
  %v2221 = vadd.f32 %v2220, %v968
  %v2222 = vadd.f32 %v2221, %v974
  %v2223 = vadd.f32 %v2222, %v978
  %v2224 = vadd.f32 %v2223, %v984
  %v2225 = vadd.f32 %v2224, %v988
  %v2226 = vadd.f32 %v2225, %v994
  %v2227 = vadd.f32 %v2226, %v998
  %v2228 = vadd.f32 %v2227, %v1004
  %v2229 = vadd.f32 %v2228, %v1008
  %v2230 = vadd.f32 %v2229, %v1014
  %v2231 = vadd.f32 %v2230, %v1018
  %v2232 = vadd.f32 %v2231, %v1024
  %v2233 = vadd.f32 %v2232, %v1028
  %v2234 = vadd.f32 %v2233, %v1034
  %v2235 = vadd.f32 %v2234, %v1038
  %v2236 = vadd.f32 %v2235, %v1044
  %v2237 = vadd.f32 %v2236, %v1048
  %v2238 = vadd.f32 %v2237, %v1054
  %v2239 = vadd.f32 %v2238, %v1058
  %v2240 = vrot.slane %v2239, 4
  %v2241 = vadd.f32 %v2239, %v2240
  %v2242 = vrot.slane %v2241, 2
  %v2243 = vadd.f32 %v2241, %v2242
  %v2244 = vrot.slane %v2243, 1
  %v2245 = vadd.f32 %v2243, %v2244
  %v2246 = vadd.f32 %v746, %v750
  %v2247 = vadd.f32 %v2246, %v756
  %v2248 = vadd.f32 %v2247, %v760
  %v2249 = vadd.f32 %v2248, %v766
  %v2250 = vadd.f32 %v2249, %v770
  %v2251 = vadd.f32 %v2250, %v776
  %v2252 = vadd.f32 %v2251, %v780
  %v2253 = vadd.f32 %v2252, %v786
  %v2254 = vadd.f32 %v2253, %v790
  %v2255 = vadd.f32 %v2254, %v796
  %v2256 = vadd.f32 %v2255, %v800
  %v2257 = vadd.f32 %v2256, %v806
  %v2258 = vadd.f32 %v2257, %v810
  %v2259 = vadd.f32 %v2258, %v816
  %v2260 = vadd.f32 %v2259, %v820
  %v2261 = vadd.f32 %v2260, %v826
  %v2262 = vadd.f32 %v2261, %v830
  %v2263 = vadd.f32 %v2262, %v836
  %v2264 = vadd.f32 %v2263, %v840
  %v2265 = vadd.f32 %v2264, %v846
  %v2266 = vadd.f32 %v2265, %v850
  %v2267 = vadd.f32 %v2266, %v856
  %v2268 = vadd.f32 %v2267, %v860
  %v2269 = vadd.f32 %v2268, %v866
  %v2270 = vadd.f32 %v2269, %v870
  %v2271 = vadd.f32 %v2270, %v876
  %v2272 = vadd.f32 %v2271, %v880
  %v2273 = vadd.f32 %v2272, %v886
  %v2274 = vadd.f32 %v2273, %v890
  %v2275 = vadd.f32 %v2274, %v896
  %v2276 = vadd.f32 %v2275, %v900
  %v2277 = vadd.f32 %v2276, %v906
  %v2278 = vadd.f32 %v2277, %v910
  %v2279 = vadd.f32 %v2278, %v916
  %v2280 = vadd.f32 %v2279, %v920
  %v2281 = vadd.f32 %v2280, %v926
  %v2282 = vadd.f32 %v2281, %v930
  %v2283 = vadd.f32 %v2282, %v936
  %v2284 = vadd.f32 %v2283, %v940
  %v2285 = vadd.f32 %v2284, %v946
  %v2286 = vadd.f32 %v2285, %v950
  %v2287 = vadd.f32 %v2286, %v956
  %v2288 = vadd.f32 %v2287, %v960
  %v2289 = vadd.f32 %v2288, %v966
  %v2290 = vadd.f32 %v2289, %v970
  %v2291 = vadd.f32 %v2290, %v976
  %v2292 = vadd.f32 %v2291, %v980
  %v2293 = vadd.f32 %v2292, %v986
  %v2294 = vadd.f32 %v2293, %v990
  %v2295 = vadd.f32 %v2294, %v996
  %v2296 = vadd.f32 %v2295, %v1000
  %v2297 = vadd.f32 %v2296, %v1006
  %v2298 = vadd.f32 %v2297, %v1010
  %v2299 = vadd.f32 %v2298, %v1016
  %v2300 = vadd.f32 %v2299, %v1020
  %v2301 = vadd.f32 %v2300, %v1026
  %v2302 = vadd.f32 %v2301, %v1030
  %v2303 = vadd.f32 %v2302, %v1036
  %v2304 = vadd.f32 %v2303, %v1040
  %v2305 = vadd.f32 %v2304, %v1046
  %v2306 = vadd.f32 %v2305, %v1050
  %v2307 = vadd.f32 %v2306, %v1056
  %v2308 = vadd.f32 %v2307, %v1060
  %v2309 = vrot.slane %v2308, 4
  %v2310 = vadd.f32 %v2308, %v2309
  %v2311 = vrot.slane %v2310, 2
  %v2312 = vadd.f32 %v2310, %v2311
  %v2313 = vrot.slane %v2312, 1
  %v2314 = vadd.f32 %v2312, %v2313
  %v2315 = vmul.f32 %v744, %v744
  %v2316 = vmul.f32 %v746, %v746
  %v2317 = vmul.f32 %v748, %v748
  %v2318 = vmul.f32 %v750, %v750
  %v2319 = vmul.f32 %v754, %v754
  %v2320 = vmul.f32 %v756, %v756
  %v2321 = vmul.f32 %v758, %v758
  %v2322 = vmul.f32 %v760, %v760
  %v2323 = vmul.f32 %v764, %v764
  %v2324 = vmul.f32 %v766, %v766
  %v2325 = vmul.f32 %v768, %v768
  %v2326 = vmul.f32 %v770, %v770
  %v2327 = vmul.f32 %v774, %v774
  %v2328 = vmul.f32 %v776, %v776
  %v2329 = vmul.f32 %v778, %v778
  %v2330 = vmul.f32 %v780, %v780
  %v2331 = vmul.f32 %v784, %v784
  %v2332 = vmul.f32 %v786, %v786
  %v2333 = vmul.f32 %v788, %v788
  %v2334 = vmul.f32 %v790, %v790
  %v2335 = vmul.f32 %v794, %v794
  %v2336 = vmul.f32 %v796, %v796
  %v2337 = vmul.f32 %v798, %v798
  %v2338 = vmul.f32 %v800, %v800
  %v2339 = vmul.f32 %v804, %v804
  %v2340 = vmul.f32 %v806, %v806
  %v2341 = vmul.f32 %v808, %v808
  %v2342 = vmul.f32 %v810, %v810
  %v2343 = vmul.f32 %v814, %v814
  %v2344 = vmul.f32 %v816, %v816
  %v2345 = vmul.f32 %v818, %v818
  %v2346 = vmul.f32 %v820, %v820
  %v2347 = vmul.f32 %v824, %v824
  %v2348 = vmul.f32 %v826, %v826
  %v2349 = vmul.f32 %v828, %v828
  %v2350 = vmul.f32 %v830, %v830
  %v2351 = vmul.f32 %v834, %v834
  %v2352 = vmul.f32 %v836, %v836
  %v2353 = vmul.f32 %v838, %v838
  %v2354 = vmul.f32 %v840, %v840
  %v2355 = vmul.f32 %v844, %v844
  %v2356 = vmul.f32 %v846, %v846
  %v2357 = vmul.f32 %v848, %v848
  %v2358 = vmul.f32 %v850, %v850
  %v2359 = vmul.f32 %v854, %v854
  %v2360 = vmul.f32 %v856, %v856
  %v2361 = vmul.f32 %v858, %v858
  %v2362 = vmul.f32 %v860, %v860
  %v2363 = vmul.f32 %v864, %v864
  %v2364 = vmul.f32 %v866, %v866
  %v2365 = vmul.f32 %v868, %v868
  %v2366 = vmul.f32 %v870, %v870
  %v2367 = vmul.f32 %v874, %v874
  %v2368 = vmul.f32 %v876, %v876
  %v2369 = vmul.f32 %v878, %v878
  %v2370 = vmul.f32 %v880, %v880
  %v2371 = vmul.f32 %v884, %v884
  %v2372 = vmul.f32 %v886, %v886
  %v2373 = vmul.f32 %v888, %v888
  %v2374 = vmul.f32 %v890, %v890
  %v2375 = vmul.f32 %v894, %v894
  %v2376 = vmul.f32 %v896, %v896
  %v2377 = vmul.f32 %v898, %v898
  %v2378 = vmul.f32 %v900, %v900
  %v2379 = vmul.f32 %v904, %v904
  %v2380 = vmul.f32 %v906, %v906
  %v2381 = vmul.f32 %v908, %v908
  %v2382 = vmul.f32 %v910, %v910
  %v2383 = vmul.f32 %v914, %v914
  %v2384 = vmul.f32 %v916, %v916
  %v2385 = vmul.f32 %v918, %v918
  %v2386 = vmul.f32 %v920, %v920
  %v2387 = vmul.f32 %v924, %v924
  %v2388 = vmul.f32 %v926, %v926
  %v2389 = vmul.f32 %v928, %v928
  %v2390 = vmul.f32 %v930, %v930
  %v2391 = vmul.f32 %v934, %v934
  %v2392 = vmul.f32 %v936, %v936
  %v2393 = vmul.f32 %v938, %v938
  %v2394 = vmul.f32 %v940, %v940
  %v2395 = vmul.f32 %v944, %v944
  %v2396 = vmul.f32 %v946, %v946
  %v2397 = vmul.f32 %v948, %v948
  %v2398 = vmul.f32 %v950, %v950
  %v2399 = vmul.f32 %v954, %v954
  %v2400 = vmul.f32 %v956, %v956
  %v2401 = vmul.f32 %v958, %v958
  %v2402 = vmul.f32 %v960, %v960
  %v2403 = vmul.f32 %v964, %v964
  %v2404 = vmul.f32 %v966, %v966
  %v2405 = vmul.f32 %v968, %v968
  %v2406 = vmul.f32 %v970, %v970
  %v2407 = vmul.f32 %v974, %v974
  %v2408 = vmul.f32 %v976, %v976
  %v2409 = vmul.f32 %v978, %v978
  %v2410 = vmul.f32 %v980, %v980
  %v2411 = vmul.f32 %v984, %v984
  %v2412 = vmul.f32 %v986, %v986
  %v2413 = vmul.f32 %v988, %v988
  %v2414 = vmul.f32 %v990, %v990
  %v2415 = vmul.f32 %v994, %v994
  %v2416 = vmul.f32 %v996, %v996
  %v2417 = vmul.f32 %v998, %v998
  %v2418 = vmul.f32 %v1000, %v1000
  %v2419 = vmul.f32 %v1004, %v1004
  %v2420 = vmul.f32 %v1006, %v1006
  %v2421 = vmul.f32 %v1008, %v1008
  %v2422 = vmul.f32 %v1010, %v1010
  %v2423 = vmul.f32 %v1014, %v1014
  %v2424 = vmul.f32 %v1016, %v1016
  %v2425 = vmul.f32 %v1018, %v1018
  %v2426 = vmul.f32 %v1020, %v1020
  %v2427 = vmul.f32 %v1024, %v1024
  %v2428 = vmul.f32 %v1026, %v1026
  %v2429 = vmul.f32 %v1028, %v1028
  %v2430 = vmul.f32 %v1030, %v1030
  %v2431 = vmul.f32 %v1034, %v1034
  %v2432 = vmul.f32 %v1036, %v1036
  %v2433 = vmul.f32 %v1038, %v1038
  %v2434 = vmul.f32 %v1040, %v1040
  %v2435 = vmul.f32 %v1044, %v1044
  %v2436 = vmul.f32 %v1046, %v1046
  %v2437 = vmul.f32 %v1048, %v1048
  %v2438 = vmul.f32 %v1050, %v1050
  %v2439 = vmul.f32 %v1054, %v1054
  %v2440 = vmul.f32 %v1056, %v1056
  %v2441 = vmul.f32 %v1058, %v1058
  %v2442 = vmul.f32 %v1060, %v1060
  %v2443 = vadd.f32 %v2315, %v2317
  %v2444 = vadd.f32 %v2443, %v2319
  %v2445 = vadd.f32 %v2444, %v2321
  %v2446 = vadd.f32 %v2445, %v2323
  %v2447 = vadd.f32 %v2446, %v2325
  %v2448 = vadd.f32 %v2447, %v2327
  %v2449 = vadd.f32 %v2448, %v2329
  %v2450 = vadd.f32 %v2449, %v2331
  %v2451 = vadd.f32 %v2450, %v2333
  %v2452 = vadd.f32 %v2451, %v2335
  %v2453 = vadd.f32 %v2452, %v2337
  %v2454 = vadd.f32 %v2453, %v2339
  %v2455 = vadd.f32 %v2454, %v2341
  %v2456 = vadd.f32 %v2455, %v2343
  %v2457 = vadd.f32 %v2456, %v2345
  %v2458 = vadd.f32 %v2457, %v2347
  %v2459 = vadd.f32 %v2458, %v2349
  %v2460 = vadd.f32 %v2459, %v2351
  %v2461 = vadd.f32 %v2460, %v2353
  %v2462 = vadd.f32 %v2461, %v2355
  %v2463 = vadd.f32 %v2462, %v2357
  %v2464 = vadd.f32 %v2463, %v2359
  %v2465 = vadd.f32 %v2464, %v2361
  %v2466 = vadd.f32 %v2465, %v2363
  %v2467 = vadd.f32 %v2466, %v2365
  %v2468 = vadd.f32 %v2467, %v2367
  %v2469 = vadd.f32 %v2468, %v2369
  %v2470 = vadd.f32 %v2469, %v2371
  %v2471 = vadd.f32 %v2470, %v2373
  %v2472 = vadd.f32 %v2471, %v2375
  %v2473 = vadd.f32 %v2472, %v2377
  %v2474 = vadd.f32 %v2473, %v2379
  %v2475 = vadd.f32 %v2474, %v2381
  %v2476 = vadd.f32 %v2475, %v2383
  %v2477 = vadd.f32 %v2476, %v2385
  %v2478 = vadd.f32 %v2477, %v2387
  %v2479 = vadd.f32 %v2478, %v2389
  %v2480 = vadd.f32 %v2479, %v2391
  %v2481 = vadd.f32 %v2480, %v2393
  %v2482 = vadd.f32 %v2481, %v2395
  %v2483 = vadd.f32 %v2482, %v2397
  %v2484 = vadd.f32 %v2483, %v2399
  %v2485 = vadd.f32 %v2484, %v2401
  %v2486 = vadd.f32 %v2485, %v2403
  %v2487 = vadd.f32 %v2486, %v2405
  %v2488 = vadd.f32 %v2487, %v2407
  %v2489 = vadd.f32 %v2488, %v2409
  %v2490 = vadd.f32 %v2489, %v2411
  %v2491 = vadd.f32 %v2490, %v2413
  %v2492 = vadd.f32 %v2491, %v2415
  %v2493 = vadd.f32 %v2492, %v2417
  %v2494 = vadd.f32 %v2493, %v2419
  %v2495 = vadd.f32 %v2494, %v2421
  %v2496 = vadd.f32 %v2495, %v2423
  %v2497 = vadd.f32 %v2496, %v2425
  %v2498 = vadd.f32 %v2497, %v2427
  %v2499 = vadd.f32 %v2498, %v2429
  %v2500 = vadd.f32 %v2499, %v2431
  %v2501 = vadd.f32 %v2500, %v2433
  %v2502 = vadd.f32 %v2501, %v2435
  %v2503 = vadd.f32 %v2502, %v2437
  %v2504 = vadd.f32 %v2503, %v2439
  %v2505 = vadd.f32 %v2504, %v2441
  %v2506 = vrot.slane %v2505, 4
  %v2507 = vadd.f32 %v2505, %v2506
  %v2508 = vrot.slane %v2507, 2
  %v2509 = vadd.f32 %v2507, %v2508
  %v2510 = vrot.slane %v2509, 1
  %v2511 = vadd.f32 %v2509, %v2510
  %v2512 = vadd.f32 %v2316, %v2318
  %v2513 = vadd.f32 %v2512, %v2320
  %v2514 = vadd.f32 %v2513, %v2322
  %v2515 = vadd.f32 %v2514, %v2324
  %v2516 = vadd.f32 %v2515, %v2326
  %v2517 = vadd.f32 %v2516, %v2328
  %v2518 = vadd.f32 %v2517, %v2330
  %v2519 = vadd.f32 %v2518, %v2332
  %v2520 = vadd.f32 %v2519, %v2334
  %v2521 = vadd.f32 %v2520, %v2336
  %v2522 = vadd.f32 %v2521, %v2338
  %v2523 = vadd.f32 %v2522, %v2340
  %v2524 = vadd.f32 %v2523, %v2342
  %v2525 = vadd.f32 %v2524, %v2344
  %v2526 = vadd.f32 %v2525, %v2346
  %v2527 = vadd.f32 %v2526, %v2348
  %v2528 = vadd.f32 %v2527, %v2350
  %v2529 = vadd.f32 %v2528, %v2352
  %v2530 = vadd.f32 %v2529, %v2354
  %v2531 = vadd.f32 %v2530, %v2356
  %v2532 = vadd.f32 %v2531, %v2358
  %v2533 = vadd.f32 %v2532, %v2360
  %v2534 = vadd.f32 %v2533, %v2362
  %v2535 = vadd.f32 %v2534, %v2364
  %v2536 = vadd.f32 %v2535, %v2366
  %v2537 = vadd.f32 %v2536, %v2368
  %v2538 = vadd.f32 %v2537, %v2370
  %v2539 = vadd.f32 %v2538, %v2372
  %v2540 = vadd.f32 %v2539, %v2374
  %v2541 = vadd.f32 %v2540, %v2376
  %v2542 = vadd.f32 %v2541, %v2378
  %v2543 = vadd.f32 %v2542, %v2380
  %v2544 = vadd.f32 %v2543, %v2382
  %v2545 = vadd.f32 %v2544, %v2384
  %v2546 = vadd.f32 %v2545, %v2386
  %v2547 = vadd.f32 %v2546, %v2388
  %v2548 = vadd.f32 %v2547, %v2390
  %v2549 = vadd.f32 %v2548, %v2392
  %v2550 = vadd.f32 %v2549, %v2394
  %v2551 = vadd.f32 %v2550, %v2396
  %v2552 = vadd.f32 %v2551, %v2398
  %v2553 = vadd.f32 %v2552, %v2400
  %v2554 = vadd.f32 %v2553, %v2402
  %v2555 = vadd.f32 %v2554, %v2404
  %v2556 = vadd.f32 %v2555, %v2406
  %v2557 = vadd.f32 %v2556, %v2408
  %v2558 = vadd.f32 %v2557, %v2410
  %v2559 = vadd.f32 %v2558, %v2412
  %v2560 = vadd.f32 %v2559, %v2414
  %v2561 = vadd.f32 %v2560, %v2416
  %v2562 = vadd.f32 %v2561, %v2418
  %v2563 = vadd.f32 %v2562, %v2420
  %v2564 = vadd.f32 %v2563, %v2422
  %v2565 = vadd.f32 %v2564, %v2424
  %v2566 = vadd.f32 %v2565, %v2426
  %v2567 = vadd.f32 %v2566, %v2428
  %v2568 = vadd.f32 %v2567, %v2430
  %v2569 = vadd.f32 %v2568, %v2432
  %v2570 = vadd.f32 %v2569, %v2434
  %v2571 = vadd.f32 %v2570, %v2436
  %v2572 = vadd.f32 %v2571, %v2438
  %v2573 = vadd.f32 %v2572, %v2440
  %v2574 = vadd.f32 %v2573, %v2442
  %v2575 = vrot.slane %v2574, 4
  %v2576 = vadd.f32 %v2574, %v2575
  %v2577 = vrot.slane %v2576, 2
  %v2578 = vadd.f32 %v2576, %v2577
  %v2579 = vrot.slane %v2578, 1
  %v2580 = vadd.f32 %v2578, %v2579
  %v2581 = vsel %vm2169, %v2245, %v2511
  %v2582 = vsel %vm2169, %v2314, %v2580
  %v2583 = vsel %vm2171, %v2581, 0.0
  %v2584 = vsel %vm2171, %v2582, 0.0
  %v2585 = vadd.f32 %v2175, %v2583
  %v2586 = vadd.f32 %v2176, %v2584
  %2587 = vst [vmem:[%s6] sm:$0xff] %v2585
  %2588 = vst [vmem:[%s6 + $0x8] sm:$0xff] %v2586
  // Predicated region
  $region18: #{bottleneck_forward.4} parent=0 // pred_check
    _
  $region19: #{bottleneck_forward.4} parent=0 // pred_check_branch
    %2590 = sbr.rel (0) target = $region21
  $region20: #{bottleneck_forward.4} parent=0 // pred_region
    _
  $region21: #{bottleneck_forward.4} parent=0 // pred_fallthru
    _
  // Predicated region
  $region22: #{bottleneck_forward.4} parent=0 // pred_check
    _
  $region23: #{bottleneck_forward.4} parent=0 // pred_check_branch
    %2592 = sbr.rel (0) target = $region25
  $region24: #{bottleneck_forward.4} parent=0 // pred_region
    _
  $region25: #{bottleneck_forward.4} parent=0 // pred_fallthru
    _
  // Predicated region
  $region26: #{bottleneck_forward.4} parent=0 // pred_check
    _
  $region27: #{bottleneck_forward.4} parent=0 // pred_check_branch
    %2594 = sbr.rel (0) target = $region29
  $region28: #{bottleneck_forward.4} parent=0 // pred_region
    _
  $region29: #{bottleneck_forward.4} parent=0 // pred_fallthru
    _
  // Predicated region
  $region30: #{bottleneck_forward.4} parent=0 // pred_check
    _
  $region31: #{bottleneck_forward.4} parent=0 // pred_check_branch
    %2596 = sbr.rel (0) target = $region33
  $region32: #{bottleneck_forward.4} parent=0 // pred_region
    _
  $region33: #{bottleneck_forward.4} parent=0 // pred_fallthru
    _
  // Predicated region
  $region34: #{bottleneck_forward.4} parent=0 // pred_check
    _
  $region35: #{bottleneck_forward.4} parent=0 // pred_check_branch
    %2598 = sbr.rel (0) target = $region37
  $region36: #{bottleneck_forward.4} parent=0 // pred_region
    _
  $region37: #{bottleneck_forward.4} parent=0 // pred_fallthru
    _
  // Predicated region
  $region38: #{bottleneck_forward.4} parent=0 // pred_check
    _
  $region39: #{bottleneck_forward.4} parent=0 // pred_check_branch
    %2600 = sbr.rel (0) target = $region41
  $region40: #{bottleneck_forward.4} parent=0 // pred_region
    _
  $region41: #{bottleneck_forward.4} parent=0 // pred_fallthru
    _
  // Predicated region
  $region42: #{bottleneck_forward.4} parent=0 // pred_check
    _
  $region43: #{bottleneck_forward.4} parent=0 // pred_check_branch
    %2602 = sbr.rel (0) target = $region45
  $region44: #{bottleneck_forward.4} parent=0 // pred_region
    _
  $region45: #{bottleneck_forward.4} parent=0 // pred_fallthru
    _
  // Predicated region
  $region46: #{bottleneck_forward.4} parent=0 // pred_check
    _
  $region47: #{bottleneck_forward.4} parent=0 // pred_check_branch
    %2604 = sbr.rel (0) target = $region49
  $region48: #{bottleneck_forward.4} parent=0 // pred_region
    _
  $region49: #{bottleneck_forward.4} parent=0 // pred_fallthru
    _

// kernel: bottleneck_forward.5
$region0: #{bottleneck_forward.5}
  #allocation0 [shape = 'u32[]', space=smem, size = 0x4, offset = 0x4, fixed_abs, tag = 'smem constant byte address 0x4 - core index']
  #allocation1 [shape = 'u32[144,128]{1,0:T(1,128)}', space=vmem, size = 0x12000, scoped, tag = 'internal scratch']
  #allocation2 [shape = 'bf16[10,24,64]{2,1,0:T(8,128)(2,1)}', space=vmem, size = 0xf000, scoped, tag = 'scratch operand']
  %s0 = inlined_call_operand.vmem [shape: bf16[2,16,16,64], index: 0, kind: input, shape index: {}, may-alias: {0,1,2}]
  %s1 = inlined_call_operand.vmem [shape: bf16[2,16,16,64], index: 1, kind: input, shape index: {}, may-alias: {0,1,2}]
  %s2 = inlined_call_operand.vmem [shape: bf16[2,16,16,64], index: 2, kind: input, shape index: {}, may-alias: {0,1,2}]
  %s3 = inlined_call_operand.vmem [shape: f32[1,64], index: 3, kind: input, shape index: {}]
  %s4 = inlined_call_operand.vmem [shape: f32[1,64], index: 4, kind: input, shape index: {}]
  %s5 = inlined_call_operand.vmem [shape: bf16[9,64,64], index: 5, kind: input, shape index: {}]
  %s6 = inlined_call_operand.vmem [shape: bf16[512,64], index: 6, kind: output, shape index: {0}]
  %s7 = inlined_call_operand.vmem [shape: f32[8,64], index: 7, kind: output, shape index: {1}]
  %8 = xla_tuple %s6, %s7
  %s9 = sld [smem:[#allocation0]]
  $region69: #{bottleneck_forward.5} parent=0
    _
  %s11 = ssub.s32 1, %s9
  %s12 = scalar_select 0, %s11, %s9
  loop: start=0, step=1, limit=6
  $region2: #{bottleneck_forward.5} parent=0 // loop_pre_header
    _
  $region3: #{bottleneck_forward.5} parent=0 // loop_header
    %s14 = sphi 0, %s18
    %p15 = scmp.ge.s32.totalorder %s14, 6
    %s21 = sphi 0, %s33
    %s22 = sphi 0, %s29
    %s23 = sphi 0, %s21
    %s24 = sphi 0, %s22
    %s25 = sphi 0, %s23
    %s26 = sphi 0, %s24
    %s38 = sphi 0, %s40
    %s41 = sphi 0, %s38
    %s42 = sphi 0, %s41
    %s58 = sphi 0, %s42
    %s74 = sphi 0, %s76
    %s77 = sphi 0, %s74
    %s78 = sphi 0, %s77
    %s94 = sphi 0, %s78
    %s110 = sphi 0, %s112
    %s113 = sphi 0, %s110
    %s114 = sphi 0, %s113
    %s130 = sphi 0, %s114
    %s134 = sphi 0, %s134
    %s136 = sphi 0, %s134
    %s137 = sphi 0, %s136
    %s151 = sphi 0, %s137
    %s155 = sphi 0, %s155
    %s157 = sphi 0, %s155
    %s158 = sphi 0, %s157
    %s172 = sphi 0, %s158
    %s176 = sphi 0, %s176
    %s178 = sphi 0, %s176
    %s179 = sphi 0, %s178
    %s193 = sphi 0, %s179
    %s203 = sphi 0, %s205
    %s206 = sphi 0, %s203
    %s207 = sphi 0, %s206
    %s223 = sphi 0, %s207
    %s227 = sphi 0, %s227
    %s229 = sphi 0, %s227
    %s230 = sphi 0, %s229
    %s244 = sphi 0, %s230
  $region4: #{bottleneck_forward.5} parent=0 // loop_header_branch
    %17 = sbr.rel (%p15) target = $region8
  $region5: #{bottleneck_forward.5} parent=0 // loop_body
    %s19 = ssub.s32 %s14, 1
    %s20 = ssub.s32 %s14, 2
    %s27 = sadd.s32 1, %s22
    %p28 = scmp.ge.s32.totalorder %s27, 2
    %s29 = scalar_select %p28, 0, %s27
    %s30 = sadd.s32 1, %s21
    %s31 = scalar_select %p28, %s30, %s21
    %p32 = scmp.ge.s32.totalorder %s31, 2
    %s33 = scalar_select %p32, 0, %s31
    %s34 = ssub.s32 %s21, %s33
    %s35 = ssub.s32 %s22, %s29
    %s36 = sor.u32 %s34, %s35
    %p37 = scmp.eq.s32.totalorder %s36, 0
    %s39 = sadd.s32 %s38, 1
    %s40 = scalar_select %p37, %s38, %s39
    %p43 = pneg %p37
    %p44 = scmp.eq.s32.totalorder %s14, 3
    %p45 = por %p43, %p44
    %p46 = scmp.ne.s32.totalorder %s38, %s41
    %p47 = scmp.eq.s32.totalorder %s14, 0
    %p48 = por %p46, %p47
    %p49 = scmp.ne.s32.totalorder %s38, %s41
    %p50 = scmp.eq.s32.totalorder %s19, 3
    %p51 = por %p49, %p50
    %p52 = scmp.ne.s32.totalorder %s41, %s42
    %p53 = scmp.eq.s32.totalorder %s19, 0
    %p54 = por %p52, %p53
    %p55 = scmp.ne.s32.totalorder %s41, %s42
    %p56 = scmp.eq.s32.totalorder %s20, 3
    %p57 = por %p55, %p56
    %p59 = scmp.ne.s32.totalorder %s42, %s58
    %p60 = scmp.eq.s32.totalorder %s20, 0
    %p61 = por %p59, %p60
    %s62 = smul.u32 %s22, 8
    %s63 = ssub.s32 %s62, 1
    %p64 = scmp.gt.s32.totalorder %s63, 0
    %s65 = scalar_select %p64, %s63, 0
    %s66 = smul.u32 %s29, 8
    %s67 = ssub.s32 %s66, 1
    %p68 = scmp.gt.s32.totalorder %s67, 0
    %s69 = scalar_select %p68, %s67, 0
    %s70 = ssub.s32 %s21, %s33
    %s71 = ssub.s32 %s65, %s69
    %s72 = sor.u32 %s70, %s71
    %p73 = scmp.eq.s32.totalorder %s72, 0
    %s75 = sadd.s32 %s74, 1
    %s76 = scalar_select %p73, %s74, %s75
    %p79 = pneg %p73
    %p80 = scmp.eq.s32.totalorder %s14, 3
    %p81 = por %p79, %p80
    %p82 = scmp.ne.s32.totalorder %s74, %s77
    %p83 = scmp.eq.s32.totalorder %s14, 0
    %p84 = por %p82, %p83
    %p85 = scmp.ne.s32.totalorder %s74, %s77
    %p86 = scmp.eq.s32.totalorder %s19, 3
    %p87 = por %p85, %p86
    %p88 = scmp.ne.s32.totalorder %s77, %s78
    %p89 = scmp.eq.s32.totalorder %s19, 0
    %p90 = por %p88, %p89
    %p91 = scmp.ne.s32.totalorder %s77, %s78
    %p92 = scmp.eq.s32.totalorder %s20, 3
    %p93 = por %p91, %p92
    %p95 = scmp.ne.s32.totalorder %s78, %s94
    %p96 = scmp.eq.s32.totalorder %s20, 0
    %p97 = por %p95, %p96
    %s98 = smul.u32 %s22, 8
    %s99 = sadd.s32 %s98, 8
    %p100 = scmp.lt.s32.totalorder %s99, 15
    %s101 = scalar_select %p100, %s99, 15
    %s102 = smul.u32 %s29, 8
    %s103 = sadd.s32 %s102, 8
    %p104 = scmp.lt.s32.totalorder %s103, 15
    %s105 = scalar_select %p104, %s103, 15
    %s106 = ssub.s32 %s21, %s33
    %s107 = ssub.s32 %s101, %s105
    %s108 = sor.u32 %s106, %s107
    %p109 = scmp.eq.s32.totalorder %s108, 0
    %s111 = sadd.s32 %s110, 1
    %s112 = scalar_select %p109, %s110, %s111
    %p115 = pneg %p109
    %p116 = scmp.eq.s32.totalorder %s14, 3
    %p117 = por %p115, %p116
    %p118 = scmp.ne.s32.totalorder %s110, %s113
    %p119 = scmp.eq.s32.totalorder %s14, 0
    %p120 = por %p118, %p119
    %p121 = scmp.ne.s32.totalorder %s110, %s113
    %p122 = scmp.eq.s32.totalorder %s19, 3
    %p123 = por %p121, %p122
    %p124 = scmp.ne.s32.totalorder %s113, %s114
    %p125 = scmp.eq.s32.totalorder %s19, 0
    %p126 = por %p124, %p125
    %p127 = scmp.ne.s32.totalorder %s113, %s114
    %p128 = scmp.eq.s32.totalorder %s20, 3
    %p129 = por %p127, %p128
    %p131 = scmp.ne.s32.totalorder %s114, %s130
    %p132 = scmp.eq.s32.totalorder %s20, 0
    %p133 = por %p131, %p132
    %s135 = sadd.s32 %s134, 1
    %p138 = scmp.eq.s32.totalorder %s14, 3
    %p139 = scmp.ne.s32.totalorder %s134, %s136
    %p140 = scmp.eq.s32.totalorder %s14, 0
    %p141 = por %p139, %p140
    %p142 = scmp.ne.s32.totalorder %s134, %s136
    %p143 = scmp.eq.s32.totalorder %s19, 3
    %p144 = por %p142, %p143
    %p145 = scmp.ne.s32.totalorder %s136, %s137
    %p146 = scmp.eq.s32.totalorder %s19, 0
    %p147 = por %p145, %p146
    %p148 = scmp.ne.s32.totalorder %s136, %s137
    %p149 = scmp.eq.s32.totalorder %s20, 3
    %p150 = por %p148, %p149
    %p152 = scmp.ne.s32.totalorder %s137, %s151
    %p153 = scmp.eq.s32.totalorder %s20, 0
    %p154 = por %p152, %p153
    %s156 = sadd.s32 %s155, 1
    %p159 = scmp.eq.s32.totalorder %s14, 3
    %p160 = scmp.ne.s32.totalorder %s155, %s157
    %p161 = scmp.eq.s32.totalorder %s14, 0
    %p162 = por %p160, %p161
    %p163 = scmp.ne.s32.totalorder %s155, %s157
    %p164 = scmp.eq.s32.totalorder %s19, 3
    %p165 = por %p163, %p164
    %p166 = scmp.ne.s32.totalorder %s157, %s158
    %p167 = scmp.eq.s32.totalorder %s19, 0
    %p168 = por %p166, %p167
    %p169 = scmp.ne.s32.totalorder %s157, %s158
    %p170 = scmp.eq.s32.totalorder %s20, 3
    %p171 = por %p169, %p170
    %p173 = scmp.ne.s32.totalorder %s158, %s172
    %p174 = scmp.eq.s32.totalorder %s20, 0
    %p175 = por %p173, %p174
    %s177 = sadd.s32 %s176, 1
    %p180 = scmp.eq.s32.totalorder %s14, 3
    %p181 = scmp.ne.s32.totalorder %s176, %s178
    %p182 = scmp.eq.s32.totalorder %s14, 0
    %p183 = por %p181, %p182
    %p184 = scmp.ne.s32.totalorder %s176, %s178
    %p185 = scmp.eq.s32.totalorder %s19, 3
    %p186 = por %p184, %p185
    %p187 = scmp.ne.s32.totalorder %s178, %s179
    %p188 = scmp.eq.s32.totalorder %s19, 0
    %p189 = por %p187, %p188
    %p190 = scmp.ne.s32.totalorder %s178, %s179
    %p191 = scmp.eq.s32.totalorder %s20, 3
    %p192 = por %p190, %p191
    %p194 = scmp.ne.s32.totalorder %s179, %s193
    %p195 = scmp.eq.s32.totalorder %s20, 0
    %p196 = por %p194, %p195
    %s197 = smul.u32 %s21, 2
    %s198 = sadd.s32 %s197, %s22
    %s199 = smul.u32 %s33, 2
    %s200 = sadd.s32 %s199, %s29
    %s201 = ssub.s32 %s198, %s200
    %p202 = scmp.eq.s32.totalorder %s201, 0
    %s204 = sadd.s32 %s203, 1
    %s205 = scalar_select %p202, %s203, %s204
    %p208 = pneg %p202
    %p209 = scmp.eq.s32.totalorder %s14, 3
    %p210 = por %p208, %p209
    %p211 = scmp.ne.s32.totalorder %s203, %s206
    %p212 = scmp.eq.s32.totalorder %s14, 0
    %p213 = por %p211, %p212
    %p214 = scmp.ne.s32.totalorder %s203, %s206
    %p215 = scmp.eq.s32.totalorder %s19, 3
    %p216 = por %p214, %p215
    %p217 = scmp.ne.s32.totalorder %s206, %s207
    %p218 = scmp.eq.s32.totalorder %s19, 0
    %p219 = por %p217, %p218
    %p220 = scmp.ne.s32.totalorder %s206, %s207
    %p221 = scmp.eq.s32.totalorder %s20, 3
    %p222 = por %p220, %p221
    %p224 = scmp.ne.s32.totalorder %s207, %s223
    %p225 = scmp.eq.s32.totalorder %s20, 0
    %p226 = por %p224, %p225
    %s228 = sadd.s32 %s227, 1
    %p231 = scmp.eq.s32.totalorder %s14, 3
    %p232 = scmp.ne.s32.totalorder %s227, %s229
    %p233 = scmp.eq.s32.totalorder %s14, 0
    %p234 = por %p232, %p233
    %p235 = scmp.ne.s32.totalorder %s227, %s229
    %p236 = scmp.eq.s32.totalorder %s19, 3
    %p237 = por %p235, %p236
    %p238 = scmp.ne.s32.totalorder %s229, %s230
    %p239 = scmp.eq.s32.totalorder %s19, 0
    %p240 = por %p238, %p239
    %p241 = scmp.ne.s32.totalorder %s229, %s230
    %p242 = scmp.eq.s32.totalorder %s20, 3
    %p243 = por %p241, %p242
    %p245 = scmp.ne.s32.totalorder %s230, %s244
    %p246 = scmp.eq.s32.totalorder %s20, 0
    %p247 = por %p245, %p246
    %p248 = scmp.le.s32.totalorder 1, %s14
    %p249 = scmp.lt.s32.totalorder %s14, 5
    %p250 = pnand %p248, %p249
    %p251 = pneg %p250
    // Predicated region
    $region9: #{bottleneck_forward.5} parent=5 // pred_check
      _
    $region10: #{bottleneck_forward.5} parent=5 // pred_check_branch
      %253 = sbr.rel (%p250) target = $region12
    $region11: #{bottleneck_forward.5} parent=5 // pred_region
      %s254 = ssub.s32 %s14, 1
      // Predicated region
      $region13: #{bottleneck_forward.5} parent=11 // pred_check
        %p255 = pneg %p147
      $region14: #{bottleneck_forward.5} parent=11 // pred_check_branch
        %257 = sbr.rel (%p255) target = $region16
      $region15: #{bottleneck_forward.5} parent=11 // pred_region
        _
      $region16: #{bottleneck_forward.5} parent=11 // pred_fallthru
        _
      // Predicated region
      $region17: #{bottleneck_forward.5} parent=11 // pred_check
        %p258 = pneg %p168
      $region18: #{bottleneck_forward.5} parent=11 // pred_check_branch
        %260 = sbr.rel (%p258) target = $region20
      $region19: #{bottleneck_forward.5} parent=11 // pred_region
        _
      $region20: #{bottleneck_forward.5} parent=11 // pred_fallthru
        _
      // Predicated region
      $region21: #{bottleneck_forward.5} parent=11 // pred_check
        %p261 = pneg %p189
      $region22: #{bottleneck_forward.5} parent=11 // pred_check_branch
        %263 = sbr.rel (%p261) target = $region24
      $region23: #{bottleneck_forward.5} parent=11 // pred_region
        _
      $region24: #{bottleneck_forward.5} parent=11 // pred_fallthru
        _
    $region12: #{bottleneck_forward.5} parent=5 // pred_fallthru
      _
    %p264 = scmp.lt.s32.totalorder %s14, 4
    // Predicated region
    $region25: #{bottleneck_forward.5} parent=5 // pred_check
      %p265 = pneg %p264
    $region26: #{bottleneck_forward.5} parent=5 // pred_check_branch
      %267 = sbr.rel (%p265) target = $region28
    $region27: #{bottleneck_forward.5} parent=5 // pred_region
      // Predicated region
      $region29: #{bottleneck_forward.5} parent=27 // pred_check
        %p268 = pneg %p48
      $region30: #{bottleneck_forward.5} parent=27 // pred_check_branch
        %270 = sbr.rel (%p268) target = $region32
      $region31: #{bottleneck_forward.5} parent=27 // pred_region
        %s271 = smul.u32 8, %s22
        %p272 = scmp.lt.s32.totalorder %s21, 1
        %s273 = scalar_select %p272, %s21, 1
        %p274 = scmp.lt.s32.totalorder %s271, 15
        %s275 = scalar_select %p274, %s271, 15
        %s276 = smul.addr %s275, 2
        %s277 = smul.addr %s273, 32
        %s278 = sadd.s32 %s276, %s277
        %s279 = smul.addr %s278, 4
        %s280 = scalar_lea.vmem %s0, %s279
        %s281 = smul.u32 8, %s22
      $region32: #{bottleneck_forward.5} parent=27 // pred_fallthru
        _
      // Predicated region
      $region33: #{bottleneck_forward.5} parent=27 // pred_check
        %p282 = pneg %p84
      $region34: #{bottleneck_forward.5} parent=27 // pred_check_branch
        %284 = sbr.rel (%p282) target = $region36
      $region35: #{bottleneck_forward.5} parent=27 // pred_region
        %s285 = smul.u32 %s22, 8
        %s286 = ssub.s32 %s285, 1
        %p287 = scmp.gt.s32.totalorder %s286, 0
        %s288 = scalar_select %p287, %s286, 0
        %p289 = scmp.lt.s32.totalorder %s21, 1
        %s290 = scalar_select %p289, %s21, 1
        %p291 = scmp.lt.s32.totalorder %s288, 15
        %s292 = scalar_select %p291, %s288, 15
        %s293 = smul.addr %s292, 2
        %s294 = smul.addr %s290, 32
        %s295 = sadd.s32 %s293, %s294
        %s296 = smul.addr %s295, 4
        %s297 = scalar_lea.vmem %s1, %s296
        %s298 = smul.u32 %s22, 8
        %s299 = ssub.s32 %s298, 1
        %p300 = scmp.gt.s32.totalorder %s299, 0
        %s301 = scalar_select %p300, %s299, 0
      $region36: #{bottleneck_forward.5} parent=27 // pred_fallthru
        _
      // Predicated region
      $region37: #{bottleneck_forward.5} parent=27 // pred_check
        %p302 = pneg %p120
      $region38: #{bottleneck_forward.5} parent=27 // pred_check_branch
        %304 = sbr.rel (%p302) target = $region40
      $region39: #{bottleneck_forward.5} parent=27 // pred_region
        %s305 = smul.u32 %s22, 8
        %s306 = sadd.s32 %s305, 8
        %p307 = scmp.lt.s32.totalorder %s306, 15
        %s308 = scalar_select %p307, %s306, 15
        %p309 = scmp.lt.s32.totalorder %s21, 1
        %s310 = scalar_select %p309, %s21, 1
        %p311 = scmp.lt.s32.totalorder %s308, 15
        %s312 = scalar_select %p311, %s308, 15
        %s313 = smul.addr %s312, 2
        %s314 = smul.addr %s310, 32
        %s315 = sadd.s32 %s313, %s314
        %s316 = smul.addr %s315, 4
        %s317 = scalar_lea.vmem %s2, %s316
        %s318 = smul.u32 %s22, 8
        %s319 = sadd.s32 %s318, 8
        %p320 = scmp.lt.s32.totalorder %s319, 15
        %s321 = scalar_select %p320, %s319, 15
      $region40: #{bottleneck_forward.5} parent=27 // pred_fallthru
        _
    $region28: #{bottleneck_forward.5} parent=5 // pred_fallthru
      _
    %p322 = scmp.le.s32.totalorder 1, %s14
    %p323 = scmp.lt.s32.totalorder %s14, 5
    %p324 = pnand %p322, %p323
    %p325 = pneg %p324
    // Predicated region
    $region41: #{bottleneck_forward.5} parent=5 // pred_check
      _
    $region42: #{bottleneck_forward.5} parent=5 // pred_check_branch
      %327 = sbr.rel (%p324) target = $region44
    $region43: #{bottleneck_forward.5} parent=5 // pred_region
      %s328 = ssub.s32 %s14, 1
      %s329 = smul.u32 8, %s24
      %p330 = scmp.lt.s32.totalorder %s23, 1
      %s331 = scalar_select %p330, %s23, 1
      %p332 = scmp.lt.s32.totalorder %s329, 15
      %s333 = scalar_select %p332, %s329, 15
      %s334 = smul.addr %s333, 2
      %s335 = smul.addr %s331, 32
      %s336 = sadd.s32 %s334, %s335
      %s337 = smul.addr %s336, 4
      %s338 = scalar_lea.vmem %s0, %s337
      %p339 = pneg %p54
      %p340 = pneg %p51
      %s341 = smul.u32 %s24, 8
      %s342 = ssub.s32 %s341, 1
      %p343 = scmp.gt.s32.totalorder %s342, 0
      %s344 = scalar_select %p343, %s342, 0
      %p345 = scmp.lt.s32.totalorder %s23, 1
      %s346 = scalar_select %p345, %s23, 1
      %p347 = scmp.lt.s32.totalorder %s344, 15
      %s348 = scalar_select %p347, %s344, 15
      %s349 = smul.addr %s348, 2
      %s350 = smul.addr %s346, 32
      %s351 = sadd.s32 %s349, %s350
      %s352 = smul.addr %s351, 4
      %s353 = scalar_lea.vmem %s1, %s352
      %p354 = pneg %p90
      %p355 = pneg %p87
      %s356 = smul.u32 %s24, 8
      %s357 = sadd.s32 %s356, 8
      %p358 = scmp.lt.s32.totalorder %s357, 15
      %s359 = scalar_select %p358, %s357, 15
      %p360 = scmp.lt.s32.totalorder %s23, 1
      %s361 = scalar_select %p360, %s23, 1
      %p362 = scmp.lt.s32.totalorder %s359, 15
      %s363 = scalar_select %p362, %s359, 15
      %s364 = smul.addr %s363, 2
      %s365 = smul.addr %s361, 32
      %s366 = sadd.s32 %s364, %s365
      %s367 = smul.addr %s366, 4
      %s368 = scalar_lea.vmem %s2, %s367
      %p369 = pneg %p126
      %p370 = pneg %p123
      %p371 = pneg %p147
      %p372 = pneg %p144
      %p373 = pneg %p168
      %p374 = pneg %p165
      %p375 = pneg %p189
      %p376 = pneg %p186
      %p377 = pneg %p219
      %p378 = pneg %p216
      %s379 = smul.u32 %s23, 2
      %s380 = sadd.s32 %s379, %s24
      %s381 = smul.u32 16, %s380
      %p382 = scmp.lt.s32.totalorder %s381, 63
      %s383 = scalar_select %p382, %s381, 63
      %s384 = smul.addr %s383, 4
      %s385 = scalar_lea.vmem %s6, %s384
      %p386 = pneg %p240
      %p387 = pneg %p237
      %s388 = smul.u32 8, %s24
      %p389 = scmp.lt.s32.totalorder %s23, 1
      %s390 = scalar_select %p389, %s23, 1
      %p391 = scmp.lt.s32.totalorder %s388, 15
      %s392 = scalar_select %p391, %s388, 15
      %s393 = smul.addr %s392, 2
      %s394 = smul.addr %s390, 32
      %s395 = sadd.s32 %s393, %s394
      %s396 = smul.addr %s395, 4
      %s397 = scalar_lea.vmem %s0, %s396
      %s398 = smul.u32 8, %s24
      %s399 = smul.u32 %s24, 8
      %s400 = ssub.s32 %s399, 1
      %p401 = scmp.gt.s32.totalorder %s400, 0
      %s402 = scalar_select %p401, %s400, 0
      %p403 = scmp.lt.s32.totalorder %s23, 1
      %s404 = scalar_select %p403, %s23, 1
      %p405 = scmp.lt.s32.totalorder %s402, 15
      %s406 = scalar_select %p405, %s402, 15
      %s407 = smul.addr %s406, 2
      %s408 = smul.addr %s404, 32
      %s409 = sadd.s32 %s407, %s408
      %s410 = smul.addr %s409, 4
      %s411 = scalar_lea.vmem %s1, %s410
      %s412 = smul.u32 %s24, 8
      %s413 = ssub.s32 %s412, 1
      %p414 = scmp.gt.s32.totalorder %s413, 0
      %s415 = scalar_select %p414, %s413, 0
      %s416 = smul.u32 %s24, 8
      %s417 = sadd.s32 %s416, 8
      %p418 = scmp.lt.s32.totalorder %s417, 15
      %s419 = scalar_select %p418, %s417, 15
      %p420 = scmp.lt.s32.totalorder %s23, 1
      %s421 = scalar_select %p420, %s23, 1
      %p422 = scmp.lt.s32.totalorder %s419, 15
      %s423 = scalar_select %p422, %s419, 15
      %s424 = smul.addr %s423, 2
      %s425 = smul.addr %s421, 32
      %s426 = sadd.s32 %s424, %s425
      %s427 = smul.addr %s426, 4
      %s428 = scalar_lea.vmem %s2, %s427
      %s429 = smul.u32 %s24, 8
      %s430 = sadd.s32 %s429, 8
      %p431 = scmp.lt.s32.totalorder %s430, 15
      %s432 = scalar_select %p431, %s430, 15
      %s433 = smul.u32 %s23, 2
      %s434 = sadd.s32 %s433, %s24
      %s435 = smul.u32 16, %s434
      %p436 = scmp.lt.s32.totalorder %s435, 63
      %s437 = scalar_select %p436, %s435, 63
      %s438 = smul.addr %s437, 4
      %s439 = scalar_lea.vmem %s6, %s438
      %s440 = smul.u32 %s23, 2
      %s441 = sadd.s32 %s440, %s24
      %s442 = smul.u32 16, %s441
      %p444 = scmp.eq.s32.totalorder %s23, 0
      %p445 = scmp.eq.s32.totalorder %s24, 0
      %p446 = pnand %p444, %p445
      %p447 = pneg %p446
      // Predicated region
      $region45: #{bottleneck_forward.5} parent=43 // pred_check
        _
      $region46: #{bottleneck_forward.5} parent=43 // pred_check_branch
        %449 = sbr.rel (%p446) target = $region48
      $region47: #{bottleneck_forward.5} parent=43 // pred_region
        %vm450 = vcmask 519168
        %451 = vst.msk [vmem:[#allocation2] sm:$0xf] %vm450, 0
        %452 = vst.msk [vmem:[#allocation2 + $0x4] sm:$0xf] %vm450, 0
        %453 = vst.msk [vmem:[#allocation2 + $0x8] sm:$0xf] %vm450, 0
        %454 = vst.msk [vmem:[#allocation2 + $0xc] sm:$0xf] %vm450, 0
        %455 = vst.msk [vmem:[#allocation2 + $0x10] sm:$0xf] %vm450, 0
        %456 = vst.msk [vmem:[#allocation2 + $0x14] sm:$0xf] %vm450, 0
        %457 = vst.msk [vmem:[#allocation2 + $0x18] sm:$0xf] %vm450, 0
        %458 = vst.msk [vmem:[#allocation2 + $0x1c] sm:$0xf] %vm450, 0
        %459 = vst.msk [vmem:[#allocation2 + $0x20] sm:$0xf] %vm450, 0
        %460 = vst.msk [vmem:[#allocation2 + $0x24] sm:$0xf] %vm450, 0
        %461 = vst.msk [vmem:[#allocation2 + $0x28] sm:$0xf] %vm450, 0
        %462 = vst.msk [vmem:[#allocation2 + $0x2c] sm:$0xf] %vm450, 0
        %463 = vst.msk [vmem:[#allocation2 + $0x30] sm:$0xf] %vm450, 0
        %464 = vst.msk [vmem:[#allocation2 + $0x34] sm:$0xf] %vm450, 0
        %465 = vst.msk [vmem:[#allocation2 + $0x38] sm:$0xf] %vm450, 0
        %466 = vst.msk [vmem:[#allocation2 + $0x3c] sm:$0xf] %vm450, 0
        %467 = vst.msk [vmem:[#allocation2 + $0x40] sm:$0xf] %vm450, 0
        %468 = vst.msk [vmem:[#allocation2 + $0x44] sm:$0xf] %vm450, 0
        %469 = vst.msk [vmem:[#allocation2 + $0x48] sm:$0xf] %vm450, 0
        %470 = vst.msk [vmem:[#allocation2 + $0x4c] sm:$0xf] %vm450, 0
        %471 = vst.msk [vmem:[#allocation2 + $0x50] sm:$0xf] %vm450, 0
        %472 = vst.msk [vmem:[#allocation2 + $0x54] sm:$0xf] %vm450, 0
        %473 = vst.msk [vmem:[#allocation2 + $0x58] sm:$0xf] %vm450, 0
        %474 = vst.msk [vmem:[#allocation2 + $0x5c] sm:$0xf] %vm450, 0
        %475 = vst.msk [vmem:[#allocation2 + $0x60] sm:$0xf] %vm450, 0
        %476 = vst.msk [vmem:[#allocation2 + $0x64] sm:$0xf] %vm450, 0
        %477 = vst.msk [vmem:[#allocation2 + $0x68] sm:$0xf] %vm450, 0
        %478 = vst.msk [vmem:[#allocation2 + $0x6c] sm:$0xf] %vm450, 0
        %479 = vst.msk [vmem:[#allocation2 + $0x70] sm:$0xf] %vm450, 0
        %480 = vst.msk [vmem:[#allocation2 + $0x74] sm:$0xf] %vm450, 0
        %vm481 = vcmask 523264
        %482 = vst.msk [vmem:[%s7] sm:$0xff] %vm481, 0.0
      $region48: #{bottleneck_forward.5} parent=43 // pred_fallthru
        _
      %v483 = vld [vmem:[%s3] sm:$0x1]
      %v484 = vld [vmem:[%s4] sm:$0x1]
      %v485 = vld [vmem:[%s397] sm:$0xf]
      %v486 = vld [vmem:[%s397 + $0x4] sm:$0xf]
      %v487 = vld [vmem:[%s397 + $0x8] sm:$0xf]
      %v488 = vld [vmem:[%s397 + $0xc] sm:$0xf]
      %v489 = vld [vmem:[%s397 + $0x10] sm:$0xf]
      %v490 = vld [vmem:[%s397 + $0x14] sm:$0xf]
      %v491 = vld [vmem:[%s397 + $0x18] sm:$0xf]
      %v492 = vld [vmem:[%s397 + $0x1c] sm:$0xf]
      %v493 = vld [vmem:[%s397 + $0x20] sm:$0xf]
      %v494 = vld [vmem:[%s397 + $0x24] sm:$0xf]
      %v495 = vld [vmem:[%s397 + $0x28] sm:$0xf]
      %v496 = vld [vmem:[%s397 + $0x2c] sm:$0xf]
      %v497 = vld [vmem:[%s397 + $0x30] sm:$0xf]
      %v498 = vld [vmem:[%s397 + $0x34] sm:$0xf]
      %v499 = vld [vmem:[%s397 + $0x38] sm:$0xf]
      %v500 = vld [vmem:[%s397 + $0x3c] sm:$0xf]
      %v501 = vunpack.c.l.bf16 %v485
      %v502 = vunpack.c.l.bf16 %v486
      %v503 = vunpack.c.l.bf16 %v487
      %v504 = vunpack.c.l.bf16 %v488
      %v505 = vunpack.c.l.bf16 %v489
      %v506 = vunpack.c.l.bf16 %v490
      %v507 = vunpack.c.l.bf16 %v491
      %v508 = vunpack.c.l.bf16 %v492
      %v509 = vunpack.c.l.bf16 %v493
      %v510 = vunpack.c.l.bf16 %v494
      %v511 = vunpack.c.l.bf16 %v495
      %v512 = vunpack.c.l.bf16 %v496
      %v513 = vunpack.c.l.bf16 %v497
      %v514 = vunpack.c.l.bf16 %v498
      %v515 = vunpack.c.l.bf16 %v499
      %v516 = vunpack.c.l.bf16 %v500
      %v518 = vlaneseq
      %v519 = vshrl.u32 %v518, 7
      %v520 = vsub.s32 0, %v519
      %v521 = vrot.slane %v483, %v520
      %v523 = vmul.f32 %v501, %v521
      %v524 = vmul.f32 %v502, %v521
      %v525 = vmul.f32 %v503, %v521
      %v526 = vmul.f32 %v504, %v521
      %v527 = vmul.f32 %v505, %v521
      %v528 = vmul.f32 %v506, %v521
      %v529 = vmul.f32 %v507, %v521
      %v530 = vmul.f32 %v508, %v521
      %v531 = vmul.f32 %v509, %v521
      %v532 = vmul.f32 %v510, %v521
      %v533 = vmul.f32 %v511, %v521
      %v534 = vmul.f32 %v512, %v521
      %v535 = vmul.f32 %v513, %v521
      %v536 = vmul.f32 %v514, %v521
      %v537 = vmul.f32 %v515, %v521
      %v538 = vmul.f32 %v516, %v521
      %v540 = vlaneseq
      %v541 = vshrl.u32 %v540, 7
      %v542 = vsub.s32 0, %v541
      %v543 = vrot.slane %v484, %v542
      %v545 = vadd.f32 %v523, %v543
      %v546 = vadd.f32 %v524, %v543
      %v547 = vadd.f32 %v525, %v543
      %v548 = vadd.f32 %v526, %v543
      %v549 = vadd.f32 %v527, %v543
      %v550 = vadd.f32 %v528, %v543
      %v551 = vadd.f32 %v529, %v543
      %v552 = vadd.f32 %v530, %v543
      %v553 = vadd.f32 %v531, %v543
      %v554 = vadd.f32 %v532, %v543
      %v555 = vadd.f32 %v533, %v543
      %v556 = vadd.f32 %v534, %v543
      %v557 = vadd.f32 %v535, %v543
      %v558 = vadd.f32 %v536, %v543
      %v559 = vadd.f32 %v537, %v543
      %v560 = vadd.f32 %v538, %v543
      %v561 = vmax.f32 %v545, 0.0
      %v562 = vmax.f32 %v546, 0.0
      %v563 = vmax.f32 %v547, 0.0
      %v564 = vmax.f32 %v548, 0.0
      %v565 = vmax.f32 %v549, 0.0
      %v566 = vmax.f32 %v550, 0.0
      %v567 = vmax.f32 %v551, 0.0
      %v568 = vmax.f32 %v552, 0.0
      %v569 = vmax.f32 %v553, 0.0
      %v570 = vmax.f32 %v554, 0.0
      %v571 = vmax.f32 %v555, 0.0
      %v572 = vmax.f32 %v556, 0.0
      %v573 = vmax.f32 %v557, 0.0
      %v574 = vmax.f32 %v558, 0.0
      %v575 = vmax.f32 %v559, 0.0
      %v576 = vmax.f32 %v560, 0.0
      %v577 = vld [vmem:[%s411] sm:$0xf]
      %v578 = vld [vmem:[%s411 + $0x4] sm:$0xf]
      %v579 = vunpack.c.l.bf16 %v577
      %v580 = vunpack.c.l.bf16 %v578
      %v581 = vmul.f32 %v579, %v521
      %v582 = vmul.f32 %v580, %v521
      %v583 = vadd.f32 %v581, %v543
      %v584 = vadd.f32 %v582, %v543
      %v585 = vmax.f32 %v583, 0.0
      %v586 = vmax.f32 %v584, 0.0
      %s587 = scalar_select %p445, 0.0, 1.0
      %v588 = vstv %s587
      %v589 = vmul.f32 %v585, %v588
      %v590 = vmul.f32 %v586, %v588
      %v591 = vld [vmem:[%s428] sm:$0xf]
      %v592 = vld [vmem:[%s428 + $0x4] sm:$0xf]
      %v593 = vunpack.c.l.bf16 %v591
      %v594 = vunpack.c.l.bf16 %v592
      %v595 = vmul.f32 %v593, %v521
      %v596 = vmul.f32 %v594, %v521
      %v597 = vadd.f32 %v595, %v543
      %v598 = vadd.f32 %v596, %v543
      %v599 = vmax.f32 %v597, 0.0
      %v600 = vmax.f32 %v598, 0.0
      %p601 = scmp.eq.s32.totalorder %s24, 1
      %s602 = scalar_select %p601, 0.0, 1.0
      %v603 = vstv %s602
      %v604 = vmul.f32 %v599, %v603
      %v605 = vmul.f32 %v600, %v603
      %v606 = vpack.c.bf16 %v590, %v589
      %v608 = vunpack.c.l.b16 %v606
      %v609 = vunpack.c.h.b16 %v606
      %v610 = vpack.c.b16 %v608, %v608
      %v611 = vpack.c.b16 %v609, %v609
      %vm612 = vsmask.f32 256
      %vm613 = vsmask.f32 4368
      %vm614 = vmor %vm612, %vm613
      %v616 = vshrl.u32 %v610, 16
      %v618 = vrot.slane %v616, 7
      %v619 = vshll.u32 %v610, 16
      %v621 = vor.u32 %v618, %v619
      %v622 = vrot.slane %v618, 4
      %v624 = vshrl.u32 %v611, 16
      %v626 = vrot.slane %v624, 7
      %v627 = vshll.u32 %v611, 16
      %v629 = vor.u32 %v626, %v627
      %v630 = vsel %vm614, %v622, %v629
      %v631 = vrot.slane %v626, 4
      %vm635 = vcmask 519168
      %vm636 = vsmask.f32 7938
      %vm637 = vmand %vm635, %vm636
      %v638 = vld [vmem:[#allocation2] sm:$0xf]
      %v639 = vsel %vm637, %v621, %v638
      %640 = vst [vmem:[#allocation2] sm:$0xf] %v639
      %vm641 = vcmask 519168
      %642 = vst.msk [vmem:[#allocation2 + $0x4] sm:$0xf] %vm641, %v630
      %vm643 = vcmask 516096
      %vm644 = vmand %vm643, %vm612
      %v645 = vld [vmem:[#allocation2 + $0x8] sm:$0x1]
      %v646 = vsel %vm644, %v631, %v645
      %647 = vst [vmem:[#allocation2 + $0x8] sm:$0x1] %v646
      %v648 = vpack.c.bf16 %v562, %v561
      %v649 = vpack.c.bf16 %v564, %v563
      %v650 = vpack.c.bf16 %v566, %v565
      %v651 = vpack.c.bf16 %v568, %v567
      %v652 = vpack.c.bf16 %v570, %v569
      %v653 = vpack.c.bf16 %v572, %v571
      %v654 = vpack.c.bf16 %v574, %v573
      %v655 = vpack.c.bf16 %v576, %v575
      %v664 = vunpack.c.l.b16 %v648
      %v665 = vunpack.c.h.b16 %v648
      %v666 = vunpack.c.l.b16 %v649
      %v667 = vunpack.c.h.b16 %v649
      %v668 = vunpack.c.l.b16 %v650
      %v669 = vunpack.c.h.b16 %v650
      %v670 = vunpack.c.l.b16 %v651
      %v671 = vunpack.c.h.b16 %v651
      %v672 = vunpack.c.l.b16 %v652
      %v673 = vunpack.c.h.b16 %v652
      %v674 = vunpack.c.l.b16 %v653
      %v675 = vunpack.c.h.b16 %v653
      %v676 = vunpack.c.l.b16 %v654
      %v677 = vunpack.c.h.b16 %v654
      %v678 = vunpack.c.l.b16 %v655
      %v679 = vunpack.c.h.b16 %v655
      %v680 = vpack.c.b16 %v664, %v664
      %v681 = vpack.c.b16 %v665, %v665
      %v682 = vpack.c.b16 %v666, %v666
      %v683 = vpack.c.b16 %v667, %v667
      %v684 = vpack.c.b16 %v668, %v668
      %v685 = vpack.c.b16 %v669, %v669
      %v686 = vpack.c.b16 %v670, %v670
      %v687 = vpack.c.b16 %v671, %v671
      %v688 = vpack.c.b16 %v672, %v672
      %v689 = vpack.c.b16 %v673, %v673
      %v690 = vpack.c.b16 %v674, %v674
      %v691 = vpack.c.b16 %v675, %v675
      %v692 = vpack.c.b16 %v676, %v676
      %v693 = vpack.c.b16 %v677, %v677
      %v694 = vpack.c.b16 %v678, %v678
      %v695 = vpack.c.b16 %v679, %v679
      %v697 = vshrl.u32 %v680, 16
      %v699 = vrot.slane %v697, 7
      %v700 = vshll.u32 %v680, 16
      %v702 = vor.u32 %v699, %v700
      %v703 = vrot.slane %v699, 4
      %v705 = vshrl.u32 %v681, 16
      %v707 = vrot.slane %v705, 7
      %v708 = vshll.u32 %v681, 16
      %v710 = vor.u32 %v707, %v708
      %v711 = vsel %vm614, %v703, %v710
      %v712 = vrot.slane %v707, 4
      %v714 = vshrl.u32 %v682, 16
      %v716 = vrot.slane %v714, 7
      %v717 = vshll.u32 %v682, 16
      %v719 = vor.u32 %v716, %v717
      %v720 = vrot.slane %v716, 4
      %v722 = vshrl.u32 %v683, 16
      %v724 = vrot.slane %v722, 7
      %v725 = vshll.u32 %v683, 16
      %v727 = vor.u32 %v724, %v725
      %v728 = vsel %vm614, %v720, %v727
      %v729 = vrot.slane %v724, 4
      %v731 = vshrl.u32 %v684, 16
      %v733 = vrot.slane %v731, 7
      %v734 = vshll.u32 %v684, 16
      %v736 = vor.u32 %v733, %v734
      %v737 = vrot.slane %v733, 4
      %v739 = vshrl.u32 %v685, 16
      %v741 = vrot.slane %v739, 7
      %v742 = vshll.u32 %v685, 16
      %v744 = vor.u32 %v741, %v742
      %v745 = vsel %vm614, %v737, %v744
      %v746 = vrot.slane %v741, 4
      %v748 = vshrl.u32 %v686, 16
      %v750 = vrot.slane %v748, 7
      %v751 = vshll.u32 %v686, 16
      %v753 = vor.u32 %v750, %v751
      %v754 = vrot.slane %v750, 4
      %v756 = vshrl.u32 %v687, 16
      %v758 = vrot.slane %v756, 7
      %v759 = vshll.u32 %v687, 16
      %v761 = vor.u32 %v758, %v759
      %v762 = vsel %vm614, %v754, %v761
      %v763 = vrot.slane %v758, 4
      %v765 = vshrl.u32 %v688, 16
      %v767 = vrot.slane %v765, 7
      %v768 = vshll.u32 %v688, 16
      %v770 = vor.u32 %v767, %v768
      %v771 = vrot.slane %v767, 4
      %v773 = vshrl.u32 %v689, 16
      %v775 = vrot.slane %v773, 7
      %v776 = vshll.u32 %v689, 16
      %v778 = vor.u32 %v775, %v776
      %v779 = vsel %vm614, %v771, %v778
      %v780 = vrot.slane %v775, 4
      %v782 = vshrl.u32 %v690, 16
      %v784 = vrot.slane %v782, 7
      %v785 = vshll.u32 %v690, 16
      %v787 = vor.u32 %v784, %v785
      %v788 = vrot.slane %v784, 4
      %v790 = vshrl.u32 %v691, 16
      %v792 = vrot.slane %v790, 7
      %v793 = vshll.u32 %v691, 16
      %v795 = vor.u32 %v792, %v793
      %v796 = vsel %vm614, %v788, %v795
      %v797 = vrot.slane %v792, 4
      %v799 = vshrl.u32 %v692, 16
      %v801 = vrot.slane %v799, 7
      %v802 = vshll.u32 %v692, 16
      %v804 = vor.u32 %v801, %v802
      %v805 = vrot.slane %v801, 4
      %v807 = vshrl.u32 %v693, 16
      %v809 = vrot.slane %v807, 7
      %v810 = vshll.u32 %v693, 16
      %v812 = vor.u32 %v809, %v810
      %v813 = vsel %vm614, %v805, %v812
      %v814 = vrot.slane %v809, 4
      %v816 = vshrl.u32 %v694, 16
      %v818 = vrot.slane %v816, 7
      %v819 = vshll.u32 %v694, 16
      %v821 = vor.u32 %v818, %v819
      %v822 = vrot.slane %v818, 4
      %v824 = vshrl.u32 %v695, 16
      %v826 = vrot.slane %v824, 7
      %v827 = vshll.u32 %v695, 16
      %v829 = vor.u32 %v826, %v827
      %v830 = vsel %vm614, %v822, %v829
      %v831 = vrot.slane %v826, 4
      %s856 = scalar_lea.vmem [#allocation2], 12
      %v857 = vld [vmem:[%s856] sm:$0xf]
      %v858 = vsel %vm637, %v702, %v857
      %859 = vst [vmem:[%s856] sm:$0xf] %v858
      %860 = vst.msk [vmem:[%s856 + $0x4] sm:$0xf] %vm641, %v711
      %v861 = vld [vmem:[%s856 + $0x8] sm:$0x1]
      %v862 = vsel %vm644, %v712, %v861
      %863 = vst [vmem:[%s856 + $0x8] sm:$0x1] %v862
      %v864 = vld [vmem:[%s856 + $0xc] sm:$0xf]
      %v865 = vsel %vm637, %v719, %v864
      %866 = vst [vmem:[%s856 + $0xc] sm:$0xf] %v865
      %867 = vst.msk [vmem:[%s856 + $0x10] sm:$0xf] %vm641, %v728
      %v868 = vld [vmem:[%s856 + $0x14] sm:$0x1]
      %v869 = vsel %vm644, %v729, %v868
      %870 = vst [vmem:[%s856 + $0x14] sm:$0x1] %v869
      %v871 = vld [vmem:[%s856 + $0x18] sm:$0xf]
      %v872 = vsel %vm637, %v736, %v871
      %873 = vst [vmem:[%s856 + $0x18] sm:$0xf] %v872
      %874 = vst.msk [vmem:[%s856 + $0x1c] sm:$0xf] %vm641, %v745
      %v875 = vld [vmem:[%s856 + $0x20] sm:$0x1]
      %v876 = vsel %vm644, %v746, %v875
      %877 = vst [vmem:[%s856 + $0x20] sm:$0x1] %v876
      %v878 = vld [vmem:[%s856 + $0x24] sm:$0xf]
      %v879 = vsel %vm637, %v753, %v878
      %880 = vst [vmem:[%s856 + $0x24] sm:$0xf] %v879
      %881 = vst.msk [vmem:[%s856 + $0x28] sm:$0xf] %vm641, %v762
      %v882 = vld [vmem:[%s856 + $0x2c] sm:$0x1]
      %v883 = vsel %vm644, %v763, %v882
      %884 = vst [vmem:[%s856 + $0x2c] sm:$0x1] %v883
      %v885 = vld [vmem:[%s856 + $0x30] sm:$0xf]
      %v886 = vsel %vm637, %v770, %v885
      %887 = vst [vmem:[%s856 + $0x30] sm:$0xf] %v886
      %888 = vst.msk [vmem:[%s856 + $0x34] sm:$0xf] %vm641, %v779
      %v889 = vld [vmem:[%s856 + $0x38] sm:$0x1]
      %v890 = vsel %vm644, %v780, %v889
      %891 = vst [vmem:[%s856 + $0x38] sm:$0x1] %v890
      %v892 = vld [vmem:[%s856 + $0x3c] sm:$0xf]
      %v893 = vsel %vm637, %v787, %v892
      %894 = vst [vmem:[%s856 + $0x3c] sm:$0xf] %v893
      %895 = vst.msk [vmem:[%s856 + $0x40] sm:$0xf] %vm641, %v796
      %v896 = vld [vmem:[%s856 + $0x44] sm:$0x1]
      %v897 = vsel %vm644, %v797, %v896
      %898 = vst [vmem:[%s856 + $0x44] sm:$0x1] %v897
      %v899 = vld [vmem:[%s856 + $0x48] sm:$0xf]
      %v900 = vsel %vm637, %v804, %v899
      %901 = vst [vmem:[%s856 + $0x48] sm:$0xf] %v900
      %902 = vst.msk [vmem:[%s856 + $0x4c] sm:$0xf] %vm641, %v813
      %v903 = vld [vmem:[%s856 + $0x50] sm:$0x1]
      %v904 = vsel %vm644, %v814, %v903
      %905 = vst [vmem:[%s856 + $0x50] sm:$0x1] %v904
      %v906 = vld [vmem:[%s856 + $0x54] sm:$0xf]
      %v907 = vsel %vm637, %v821, %v906
      %908 = vst [vmem:[%s856 + $0x54] sm:$0xf] %v907
      %909 = vst.msk [vmem:[%s856 + $0x58] sm:$0xf] %vm641, %v830
      %v910 = vld [vmem:[%s856 + $0x5c] sm:$0x1]
      %v911 = vsel %vm644, %v831, %v910
      %912 = vst [vmem:[%s856 + $0x5c] sm:$0x1] %v911
      %v913 = vpack.c.bf16 %v605, %v604
      %v915 = vunpack.c.l.b16 %v913
      %v916 = vunpack.c.h.b16 %v913
      %v917 = vpack.c.b16 %v915, %v915
      %v918 = vpack.c.b16 %v916, %v916
      %v920 = vshrl.u32 %v917, 16
      %v922 = vrot.slane %v920, 7
      %v923 = vshll.u32 %v917, 16
      %v925 = vor.u32 %v922, %v923
      %v926 = vrot.slane %v922, 4
      %v928 = vshrl.u32 %v918, 16
      %v930 = vrot.slane %v928, 7
      %v931 = vshll.u32 %v918, 16
      %v933 = vor.u32 %v930, %v931
      %v934 = vsel %vm614, %v926, %v933
      %v935 = vrot.slane %v930, 4
      %s939 = scalar_lea.vmem [#allocation2], 108
      %v940 = vld [vmem:[%s939] sm:$0xf]
      %v941 = vsel %vm637, %v925, %v940
      %942 = vst [vmem:[%s939] sm:$0xf] %v941
      %943 = vst.msk [vmem:[%s939 + $0x4] sm:$0xf] %vm641, %v934
      %v944 = vld [vmem:[%s939 + $0x8] sm:$0x1]
      %v945 = vsel %vm644, %v935, %v944
      %946 = vst [vmem:[%s939 + $0x8] sm:$0x1] %v945
      %v947 = vld [vmem:[#allocation2] sm:$0xf]
      %v948 = vld [vmem:[#allocation2 + $0x4] sm:$0xf]
      %v949 = vld [vmem:[#allocation2 + $0xc] sm:$0xf]
      %v950 = vld [vmem:[#allocation2 + $0x10] sm:$0xf]
      %v951 = vld [vmem:[#allocation2 + $0x18] sm:$0xf]
      %v952 = vld [vmem:[#allocation2 + $0x1c] sm:$0xf]
      %v953 = vld [vmem:[#allocation2 + $0x24] sm:$0xf]
      %v954 = vld [vmem:[#allocation2 + $0x28] sm:$0xf]
      %v955 = vld [vmem:[#allocation2 + $0x30] sm:$0xf]
      %v956 = vld [vmem:[#allocation2 + $0x34] sm:$0xf]
      %v957 = vld [vmem:[#allocation2 + $0x3c] sm:$0xf]
      %v958 = vld [vmem:[#allocation2 + $0x40] sm:$0xf]
      %v959 = vld [vmem:[#allocation2 + $0x48] sm:$0xf]
      %v960 = vld [vmem:[#allocation2 + $0x4c] sm:$0xf]
      %v961 = vld [vmem:[#allocation2 + $0x54] sm:$0xf]
      %v962 = vld [vmem:[#allocation2 + $0x58] sm:$0xf]
      %v963 = vld [vmem:[%s5] sm:$0xf]
      %v964 = vld [vmem:[%s5 + $0x4] sm:$0xf]
      %v965 = vld [vmem:[%s5 + $0x8] sm:$0xf]
      %v966 = vld [vmem:[%s5 + $0xc] sm:$0xf]
      %v967 = vld [vmem:[%s5 + $0x10] sm:$0xf]
      %v968 = vld [vmem:[%s5 + $0x14] sm:$0xf]
      %v969 = vld [vmem:[%s5 + $0x18] sm:$0xf]
      %v970 = vld [vmem:[%s5 + $0x1c] sm:$0xf]
      %v971 = vld [vmem:[#allocation2 + $0x8] sm:$0x1]
      %v972 = vld [vmem:[#allocation2 + $0x14] sm:$0x1]
      %v973 = vld [vmem:[#allocation2 + $0x20] sm:$0x1]
      %v974 = vld [vmem:[#allocation2 + $0x2c] sm:$0x1]
      %v975 = vld [vmem:[#allocation2 + $0x38] sm:$0x1]
      %v976 = vld [vmem:[#allocation2 + $0x44] sm:$0x1]
      %v977 = vld [vmem:[#allocation2 + $0x50] sm:$0x1]
      %v978 = vld [vmem:[#allocation2 + $0x5c] sm:$0x1]
      %vm979 = vsmask.f32 3328
      %vm980 = vsmask.f32 7440
      %vm981 = vmor %vm979, %vm980
      %v983 = vshrl.u32 %v947, 16
      %v985 = vrot.slane %v983, 4
      %v986 = vshll.u32 %v947, 16
      %v988 = vrot.slane %v986, 5
      %v989 = vor.u32 %v985, %v988
      %v990 = vrot.slane %v989, 4
      %v992 = vshll.u32 %v948, 16
      %v994 = vrot.slane %v992, 5
      %v995 = vsel %vm981, %v990, %v994
      %v996 = vshrl.u32 %v948, 16
      %v998 = vrot.slane %v996, 4
      %v999 = vor.u32 %v998, %v994
      %v1000 = vrot.slane %v999, 4
      %v1002 = vshll.u32 %v971, 16
      %v1004 = vrot.slane %v1002, 5
      %v1005 = vsel %vm981, %v1000, %v1004
      %v1007 = vshrl.u32 %v949, 16
      %v1009 = vrot.slane %v1007, 4
      %v1010 = vshll.u32 %v949, 16
      %v1012 = vrot.slane %v1010, 5
      %v1013 = vor.u32 %v1009, %v1012
      %v1014 = vrot.slane %v1013, 4
      %v1016 = vshll.u32 %v950, 16
      %v1018 = vrot.slane %v1016, 5
      %v1019 = vsel %vm981, %v1014, %v1018
      %v1020 = vshrl.u32 %v950, 16
      %v1022 = vrot.slane %v1020, 4
      %v1023 = vor.u32 %v1022, %v1018
      %v1024 = vrot.slane %v1023, 4
      %v1026 = vshll.u32 %v972, 16
      %v1028 = vrot.slane %v1026, 5
      %v1029 = vsel %vm981, %v1024, %v1028
      %v1031 = vshrl.u32 %v951, 16
      %v1033 = vrot.slane %v1031, 4
      %v1034 = vshll.u32 %v951, 16
      %v1036 = vrot.slane %v1034, 5
      %v1037 = vor.u32 %v1033, %v1036
      %v1038 = vrot.slane %v1037, 4
      %v1040 = vshll.u32 %v952, 16
      %v1042 = vrot.slane %v1040, 5
      %v1043 = vsel %vm981, %v1038, %v1042
      %v1044 = vshrl.u32 %v952, 16
      %v1046 = vrot.slane %v1044, 4
      %v1047 = vor.u32 %v1046, %v1042
      %v1048 = vrot.slane %v1047, 4
      %v1050 = vshll.u32 %v973, 16
      %v1052 = vrot.slane %v1050, 5
      %v1053 = vsel %vm981, %v1048, %v1052
      %v1055 = vshrl.u32 %v953, 16
      %v1057 = vrot.slane %v1055, 4
      %v1058 = vshll.u32 %v953, 16
      %v1060 = vrot.slane %v1058, 5
      %v1061 = vor.u32 %v1057, %v1060
      %v1062 = vrot.slane %v1061, 4
      %v1064 = vshll.u32 %v954, 16
      %v1066 = vrot.slane %v1064, 5
      %v1067 = vsel %vm981, %v1062, %v1066
      %v1068 = vshrl.u32 %v954, 16
      %v1070 = vrot.slane %v1068, 4
      %v1071 = vor.u32 %v1070, %v1066
      %v1072 = vrot.slane %v1071, 4
      %v1074 = vshll.u32 %v974, 16
      %v1076 = vrot.slane %v1074, 5
      %v1077 = vsel %vm981, %v1072, %v1076
      %v1079 = vshrl.u32 %v955, 16
      %v1081 = vrot.slane %v1079, 4
      %v1082 = vshll.u32 %v955, 16
      %v1084 = vrot.slane %v1082, 5
      %v1085 = vor.u32 %v1081, %v1084
      %v1086 = vrot.slane %v1085, 4
      %v1088 = vshll.u32 %v956, 16
      %v1090 = vrot.slane %v1088, 5
      %v1091 = vsel %vm981, %v1086, %v1090
      %v1092 = vshrl.u32 %v956, 16
      %v1094 = vrot.slane %v1092, 4
      %v1095 = vor.u32 %v1094, %v1090
      %v1096 = vrot.slane %v1095, 4
      %v1098 = vshll.u32 %v975, 16
      %v1100 = vrot.slane %v1098, 5
      %v1101 = vsel %vm981, %v1096, %v1100
      %v1103 = vshrl.u32 %v957, 16
      %v1105 = vrot.slane %v1103, 4
      %v1106 = vshll.u32 %v957, 16
      %v1108 = vrot.slane %v1106, 5
      %v1109 = vor.u32 %v1105, %v1108
      %v1110 = vrot.slane %v1109, 4
      %v1112 = vshll.u32 %v958, 16
      %v1114 = vrot.slane %v1112, 5
      %v1115 = vsel %vm981, %v1110, %v1114
      %v1116 = vshrl.u32 %v958, 16
      %v1118 = vrot.slane %v1116, 4
      %v1119 = vor.u32 %v1118, %v1114
      %v1120 = vrot.slane %v1119, 4
      %v1122 = vshll.u32 %v976, 16
      %v1124 = vrot.slane %v1122, 5
      %v1125 = vsel %vm981, %v1120, %v1124
      %v1127 = vshrl.u32 %v959, 16
      %v1129 = vrot.slane %v1127, 4
      %v1130 = vshll.u32 %v959, 16
      %v1132 = vrot.slane %v1130, 5
      %v1133 = vor.u32 %v1129, %v1132
      %v1134 = vrot.slane %v1133, 4
      %v1136 = vshll.u32 %v960, 16
      %v1138 = vrot.slane %v1136, 5
      %v1139 = vsel %vm981, %v1134, %v1138
      %v1140 = vshrl.u32 %v960, 16
      %v1142 = vrot.slane %v1140, 4
      %v1143 = vor.u32 %v1142, %v1138
      %v1144 = vrot.slane %v1143, 4
      %v1146 = vshll.u32 %v977, 16
      %v1148 = vrot.slane %v1146, 5
      %v1149 = vsel %vm981, %v1144, %v1148
      %v1151 = vshrl.u32 %v961, 16
      %v1153 = vrot.slane %v1151, 4
      %v1154 = vshll.u32 %v961, 16
      %v1156 = vrot.slane %v1154, 5
      %v1157 = vor.u32 %v1153, %v1156
      %v1158 = vrot.slane %v1157, 4
      %v1160 = vshll.u32 %v962, 16
      %v1162 = vrot.slane %v1160, 5
      %v1163 = vsel %vm981, %v1158, %v1162
      %v1164 = vshrl.u32 %v962, 16
      %v1166 = vrot.slane %v1164, 4
      %v1167 = vor.u32 %v1166, %v1162
      %v1168 = vrot.slane %v1167, 4
      %v1170 = vshll.u32 %v978, 16
      %v1172 = vrot.slane %v1170, 5
      %v1173 = vsel %vm981, %v1168, %v1172
      %s1174 = scalar_lea.vmem %s5, 32
      %v1175 = vld [vmem:[%s1174] sm:$0xf]
      %v1176 = vld [vmem:[%s1174 + $0x4] sm:$0xf]
      %v1177 = vld [vmem:[%s1174 + $0x8] sm:$0xf]
      %v1178 = vld [vmem:[%s1174 + $0xc] sm:$0xf]
      %v1179 = vld [vmem:[%s1174 + $0x10] sm:$0xf]
      %v1180 = vld [vmem:[%s1174 + $0x14] sm:$0xf]
      %v1181 = vld [vmem:[%s1174 + $0x18] sm:$0xf]
      %v1182 = vld [vmem:[%s1174 + $0x1c] sm:$0xf]
      %v1183 = vunpack.c.l.b16 %v995
      %v1184 = vunpack.c.l.b16 %v1005
      %v1185 = vunpack.c.l.b16 %v1019
      %v1186 = vunpack.c.l.b16 %v1029
      %v1187 = vunpack.c.l.b16 %v1043
      %v1188 = vunpack.c.l.b16 %v1053
      %v1189 = vunpack.c.l.b16 %v1067
      %v1190 = vunpack.c.l.b16 %v1077
      %v1191 = vunpack.c.l.b16 %v1091
      %v1192 = vunpack.c.l.b16 %v1101
      %v1193 = vunpack.c.l.b16 %v1115
      %v1194 = vunpack.c.l.b16 %v1125
      %v1195 = vunpack.c.l.b16 %v1139
      %v1196 = vunpack.c.l.b16 %v1149
      %v1197 = vunpack.c.l.b16 %v1163
      %v1198 = vunpack.c.l.b16 %v1173
      %v1199 = vpack.c.b16 %v1184, %v1183
      %v1200 = vpack.c.b16 %v1186, %v1185
      %v1201 = vpack.c.b16 %v1188, %v1187
      %v1202 = vpack.c.b16 %v1190, %v1189
      %v1203 = vpack.c.b16 %v1192, %v1191
      %v1204 = vpack.c.b16 %v1194, %v1193
      %v1205 = vpack.c.b16 %v1196, %v1195
      %v1206 = vpack.c.b16 %v1198, %v1197
      %v1215 = vunpack.c.l.b16 %v1175
      %v1216 = vunpack.c.l.b16 %v1176
      %v1217 = vunpack.c.l.b16 %v1177
      %v1218 = vunpack.c.l.b16 %v1178
      %v1219 = vunpack.c.l.b16 %v1179
      %v1220 = vunpack.c.l.b16 %v1180
      %v1221 = vunpack.c.l.b16 %v1181
      %v1222 = vunpack.c.l.b16 %v1182
      %v1223 = vpack.c.b16 %v1216, %v1215
      %v1224 = vpack.c.b16 %v1218, %v1217
      %v1225 = vpack.c.b16 %v1220, %v1219
      %v1226 = vpack.c.b16 %v1222, %v1221
      %vm1231 = vcmask 523264
      %v1233 = vsel %vm1231, %v1199, 0
      %v1236 = vsel %vm1231, %v1200, 0
      %v1239 = vsel %vm1231, %v1201, 0
      %v1242 = vsel %vm1231, %v1202, 0
      %v1245 = vsel %vm1231, %v1203, 0
      %v1248 = vsel %vm1231, %v1204, 0
      %v1251 = vsel %vm1231, %v1205, 0
      %v1254 = vsel %vm1231, %v1206, 0
      %1256 = vmatprep.subr.bf16.mxu0 0
      %1257 = vmatpush1.bf16.msra.mxu0 %v1223
      %1258 = vmatprep.subr.bf16.mxu0 0
      %1259 = vmatpush1.bf16.msra.mxu0 %v1224
      %1260 = vmatprep.subr.bf16.mxu0 0
      %1261 = vmatpush1.bf16.msra.mxu0 %v1225
      %1262 = vmatprep.subr.bf16.mxu0 0
      %1263 = vmatpush1.bf16.msra.mxu0 %v1226
      %1264 = vmatprep.subr.bf16.mxu0 0
      %1265 = vmatpush1.bf16.msra.mxu0 0
      %1266 = vmatprep.subr.bf16.mxu0 0
      %1267 = vmatpush1.bf16.msra.mxu0 0
      %1268 = vmatprep.subr.bf16.mxu0 0
      %1269 = vmatpush1.bf16.msra.mxu0 0
      %1270 = vmatprep.subr.bf16.mxu0 0
      %1271 = vmatpush1.bf16.msra.mxu0 0
      %1272 = vmatprep.subr.bf16.mxu0 0
      %1273 = vmatpush1.bf16.msra.mxu0 0
      %1274 = vmatprep.subr.bf16.mxu0 0
      %1275 = vmatpush1.bf16.msra.mxu0 0
      %1276 = vmatprep.subr.bf16.mxu0 0
      %1277 = vmatpush1.bf16.msra.mxu0 0
      %1278 = vmatprep.subr.bf16.mxu0 0
      %1279 = vmatpush1.bf16.msra.mxu0 0
      %1280 = vmatprep.subr.bf16.mxu0 0
      %1281 = vmatpush1.bf16.msra.mxu0 0
      %1282 = vmatprep.subr.bf16.mxu0 0
      %1283 = vmatpush1.bf16.msra.mxu0 0
      %1284 = vmatprep.subr.bf16.mxu0 0
      %1285 = vmatpush1.bf16.msra.mxu0 0
      %1286 = vmatprep.subr.bf16.mxu0 0
      %1287 = vmatpush1.bf16.msra.mxu0 0
      %1288 = vmatprep.mubr.bf16.mxu0 0
      %1289 = vmatmul.mubr.bf16.gmra.mrb[0].mxu0 %v1233
      %v1290 = vpop.f32.mrb[0].mxu0
      %v1291 = vadd.f32 0.0, %v1290
      %v1292 = vpop.f32.mrb[0].mxu0
      %v1293 = vpop.f32.mrb[0].mxu0
      %v1294 = vadd.f32 0.0, %v1293
      %v1295 = vpop.f32.mrb[0].mxu0
      %1296 = vmatprep.mubr.bf16.mxu0 0
      %1297 = vmatmul.mubr.bf16.gmra.mrb[0].mxu0 %v1236
      %v1298 = vpop.f32.mrb[0].mxu0
      %v1299 = vadd.f32 0.0, %v1298
      %v1300 = vpop.f32.mrb[0].mxu0
      %v1301 = vpop.f32.mrb[0].mxu0
      %v1302 = vadd.f32 0.0, %v1301
      %v1303 = vpop.f32.mrb[0].mxu0
      %1304 = vmatprep.mubr.bf16.mxu0 0
      %1305 = vmatmul.mubr.bf16.gmra.mrb[0].mxu0 %v1239
      %v1306 = vpop.f32.mrb[0].mxu0
      %v1307 = vadd.f32 0.0, %v1306
      %v1308 = vpop.f32.mrb[0].mxu0
      %v1309 = vpop.f32.mrb[0].mxu0
      %v1310 = vadd.f32 0.0, %v1309
      %v1311 = vpop.f32.mrb[0].mxu0
      %1312 = vmatprep.mubr.bf16.mxu0 0
      %1313 = vmatmul.mubr.bf16.gmra.mrb[0].mxu0 %v1242
      %v1314 = vpop.f32.mrb[0].mxu0
      %v1315 = vadd.f32 0.0, %v1314
      %v1316 = vpop.f32.mrb[0].mxu0
      %v1317 = vpop.f32.mrb[0].mxu0
      %v1318 = vadd.f32 0.0, %v1317
      %v1319 = vpop.f32.mrb[0].mxu0
      %1320 = vmatprep.mubr.bf16.mxu0 0
      %1321 = vmatmul.mubr.bf16.gmra.mrb[0].mxu0 %v1245
      %v1322 = vpop.f32.mrb[0].mxu0
      %v1323 = vadd.f32 0.0, %v1322
      %v1324 = vpop.f32.mrb[0].mxu0
      %v1325 = vpop.f32.mrb[0].mxu0
      %v1326 = vadd.f32 0.0, %v1325
      %v1327 = vpop.f32.mrb[0].mxu0
      %1328 = vmatprep.mubr.bf16.mxu0 0
      %1329 = vmatmul.mubr.bf16.gmra.mrb[0].mxu0 %v1248
      %v1330 = vpop.f32.mrb[0].mxu0
      %v1331 = vadd.f32 0.0, %v1330
      %v1332 = vpop.f32.mrb[0].mxu0
      %v1333 = vpop.f32.mrb[0].mxu0
      %v1334 = vadd.f32 0.0, %v1333
      %v1335 = vpop.f32.mrb[0].mxu0
      %1336 = vmatprep.mubr.bf16.mxu0 0
      %1337 = vmatmul.mubr.bf16.gmra.mrb[0].mxu0 %v1251
      %v1338 = vpop.f32.mrb[0].mxu0
      %v1339 = vadd.f32 0.0, %v1338
      %v1340 = vpop.f32.mrb[0].mxu0
      %v1341 = vpop.f32.mrb[0].mxu0
      %v1342 = vadd.f32 0.0, %v1341
      %v1343 = vpop.f32.mrb[0].mxu0
      %1344 = vmatprep.mubr.bf16.mxu0 0
      %1345 = vmatmul.mubr.bf16.gmra.mrb[0].mxu0 %v1254
      %v1346 = vpop.f32.mrb[0].mxu0
      %v1347 = vadd.f32 0.0, %v1346
      %v1348 = vpop.f32.mrb[0].mxu0
      %v1349 = vpop.f32.mrb[0].mxu0
      %v1350 = vadd.f32 0.0, %v1349
      %v1351 = vpop.f32.mrb[0].mxu0
      %1352 = vdwg.mxu0
      %v1369 = vunpack.c.l.b16 %v947
      %v1370 = vunpack.c.l.b16 %v948
      %v1371 = vunpack.c.l.b16 %v949
      %v1372 = vunpack.c.l.b16 %v950
      %v1373 = vunpack.c.l.b16 %v951
      %v1374 = vunpack.c.l.b16 %v952
      %v1375 = vunpack.c.l.b16 %v953
      %v1376 = vunpack.c.l.b16 %v954
      %v1377 = vunpack.c.l.b16 %v955
      %v1378 = vunpack.c.l.b16 %v956
      %v1379 = vunpack.c.l.b16 %v957
      %v1380 = vunpack.c.l.b16 %v958
      %v1381 = vunpack.c.l.b16 %v959
      %v1382 = vunpack.c.l.b16 %v960
      %v1383 = vunpack.c.l.b16 %v961
      %v1384 = vunpack.c.l.b16 %v962
      %v1385 = vpack.c.b16 %v1370, %v1369
      %v1386 = vpack.c.b16 %v1372, %v1371
      %v1387 = vpack.c.b16 %v1374, %v1373
      %v1388 = vpack.c.b16 %v1376, %v1375
      %v1389 = vpack.c.b16 %v1378, %v1377
      %v1390 = vpack.c.b16 %v1380, %v1379
      %v1391 = vpack.c.b16 %v1382, %v1381
      %v1392 = vpack.c.b16 %v1384, %v1383
      %v1401 = vunpack.c.l.b16 %v963
      %v1402 = vunpack.c.l.b16 %v964
      %v1403 = vunpack.c.l.b16 %v965
      %v1404 = vunpack.c.l.b16 %v966
      %v1405 = vunpack.c.l.b16 %v967
      %v1406 = vunpack.c.l.b16 %v968
      %v1407 = vunpack.c.l.b16 %v969
      %v1408 = vunpack.c.l.b16 %v970
      %v1409 = vpack.c.b16 %v1402, %v1401
      %v1410 = vpack.c.b16 %v1404, %v1403
      %v1411 = vpack.c.b16 %v1406, %v1405
      %v1412 = vpack.c.b16 %v1408, %v1407
      %v1418 = vsel %vm1231, %v1385, 0
      %v1421 = vsel %vm1231, %v1386, 0
      %v1424 = vsel %vm1231, %v1387, 0
      %v1427 = vsel %vm1231, %v1388, 0
      %v1430 = vsel %vm1231, %v1389, 0
      %v1433 = vsel %vm1231, %v1390, 0
      %v1436 = vsel %vm1231, %v1391, 0
      %v1439 = vsel %vm1231, %v1392, 0
      %1441 = vmatprep.subr.bf16.mxu0 0
      %1442 = vmatpush1.bf16.msra.mxu0 %v1409
      %1443 = vmatprep.subr.bf16.mxu0 0
      %1444 = vmatpush1.bf16.msra.mxu0 %v1410
      %1445 = vmatprep.subr.bf16.mxu0 0
      %1446 = vmatpush1.bf16.msra.mxu0 %v1411
      %1447 = vmatprep.subr.bf16.mxu0 0
      %1448 = vmatpush1.bf16.msra.mxu0 %v1412
      %1449 = vmatprep.subr.bf16.mxu0 0
      %1450 = vmatpush1.bf16.msra.mxu0 0
      %1451 = vmatprep.subr.bf16.mxu0 0
      %1452 = vmatpush1.bf16.msra.mxu0 0
      %1453 = vmatprep.subr.bf16.mxu0 0
      %1454 = vmatpush1.bf16.msra.mxu0 0
      %1455 = vmatprep.subr.bf16.mxu0 0
      %1456 = vmatpush1.bf16.msra.mxu0 0
      %1457 = vmatprep.subr.bf16.mxu0 0
      %1458 = vmatpush1.bf16.msra.mxu0 0
      %1459 = vmatprep.subr.bf16.mxu0 0
      %1460 = vmatpush1.bf16.msra.mxu0 0
      %1461 = vmatprep.subr.bf16.mxu0 0
      %1462 = vmatpush1.bf16.msra.mxu0 0
      %1463 = vmatprep.subr.bf16.mxu0 0
      %1464 = vmatpush1.bf16.msra.mxu0 0
      %1465 = vmatprep.subr.bf16.mxu0 0
      %1466 = vmatpush1.bf16.msra.mxu0 0
      %1467 = vmatprep.subr.bf16.mxu0 0
      %1468 = vmatpush1.bf16.msra.mxu0 0
      %1469 = vmatprep.subr.bf16.mxu0 0
      %1470 = vmatpush1.bf16.msra.mxu0 0
      %1471 = vmatprep.subr.bf16.mxu0 0
      %1472 = vmatpush1.bf16.msra.mxu0 0
      %1473 = vmatprep.mubr.bf16.mxu0 0
      %1474 = vmatmul.mubr.bf16.gmra.mrb[0].mxu0 %v1418
      %v1475 = vpop.f32.mrb[0].mxu0
      %v1476 = vadd.f32 %v1291, %v1475
      %v1477 = vpop.f32.mrb[0].mxu0
      %v1478 = vpop.f32.mrb[0].mxu0
      %v1479 = vadd.f32 %v1294, %v1478
      %v1480 = vpop.f32.mrb[0].mxu0
      %1481 = vmatprep.mubr.bf16.mxu0 0
      %1482 = vmatmul.mubr.bf16.gmra.mrb[0].mxu0 %v1421
      %v1483 = vpop.f32.mrb[0].mxu0
      %v1484 = vadd.f32 %v1299, %v1483
      %v1485 = vpop.f32.mrb[0].mxu0
      %v1486 = vpop.f32.mrb[0].mxu0
      %v1487 = vadd.f32 %v1302, %v1486
      %v1488 = vpop.f32.mrb[0].mxu0
      %1489 = vmatprep.mubr.bf16.mxu0 0
      %1490 = vmatmul.mubr.bf16.gmra.mrb[0].mxu0 %v1424
      %v1491 = vpop.f32.mrb[0].mxu0
      %v1492 = vadd.f32 %v1307, %v1491
      %v1493 = vpop.f32.mrb[0].mxu0
      %v1494 = vpop.f32.mrb[0].mxu0
      %v1495 = vadd.f32 %v1310, %v1494
      %v1496 = vpop.f32.mrb[0].mxu0
      %1497 = vmatprep.mubr.bf16.mxu0 0
      %1498 = vmatmul.mubr.bf16.gmra.mrb[0].mxu0 %v1427
      %v1499 = vpop.f32.mrb[0].mxu0
      %v1500 = vadd.f32 %v1315, %v1499
      %v1501 = vpop.f32.mrb[0].mxu0
      %v1502 = vpop.f32.mrb[0].mxu0
      %v1503 = vadd.f32 %v1318, %v1502
      %v1504 = vpop.f32.mrb[0].mxu0
      %1505 = vmatprep.mubr.bf16.mxu0 0
      %1506 = vmatmul.mubr.bf16.gmra.mrb[0].mxu0 %v1430
      %v1507 = vpop.f32.mrb[0].mxu0
      %v1508 = vadd.f32 %v1323, %v1507
      %v1509 = vpop.f32.mrb[0].mxu0
      %v1510 = vpop.f32.mrb[0].mxu0
      %v1511 = vadd.f32 %v1326, %v1510
      %v1512 = vpop.f32.mrb[0].mxu0
      %1513 = vmatprep.mubr.bf16.mxu0 0
      %1514 = vmatmul.mubr.bf16.gmra.mrb[0].mxu0 %v1433
      %v1515 = vpop.f32.mrb[0].mxu0
      %v1516 = vadd.f32 %v1331, %v1515
      %v1517 = vpop.f32.mrb[0].mxu0
      %v1518 = vpop.f32.mrb[0].mxu0
      %v1519 = vadd.f32 %v1334, %v1518
      %v1520 = vpop.f32.mrb[0].mxu0
      %1521 = vmatprep.mubr.bf16.mxu0 0
      %1522 = vmatmul.mubr.bf16.gmra.mrb[0].mxu0 %v1436
      %v1523 = vpop.f32.mrb[0].mxu0
      %v1524 = vadd.f32 %v1339, %v1523
      %v1525 = vpop.f32.mrb[0].mxu0
      %v1526 = vpop.f32.mrb[0].mxu0
      %v1527 = vadd.f32 %v1342, %v1526
      %v1528 = vpop.f32.mrb[0].mxu0
      %1529 = vmatprep.mubr.bf16.mxu0 0
      %1530 = vmatmul.mubr.bf16.gmra.mrb[0].mxu0 %v1439
      %v1531 = vpop.f32.mrb[0].mxu0
      %v1532 = vadd.f32 %v1347, %v1531
      %v1533 = vpop.f32.mrb[0].mxu0
      %v1534 = vpop.f32.mrb[0].mxu0
      %v1535 = vadd.f32 %v1350, %v1534
      %v1536 = vpop.f32.mrb[0].mxu0
      %1537 = vdwg.mxu0
      %v1538 = vld [vmem:[#allocation2] sm:$0xe]
      %v1539 = vld [vmem:[#allocation2 + $0xc] sm:$0xe]
      %v1540 = vld [vmem:[#allocation2 + $0x18] sm:$0xe]
      %v1541 = vld [vmem:[#allocation2 + $0x24] sm:$0xe]
      %v1542 = vld [vmem:[#allocation2 + $0x30] sm:$0xe]
      %v1543 = vld [vmem:[#allocation2 + $0x3c] sm:$0xe]
      %v1544 = vld [vmem:[#allocation2 + $0x48] sm:$0xe]
      %v1545 = vld [vmem:[#allocation2 + $0x54] sm:$0xe]
      %vm1562 = vcmask 1042432
      %vm1563 = vcmask 1046532
      %vm1564 = vmor %vm1562, %vm1563
      %v1565 = vrot.slane %v1538, 5
      %v1566 = vrot.slane %v1565, 4
      %v1567 = vrot.slane %v948, 5
      %v1568 = vsel %vm1564, %v1566, %v1567
      %v1569 = vrot.slane %v1567, 4
      %v1570 = vrot.slane %v971, 5
      %v1571 = vsel %vm1564, %v1569, %v1570
      %v1572 = vrot.slane %v1539, 5
      %v1573 = vrot.slane %v1572, 4
      %v1574 = vrot.slane %v950, 5
      %v1575 = vsel %vm1564, %v1573, %v1574
      %v1576 = vrot.slane %v1574, 4
      %v1577 = vrot.slane %v972, 5
      %v1578 = vsel %vm1564, %v1576, %v1577
      %v1579 = vrot.slane %v1540, 5
      %v1580 = vrot.slane %v1579, 4
      %v1581 = vrot.slane %v952, 5
      %v1582 = vsel %vm1564, %v1580, %v1581
      %v1583 = vrot.slane %v1581, 4
      %v1584 = vrot.slane %v973, 5
      %v1585 = vsel %vm1564, %v1583, %v1584
      %v1586 = vrot.slane %v1541, 5
      %v1587 = vrot.slane %v1586, 4
      %v1588 = vrot.slane %v954, 5
      %v1589 = vsel %vm1564, %v1587, %v1588
      %v1590 = vrot.slane %v1588, 4
      %v1591 = vrot.slane %v974, 5
      %v1592 = vsel %vm1564, %v1590, %v1591
      %v1593 = vrot.slane %v1542, 5
      %v1594 = vrot.slane %v1593, 4
      %v1595 = vrot.slane %v956, 5
      %v1596 = vsel %vm1564, %v1594, %v1595
      %v1597 = vrot.slane %v1595, 4
      %v1598 = vrot.slane %v975, 5
      %v1599 = vsel %vm1564, %v1597, %v1598
      %v1600 = vrot.slane %v1543, 5
      %v1601 = vrot.slane %v1600, 4
      %v1602 = vrot.slane %v958, 5
      %v1603 = vsel %vm1564, %v1601, %v1602
      %v1604 = vrot.slane %v1602, 4
      %v1605 = vrot.slane %v976, 5
      %v1606 = vsel %vm1564, %v1604, %v1605
      %v1607 = vrot.slane %v1544, 5
      %v1608 = vrot.slane %v1607, 4
      %v1609 = vrot.slane %v960, 5
      %v1610 = vsel %vm1564, %v1608, %v1609
      %v1611 = vrot.slane %v1609, 4
      %v1612 = vrot.slane %v977, 5
      %v1613 = vsel %vm1564, %v1611, %v1612
      %v1614 = vrot.slane %v1545, 5
      %v1615 = vrot.slane %v1614, 4
      %v1616 = vrot.slane %v962, 5
      %v1617 = vsel %vm1564, %v1615, %v1616
      %v1618 = vrot.slane %v1616, 4
      %v1619 = vrot.slane %v978, 5
      %v1620 = vsel %vm1564, %v1618, %v1619
      %s1621 = scalar_lea.vmem %s5, 64
      %v1622 = vld [vmem:[%s1621] sm:$0xf]
      %v1623 = vld [vmem:[%s1621 + $0x4] sm:$0xf]
      %v1624 = vld [vmem:[%s1621 + $0x8] sm:$0xf]
      %v1625 = vld [vmem:[%s1621 + $0xc] sm:$0xf]
      %v1626 = vld [vmem:[%s1621 + $0x10] sm:$0xf]
      %v1627 = vld [vmem:[%s1621 + $0x14] sm:$0xf]
      %v1628 = vld [vmem:[%s1621 + $0x18] sm:$0xf]
      %v1629 = vld [vmem:[%s1621 + $0x1c] sm:$0xf]
      %v1630 = vunpack.c.l.b16 %v1568
      %v1631 = vunpack.c.l.b16 %v1571
      %v1632 = vunpack.c.l.b16 %v1575
      %v1633 = vunpack.c.l.b16 %v1578
      %v1634 = vunpack.c.l.b16 %v1582
      %v1635 = vunpack.c.l.b16 %v1585
      %v1636 = vunpack.c.l.b16 %v1589
      %v1637 = vunpack.c.l.b16 %v1592
      %v1638 = vunpack.c.l.b16 %v1596
      %v1639 = vunpack.c.l.b16 %v1599
      %v1640 = vunpack.c.l.b16 %v1603
      %v1641 = vunpack.c.l.b16 %v1606
      %v1642 = vunpack.c.l.b16 %v1610
      %v1643 = vunpack.c.l.b16 %v1613
      %v1644 = vunpack.c.l.b16 %v1617
      %v1645 = vunpack.c.l.b16 %v1620
      %v1646 = vpack.c.b16 %v1631, %v1630
      %v1647 = vpack.c.b16 %v1633, %v1632
      %v1648 = vpack.c.b16 %v1635, %v1634
      %v1649 = vpack.c.b16 %v1637, %v1636
      %v1650 = vpack.c.b16 %v1639, %v1638
      %v1651 = vpack.c.b16 %v1641, %v1640
      %v1652 = vpack.c.b16 %v1643, %v1642
      %v1653 = vpack.c.b16 %v1645, %v1644
      %v1662 = vunpack.c.l.b16 %v1622
      %v1663 = vunpack.c.l.b16 %v1623
      %v1664 = vunpack.c.l.b16 %v1624
      %v1665 = vunpack.c.l.b16 %v1625
      %v1666 = vunpack.c.l.b16 %v1626
      %v1667 = vunpack.c.l.b16 %v1627
      %v1668 = vunpack.c.l.b16 %v1628
      %v1669 = vunpack.c.l.b16 %v1629
      %v1670 = vpack.c.b16 %v1663, %v1662
      %v1671 = vpack.c.b16 %v1665, %v1664
      %v1672 = vpack.c.b16 %v1667, %v1666
      %v1673 = vpack.c.b16 %v1669, %v1668
      %v1679 = vsel %vm1231, %v1646, 0
      %v1682 = vsel %vm1231, %v1647, 0
      %v1685 = vsel %vm1231, %v1648, 0
      %v1688 = vsel %vm1231, %v1649, 0
      %v1691 = vsel %vm1231, %v1650, 0
      %v1694 = vsel %vm1231, %v1651, 0
      %v1697 = vsel %vm1231, %v1652, 0
      %v1700 = vsel %vm1231, %v1653, 0
      %1702 = vmatprep.subr.bf16.mxu0 0
      %1703 = vmatpush1.bf16.msra.mxu0 %v1670
      %1704 = vmatprep.subr.bf16.mxu0 0
      %1705 = vmatpush1.bf16.msra.mxu0 %v1671
      %1706 = vmatprep.subr.bf16.mxu0 0
      %1707 = vmatpush1.bf16.msra.mxu0 %v1672
      %1708 = vmatprep.subr.bf16.mxu0 0
      %1709 = vmatpush1.bf16.msra.mxu0 %v1673
      %1710 = vmatprep.subr.bf16.mxu0 0
      %1711 = vmatpush1.bf16.msra.mxu0 0
      %1712 = vmatprep.subr.bf16.mxu0 0
      %1713 = vmatpush1.bf16.msra.mxu0 0
      %1714 = vmatprep.subr.bf16.mxu0 0
      %1715 = vmatpush1.bf16.msra.mxu0 0
      %1716 = vmatprep.subr.bf16.mxu0 0
      %1717 = vmatpush1.bf16.msra.mxu0 0
      %1718 = vmatprep.subr.bf16.mxu0 0
      %1719 = vmatpush1.bf16.msra.mxu0 0
      %1720 = vmatprep.subr.bf16.mxu0 0
      %1721 = vmatpush1.bf16.msra.mxu0 0
      %1722 = vmatprep.subr.bf16.mxu0 0
      %1723 = vmatpush1.bf16.msra.mxu0 0
      %1724 = vmatprep.subr.bf16.mxu0 0
      %1725 = vmatpush1.bf16.msra.mxu0 0
      %1726 = vmatprep.subr.bf16.mxu0 0
      %1727 = vmatpush1.bf16.msra.mxu0 0
      %1728 = vmatprep.subr.bf16.mxu0 0
      %1729 = vmatpush1.bf16.msra.mxu0 0
      %1730 = vmatprep.subr.bf16.mxu0 0
      %1731 = vmatpush1.bf16.msra.mxu0 0
      %1732 = vmatprep.subr.bf16.mxu0 0
      %1733 = vmatpush1.bf16.msra.mxu0 0
      %1734 = vmatprep.mubr.bf16.mxu0 0
      %1735 = vmatmul.mubr.bf16.gmra.mrb[0].mxu0 %v1679
      %v1736 = vpop.f32.mrb[0].mxu0
      %v1737 = vadd.f32 0.0, %v1736
      %v1738 = vpop.f32.mrb[0].mxu0
      %v1739 = vpop.f32.mrb[0].mxu0
      %v1740 = vadd.f32 0.0, %v1739
      %v1741 = vpop.f32.mrb[0].mxu0
      %1742 = vmatprep.mubr.bf16.mxu0 0
      %1743 = vmatmul.mubr.bf16.gmra.mrb[0].mxu0 %v1682
      %v1744 = vpop.f32.mrb[0].mxu0
      %v1745 = vadd.f32 0.0, %v1744
      %v1746 = vpop.f32.mrb[0].mxu0
      %v1747 = vpop.f32.mrb[0].mxu0
      %v1748 = vadd.f32 0.0, %v1747
      %v1749 = vpop.f32.mrb[0].mxu0
      %1750 = vmatprep.mubr.bf16.mxu0 0
      %1751 = vmatmul.mubr.bf16.gmra.mrb[0].mxu0 %v1685
      %v1752 = vpop.f32.mrb[0].mxu0
      %v1753 = vadd.f32 0.0, %v1752
      %v1754 = vpop.f32.mrb[0].mxu0
      %v1755 = vpop.f32.mrb[0].mxu0
      %v1756 = vadd.f32 0.0, %v1755
      %v1757 = vpop.f32.mrb[0].mxu0
      %1758 = vmatprep.mubr.bf16.mxu0 0
      %1759 = vmatmul.mubr.bf16.gmra.mrb[0].mxu0 %v1688
      %v1760 = vpop.f32.mrb[0].mxu0
      %v1761 = vadd.f32 0.0, %v1760
      %v1762 = vpop.f32.mrb[0].mxu0
      %v1763 = vpop.f32.mrb[0].mxu0
      %v1764 = vadd.f32 0.0, %v1763
      %v1765 = vpop.f32.mrb[0].mxu0
      %1766 = vmatprep.mubr.bf16.mxu0 0
      %1767 = vmatmul.mubr.bf16.gmra.mrb[0].mxu0 %v1691
      %v1768 = vpop.f32.mrb[0].mxu0
      %v1769 = vadd.f32 0.0, %v1768
      %v1770 = vpop.f32.mrb[0].mxu0
      %v1771 = vpop.f32.mrb[0].mxu0
      %v1772 = vadd.f32 0.0, %v1771
      %v1773 = vpop.f32.mrb[0].mxu0
      %1774 = vmatprep.mubr.bf16.mxu0 0
      %1775 = vmatmul.mubr.bf16.gmra.mrb[0].mxu0 %v1694
      %v1776 = vpop.f32.mrb[0].mxu0
      %v1777 = vadd.f32 0.0, %v1776
      %v1778 = vpop.f32.mrb[0].mxu0
      %v1779 = vpop.f32.mrb[0].mxu0
      %v1780 = vadd.f32 0.0, %v1779
      %v1781 = vpop.f32.mrb[0].mxu0
      %1782 = vmatprep.mubr.bf16.mxu0 0
      %1783 = vmatmul.mubr.bf16.gmra.mrb[0].mxu0 %v1697
      %v1784 = vpop.f32.mrb[0].mxu0
      %v1785 = vadd.f32 0.0, %v1784
      %v1786 = vpop.f32.mrb[0].mxu0
      %v1787 = vpop.f32.mrb[0].mxu0
      %v1788 = vadd.f32 0.0, %v1787
      %v1789 = vpop.f32.mrb[0].mxu0
      %1790 = vmatprep.mubr.bf16.mxu0 0
      %1791 = vmatmul.mubr.bf16.gmra.mrb[0].mxu0 %v1700
      %v1792 = vpop.f32.mrb[0].mxu0
      %v1793 = vadd.f32 0.0, %v1792
      %v1794 = vpop.f32.mrb[0].mxu0
      %v1795 = vpop.f32.mrb[0].mxu0
      %v1796 = vadd.f32 0.0, %v1795
      %v1797 = vpop.f32.mrb[0].mxu0
      %1798 = vdwg.mxu0
      %v1799 = vadd.f32 %v1476, %v1737
      %v1800 = vadd.f32 %v1479, %v1740
      %v1801 = vadd.f32 %v1484, %v1745
      %v1802 = vadd.f32 %v1487, %v1748
      %v1803 = vadd.f32 %v1492, %v1753
      %v1804 = vadd.f32 %v1495, %v1756
      %v1805 = vadd.f32 %v1500, %v1761
      %v1806 = vadd.f32 %v1503, %v1764
      %v1807 = vadd.f32 %v1508, %v1769
      %v1808 = vadd.f32 %v1511, %v1772
      %v1809 = vadd.f32 %v1516, %v1777
      %v1810 = vadd.f32 %v1519, %v1780
      %v1811 = vadd.f32 %v1524, %v1785
      %v1812 = vadd.f32 %v1527, %v1788
      %v1813 = vadd.f32 %v1532, %v1793
      %v1814 = vadd.f32 %v1535, %v1796
      %v1815 = vld [vmem:[%s856] sm:$0xf]
      %v1816 = vld [vmem:[%s856 + $0x4] sm:$0xf]
      %v1817 = vld [vmem:[%s856 + $0xc] sm:$0xf]
      %v1818 = vld [vmem:[%s856 + $0x10] sm:$0xf]
      %v1819 = vld [vmem:[%s856 + $0x18] sm:$0xf]
      %v1820 = vld [vmem:[%s856 + $0x1c] sm:$0xf]
      %v1821 = vld [vmem:[%s856 + $0x24] sm:$0xf]
      %v1822 = vld [vmem:[%s856 + $0x28] sm:$0xf]
      %v1823 = vld [vmem:[%s856 + $0x30] sm:$0xf]
      %v1824 = vld [vmem:[%s856 + $0x34] sm:$0xf]
      %v1825 = vld [vmem:[%s856 + $0x3c] sm:$0xf]
      %v1826 = vld [vmem:[%s856 + $0x40] sm:$0xf]
      %v1827 = vld [vmem:[%s856 + $0x48] sm:$0xf]
      %v1828 = vld [vmem:[%s856 + $0x4c] sm:$0xf]
      %v1829 = vld [vmem:[%s856 + $0x54] sm:$0xf]
      %v1830 = vld [vmem:[%s856 + $0x58] sm:$0xf]
      %s1831 = scalar_lea.vmem %s5, 96
      %v1832 = vld [vmem:[%s1831] sm:$0xf]
      %v1833 = vld [vmem:[%s1831 + $0x4] sm:$0xf]
      %v1834 = vld [vmem:[%s1831 + $0x8] sm:$0xf]
      %v1835 = vld [vmem:[%s1831 + $0xc] sm:$0xf]
      %v1836 = vld [vmem:[%s1831 + $0x10] sm:$0xf]
      %v1837 = vld [vmem:[%s1831 + $0x14] sm:$0xf]
      %v1838 = vld [vmem:[%s1831 + $0x18] sm:$0xf]
      %v1839 = vld [vmem:[%s1831 + $0x1c] sm:$0xf]
      %v1856 = vunpack.c.l.b16 %v1815
      %v1857 = vunpack.c.l.b16 %v1816
      %v1858 = vunpack.c.l.b16 %v1817
      %v1859 = vunpack.c.l.b16 %v1818
      %v1860 = vunpack.c.l.b16 %v1819
      %v1861 = vunpack.c.l.b16 %v1820
      %v1862 = vunpack.c.l.b16 %v1821
      %v1863 = vunpack.c.l.b16 %v1822
      %v1864 = vunpack.c.l.b16 %v1823
      %v1865 = vunpack.c.l.b16 %v1824
      %v1866 = vunpack.c.l.b16 %v1825
      %v1867 = vunpack.c.l.b16 %v1826
      %v1868 = vunpack.c.l.b16 %v1827
      %v1869 = vunpack.c.l.b16 %v1828
      %v1870 = vunpack.c.l.b16 %v1829
      %v1871 = vunpack.c.l.b16 %v1830
      %v1872 = vpack.c.b16 %v1857, %v1856
      %v1873 = vpack.c.b16 %v1859, %v1858
      %v1874 = vpack.c.b16 %v1861, %v1860
      %v1875 = vpack.c.b16 %v1863, %v1862
      %v1876 = vpack.c.b16 %v1865, %v1864
      %v1877 = vpack.c.b16 %v1867, %v1866
      %v1878 = vpack.c.b16 %v1869, %v1868
      %v1879 = vpack.c.b16 %v1871, %v1870
      %v1888 = vunpack.c.l.b16 %v1832
      %v1889 = vunpack.c.l.b16 %v1833
      %v1890 = vunpack.c.l.b16 %v1834
      %v1891 = vunpack.c.l.b16 %v1835
      %v1892 = vunpack.c.l.b16 %v1836
      %v1893 = vunpack.c.l.b16 %v1837
      %v1894 = vunpack.c.l.b16 %v1838
      %v1895 = vunpack.c.l.b16 %v1839
      %v1896 = vpack.c.b16 %v1889, %v1888
      %v1897 = vpack.c.b16 %v1891, %v1890
      %v1898 = vpack.c.b16 %v1893, %v1892
      %v1899 = vpack.c.b16 %v1895, %v1894
      %v1905 = vsel %vm1231, %v1872, 0
      %v1908 = vsel %vm1231, %v1873, 0
      %v1911 = vsel %vm1231, %v1874, 0
      %v1914 = vsel %vm1231, %v1875, 0
      %v1917 = vsel %vm1231, %v1876, 0
      %v1920 = vsel %vm1231, %v1877, 0
      %v1923 = vsel %vm1231, %v1878, 0
      %v1926 = vsel %vm1231, %v1879, 0
      %1928 = vmatprep.subr.bf16.mxu0 0
      %1929 = vmatpush1.bf16.msra.mxu0 %v1896
      %1930 = vmatprep.subr.bf16.mxu0 0
      %1931 = vmatpush1.bf16.msra.mxu0 %v1897
      %1932 = vmatprep.subr.bf16.mxu0 0
      %1933 = vmatpush1.bf16.msra.mxu0 %v1898
      %1934 = vmatprep.subr.bf16.mxu0 0
      %1935 = vmatpush1.bf16.msra.mxu0 %v1899
      %1936 = vmatprep.subr.bf16.mxu0 0
      %1937 = vmatpush1.bf16.msra.mxu0 0
      %1938 = vmatprep.subr.bf16.mxu0 0
      %1939 = vmatpush1.bf16.msra.mxu0 0
      %1940 = vmatprep.subr.bf16.mxu0 0
      %1941 = vmatpush1.bf16.msra.mxu0 0
      %1942 = vmatprep.subr.bf16.mxu0 0
      %1943 = vmatpush1.bf16.msra.mxu0 0
      %1944 = vmatprep.subr.bf16.mxu0 0
      %1945 = vmatpush1.bf16.msra.mxu0 0
      %1946 = vmatprep.subr.bf16.mxu0 0
      %1947 = vmatpush1.bf16.msra.mxu0 0
      %1948 = vmatprep.subr.bf16.mxu0 0
      %1949 = vmatpush1.bf16.msra.mxu0 0
      %1950 = vmatprep.subr.bf16.mxu0 0
      %1951 = vmatpush1.bf16.msra.mxu0 0
      %1952 = vmatprep.subr.bf16.mxu0 0
      %1953 = vmatpush1.bf16.msra.mxu0 0
      %1954 = vmatprep.subr.bf16.mxu0 0
      %1955 = vmatpush1.bf16.msra.mxu0 0
      %1956 = vmatprep.subr.bf16.mxu0 0
      %1957 = vmatpush1.bf16.msra.mxu0 0
      %1958 = vmatprep.subr.bf16.mxu0 0
      %1959 = vmatpush1.bf16.msra.mxu0 0
      %1960 = vmatprep.mubr.bf16.mxu0 0
      %1961 = vmatmul.mubr.bf16.gmra.mrb[0].mxu0 %v1905
      %v1962 = vpop.f32.mrb[0].mxu0
      %v1963 = vadd.f32 0.0, %v1962
      %v1964 = vpop.f32.mrb[0].mxu0
      %v1965 = vpop.f32.mrb[0].mxu0
      %v1966 = vadd.f32 0.0, %v1965
      %v1967 = vpop.f32.mrb[0].mxu0
      %1968 = vmatprep.mubr.bf16.mxu0 0
      %1969 = vmatmul.mubr.bf16.gmra.mrb[0].mxu0 %v1908
      %v1970 = vpop.f32.mrb[0].mxu0
      %v1971 = vadd.f32 0.0, %v1970
      %v1972 = vpop.f32.mrb[0].mxu0
      %v1973 = vpop.f32.mrb[0].mxu0
      %v1974 = vadd.f32 0.0, %v1973
      %v1975 = vpop.f32.mrb[0].mxu0
      %1976 = vmatprep.mubr.bf16.mxu0 0
      %1977 = vmatmul.mubr.bf16.gmra.mrb[0].mxu0 %v1911
      %v1978 = vpop.f32.mrb[0].mxu0
      %v1979 = vadd.f32 0.0, %v1978
      %v1980 = vpop.f32.mrb[0].mxu0
      %v1981 = vpop.f32.mrb[0].mxu0
      %v1982 = vadd.f32 0.0, %v1981
      %v1983 = vpop.f32.mrb[0].mxu0
      %1984 = vmatprep.mubr.bf16.mxu0 0
      %1985 = vmatmul.mubr.bf16.gmra.mrb[0].mxu0 %v1914
      %v1986 = vpop.f32.mrb[0].mxu0
      %v1987 = vadd.f32 0.0, %v1986
      %v1988 = vpop.f32.mrb[0].mxu0
      %v1989 = vpop.f32.mrb[0].mxu0
      %v1990 = vadd.f32 0.0, %v1989
      %v1991 = vpop.f32.mrb[0].mxu0
      %1992 = vmatprep.mubr.bf16.mxu0 0
      %1993 = vmatmul.mubr.bf16.gmra.mrb[0].mxu0 %v1917
      %v1994 = vpop.f32.mrb[0].mxu0
      %v1995 = vadd.f32 0.0, %v1994
      %v1996 = vpop.f32.mrb[0].mxu0
      %v1997 = vpop.f32.mrb[0].mxu0
      %v1998 = vadd.f32 0.0, %v1997
      %v1999 = vpop.f32.mrb[0].mxu0
      %2000 = vmatprep.mubr.bf16.mxu0 0
      %2001 = vmatmul.mubr.bf16.gmra.mrb[0].mxu0 %v1920
      %v2002 = vpop.f32.mrb[0].mxu0
      %v2003 = vadd.f32 0.0, %v2002
      %v2004 = vpop.f32.mrb[0].mxu0
      %v2005 = vpop.f32.mrb[0].mxu0
      %v2006 = vadd.f32 0.0, %v2005
      %v2007 = vpop.f32.mrb[0].mxu0
      %2008 = vmatprep.mubr.bf16.mxu0 0
      %2009 = vmatmul.mubr.bf16.gmra.mrb[0].mxu0 %v1923
      %v2010 = vpop.f32.mrb[0].mxu0
      %v2011 = vadd.f32 0.0, %v2010
      %v2012 = vpop.f32.mrb[0].mxu0
      %v2013 = vpop.f32.mrb[0].mxu0
      %v2014 = vadd.f32 0.0, %v2013
      %v2015 = vpop.f32.mrb[0].mxu0
      %2016 = vmatprep.mubr.bf16.mxu0 0
      %2017 = vmatmul.mubr.bf16.gmra.mrb[0].mxu0 %v1926
      %v2018 = vpop.f32.mrb[0].mxu0
      %v2019 = vadd.f32 0.0, %v2018
      %v2020 = vpop.f32.mrb[0].mxu0
      %v2021 = vpop.f32.mrb[0].mxu0
      %v2022 = vadd.f32 0.0, %v2021
      %v2023 = vpop.f32.mrb[0].mxu0
      %2024 = vdwg.mxu0
      %v2025 = vadd.f32 %v1799, %v1963
      %v2026 = vadd.f32 %v1800, %v1966
      %v2027 = vadd.f32 %v1801, %v1971
      %v2028 = vadd.f32 %v1802, %v1974
      %v2029 = vadd.f32 %v1803, %v1979
      %v2030 = vadd.f32 %v1804, %v1982
      %v2031 = vadd.f32 %v1805, %v1987
      %v2032 = vadd.f32 %v1806, %v1990
      %v2033 = vadd.f32 %v1807, %v1995
      %v2034 = vadd.f32 %v1808, %v1998
      %v2035 = vadd.f32 %v1809, %v2003
      %v2036 = vadd.f32 %v1810, %v2006
      %v2037 = vadd.f32 %v1811, %v2011
      %v2038 = vadd.f32 %v1812, %v2014
      %v2039 = vadd.f32 %v1813, %v2019
      %v2040 = vadd.f32 %v1814, %v2022
      %v2041 = vld [vmem:[%s856] sm:$0xf]
      %v2042 = vld [vmem:[%s856 + $0x4] sm:$0xf]
      %v2043 = vld [vmem:[%s856 + $0x8] sm:$0x1]
      %v2044 = vld [vmem:[%s856 + $0xc] sm:$0xf]
      %v2045 = vld [vmem:[%s856 + $0x10] sm:$0xf]
      %v2046 = vld [vmem:[%s856 + $0x14] sm:$0x1]
      %v2047 = vld [vmem:[%s856 + $0x18] sm:$0xf]
      %v2048 = vld [vmem:[%s856 + $0x1c] sm:$0xf]
      %v2049 = vld [vmem:[%s856 + $0x20] sm:$0x1]
      %v2050 = vld [vmem:[%s856 + $0x24] sm:$0xf]
      %v2051 = vld [vmem:[%s856 + $0x28] sm:$0xf]
      %v2052 = vld [vmem:[%s856 + $0x2c] sm:$0x1]
      %v2053 = vld [vmem:[%s856 + $0x30] sm:$0xf]
      %v2054 = vld [vmem:[%s856 + $0x34] sm:$0xf]
      %v2055 = vld [vmem:[%s856 + $0x38] sm:$0x1]
      %v2056 = vld [vmem:[%s856 + $0x3c] sm:$0xf]
      %v2057 = vld [vmem:[%s856 + $0x40] sm:$0xf]
      %v2058 = vld [vmem:[%s856 + $0x44] sm:$0x1]
      %v2059 = vld [vmem:[%s856 + $0x48] sm:$0xf]
      %v2060 = vld [vmem:[%s856 + $0x4c] sm:$0xf]
      %v2061 = vld [vmem:[%s856 + $0x50] sm:$0x1]
      %v2062 = vld [vmem:[%s856 + $0x54] sm:$0xf]
      %v2063 = vld [vmem:[%s856 + $0x58] sm:$0xf]
      %v2064 = vld [vmem:[%s856 + $0x5c] sm:$0x1]
      %v2066 = vshrl.u32 %v2041, 16
      %v2068 = vrot.slane %v2066, 4
      %v2069 = vshll.u32 %v2041, 16
      %v2071 = vrot.slane %v2069, 5
      %v2072 = vor.u32 %v2068, %v2071
      %v2073 = vrot.slane %v2072, 4
      %v2075 = vshll.u32 %v2042, 16
      %v2077 = vrot.slane %v2075, 5
      %v2078 = vsel %vm981, %v2073, %v2077
      %v2079 = vshrl.u32 %v2042, 16
      %v2081 = vrot.slane %v2079, 4
      %v2082 = vor.u32 %v2081, %v2077
      %v2083 = vrot.slane %v2082, 4
      %v2085 = vshll.u32 %v2043, 16
      %v2087 = vrot.slane %v2085, 5
      %v2088 = vsel %vm981, %v2083, %v2087
      %v2090 = vshrl.u32 %v2044, 16
      %v2092 = vrot.slane %v2090, 4
      %v2093 = vshll.u32 %v2044, 16
      %v2095 = vrot.slane %v2093, 5
      %v2096 = vor.u32 %v2092, %v2095
      %v2097 = vrot.slane %v2096, 4
      %v2099 = vshll.u32 %v2045, 16
      %v2101 = vrot.slane %v2099, 5
      %v2102 = vsel %vm981, %v2097, %v2101
      %v2103 = vshrl.u32 %v2045, 16
      %v2105 = vrot.slane %v2103, 4
      %v2106 = vor.u32 %v2105, %v2101
      %v2107 = vrot.slane %v2106, 4
      %v2109 = vshll.u32 %v2046, 16
      %v2111 = vrot.slane %v2109, 5
      %v2112 = vsel %vm981, %v2107, %v2111
      %v2114 = vshrl.u32 %v2047, 16
      %v2116 = vrot.slane %v2114, 4
      %v2117 = vshll.u32 %v2047, 16
      %v2119 = vrot.slane %v2117, 5
      %v2120 = vor.u32 %v2116, %v2119
      %v2121 = vrot.slane %v2120, 4
      %v2123 = vshll.u32 %v2048, 16
      %v2125 = vrot.slane %v2123, 5
      %v2126 = vsel %vm981, %v2121, %v2125
      %v2127 = vshrl.u32 %v2048, 16
      %v2129 = vrot.slane %v2127, 4
      %v2130 = vor.u32 %v2129, %v2125
      %v2131 = vrot.slane %v2130, 4
      %v2133 = vshll.u32 %v2049, 16
      %v2135 = vrot.slane %v2133, 5
      %v2136 = vsel %vm981, %v2131, %v2135
      %v2138 = vshrl.u32 %v2050, 16
      %v2140 = vrot.slane %v2138, 4
      %v2141 = vshll.u32 %v2050, 16
      %v2143 = vrot.slane %v2141, 5
      %v2144 = vor.u32 %v2140, %v2143
      %v2145 = vrot.slane %v2144, 4
      %v2147 = vshll.u32 %v2051, 16
      %v2149 = vrot.slane %v2147, 5
      %v2150 = vsel %vm981, %v2145, %v2149
      %v2151 = vshrl.u32 %v2051, 16
      %v2153 = vrot.slane %v2151, 4
      %v2154 = vor.u32 %v2153, %v2149
      %v2155 = vrot.slane %v2154, 4
      %v2157 = vshll.u32 %v2052, 16
      %v2159 = vrot.slane %v2157, 5
      %v2160 = vsel %vm981, %v2155, %v2159
      %v2162 = vshrl.u32 %v2053, 16
      %v2164 = vrot.slane %v2162, 4
      %v2165 = vshll.u32 %v2053, 16
      %v2167 = vrot.slane %v2165, 5
      %v2168 = vor.u32 %v2164, %v2167
      %v2169 = vrot.slane %v2168, 4
      %v2171 = vshll.u32 %v2054, 16
      %v2173 = vrot.slane %v2171, 5
      %v2174 = vsel %vm981, %v2169, %v2173
      %v2175 = vshrl.u32 %v2054, 16
      %v2177 = vrot.slane %v2175, 4
      %v2178 = vor.u32 %v2177, %v2173
      %v2179 = vrot.slane %v2178, 4
      %v2181 = vshll.u32 %v2055, 16
      %v2183 = vrot.slane %v2181, 5
      %v2184 = vsel %vm981, %v2179, %v2183
      %v2186 = vshrl.u32 %v2056, 16
      %v2188 = vrot.slane %v2186, 4
      %v2189 = vshll.u32 %v2056, 16
      %v2191 = vrot.slane %v2189, 5
      %v2192 = vor.u32 %v2188, %v2191
      %v2193 = vrot.slane %v2192, 4
      %v2195 = vshll.u32 %v2057, 16
      %v2197 = vrot.slane %v2195, 5
      %v2198 = vsel %vm981, %v2193, %v2197
      %v2199 = vshrl.u32 %v2057, 16
      %v2201 = vrot.slane %v2199, 4
      %v2202 = vor.u32 %v2201, %v2197
      %v2203 = vrot.slane %v2202, 4
      %v2205 = vshll.u32 %v2058, 16
      %v2207 = vrot.slane %v2205, 5
      %v2208 = vsel %vm981, %v2203, %v2207
      %v2210 = vshrl.u32 %v2059, 16
      %v2212 = vrot.slane %v2210, 4
      %v2213 = vshll.u32 %v2059, 16
      %v2215 = vrot.slane %v2213, 5
      %v2216 = vor.u32 %v2212, %v2215
      %v2217 = vrot.slane %v2216, 4
      %v2219 = vshll.u32 %v2060, 16
      %v2221 = vrot.slane %v2219, 5
      %v2222 = vsel %vm981, %v2217, %v2221
      %v2223 = vshrl.u32 %v2060, 16
      %v2225 = vrot.slane %v2223, 4
      %v2226 = vor.u32 %v2225, %v2221
      %v2227 = vrot.slane %v2226, 4
      %v2229 = vshll.u32 %v2061, 16
      %v2231 = vrot.slane %v2229, 5
      %v2232 = vsel %vm981, %v2227, %v2231
      %v2234 = vshrl.u32 %v2062, 16
      %v2236 = vrot.slane %v2234, 4
      %v2237 = vshll.u32 %v2062, 16
      %v2239 = vrot.slane %v2237, 5
      %v2240 = vor.u32 %v2236, %v2239
      %v2241 = vrot.slane %v2240, 4
      %v2243 = vshll.u32 %v2063, 16
      %v2245 = vrot.slane %v2243, 5
      %v2246 = vsel %vm981, %v2241, %v2245
      %v2247 = vshrl.u32 %v2063, 16
      %v2249 = vrot.slane %v2247, 4
      %v2250 = vor.u32 %v2249, %v2245
      %v2251 = vrot.slane %v2250, 4
      %v2253 = vshll.u32 %v2064, 16
      %v2255 = vrot.slane %v2253, 5
      %v2256 = vsel %vm981, %v2251, %v2255
      %s2257 = scalar_lea.vmem %s5, 128
      %v2258 = vld [vmem:[%s2257] sm:$0xf]
      %v2259 = vld [vmem:[%s2257 + $0x4] sm:$0xf]
      %v2260 = vld [vmem:[%s2257 + $0x8] sm:$0xf]
      %v2261 = vld [vmem:[%s2257 + $0xc] sm:$0xf]
      %v2262 = vld [vmem:[%s2257 + $0x10] sm:$0xf]
      %v2263 = vld [vmem:[%s2257 + $0x14] sm:$0xf]
      %v2264 = vld [vmem:[%s2257 + $0x18] sm:$0xf]
      %v2265 = vld [vmem:[%s2257 + $0x1c] sm:$0xf]
      %v2266 = vunpack.c.l.b16 %v2078
      %v2267 = vunpack.c.l.b16 %v2088
      %v2268 = vunpack.c.l.b16 %v2102
      %v2269 = vunpack.c.l.b16 %v2112
      %v2270 = vunpack.c.l.b16 %v2126
      %v2271 = vunpack.c.l.b16 %v2136
      %v2272 = vunpack.c.l.b16 %v2150
      %v2273 = vunpack.c.l.b16 %v2160
      %v2274 = vunpack.c.l.b16 %v2174
      %v2275 = vunpack.c.l.b16 %v2184
      %v2276 = vunpack.c.l.b16 %v2198
      %v2277 = vunpack.c.l.b16 %v2208
      %v2278 = vunpack.c.l.b16 %v2222
      %v2279 = vunpack.c.l.b16 %v2232
      %v2280 = vunpack.c.l.b16 %v2246
      %v2281 = vunpack.c.l.b16 %v2256
      %v2282 = vpack.c.b16 %v2267, %v2266
      %v2283 = vpack.c.b16 %v2269, %v2268
      %v2284 = vpack.c.b16 %v2271, %v2270
      %v2285 = vpack.c.b16 %v2273, %v2272
      %v2286 = vpack.c.b16 %v2275, %v2274
      %v2287 = vpack.c.b16 %v2277, %v2276
      %v2288 = vpack.c.b16 %v2279, %v2278
      %v2289 = vpack.c.b16 %v2281, %v2280
      %v2298 = vunpack.c.l.b16 %v2258
      %v2299 = vunpack.c.l.b16 %v2259
      %v2300 = vunpack.c.l.b16 %v2260
      %v2301 = vunpack.c.l.b16 %v2261
      %v2302 = vunpack.c.l.b16 %v2262
      %v2303 = vunpack.c.l.b16 %v2263
      %v2304 = vunpack.c.l.b16 %v2264
      %v2305 = vunpack.c.l.b16 %v2265
      %v2306 = vpack.c.b16 %v2299, %v2298
      %v2307 = vpack.c.b16 %v2301, %v2300
      %v2308 = vpack.c.b16 %v2303, %v2302
      %v2309 = vpack.c.b16 %v2305, %v2304
      %v2315 = vsel %vm1231, %v2282, 0
      %v2318 = vsel %vm1231, %v2283, 0
      %v2321 = vsel %vm1231, %v2284, 0
      %v2324 = vsel %vm1231, %v2285, 0
      %v2327 = vsel %vm1231, %v2286, 0
      %v2330 = vsel %vm1231, %v2287, 0
      %v2333 = vsel %vm1231, %v2288, 0
      %v2336 = vsel %vm1231, %v2289, 0
      %2338 = vmatprep.subr.bf16.mxu0 0
      %2339 = vmatpush1.bf16.msra.mxu0 %v2306
      %2340 = vmatprep.subr.bf16.mxu0 0
      %2341 = vmatpush1.bf16.msra.mxu0 %v2307
      %2342 = vmatprep.subr.bf16.mxu0 0
      %2343 = vmatpush1.bf16.msra.mxu0 %v2308
      %2344 = vmatprep.subr.bf16.mxu0 0
      %2345 = vmatpush1.bf16.msra.mxu0 %v2309
      %2346 = vmatprep.subr.bf16.mxu0 0
      %2347 = vmatpush1.bf16.msra.mxu0 0
      %2348 = vmatprep.subr.bf16.mxu0 0
      %2349 = vmatpush1.bf16.msra.mxu0 0
      %2350 = vmatprep.subr.bf16.mxu0 0
      %2351 = vmatpush1.bf16.msra.mxu0 0
      %2352 = vmatprep.subr.bf16.mxu0 0
      %2353 = vmatpush1.bf16.msra.mxu0 0
      %2354 = vmatprep.subr.bf16.mxu0 0
      %2355 = vmatpush1.bf16.msra.mxu0 0
      %2356 = vmatprep.subr.bf16.mxu0 0
      %2357 = vmatpush1.bf16.msra.mxu0 0
      %2358 = vmatprep.subr.bf16.mxu0 0
      %2359 = vmatpush1.bf16.msra.mxu0 0
      %2360 = vmatprep.subr.bf16.mxu0 0
      %2361 = vmatpush1.bf16.msra.mxu0 0
      %2362 = vmatprep.subr.bf16.mxu0 0
      %2363 = vmatpush1.bf16.msra.mxu0 0
      %2364 = vmatprep.subr.bf16.mxu0 0
      %2365 = vmatpush1.bf16.msra.mxu0 0
      %2366 = vmatprep.subr.bf16.mxu0 0
      %2367 = vmatpush1.bf16.msra.mxu0 0
      %2368 = vmatprep.subr.bf16.mxu0 0
      %2369 = vmatpush1.bf16.msra.mxu0 0
      %2370 = vmatprep.mubr.bf16.mxu0 0
      %2371 = vmatmul.mubr.bf16.gmra.mrb[0].mxu0 %v2315
      %v2372 = vpop.f32.mrb[0].mxu0
      %v2373 = vadd.f32 0.0, %v2372
      %v2374 = vpop.f32.mrb[0].mxu0
      %v2375 = vpop.f32.mrb[0].mxu0
      %v2376 = vadd.f32 0.0, %v2375
      %v2377 = vpop.f32.mrb[0].mxu0
      %2378 = vmatprep.mubr.bf16.mxu0 0
      %2379 = vmatmul.mubr.bf16.gmra.mrb[0].mxu0 %v2318
      %v2380 = vpop.f32.mrb[0].mxu0
      %v2381 = vadd.f32 0.0, %v2380
      %v2382 = vpop.f32.mrb[0].mxu0
      %v2383 = vpop.f32.mrb[0].mxu0
      %v2384 = vadd.f32 0.0, %v2383
      %v2385 = vpop.f32.mrb[0].mxu0
      %2386 = vmatprep.mubr.bf16.mxu0 0
      %2387 = vmatmul.mubr.bf16.gmra.mrb[0].mxu0 %v2321
      %v2388 = vpop.f32.mrb[0].mxu0
      %v2389 = vadd.f32 0.0, %v2388
      %v2390 = vpop.f32.mrb[0].mxu0
      %v2391 = vpop.f32.mrb[0].mxu0
      %v2392 = vadd.f32 0.0, %v2391
      %v2393 = vpop.f32.mrb[0].mxu0
      %2394 = vmatprep.mubr.bf16.mxu0 0
      %2395 = vmatmul.mubr.bf16.gmra.mrb[0].mxu0 %v2324
      %v2396 = vpop.f32.mrb[0].mxu0
      %v2397 = vadd.f32 0.0, %v2396
      %v2398 = vpop.f32.mrb[0].mxu0
      %v2399 = vpop.f32.mrb[0].mxu0
      %v2400 = vadd.f32 0.0, %v2399
      %v2401 = vpop.f32.mrb[0].mxu0
      %2402 = vmatprep.mubr.bf16.mxu0 0
      %2403 = vmatmul.mubr.bf16.gmra.mrb[0].mxu0 %v2327
      %v2404 = vpop.f32.mrb[0].mxu0
      %v2405 = vadd.f32 0.0, %v2404
      %v2406 = vpop.f32.mrb[0].mxu0
      %v2407 = vpop.f32.mrb[0].mxu0
      %v2408 = vadd.f32 0.0, %v2407
      %v2409 = vpop.f32.mrb[0].mxu0
      %2410 = vmatprep.mubr.bf16.mxu0 0
      %2411 = vmatmul.mubr.bf16.gmra.mrb[0].mxu0 %v2330
      %v2412 = vpop.f32.mrb[0].mxu0
      %v2413 = vadd.f32 0.0, %v2412
      %v2414 = vpop.f32.mrb[0].mxu0
      %v2415 = vpop.f32.mrb[0].mxu0
      %v2416 = vadd.f32 0.0, %v2415
      %v2417 = vpop.f32.mrb[0].mxu0
      %2418 = vmatprep.mubr.bf16.mxu0 0
      %2419 = vmatmul.mubr.bf16.gmra.mrb[0].mxu0 %v2333
      %v2420 = vpop.f32.mrb[0].mxu0
      %v2421 = vadd.f32 0.0, %v2420
      %v2422 = vpop.f32.mrb[0].mxu0
      %v2423 = vpop.f32.mrb[0].mxu0
      %v2424 = vadd.f32 0.0, %v2423
      %v2425 = vpop.f32.mrb[0].mxu0
      %2426 = vmatprep.mubr.bf16.mxu0 0
      %2427 = vmatmul.mubr.bf16.gmra.mrb[0].mxu0 %v2336
      %v2428 = vpop.f32.mrb[0].mxu0
      %v2429 = vadd.f32 0.0, %v2428
      %v2430 = vpop.f32.mrb[0].mxu0
      %v2431 = vpop.f32.mrb[0].mxu0
      %v2432 = vadd.f32 0.0, %v2431
      %v2433 = vpop.f32.mrb[0].mxu0
      %2434 = vdwg.mxu0
      %v2435 = vadd.f32 %v2025, %v2373
      %v2436 = vadd.f32 %v2026, %v2376
      %v2437 = vadd.f32 %v2027, %v2381
      %v2438 = vadd.f32 %v2028, %v2384
      %v2439 = vadd.f32 %v2029, %v2389
      %v2440 = vadd.f32 %v2030, %v2392
      %v2441 = vadd.f32 %v2031, %v2397
      %v2442 = vadd.f32 %v2032, %v2400
      %v2443 = vadd.f32 %v2033, %v2405
      %v2444 = vadd.f32 %v2034, %v2408
      %v2445 = vadd.f32 %v2035, %v2413
      %v2446 = vadd.f32 %v2036, %v2416
      %v2447 = vadd.f32 %v2037, %v2421
      %v2448 = vadd.f32 %v2038, %v2424
      %v2449 = vadd.f32 %v2039, %v2429
      %v2450 = vadd.f32 %v2040, %v2432
      %v2451 = vld [vmem:[%s856] sm:$0xe]
      %v2452 = vld [vmem:[%s856 + $0xc] sm:$0xe]
      %v2453 = vld [vmem:[%s856 + $0x18] sm:$0xe]
      %v2454 = vld [vmem:[%s856 + $0x24] sm:$0xe]
      %v2455 = vld [vmem:[%s856 + $0x30] sm:$0xe]
      %v2456 = vld [vmem:[%s856 + $0x3c] sm:$0xe]
      %v2457 = vld [vmem:[%s856 + $0x48] sm:$0xe]
      %v2458 = vld [vmem:[%s856 + $0x54] sm:$0xe]
      %v2483 = vrot.slane %v2451, 5
      %v2484 = vrot.slane %v2483, 4
      %v2485 = vrot.slane %v2042, 5
      %v2486 = vsel %vm1564, %v2484, %v2485
      %v2487 = vrot.slane %v2485, 4
      %v2488 = vrot.slane %v2043, 5
      %v2489 = vsel %vm1564, %v2487, %v2488
      %v2490 = vrot.slane %v2452, 5
      %v2491 = vrot.slane %v2490, 4
      %v2492 = vrot.slane %v2045, 5
      %v2493 = vsel %vm1564, %v2491, %v2492
      %v2494 = vrot.slane %v2492, 4
      %v2495 = vrot.slane %v2046, 5
      %v2496 = vsel %vm1564, %v2494, %v2495
      %v2497 = vrot.slane %v2453, 5
      %v2498 = vrot.slane %v2497, 4
      %v2499 = vrot.slane %v2048, 5
      %v2500 = vsel %vm1564, %v2498, %v2499
      %v2501 = vrot.slane %v2499, 4
      %v2502 = vrot.slane %v2049, 5
      %v2503 = vsel %vm1564, %v2501, %v2502
      %v2504 = vrot.slane %v2454, 5
      %v2505 = vrot.slane %v2504, 4
      %v2506 = vrot.slane %v2051, 5
      %v2507 = vsel %vm1564, %v2505, %v2506
      %v2508 = vrot.slane %v2506, 4
      %v2509 = vrot.slane %v2052, 5
      %v2510 = vsel %vm1564, %v2508, %v2509
      %v2511 = vrot.slane %v2455, 5
      %v2512 = vrot.slane %v2511, 4
      %v2513 = vrot.slane %v2054, 5
      %v2514 = vsel %vm1564, %v2512, %v2513
      %v2515 = vrot.slane %v2513, 4
      %v2516 = vrot.slane %v2055, 5
      %v2517 = vsel %vm1564, %v2515, %v2516
      %v2518 = vrot.slane %v2456, 5
      %v2519 = vrot.slane %v2518, 4
      %v2520 = vrot.slane %v2057, 5
      %v2521 = vsel %vm1564, %v2519, %v2520
      %v2522 = vrot.slane %v2520, 4
      %v2523 = vrot.slane %v2058, 5
      %v2524 = vsel %vm1564, %v2522, %v2523
      %v2525 = vrot.slane %v2457, 5
      %v2526 = vrot.slane %v2525, 4
      %v2527 = vrot.slane %v2060, 5
      %v2528 = vsel %vm1564, %v2526, %v2527
      %v2529 = vrot.slane %v2527, 4
      %v2530 = vrot.slane %v2061, 5
      %v2531 = vsel %vm1564, %v2529, %v2530
      %v2532 = vrot.slane %v2458, 5
      %v2533 = vrot.slane %v2532, 4
      %v2534 = vrot.slane %v2063, 5
      %v2535 = vsel %vm1564, %v2533, %v2534
      %v2536 = vrot.slane %v2534, 4
      %v2537 = vrot.slane %v2064, 5
      %v2538 = vsel %vm1564, %v2536, %v2537
      %s2539 = scalar_lea.vmem %s5, 160
      %v2540 = vld [vmem:[%s2539] sm:$0xf]
      %v2541 = vld [vmem:[%s2539 + $0x4] sm:$0xf]
      %v2542 = vld [vmem:[%s2539 + $0x8] sm:$0xf]
      %v2543 = vld [vmem:[%s2539 + $0xc] sm:$0xf]
      %v2544 = vld [vmem:[%s2539 + $0x10] sm:$0xf]
      %v2545 = vld [vmem:[%s2539 + $0x14] sm:$0xf]
      %v2546 = vld [vmem:[%s2539 + $0x18] sm:$0xf]
      %v2547 = vld [vmem:[%s2539 + $0x1c] sm:$0xf]
      %v2548 = vunpack.c.l.b16 %v2486
      %v2549 = vunpack.c.l.b16 %v2489
      %v2550 = vunpack.c.l.b16 %v2493
      %v2551 = vunpack.c.l.b16 %v2496
      %v2552 = vunpack.c.l.b16 %v2500
      %v2553 = vunpack.c.l.b16 %v2503
      %v2554 = vunpack.c.l.b16 %v2507
      %v2555 = vunpack.c.l.b16 %v2510
      %v2556 = vunpack.c.l.b16 %v2514
      %v2557 = vunpack.c.l.b16 %v2517
      %v2558 = vunpack.c.l.b16 %v2521
      %v2559 = vunpack.c.l.b16 %v2524
      %v2560 = vunpack.c.l.b16 %v2528
      %v2561 = vunpack.c.l.b16 %v2531
      %v2562 = vunpack.c.l.b16 %v2535
      %v2563 = vunpack.c.l.b16 %v2538
      %v2564 = vpack.c.b16 %v2549, %v2548
      %v2565 = vpack.c.b16 %v2551, %v2550
      %v2566 = vpack.c.b16 %v2553, %v2552
      %v2567 = vpack.c.b16 %v2555, %v2554
      %v2568 = vpack.c.b16 %v2557, %v2556
      %v2569 = vpack.c.b16 %v2559, %v2558
      %v2570 = vpack.c.b16 %v2561, %v2560
      %v2571 = vpack.c.b16 %v2563, %v2562
      %v2580 = vunpack.c.l.b16 %v2540
      %v2581 = vunpack.c.l.b16 %v2541
      %v2582 = vunpack.c.l.b16 %v2542
      %v2583 = vunpack.c.l.b16 %v2543
      %v2584 = vunpack.c.l.b16 %v2544
      %v2585 = vunpack.c.l.b16 %v2545
      %v2586 = vunpack.c.l.b16 %v2546
      %v2587 = vunpack.c.l.b16 %v2547
      %v2588 = vpack.c.b16 %v2581, %v2580
      %v2589 = vpack.c.b16 %v2583, %v2582
      %v2590 = vpack.c.b16 %v2585, %v2584
      %v2591 = vpack.c.b16 %v2587, %v2586
      %v2597 = vsel %vm1231, %v2564, 0
      %v2600 = vsel %vm1231, %v2565, 0
      %v2603 = vsel %vm1231, %v2566, 0
      %v2606 = vsel %vm1231, %v2567, 0
      %v2609 = vsel %vm1231, %v2568, 0
      %v2612 = vsel %vm1231, %v2569, 0
      %v2615 = vsel %vm1231, %v2570, 0
      %v2618 = vsel %vm1231, %v2571, 0
      %2620 = vmatprep.subr.bf16.mxu0 0
      %2621 = vmatpush1.bf16.msra.mxu0 %v2588
      %2622 = vmatprep.subr.bf16.mxu0 0
      %2623 = vmatpush1.bf16.msra.mxu0 %v2589
      %2624 = vmatprep.subr.bf16.mxu0 0
      %2625 = vmatpush1.bf16.msra.mxu0 %v2590
      %2626 = vmatprep.subr.bf16.mxu0 0
      %2627 = vmatpush1.bf16.msra.mxu0 %v2591
      %2628 = vmatprep.subr.bf16.mxu0 0
      %2629 = vmatpush1.bf16.msra.mxu0 0
      %2630 = vmatprep.subr.bf16.mxu0 0
      %2631 = vmatpush1.bf16.msra.mxu0 0
      %2632 = vmatprep.subr.bf16.mxu0 0
      %2633 = vmatpush1.bf16.msra.mxu0 0
      %2634 = vmatprep.subr.bf16.mxu0 0
      %2635 = vmatpush1.bf16.msra.mxu0 0
      %2636 = vmatprep.subr.bf16.mxu0 0
      %2637 = vmatpush1.bf16.msra.mxu0 0
      %2638 = vmatprep.subr.bf16.mxu0 0
      %2639 = vmatpush1.bf16.msra.mxu0 0
      %2640 = vmatprep.subr.bf16.mxu0 0
      %2641 = vmatpush1.bf16.msra.mxu0 0
      %2642 = vmatprep.subr.bf16.mxu0 0
      %2643 = vmatpush1.bf16.msra.mxu0 0
      %2644 = vmatprep.subr.bf16.mxu0 0
      %2645 = vmatpush1.bf16.msra.mxu0 0
      %2646 = vmatprep.subr.bf16.mxu0 0
      %2647 = vmatpush1.bf16.msra.mxu0 0
      %2648 = vmatprep.subr.bf16.mxu0 0
      %2649 = vmatpush1.bf16.msra.mxu0 0
      %2650 = vmatprep.subr.bf16.mxu0 0
      %2651 = vmatpush1.bf16.msra.mxu0 0
      %2652 = vmatprep.mubr.bf16.mxu0 0
      %2653 = vmatmul.mubr.bf16.gmra.mrb[0].mxu0 %v2597
      %v2654 = vpop.f32.mrb[0].mxu0
      %v2655 = vadd.f32 0.0, %v2654
      %v2656 = vpop.f32.mrb[0].mxu0
      %v2657 = vpop.f32.mrb[0].mxu0
      %v2658 = vadd.f32 0.0, %v2657
      %v2659 = vpop.f32.mrb[0].mxu0
      %2660 = vmatprep.mubr.bf16.mxu0 0
      %2661 = vmatmul.mubr.bf16.gmra.mrb[0].mxu0 %v2600
      %v2662 = vpop.f32.mrb[0].mxu0
      %v2663 = vadd.f32 0.0, %v2662
      %v2664 = vpop.f32.mrb[0].mxu0
      %v2665 = vpop.f32.mrb[0].mxu0
      %v2666 = vadd.f32 0.0, %v2665
      %v2667 = vpop.f32.mrb[0].mxu0
      %2668 = vmatprep.mubr.bf16.mxu0 0
      %2669 = vmatmul.mubr.bf16.gmra.mrb[0].mxu0 %v2603
      %v2670 = vpop.f32.mrb[0].mxu0
      %v2671 = vadd.f32 0.0, %v2670
      %v2672 = vpop.f32.mrb[0].mxu0
      %v2673 = vpop.f32.mrb[0].mxu0
      %v2674 = vadd.f32 0.0, %v2673
      %v2675 = vpop.f32.mrb[0].mxu0
      %2676 = vmatprep.mubr.bf16.mxu0 0
      %2677 = vmatmul.mubr.bf16.gmra.mrb[0].mxu0 %v2606
      %v2678 = vpop.f32.mrb[0].mxu0
      %v2679 = vadd.f32 0.0, %v2678
      %v2680 = vpop.f32.mrb[0].mxu0
      %v2681 = vpop.f32.mrb[0].mxu0
      %v2682 = vadd.f32 0.0, %v2681
      %v2683 = vpop.f32.mrb[0].mxu0
      %2684 = vmatprep.mubr.bf16.mxu0 0
      %2685 = vmatmul.mubr.bf16.gmra.mrb[0].mxu0 %v2609
      %v2686 = vpop.f32.mrb[0].mxu0
      %v2687 = vadd.f32 0.0, %v2686
      %v2688 = vpop.f32.mrb[0].mxu0
      %v2689 = vpop.f32.mrb[0].mxu0
      %v2690 = vadd.f32 0.0, %v2689
      %v2691 = vpop.f32.mrb[0].mxu0
      %2692 = vmatprep.mubr.bf16.mxu0 0
      %2693 = vmatmul.mubr.bf16.gmra.mrb[0].mxu0 %v2612
      %v2694 = vpop.f32.mrb[0].mxu0
      %v2695 = vadd.f32 0.0, %v2694
      %v2696 = vpop.f32.mrb[0].mxu0
      %v2697 = vpop.f32.mrb[0].mxu0
      %v2698 = vadd.f32 0.0, %v2697
      %v2699 = vpop.f32.mrb[0].mxu0
      %2700 = vmatprep.mubr.bf16.mxu0 0
      %2701 = vmatmul.mubr.bf16.gmra.mrb[0].mxu0 %v2615
      %v2702 = vpop.f32.mrb[0].mxu0
      %v2703 = vadd.f32 0.0, %v2702
      %v2704 = vpop.f32.mrb[0].mxu0
      %v2705 = vpop.f32.mrb[0].mxu0
      %v2706 = vadd.f32 0.0, %v2705
      %v2707 = vpop.f32.mrb[0].mxu0
      %2708 = vmatprep.mubr.bf16.mxu0 0
      %2709 = vmatmul.mubr.bf16.gmra.mrb[0].mxu0 %v2618
      %v2710 = vpop.f32.mrb[0].mxu0
      %v2711 = vadd.f32 0.0, %v2710
      %v2712 = vpop.f32.mrb[0].mxu0
      %v2713 = vpop.f32.mrb[0].mxu0
      %v2714 = vadd.f32 0.0, %v2713
      %v2715 = vpop.f32.mrb[0].mxu0
      %2716 = vdwg.mxu0
      %v2717 = vadd.f32 %v2435, %v2655
      %v2718 = vadd.f32 %v2436, %v2658
      %v2719 = vadd.f32 %v2437, %v2663
      %v2720 = vadd.f32 %v2438, %v2666
      %v2721 = vadd.f32 %v2439, %v2671
      %v2722 = vadd.f32 %v2440, %v2674
      %v2723 = vadd.f32 %v2441, %v2679
      %v2724 = vadd.f32 %v2442, %v2682
      %v2725 = vadd.f32 %v2443, %v2687
      %v2726 = vadd.f32 %v2444, %v2690
      %v2727 = vadd.f32 %v2445, %v2695
      %v2728 = vadd.f32 %v2446, %v2698
      %v2729 = vadd.f32 %v2447, %v2703
      %v2730 = vadd.f32 %v2448, %v2706
      %v2731 = vadd.f32 %v2449, %v2711
      %v2732 = vadd.f32 %v2450, %v2714
      %s2733 = scalar_lea.vmem [#allocation2], 24
      %v2734 = vld [vmem:[%s2733] sm:$0xf]
      %v2735 = vld [vmem:[%s2733 + $0x4] sm:$0xf]
      %v2736 = vld [vmem:[%s2733 + $0xc] sm:$0xf]
      %v2737 = vld [vmem:[%s2733 + $0x10] sm:$0xf]
      %v2738 = vld [vmem:[%s2733 + $0x18] sm:$0xf]
      %v2739 = vld [vmem:[%s2733 + $0x1c] sm:$0xf]
      %v2740 = vld [vmem:[%s2733 + $0x24] sm:$0xf]
      %v2741 = vld [vmem:[%s2733 + $0x28] sm:$0xf]
      %v2742 = vld [vmem:[%s2733 + $0x30] sm:$0xf]
      %v2743 = vld [vmem:[%s2733 + $0x34] sm:$0xf]
      %v2744 = vld [vmem:[%s2733 + $0x3c] sm:$0xf]
      %v2745 = vld [vmem:[%s2733 + $0x40] sm:$0xf]
      %v2746 = vld [vmem:[%s2733 + $0x48] sm:$0xf]
      %v2747 = vld [vmem:[%s2733 + $0x4c] sm:$0xf]
      %v2748 = vld [vmem:[%s2733 + $0x54] sm:$0xf]
      %v2749 = vld [vmem:[%s2733 + $0x58] sm:$0xf]
      %s2750 = scalar_lea.vmem %s5, 192
      %v2751 = vld [vmem:[%s2750] sm:$0xf]
      %v2752 = vld [vmem:[%s2750 + $0x4] sm:$0xf]
      %v2753 = vld [vmem:[%s2750 + $0x8] sm:$0xf]
      %v2754 = vld [vmem:[%s2750 + $0xc] sm:$0xf]
      %v2755 = vld [vmem:[%s2750 + $0x10] sm:$0xf]
      %v2756 = vld [vmem:[%s2750 + $0x14] sm:$0xf]
      %v2757 = vld [vmem:[%s2750 + $0x18] sm:$0xf]
      %v2758 = vld [vmem:[%s2750 + $0x1c] sm:$0xf]
      %v2775 = vunpack.c.l.b16 %v2734
      %v2776 = vunpack.c.l.b16 %v2735
      %v2777 = vunpack.c.l.b16 %v2736
      %v2778 = vunpack.c.l.b16 %v2737
      %v2779 = vunpack.c.l.b16 %v2738
      %v2780 = vunpack.c.l.b16 %v2739
      %v2781 = vunpack.c.l.b16 %v2740
      %v2782 = vunpack.c.l.b16 %v2741
      %v2783 = vunpack.c.l.b16 %v2742
      %v2784 = vunpack.c.l.b16 %v2743
      %v2785 = vunpack.c.l.b16 %v2744
      %v2786 = vunpack.c.l.b16 %v2745
      %v2787 = vunpack.c.l.b16 %v2746
      %v2788 = vunpack.c.l.b16 %v2747
      %v2789 = vunpack.c.l.b16 %v2748
      %v2790 = vunpack.c.l.b16 %v2749
      %v2791 = vpack.c.b16 %v2776, %v2775
      %v2792 = vpack.c.b16 %v2778, %v2777
      %v2793 = vpack.c.b16 %v2780, %v2779
      %v2794 = vpack.c.b16 %v2782, %v2781
      %v2795 = vpack.c.b16 %v2784, %v2783
      %v2796 = vpack.c.b16 %v2786, %v2785
      %v2797 = vpack.c.b16 %v2788, %v2787
      %v2798 = vpack.c.b16 %v2790, %v2789
      %v2807 = vunpack.c.l.b16 %v2751
      %v2808 = vunpack.c.l.b16 %v2752
      %v2809 = vunpack.c.l.b16 %v2753
      %v2810 = vunpack.c.l.b16 %v2754
      %v2811 = vunpack.c.l.b16 %v2755
      %v2812 = vunpack.c.l.b16 %v2756
      %v2813 = vunpack.c.l.b16 %v2757
      %v2814 = vunpack.c.l.b16 %v2758
      %v2815 = vpack.c.b16 %v2808, %v2807
      %v2816 = vpack.c.b16 %v2810, %v2809
      %v2817 = vpack.c.b16 %v2812, %v2811
      %v2818 = vpack.c.b16 %v2814, %v2813
      %v2824 = vsel %vm1231, %v2791, 0
      %v2827 = vsel %vm1231, %v2792, 0
      %v2830 = vsel %vm1231, %v2793, 0
      %v2833 = vsel %vm1231, %v2794, 0
      %v2836 = vsel %vm1231, %v2795, 0
      %v2839 = vsel %vm1231, %v2796, 0
      %v2842 = vsel %vm1231, %v2797, 0
      %v2845 = vsel %vm1231, %v2798, 0
      %2847 = vmatprep.subr.bf16.mxu0 0
      %2848 = vmatpush1.bf16.msra.mxu0 %v2815
      %2849 = vmatprep.subr.bf16.mxu0 0
      %2850 = vmatpush1.bf16.msra.mxu0 %v2816
      %2851 = vmatprep.subr.bf16.mxu0 0
      %2852 = vmatpush1.bf16.msra.mxu0 %v2817
      %2853 = vmatprep.subr.bf16.mxu0 0
      %2854 = vmatpush1.bf16.msra.mxu0 %v2818
      %2855 = vmatprep.subr.bf16.mxu0 0
      %2856 = vmatpush1.bf16.msra.mxu0 0
      %2857 = vmatprep.subr.bf16.mxu0 0
      %2858 = vmatpush1.bf16.msra.mxu0 0
      %2859 = vmatprep.subr.bf16.mxu0 0
      %2860 = vmatpush1.bf16.msra.mxu0 0
      %2861 = vmatprep.subr.bf16.mxu0 0
      %2862 = vmatpush1.bf16.msra.mxu0 0
      %2863 = vmatprep.subr.bf16.mxu0 0
      %2864 = vmatpush1.bf16.msra.mxu0 0
      %2865 = vmatprep.subr.bf16.mxu0 0
      %2866 = vmatpush1.bf16.msra.mxu0 0
      %2867 = vmatprep.subr.bf16.mxu0 0
      %2868 = vmatpush1.bf16.msra.mxu0 0
      %2869 = vmatprep.subr.bf16.mxu0 0
      %2870 = vmatpush1.bf16.msra.mxu0 0
      %2871 = vmatprep.subr.bf16.mxu0 0
      %2872 = vmatpush1.bf16.msra.mxu0 0
      %2873 = vmatprep.subr.bf16.mxu0 0
      %2874 = vmatpush1.bf16.msra.mxu0 0
      %2875 = vmatprep.subr.bf16.mxu0 0
      %2876 = vmatpush1.bf16.msra.mxu0 0
      %2877 = vmatprep.subr.bf16.mxu0 0
      %2878 = vmatpush1.bf16.msra.mxu0 0
      %2879 = vmatprep.mubr.bf16.mxu0 0
      %2880 = vmatmul.mubr.bf16.gmra.mrb[0].mxu0 %v2824
      %v2881 = vpop.f32.mrb[0].mxu0
      %v2882 = vadd.f32 0.0, %v2881
      %v2883 = vpop.f32.mrb[0].mxu0
      %v2884 = vpop.f32.mrb[0].mxu0
      %v2885 = vadd.f32 0.0, %v2884
      %v2886 = vpop.f32.mrb[0].mxu0
      %2887 = vmatprep.mubr.bf16.mxu0 0
      %2888 = vmatmul.mubr.bf16.gmra.mrb[0].mxu0 %v2827
      %v2889 = vpop.f32.mrb[0].mxu0
      %v2890 = vadd.f32 0.0, %v2889
      %v2891 = vpop.f32.mrb[0].mxu0
      %v2892 = vpop.f32.mrb[0].mxu0
      %v2893 = vadd.f32 0.0, %v2892
      %v2894 = vpop.f32.mrb[0].mxu0
      %2895 = vmatprep.mubr.bf16.mxu0 0
      %2896 = vmatmul.mubr.bf16.gmra.mrb[0].mxu0 %v2830
      %v2897 = vpop.f32.mrb[0].mxu0
      %v2898 = vadd.f32 0.0, %v2897
      %v2899 = vpop.f32.mrb[0].mxu0
      %v2900 = vpop.f32.mrb[0].mxu0
      %v2901 = vadd.f32 0.0, %v2900
      %v2902 = vpop.f32.mrb[0].mxu0
      %2903 = vmatprep.mubr.bf16.mxu0 0
      %2904 = vmatmul.mubr.bf16.gmra.mrb[0].mxu0 %v2833
      %v2905 = vpop.f32.mrb[0].mxu0
      %v2906 = vadd.f32 0.0, %v2905
      %v2907 = vpop.f32.mrb[0].mxu0
      %v2908 = vpop.f32.mrb[0].mxu0
      %v2909 = vadd.f32 0.0, %v2908
      %v2910 = vpop.f32.mrb[0].mxu0
      %2911 = vmatprep.mubr.bf16.mxu0 0
      %2912 = vmatmul.mubr.bf16.gmra.mrb[0].mxu0 %v2836
      %v2913 = vpop.f32.mrb[0].mxu0
      %v2914 = vadd.f32 0.0, %v2913
      %v2915 = vpop.f32.mrb[0].mxu0
      %v2916 = vpop.f32.mrb[0].mxu0
      %v2917 = vadd.f32 0.0, %v2916
      %v2918 = vpop.f32.mrb[0].mxu0
      %2919 = vmatprep.mubr.bf16.mxu0 0
      %2920 = vmatmul.mubr.bf16.gmra.mrb[0].mxu0 %v2839
      %v2921 = vpop.f32.mrb[0].mxu0
      %v2922 = vadd.f32 0.0, %v2921
      %v2923 = vpop.f32.mrb[0].mxu0
      %v2924 = vpop.f32.mrb[0].mxu0
      %v2925 = vadd.f32 0.0, %v2924
      %v2926 = vpop.f32.mrb[0].mxu0
      %2927 = vmatprep.mubr.bf16.mxu0 0
      %2928 = vmatmul.mubr.bf16.gmra.mrb[0].mxu0 %v2842
      %v2929 = vpop.f32.mrb[0].mxu0
      %v2930 = vadd.f32 0.0, %v2929
      %v2931 = vpop.f32.mrb[0].mxu0
      %v2932 = vpop.f32.mrb[0].mxu0
      %v2933 = vadd.f32 0.0, %v2932
      %v2934 = vpop.f32.mrb[0].mxu0
      %2935 = vmatprep.mubr.bf16.mxu0 0
      %2936 = vmatmul.mubr.bf16.gmra.mrb[0].mxu0 %v2845
      %v2937 = vpop.f32.mrb[0].mxu0
      %v2938 = vadd.f32 0.0, %v2937
      %v2939 = vpop.f32.mrb[0].mxu0
      %v2940 = vpop.f32.mrb[0].mxu0
      %v2941 = vadd.f32 0.0, %v2940
      %v2942 = vpop.f32.mrb[0].mxu0
      %2943 = vdwg.mxu0
      %v2944 = vadd.f32 %v2717, %v2882
      %v2945 = vadd.f32 %v2718, %v2885
      %v2946 = vadd.f32 %v2719, %v2890
      %v2947 = vadd.f32 %v2720, %v2893
      %v2948 = vadd.f32 %v2721, %v2898
      %v2949 = vadd.f32 %v2722, %v2901
      %v2950 = vadd.f32 %v2723, %v2906
      %v2951 = vadd.f32 %v2724, %v2909
      %v2952 = vadd.f32 %v2725, %v2914
      %v2953 = vadd.f32 %v2726, %v2917
      %v2954 = vadd.f32 %v2727, %v2922
      %v2955 = vadd.f32 %v2728, %v2925
      %v2956 = vadd.f32 %v2729, %v2930
      %v2957 = vadd.f32 %v2730, %v2933
      %v2958 = vadd.f32 %v2731, %v2938
      %v2959 = vadd.f32 %v2732, %v2941
      %v2960 = vld [vmem:[%s2733] sm:$0xf]
      %v2961 = vld [vmem:[%s2733 + $0x4] sm:$0xf]
      %v2962 = vld [vmem:[%s2733 + $0x8] sm:$0x1]
      %v2963 = vld [vmem:[%s2733 + $0xc] sm:$0xf]
      %v2964 = vld [vmem:[%s2733 + $0x10] sm:$0xf]
      %v2965 = vld [vmem:[%s2733 + $0x14] sm:$0x1]
      %v2966 = vld [vmem:[%s2733 + $0x18] sm:$0xf]
      %v2967 = vld [vmem:[%s2733 + $0x1c] sm:$0xf]
      %v2968 = vld [vmem:[%s2733 + $0x20] sm:$0x1]
      %v2969 = vld [vmem:[%s2733 + $0x24] sm:$0xf]
      %v2970 = vld [vmem:[%s2733 + $0x28] sm:$0xf]
      %v2971 = vld [vmem:[%s2733 + $0x2c] sm:$0x1]
      %v2972 = vld [vmem:[%s2733 + $0x30] sm:$0xf]
      %v2973 = vld [vmem:[%s2733 + $0x34] sm:$0xf]
      %v2974 = vld [vmem:[%s2733 + $0x38] sm:$0x1]
      %v2975 = vld [vmem:[%s2733 + $0x3c] sm:$0xf]
      %v2976 = vld [vmem:[%s2733 + $0x40] sm:$0xf]
      %v2977 = vld [vmem:[%s2733 + $0x44] sm:$0x1]
      %v2978 = vld [vmem:[%s2733 + $0x48] sm:$0xf]
      %v2979 = vld [vmem:[%s2733 + $0x4c] sm:$0xf]
      %v2980 = vld [vmem:[%s2733 + $0x50] sm:$0x1]
      %v2981 = vld [vmem:[%s2733 + $0x54] sm:$0xf]
      %v2982 = vld [vmem:[%s2733 + $0x58] sm:$0xf]
      %v2983 = vld [vmem:[%s2733 + $0x5c] sm:$0x1]
      %v2985 = vshrl.u32 %v2960, 16
      %v2987 = vrot.slane %v2985, 4
      %v2988 = vshll.u32 %v2960, 16
      %v2990 = vrot.slane %v2988, 5
      %v2991 = vor.u32 %v2987, %v2990
      %v2992 = vrot.slane %v2991, 4
      %v2994 = vshll.u32 %v2961, 16
      %v2996 = vrot.slane %v2994, 5
      %v2997 = vsel %vm981, %v2992, %v2996
      %v2998 = vshrl.u32 %v2961, 16
      %v3000 = vrot.slane %v2998, 4
      %v3001 = vor.u32 %v3000, %v2996
      %v3002 = vrot.slane %v3001, 4
      %v3004 = vshll.u32 %v2962, 16
      %v3006 = vrot.slane %v3004, 5
      %v3007 = vsel %vm981, %v3002, %v3006
      %v3009 = vshrl.u32 %v2963, 16
      %v3011 = vrot.slane %v3009, 4
      %v3012 = vshll.u32 %v2963, 16
      %v3014 = vrot.slane %v3012, 5
      %v3015 = vor.u32 %v3011, %v3014
      %v3016 = vrot.slane %v3015, 4
      %v3018 = vshll.u32 %v2964, 16
      %v3020 = vrot.slane %v3018, 5
      %v3021 = vsel %vm981, %v3016, %v3020
      %v3022 = vshrl.u32 %v2964, 16
      %v3024 = vrot.slane %v3022, 4
      %v3025 = vor.u32 %v3024, %v3020
      %v3026 = vrot.slane %v3025, 4
      %v3028 = vshll.u32 %v2965, 16
      %v3030 = vrot.slane %v3028, 5
      %v3031 = vsel %vm981, %v3026, %v3030
      %v3033 = vshrl.u32 %v2966, 16
      %v3035 = vrot.slane %v3033, 4
      %v3036 = vshll.u32 %v2966, 16
      %v3038 = vrot.slane %v3036, 5
      %v3039 = vor.u32 %v3035, %v3038
      %v3040 = vrot.slane %v3039, 4
      %v3042 = vshll.u32 %v2967, 16
      %v3044 = vrot.slane %v3042, 5
      %v3045 = vsel %vm981, %v3040, %v3044
      %v3046 = vshrl.u32 %v2967, 16
      %v3048 = vrot.slane %v3046, 4
      %v3049 = vor.u32 %v3048, %v3044
      %v3050 = vrot.slane %v3049, 4
      %v3052 = vshll.u32 %v2968, 16
      %v3054 = vrot.slane %v3052, 5
      %v3055 = vsel %vm981, %v3050, %v3054
      %v3057 = vshrl.u32 %v2969, 16
      %v3059 = vrot.slane %v3057, 4
      %v3060 = vshll.u32 %v2969, 16
      %v3062 = vrot.slane %v3060, 5
      %v3063 = vor.u32 %v3059, %v3062
      %v3064 = vrot.slane %v3063, 4
      %v3066 = vshll.u32 %v2970, 16
      %v3068 = vrot.slane %v3066, 5
      %v3069 = vsel %vm981, %v3064, %v3068
      %v3070 = vshrl.u32 %v2970, 16
      %v3072 = vrot.slane %v3070, 4
      %v3073 = vor.u32 %v3072, %v3068
      %v3074 = vrot.slane %v3073, 4
      %v3076 = vshll.u32 %v2971, 16
      %v3078 = vrot.slane %v3076, 5
      %v3079 = vsel %vm981, %v3074, %v3078
      %v3081 = vshrl.u32 %v2972, 16
      %v3083 = vrot.slane %v3081, 4
      %v3084 = vshll.u32 %v2972, 16
      %v3086 = vrot.slane %v3084, 5
      %v3087 = vor.u32 %v3083, %v3086
      %v3088 = vrot.slane %v3087, 4
      %v3090 = vshll.u32 %v2973, 16
      %v3092 = vrot.slane %v3090, 5
      %v3093 = vsel %vm981, %v3088, %v3092
      %v3094 = vshrl.u32 %v2973, 16
      %v3096 = vrot.slane %v3094, 4
      %v3097 = vor.u32 %v3096, %v3092
      %v3098 = vrot.slane %v3097, 4
      %v3100 = vshll.u32 %v2974, 16
      %v3102 = vrot.slane %v3100, 5
      %v3103 = vsel %vm981, %v3098, %v3102
      %v3105 = vshrl.u32 %v2975, 16
      %v3107 = vrot.slane %v3105, 4
      %v3108 = vshll.u32 %v2975, 16
      %v3110 = vrot.slane %v3108, 5
      %v3111 = vor.u32 %v3107, %v3110
      %v3112 = vrot.slane %v3111, 4
      %v3114 = vshll.u32 %v2976, 16
      %v3116 = vrot.slane %v3114, 5
      %v3117 = vsel %vm981, %v3112, %v3116
      %v3118 = vshrl.u32 %v2976, 16
      %v3120 = vrot.slane %v3118, 4
      %v3121 = vor.u32 %v3120, %v3116
      %v3122 = vrot.slane %v3121, 4
      %v3124 = vshll.u32 %v2977, 16
      %v3126 = vrot.slane %v3124, 5
      %v3127 = vsel %vm981, %v3122, %v3126
      %v3129 = vshrl.u32 %v2978, 16
      %v3131 = vrot.slane %v3129, 4
      %v3132 = vshll.u32 %v2978, 16
      %v3134 = vrot.slane %v3132, 5
      %v3135 = vor.u32 %v3131, %v3134
      %v3136 = vrot.slane %v3135, 4
      %v3138 = vshll.u32 %v2979, 16
      %v3140 = vrot.slane %v3138, 5
      %v3141 = vsel %vm981, %v3136, %v3140
      %v3142 = vshrl.u32 %v2979, 16
      %v3144 = vrot.slane %v3142, 4
      %v3145 = vor.u32 %v3144, %v3140
      %v3146 = vrot.slane %v3145, 4
      %v3148 = vshll.u32 %v2980, 16
      %v3150 = vrot.slane %v3148, 5
      %v3151 = vsel %vm981, %v3146, %v3150
      %v3153 = vshrl.u32 %v2981, 16
      %v3155 = vrot.slane %v3153, 4
      %v3156 = vshll.u32 %v2981, 16
      %v3158 = vrot.slane %v3156, 5
      %v3159 = vor.u32 %v3155, %v3158
      %v3160 = vrot.slane %v3159, 4
      %v3162 = vshll.u32 %v2982, 16
      %v3164 = vrot.slane %v3162, 5
      %v3165 = vsel %vm981, %v3160, %v3164
      %v3166 = vshrl.u32 %v2982, 16
      %v3168 = vrot.slane %v3166, 4
      %v3169 = vor.u32 %v3168, %v3164
      %v3170 = vrot.slane %v3169, 4
      %v3172 = vshll.u32 %v2983, 16
      %v3174 = vrot.slane %v3172, 5
      %v3175 = vsel %vm981, %v3170, %v3174
      %s3176 = scalar_lea.vmem %s5, 224
      %v3177 = vld [vmem:[%s3176] sm:$0xf]
      %v3178 = vld [vmem:[%s3176 + $0x4] sm:$0xf]
      %v3179 = vld [vmem:[%s3176 + $0x8] sm:$0xf]
      %v3180 = vld [vmem:[%s3176 + $0xc] sm:$0xf]
      %v3181 = vld [vmem:[%s3176 + $0x10] sm:$0xf]
      %v3182 = vld [vmem:[%s3176 + $0x14] sm:$0xf]
      %v3183 = vld [vmem:[%s3176 + $0x18] sm:$0xf]
      %v3184 = vld [vmem:[%s3176 + $0x1c] sm:$0xf]
      %v3185 = vunpack.c.l.b16 %v2997
      %v3186 = vunpack.c.l.b16 %v3007
      %v3187 = vunpack.c.l.b16 %v3021
      %v3188 = vunpack.c.l.b16 %v3031
      %v3189 = vunpack.c.l.b16 %v3045
      %v3190 = vunpack.c.l.b16 %v3055
      %v3191 = vunpack.c.l.b16 %v3069
      %v3192 = vunpack.c.l.b16 %v3079
      %v3193 = vunpack.c.l.b16 %v3093
      %v3194 = vunpack.c.l.b16 %v3103
      %v3195 = vunpack.c.l.b16 %v3117
      %v3196 = vunpack.c.l.b16 %v3127
      %v3197 = vunpack.c.l.b16 %v3141
      %v3198 = vunpack.c.l.b16 %v3151
      %v3199 = vunpack.c.l.b16 %v3165
      %v3200 = vunpack.c.l.b16 %v3175
      %v3201 = vpack.c.b16 %v3186, %v3185
      %v3202 = vpack.c.b16 %v3188, %v3187
      %v3203 = vpack.c.b16 %v3190, %v3189
      %v3204 = vpack.c.b16 %v3192, %v3191
      %v3205 = vpack.c.b16 %v3194, %v3193
      %v3206 = vpack.c.b16 %v3196, %v3195
      %v3207 = vpack.c.b16 %v3198, %v3197
      %v3208 = vpack.c.b16 %v3200, %v3199
      %v3217 = vunpack.c.l.b16 %v3177
      %v3218 = vunpack.c.l.b16 %v3178
      %v3219 = vunpack.c.l.b16 %v3179
      %v3220 = vunpack.c.l.b16 %v3180
      %v3221 = vunpack.c.l.b16 %v3181
      %v3222 = vunpack.c.l.b16 %v3182
      %v3223 = vunpack.c.l.b16 %v3183
      %v3224 = vunpack.c.l.b16 %v3184
      %v3225 = vpack.c.b16 %v3218, %v3217
      %v3226 = vpack.c.b16 %v3220, %v3219
      %v3227 = vpack.c.b16 %v3222, %v3221
      %v3228 = vpack.c.b16 %v3224, %v3223
      %v3234 = vsel %vm1231, %v3201, 0
      %v3237 = vsel %vm1231, %v3202, 0
      %v3240 = vsel %vm1231, %v3203, 0
      %v3243 = vsel %vm1231, %v3204, 0
      %v3246 = vsel %vm1231, %v3205, 0
      %v3249 = vsel %vm1231, %v3206, 0
      %v3252 = vsel %vm1231, %v3207, 0
      %v3255 = vsel %vm1231, %v3208, 0
      %3257 = vmatprep.subr.bf16.mxu0 0
      %3258 = vmatpush1.bf16.msra.mxu0 %v3225
      %3259 = vmatprep.subr.bf16.mxu0 0
      %3260 = vmatpush1.bf16.msra.mxu0 %v3226
      %3261 = vmatprep.subr.bf16.mxu0 0
      %3262 = vmatpush1.bf16.msra.mxu0 %v3227
      %3263 = vmatprep.subr.bf16.mxu0 0
      %3264 = vmatpush1.bf16.msra.mxu0 %v3228
      %3265 = vmatprep.subr.bf16.mxu0 0
      %3266 = vmatpush1.bf16.msra.mxu0 0
      %3267 = vmatprep.subr.bf16.mxu0 0
      %3268 = vmatpush1.bf16.msra.mxu0 0
      %3269 = vmatprep.subr.bf16.mxu0 0
      %3270 = vmatpush1.bf16.msra.mxu0 0
      %3271 = vmatprep.subr.bf16.mxu0 0
      %3272 = vmatpush1.bf16.msra.mxu0 0
      %3273 = vmatprep.subr.bf16.mxu0 0
      %3274 = vmatpush1.bf16.msra.mxu0 0
      %3275 = vmatprep.subr.bf16.mxu0 0
      %3276 = vmatpush1.bf16.msra.mxu0 0
      %3277 = vmatprep.subr.bf16.mxu0 0
      %3278 = vmatpush1.bf16.msra.mxu0 0
      %3279 = vmatprep.subr.bf16.mxu0 0
      %3280 = vmatpush1.bf16.msra.mxu0 0
      %3281 = vmatprep.subr.bf16.mxu0 0
      %3282 = vmatpush1.bf16.msra.mxu0 0
      %3283 = vmatprep.subr.bf16.mxu0 0
      %3284 = vmatpush1.bf16.msra.mxu0 0
      %3285 = vmatprep.subr.bf16.mxu0 0
      %3286 = vmatpush1.bf16.msra.mxu0 0
      %3287 = vmatprep.subr.bf16.mxu0 0
      %3288 = vmatpush1.bf16.msra.mxu0 0
      %3289 = vmatprep.mubr.bf16.mxu0 0
      %3290 = vmatmul.mubr.bf16.gmra.mrb[0].mxu0 %v3234
      %v3291 = vpop.f32.mrb[0].mxu0
      %v3292 = vadd.f32 0.0, %v3291
      %v3293 = vpop.f32.mrb[0].mxu0
      %v3294 = vpop.f32.mrb[0].mxu0
      %v3295 = vadd.f32 0.0, %v3294
      %v3296 = vpop.f32.mrb[0].mxu0
      %3297 = vmatprep.mubr.bf16.mxu0 0
      %3298 = vmatmul.mubr.bf16.gmra.mrb[0].mxu0 %v3237
      %v3299 = vpop.f32.mrb[0].mxu0
      %v3300 = vadd.f32 0.0, %v3299
      %v3301 = vpop.f32.mrb[0].mxu0
      %v3302 = vpop.f32.mrb[0].mxu0
      %v3303 = vadd.f32 0.0, %v3302
      %v3304 = vpop.f32.mrb[0].mxu0
      %3305 = vmatprep.mubr.bf16.mxu0 0
      %3306 = vmatmul.mubr.bf16.gmra.mrb[0].mxu0 %v3240
      %v3307 = vpop.f32.mrb[0].mxu0
      %v3308 = vadd.f32 0.0, %v3307
      %v3309 = vpop.f32.mrb[0].mxu0
      %v3310 = vpop.f32.mrb[0].mxu0
      %v3311 = vadd.f32 0.0, %v3310
      %v3312 = vpop.f32.mrb[0].mxu0
      %3313 = vmatprep.mubr.bf16.mxu0 0
      %3314 = vmatmul.mubr.bf16.gmra.mrb[0].mxu0 %v3243
      %v3315 = vpop.f32.mrb[0].mxu0
      %v3316 = vadd.f32 0.0, %v3315
      %v3317 = vpop.f32.mrb[0].mxu0
      %v3318 = vpop.f32.mrb[0].mxu0
      %v3319 = vadd.f32 0.0, %v3318
      %v3320 = vpop.f32.mrb[0].mxu0
      %3321 = vmatprep.mubr.bf16.mxu0 0
      %3322 = vmatmul.mubr.bf16.gmra.mrb[0].mxu0 %v3246
      %v3323 = vpop.f32.mrb[0].mxu0
      %v3324 = vadd.f32 0.0, %v3323
      %v3325 = vpop.f32.mrb[0].mxu0
      %v3326 = vpop.f32.mrb[0].mxu0
      %v3327 = vadd.f32 0.0, %v3326
      %v3328 = vpop.f32.mrb[0].mxu0
      %3329 = vmatprep.mubr.bf16.mxu0 0
      %3330 = vmatmul.mubr.bf16.gmra.mrb[0].mxu0 %v3249
      %v3331 = vpop.f32.mrb[0].mxu0
      %v3332 = vadd.f32 0.0, %v3331
      %v3333 = vpop.f32.mrb[0].mxu0
      %v3334 = vpop.f32.mrb[0].mxu0
      %v3335 = vadd.f32 0.0, %v3334
      %v3336 = vpop.f32.mrb[0].mxu0
      %3337 = vmatprep.mubr.bf16.mxu0 0
      %3338 = vmatmul.mubr.bf16.gmra.mrb[0].mxu0 %v3252
      %v3339 = vpop.f32.mrb[0].mxu0
      %v3340 = vadd.f32 0.0, %v3339
      %v3341 = vpop.f32.mrb[0].mxu0
      %v3342 = vpop.f32.mrb[0].mxu0
      %v3343 = vadd.f32 0.0, %v3342
      %v3344 = vpop.f32.mrb[0].mxu0
      %3345 = vmatprep.mubr.bf16.mxu0 0
      %3346 = vmatmul.mubr.bf16.gmra.mrb[0].mxu0 %v3255
      %v3347 = vpop.f32.mrb[0].mxu0
      %v3348 = vadd.f32 0.0, %v3347
      %v3349 = vpop.f32.mrb[0].mxu0
      %v3350 = vpop.f32.mrb[0].mxu0
      %v3351 = vadd.f32 0.0, %v3350
      %v3352 = vpop.f32.mrb[0].mxu0
      %3353 = vdwg.mxu0
      %v3354 = vadd.f32 %v2944, %v3292
      %v3355 = vadd.f32 %v2945, %v3295
      %v3356 = vadd.f32 %v2946, %v3300
      %v3357 = vadd.f32 %v2947, %v3303
      %v3358 = vadd.f32 %v2948, %v3308
      %v3359 = vadd.f32 %v2949, %v3311
      %v3360 = vadd.f32 %v2950, %v3316
      %v3361 = vadd.f32 %v2951, %v3319
      %v3362 = vadd.f32 %v2952, %v3324
      %v3363 = vadd.f32 %v2953, %v3327
      %v3364 = vadd.f32 %v2954, %v3332
      %v3365 = vadd.f32 %v2955, %v3335
      %v3366 = vadd.f32 %v2956, %v3340
      %v3367 = vadd.f32 %v2957, %v3343
      %v3368 = vadd.f32 %v2958, %v3348
      %v3369 = vadd.f32 %v2959, %v3351
      %v3370 = vld [vmem:[%s2733] sm:$0xe]
      %v3371 = vld [vmem:[%s2733 + $0xc] sm:$0xe]
      %v3372 = vld [vmem:[%s2733 + $0x18] sm:$0xe]
      %v3373 = vld [vmem:[%s2733 + $0x24] sm:$0xe]
      %v3374 = vld [vmem:[%s2733 + $0x30] sm:$0xe]
      %v3375 = vld [vmem:[%s2733 + $0x3c] sm:$0xe]
      %v3376 = vld [vmem:[%s2733 + $0x48] sm:$0xe]
      %v3377 = vld [vmem:[%s2733 + $0x54] sm:$0xe]
      %v3402 = vrot.slane %v3370, 5
      %v3403 = vrot.slane %v3402, 4
      %v3404 = vrot.slane %v2961, 5
      %v3405 = vsel %vm1564, %v3403, %v3404
      %v3406 = vrot.slane %v3404, 4
      %v3407 = vrot.slane %v2962, 5
      %v3408 = vsel %vm1564, %v3406, %v3407
      %v3409 = vrot.slane %v3371, 5
      %v3410 = vrot.slane %v3409, 4
      %v3411 = vrot.slane %v2964, 5
      %v3412 = vsel %vm1564, %v3410, %v3411
      %v3413 = vrot.slane %v3411, 4
      %v3414 = vrot.slane %v2965, 5
      %v3415 = vsel %vm1564, %v3413, %v3414
      %v3416 = vrot.slane %v3372, 5
      %v3417 = vrot.slane %v3416, 4
      %v3418 = vrot.slane %v2967, 5
      %v3419 = vsel %vm1564, %v3417, %v3418
      %v3420 = vrot.slane %v3418, 4
      %v3421 = vrot.slane %v2968, 5
      %v3422 = vsel %vm1564, %v3420, %v3421
      %v3423 = vrot.slane %v3373, 5
      %v3424 = vrot.slane %v3423, 4
      %v3425 = vrot.slane %v2970, 5
      %v3426 = vsel %vm1564, %v3424, %v3425
      %v3427 = vrot.slane %v3425, 4
      %v3428 = vrot.slane %v2971, 5
      %v3429 = vsel %vm1564, %v3427, %v3428
      %v3430 = vrot.slane %v3374, 5
      %v3431 = vrot.slane %v3430, 4
      %v3432 = vrot.slane %v2973, 5
      %v3433 = vsel %vm1564, %v3431, %v3432
      %v3434 = vrot.slane %v3432, 4
      %v3435 = vrot.slane %v2974, 5
      %v3436 = vsel %vm1564, %v3434, %v3435
      %v3437 = vrot.slane %v3375, 5
      %v3438 = vrot.slane %v3437, 4
      %v3439 = vrot.slane %v2976, 5
      %v3440 = vsel %vm1564, %v3438, %v3439
      %v3441 = vrot.slane %v3439, 4
      %v3442 = vrot.slane %v2977, 5
      %v3443 = vsel %vm1564, %v3441, %v3442
      %v3444 = vrot.slane %v3376, 5
      %v3445 = vrot.slane %v3444, 4
      %v3446 = vrot.slane %v2979, 5
      %v3447 = vsel %vm1564, %v3445, %v3446
      %v3448 = vrot.slane %v3446, 4
      %v3449 = vrot.slane %v2980, 5
      %v3450 = vsel %vm1564, %v3448, %v3449
      %v3451 = vrot.slane %v3377, 5
      %v3452 = vrot.slane %v3451, 4
      %v3453 = vrot.slane %v2982, 5
      %v3454 = vsel %vm1564, %v3452, %v3453
      %v3455 = vrot.slane %v3453, 4
      %v3456 = vrot.slane %v2983, 5
      %v3457 = vsel %vm1564, %v3455, %v3456
      %s3458 = scalar_lea.vmem %s5, 256
      %v3459 = vld [vmem:[%s3458] sm:$0xf]
      %v3460 = vld [vmem:[%s3458 + $0x4] sm:$0xf]
      %v3461 = vld [vmem:[%s3458 + $0x8] sm:$0xf]
      %v3462 = vld [vmem:[%s3458 + $0xc] sm:$0xf]
      %v3463 = vld [vmem:[%s3458 + $0x10] sm:$0xf]
      %v3464 = vld [vmem:[%s3458 + $0x14] sm:$0xf]
      %v3465 = vld [vmem:[%s3458 + $0x18] sm:$0xf]
      %v3466 = vld [vmem:[%s3458 + $0x1c] sm:$0xf]
      %v3467 = vunpack.c.l.b16 %v3405
      %v3468 = vunpack.c.l.b16 %v3408
      %v3469 = vunpack.c.l.b16 %v3412
      %v3470 = vunpack.c.l.b16 %v3415
      %v3471 = vunpack.c.l.b16 %v3419
      %v3472 = vunpack.c.l.b16 %v3422
      %v3473 = vunpack.c.l.b16 %v3426
      %v3474 = vunpack.c.l.b16 %v3429
      %v3475 = vunpack.c.l.b16 %v3433
      %v3476 = vunpack.c.l.b16 %v3436
      %v3477 = vunpack.c.l.b16 %v3440
      %v3478 = vunpack.c.l.b16 %v3443
      %v3479 = vunpack.c.l.b16 %v3447
      %v3480 = vunpack.c.l.b16 %v3450
      %v3481 = vunpack.c.l.b16 %v3454
      %v3482 = vunpack.c.l.b16 %v3457
      %v3483 = vpack.c.b16 %v3468, %v3467
      %v3484 = vpack.c.b16 %v3470, %v3469
      %v3485 = vpack.c.b16 %v3472, %v3471
      %v3486 = vpack.c.b16 %v3474, %v3473
      %v3487 = vpack.c.b16 %v3476, %v3475
      %v3488 = vpack.c.b16 %v3478, %v3477
      %v3489 = vpack.c.b16 %v3480, %v3479
      %v3490 = vpack.c.b16 %v3482, %v3481
      %v3499 = vunpack.c.l.b16 %v3459
      %v3500 = vunpack.c.l.b16 %v3460
      %v3501 = vunpack.c.l.b16 %v3461
      %v3502 = vunpack.c.l.b16 %v3462
      %v3503 = vunpack.c.l.b16 %v3463
      %v3504 = vunpack.c.l.b16 %v3464
      %v3505 = vunpack.c.l.b16 %v3465
      %v3506 = vunpack.c.l.b16 %v3466
      %v3507 = vpack.c.b16 %v3500, %v3499
      %v3508 = vpack.c.b16 %v3502, %v3501
      %v3509 = vpack.c.b16 %v3504, %v3503
      %v3510 = vpack.c.b16 %v3506, %v3505
      %v3516 = vsel %vm1231, %v3483, 0
      %v3519 = vsel %vm1231, %v3484, 0
      %v3522 = vsel %vm1231, %v3485, 0
      %v3525 = vsel %vm1231, %v3486, 0
      %v3528 = vsel %vm1231, %v3487, 0
      %v3531 = vsel %vm1231, %v3488, 0
      %v3534 = vsel %vm1231, %v3489, 0
      %v3537 = vsel %vm1231, %v3490, 0
      %3539 = vmatprep.subr.bf16.mxu0 0
      %3540 = vmatpush1.bf16.msra.mxu0 %v3507
      %3541 = vmatprep.subr.bf16.mxu0 0
      %3542 = vmatpush1.bf16.msra.mxu0 %v3508
      %3543 = vmatprep.subr.bf16.mxu0 0
      %3544 = vmatpush1.bf16.msra.mxu0 %v3509
      %3545 = vmatprep.subr.bf16.mxu0 0
      %3546 = vmatpush1.bf16.msra.mxu0 %v3510
      %3547 = vmatprep.subr.bf16.mxu0 0
      %3548 = vmatpush1.bf16.msra.mxu0 0
      %3549 = vmatprep.subr.bf16.mxu0 0
      %3550 = vmatpush1.bf16.msra.mxu0 0
      %3551 = vmatprep.subr.bf16.mxu0 0
      %3552 = vmatpush1.bf16.msra.mxu0 0
      %3553 = vmatprep.subr.bf16.mxu0 0
      %3554 = vmatpush1.bf16.msra.mxu0 0
      %3555 = vmatprep.subr.bf16.mxu0 0
      %3556 = vmatpush1.bf16.msra.mxu0 0
      %3557 = vmatprep.subr.bf16.mxu0 0
      %3558 = vmatpush1.bf16.msra.mxu0 0
      %3559 = vmatprep.subr.bf16.mxu0 0
      %3560 = vmatpush1.bf16.msra.mxu0 0
      %3561 = vmatprep.subr.bf16.mxu0 0
      %3562 = vmatpush1.bf16.msra.mxu0 0
      %3563 = vmatprep.subr.bf16.mxu0 0
      %3564 = vmatpush1.bf16.msra.mxu0 0
      %3565 = vmatprep.subr.bf16.mxu0 0
      %3566 = vmatpush1.bf16.msra.mxu0 0
      %3567 = vmatprep.subr.bf16.mxu0 0
      %3568 = vmatpush1.bf16.msra.mxu0 0
      %3569 = vmatprep.subr.bf16.mxu0 0
      %3570 = vmatpush1.bf16.msra.mxu0 0
      %3571 = vmatprep.mubr.bf16.mxu0 0
      %3572 = vmatmul.mubr.bf16.gmra.mrb[0].mxu0 %v3516
      %v3573 = vpop.f32.mrb[0].mxu0
      %v3574 = vadd.f32 0.0, %v3573
      %v3575 = vpop.f32.mrb[0].mxu0
      %v3576 = vpop.f32.mrb[0].mxu0
      %v3577 = vadd.f32 0.0, %v3576
      %v3578 = vpop.f32.mrb[0].mxu0
      %3579 = vmatprep.mubr.bf16.mxu0 0
      %3580 = vmatmul.mubr.bf16.gmra.mrb[0].mxu0 %v3519
      %v3581 = vpop.f32.mrb[0].mxu0
      %v3582 = vadd.f32 0.0, %v3581
      %v3583 = vpop.f32.mrb[0].mxu0
      %v3584 = vpop.f32.mrb[0].mxu0
      %v3585 = vadd.f32 0.0, %v3584
      %v3586 = vpop.f32.mrb[0].mxu0
      %3587 = vmatprep.mubr.bf16.mxu0 0
      %3588 = vmatmul.mubr.bf16.gmra.mrb[0].mxu0 %v3522
      %v3589 = vpop.f32.mrb[0].mxu0
      %v3590 = vadd.f32 0.0, %v3589
      %v3591 = vpop.f32.mrb[0].mxu0
      %v3592 = vpop.f32.mrb[0].mxu0
      %v3593 = vadd.f32 0.0, %v3592
      %v3594 = vpop.f32.mrb[0].mxu0
      %3595 = vmatprep.mubr.bf16.mxu0 0
      %3596 = vmatmul.mubr.bf16.gmra.mrb[0].mxu0 %v3525
      %v3597 = vpop.f32.mrb[0].mxu0
      %v3598 = vadd.f32 0.0, %v3597
      %v3599 = vpop.f32.mrb[0].mxu0
      %v3600 = vpop.f32.mrb[0].mxu0
      %v3601 = vadd.f32 0.0, %v3600
      %v3602 = vpop.f32.mrb[0].mxu0
      %3603 = vmatprep.mubr.bf16.mxu0 0
      %3604 = vmatmul.mubr.bf16.gmra.mrb[0].mxu0 %v3528
      %v3605 = vpop.f32.mrb[0].mxu0
      %v3606 = vadd.f32 0.0, %v3605
      %v3607 = vpop.f32.mrb[0].mxu0
      %v3608 = vpop.f32.mrb[0].mxu0
      %v3609 = vadd.f32 0.0, %v3608
      %v3610 = vpop.f32.mrb[0].mxu0
      %3611 = vmatprep.mubr.bf16.mxu0 0
      %3612 = vmatmul.mubr.bf16.gmra.mrb[0].mxu0 %v3531
      %v3613 = vpop.f32.mrb[0].mxu0
      %v3614 = vadd.f32 0.0, %v3613
      %v3615 = vpop.f32.mrb[0].mxu0
      %v3616 = vpop.f32.mrb[0].mxu0
      %v3617 = vadd.f32 0.0, %v3616
      %v3618 = vpop.f32.mrb[0].mxu0
      %3619 = vmatprep.mubr.bf16.mxu0 0
      %3620 = vmatmul.mubr.bf16.gmra.mrb[0].mxu0 %v3534
      %v3621 = vpop.f32.mrb[0].mxu0
      %v3622 = vadd.f32 0.0, %v3621
      %v3623 = vpop.f32.mrb[0].mxu0
      %v3624 = vpop.f32.mrb[0].mxu0
      %v3625 = vadd.f32 0.0, %v3624
      %v3626 = vpop.f32.mrb[0].mxu0
      %3627 = vmatprep.mubr.bf16.mxu0 0
      %3628 = vmatmul.mubr.bf16.gmra.mrb[0].mxu0 %v3537
      %v3629 = vpop.f32.mrb[0].mxu0
      %v3630 = vadd.f32 0.0, %v3629
      %v3631 = vpop.f32.mrb[0].mxu0
      %v3632 = vpop.f32.mrb[0].mxu0
      %v3633 = vadd.f32 0.0, %v3632
      %v3634 = vpop.f32.mrb[0].mxu0
      %3635 = vdwg.mxu0
      %v3636 = vadd.f32 %v3354, %v3574
      %v3637 = vadd.f32 %v3355, %v3577
      %v3638 = vadd.f32 %v3356, %v3582
      %v3639 = vadd.f32 %v3357, %v3585
      %v3640 = vadd.f32 %v3358, %v3590
      %v3641 = vadd.f32 %v3359, %v3593
      %v3642 = vadd.f32 %v3360, %v3598
      %v3643 = vadd.f32 %v3361, %v3601
      %v3644 = vadd.f32 %v3362, %v3606
      %v3645 = vadd.f32 %v3363, %v3609
      %v3646 = vadd.f32 %v3364, %v3614
      %v3647 = vadd.f32 %v3365, %v3617
      %v3648 = vadd.f32 %v3366, %v3622
      %v3649 = vadd.f32 %v3367, %v3625
      %v3650 = vadd.f32 %v3368, %v3630
      %v3651 = vadd.f32 %v3369, %v3633
      %v3652 = vpack.c.bf16 %v3637, %v3636
      %v3653 = vpack.c.bf16 %v3639, %v3638
      %v3654 = vpack.c.bf16 %v3641, %v3640
      %v3655 = vpack.c.bf16 %v3643, %v3642
      %v3656 = vpack.c.bf16 %v3645, %v3644
      %v3657 = vpack.c.bf16 %v3647, %v3646
      %v3658 = vpack.c.bf16 %v3649, %v3648
      %v3659 = vpack.c.bf16 %v3651, %v3650
      %v3668 = vunpack.c.l.b16 %v3652
      %v3669 = vunpack.c.h.b16 %v3652
      %v3670 = vunpack.c.l.b16 %v3653
      %v3671 = vunpack.c.h.b16 %v3653
      %v3672 = vunpack.c.l.b16 %v3654
      %v3673 = vunpack.c.h.b16 %v3654
      %v3674 = vunpack.c.l.b16 %v3655
      %v3675 = vunpack.c.h.b16 %v3655
      %v3676 = vunpack.c.l.b16 %v3656
      %v3677 = vunpack.c.h.b16 %v3656
      %v3678 = vunpack.c.l.b16 %v3657
      %v3679 = vunpack.c.h.b16 %v3657
      %v3680 = vunpack.c.l.b16 %v3658
      %v3681 = vunpack.c.h.b16 %v3658
      %v3682 = vunpack.c.l.b16 %v3659
      %v3683 = vunpack.c.h.b16 %v3659
      %v3684 = vpack.c.b16 %v3668, %v3668
      %v3685 = vpack.c.b16 %v3669, %v3669
      %v3686 = vpack.c.b16 %v3670, %v3670
      %v3687 = vpack.c.b16 %v3671, %v3671
      %v3688 = vpack.c.b16 %v3672, %v3672
      %v3689 = vpack.c.b16 %v3673, %v3673
      %v3690 = vpack.c.b16 %v3674, %v3674
      %v3691 = vpack.c.b16 %v3675, %v3675
      %v3692 = vpack.c.b16 %v3676, %v3676
      %v3693 = vpack.c.b16 %v3677, %v3677
      %v3694 = vpack.c.b16 %v3678, %v3678
      %v3695 = vpack.c.b16 %v3679, %v3679
      %v3696 = vpack.c.b16 %v3680, %v3680
      %v3697 = vpack.c.b16 %v3681, %v3681
      %v3698 = vpack.c.b16 %v3682, %v3682
      %v3699 = vpack.c.b16 %v3683, %v3683
      %3716 = vst.msk [vmem:[%s439] sm:$0xf] %vm641, %v3684
      %3717 = vst.msk [vmem:[%s439 + $0x4] sm:$0xf] %vm641, %v3685
      %3718 = vst.msk [vmem:[%s439 + $0x8] sm:$0xf] %vm641, %v3686
      %3719 = vst.msk [vmem:[%s439 + $0xc] sm:$0xf] %vm641, %v3687
      %3720 = vst.msk [vmem:[%s439 + $0x10] sm:$0xf] %vm641, %v3688
      %3721 = vst.msk [vmem:[%s439 + $0x14] sm:$0xf] %vm641, %v3689
      %3722 = vst.msk [vmem:[%s439 + $0x18] sm:$0xf] %vm641, %v3690
      %3723 = vst.msk [vmem:[%s439 + $0x1c] sm:$0xf] %vm641, %v3691
      %3724 = vst.msk [vmem:[%s439 + $0x20] sm:$0xf] %vm641, %v3692
      %3725 = vst.msk [vmem:[%s439 + $0x24] sm:$0xf] %vm641, %v3693
      %3726 = vst.msk [vmem:[%s439 + $0x28] sm:$0xf] %vm641, %v3694
      %3727 = vst.msk [vmem:[%s439 + $0x2c] sm:$0xf] %vm641, %v3695
      %3728 = vst.msk [vmem:[%s439 + $0x30] sm:$0xf] %vm641, %v3696
      %3729 = vst.msk [vmem:[%s439 + $0x34] sm:$0xf] %vm641, %v3697
      %3730 = vst.msk [vmem:[%s439 + $0x38] sm:$0xf] %vm641, %v3698
      %3731 = vst.msk [vmem:[%s439 + $0x3c] sm:$0xf] %vm641, %v3699
      %v3732 = vld [vmem:[%s7] sm:$0xff]
      %v3733 = vsel %vm1231, %v3636, 0.0
      %v3734 = vsel %vm1231, %v3637, 0.0
      %v3735 = vadd.f32 %v3733, %v3734
      %v3736 = vsel %vm1231, %v3638, 0.0
      %v3737 = vadd.f32 %v3735, %v3736
      %v3738 = vsel %vm1231, %v3639, 0.0
      %v3739 = vadd.f32 %v3737, %v3738
      %v3740 = vsel %vm1231, %v3640, 0.0
      %v3741 = vadd.f32 %v3739, %v3740
      %v3742 = vsel %vm1231, %v3641, 0.0
      %v3743 = vadd.f32 %v3741, %v3742
      %v3744 = vsel %vm1231, %v3642, 0.0
      %v3745 = vadd.f32 %v3743, %v3744
      %v3746 = vsel %vm1231, %v3643, 0.0
      %v3747 = vadd.f32 %v3745, %v3746
      %v3748 = vsel %vm1231, %v3644, 0.0
      %v3749 = vadd.f32 %v3747, %v3748
      %v3750 = vsel %vm1231, %v3645, 0.0
      %v3751 = vadd.f32 %v3749, %v3750
      %v3752 = vsel %vm1231, %v3646, 0.0
      %v3753 = vadd.f32 %v3751, %v3752
      %v3754 = vsel %vm1231, %v3647, 0.0
      %v3755 = vadd.f32 %v3753, %v3754
      %v3756 = vsel %vm1231, %v3648, 0.0
      %v3757 = vadd.f32 %v3755, %v3756
      %v3758 = vsel %vm1231, %v3649, 0.0
      %v3759 = vadd.f32 %v3757, %v3758
      %v3760 = vsel %vm1231, %v3650, 0.0
      %v3761 = vadd.f32 %v3759, %v3760
      %v3762 = vsel %vm1231, %v3651, 0.0
      %v3763 = vadd.f32 %v3761, %v3762
      %v3764 = vrot.slane %v3763, 4
      %v3765 = vadd.f32 %v3763, %v3764
      %v3766 = vrot.slane %v3765, 2
      %v3767 = vadd.f32 %v3765, %v3766
      %v3768 = vrot.slane %v3767, 1
      %v3769 = vadd.f32 %v3767, %v3768
      %v3770 = vmul.f32 %v3636, %v3636
      %v3771 = vmul.f32 %v3637, %v3637
      %v3772 = vmul.f32 %v3638, %v3638
      %v3773 = vmul.f32 %v3639, %v3639
      %v3774 = vmul.f32 %v3640, %v3640
      %v3775 = vmul.f32 %v3641, %v3641
      %v3776 = vmul.f32 %v3642, %v3642
      %v3777 = vmul.f32 %v3643, %v3643
      %v3778 = vmul.f32 %v3644, %v3644
      %v3779 = vmul.f32 %v3645, %v3645
      %v3780 = vmul.f32 %v3646, %v3646
      %v3781 = vmul.f32 %v3647, %v3647
      %v3782 = vmul.f32 %v3648, %v3648
      %v3783 = vmul.f32 %v3649, %v3649
      %v3784 = vmul.f32 %v3650, %v3650
      %v3785 = vmul.f32 %v3651, %v3651
      %v3786 = vsel %vm1231, %v3770, 0.0
      %v3787 = vsel %vm1231, %v3771, 0.0
      %v3788 = vadd.f32 %v3786, %v3787
      %v3789 = vsel %vm1231, %v3772, 0.0
      %v3790 = vadd.f32 %v3788, %v3789
      %v3791 = vsel %vm1231, %v3773, 0.0
      %v3792 = vadd.f32 %v3790, %v3791
      %v3793 = vsel %vm1231, %v3774, 0.0
      %v3794 = vadd.f32 %v3792, %v3793
      %v3795 = vsel %vm1231, %v3775, 0.0
      %v3796 = vadd.f32 %v3794, %v3795
      %v3797 = vsel %vm1231, %v3776, 0.0
      %v3798 = vadd.f32 %v3796, %v3797
      %v3799 = vsel %vm1231, %v3777, 0.0
      %v3800 = vadd.f32 %v3798, %v3799
      %v3801 = vsel %vm1231, %v3778, 0.0
      %v3802 = vadd.f32 %v3800, %v3801
      %v3803 = vsel %vm1231, %v3779, 0.0
      %v3804 = vadd.f32 %v3802, %v3803
      %v3805 = vsel %vm1231, %v3780, 0.0
      %v3806 = vadd.f32 %v3804, %v3805
      %v3807 = vsel %vm1231, %v3781, 0.0
      %v3808 = vadd.f32 %v3806, %v3807
      %v3809 = vsel %vm1231, %v3782, 0.0
      %v3810 = vadd.f32 %v3808, %v3809
      %v3811 = vsel %vm1231, %v3783, 0.0
      %v3812 = vadd.f32 %v3810, %v3811
      %v3813 = vsel %vm1231, %v3784, 0.0
      %v3814 = vadd.f32 %v3812, %v3813
      %v3815 = vsel %vm1231, %v3785, 0.0
      %v3816 = vadd.f32 %v3814, %v3815
      %v3817 = vrot.slane %v3816, 4
      %v3818 = vadd.f32 %v3816, %v3817
      %v3819 = vrot.slane %v3818, 2
      %v3820 = vadd.f32 %v3818, %v3819
      %v3821 = vrot.slane %v3820, 1
      %v3822 = vadd.f32 %v3820, %v3821
      %vm3823 = vcmask 1040384
      %v3824 = vsel %vm3823, %v3769, %v3822
      %vm3825 = vcmask 1041408
      %v3826 = vsel %vm3825, %v3824, 0.0
      %v3827 = vadd.f32 %v3732, %v3826
      %3828 = vst.msk [vmem:[%s7] sm:$0xff] %vm1231, %v3827
      %s3829 = smul.u32 %s23, 2
      %s3830 = sadd.s32 %s3829, %s24
      %s3831 = smul.u32 16, %s3830
      %p3832 = scmp.lt.s32.totalorder %s3831, 63
      %s3833 = scalar_select %p3832, %s3831, 63
      %s3834 = smul.addr %s3833, 4
      %s3835 = scalar_lea.vmem %s6, %s3834
      // Predicated region
      $region49: #{bottleneck_forward.5} parent=43 // pred_check
        %p3836 = pneg %p216
      $region50: #{bottleneck_forward.5} parent=43 // pred_check_branch
        %3838 = sbr.rel (%p3836) target = $region52
      $region51: #{bottleneck_forward.5} parent=43 // pred_region
        %s3839 = smul.u32 %s23, 2
        %s3840 = sadd.s32 %s3839, %s24
        %s3841 = smul.u32 16, %s3840
      $region52: #{bottleneck_forward.5} parent=43 // pred_fallthru
        _
      // Predicated region
      $region53: #{bottleneck_forward.5} parent=43 // pred_check
        %p3842 = pneg %p237
      $region54: #{bottleneck_forward.5} parent=43 // pred_check_branch
        %3844 = sbr.rel (%p3842) target = $region56
      $region55: #{bottleneck_forward.5} parent=43 // pred_region
        _
      $region56: #{bottleneck_forward.5} parent=43 // pred_fallthru
        _
      // Predicated region
      $region57: #{bottleneck_forward.5} parent=43 // pred_check
        %p3845 = pneg %p237
      $region58: #{bottleneck_forward.5} parent=43 // pred_check_branch
        %3847 = sbr.rel (%p3845) target = $region60
      $region59: #{bottleneck_forward.5} parent=43 // pred_region
        _
      $region60: #{bottleneck_forward.5} parent=43 // pred_fallthru
        _
    $region44: #{bottleneck_forward.5} parent=5 // pred_fallthru
      _
    %p3848 = scmp.le.s32.totalorder 2, %s14
    // Predicated region
    $region61: #{bottleneck_forward.5} parent=5 // pred_check
      %p3849 = pneg %p3848
    $region62: #{bottleneck_forward.5} parent=5 // pred_check_branch
      %3851 = sbr.rel (%p3849) target = $region64
    $region63: #{bottleneck_forward.5} parent=5 // pred_region
      %s3852 = ssub.s32 %s14, 2
      // Predicated region
      $region65: #{bottleneck_forward.5} parent=63 // pred_check
        %p3853 = pneg %p222
      $region66: #{bottleneck_forward.5} parent=63 // pred_check_branch
        %3855 = sbr.rel (%p3853) target = $region68
      $region67: #{bottleneck_forward.5} parent=63 // pred_region
        %s3856 = smul.u32 %s25, 2
        %s3857 = sadd.s32 %s3856, %s26
        %s3858 = smul.u32 16, %s3857
        %p3859 = scmp.lt.s32.totalorder %s3858, 63
        %s3860 = scalar_select %p3859, %s3858, 63
        %s3861 = smul.addr %s3860, 4
        %s3862 = scalar_lea.vmem %s6, %s3861
      $region68: #{bottleneck_forward.5} parent=63 // pred_fallthru
        _
    $region64: #{bottleneck_forward.5} parent=5 // pred_fallthru
      _
  $region6: #{bottleneck_forward.5} parent=0 // loop_footer
    %s18 = sadd.s32 1, %s14
  $region7: #{bottleneck_forward.5} parent=0 // loop_footer_branch
    %13 = sbr.rel target = $region3
  $region8: #{bottleneck_forward.5} parent=0 // loop_exit
    _

</llo_original>
